<compile_context>
chip_gen: v5e
topology: v5e:2x2
jax: 0.10.0
libtpu: 0.0.40
codegen_flags: <defaults>
</compile_context>

<pallas_src>
import math

import jax
import jax.numpy as jnp
from jax import lax
from jax.experimental import pallas as pl
from jax.experimental.pallas import tpu as pltpu


# ----------------------------------------------------------------------------
# Static architecture description
# ----------------------------------------------------------------------------
def make_layer_specs(feature_maps=8, image_channels=1):
    fm = feature_maps
    # (in_c, out_c, kernel, stride, pad, spectral_norm, batch_norm, leaky_relu)
    return (
        (image_channels, fm,     4, 2, 1, True,  False, True),
        (fm,             fm * 2, 4, 2, 1, True,  True,  True),
        (fm * 2,         fm * 4, 4, 2, 1, True,  True,  True),
        (fm * 4,         fm * 8, 4, 2, 1, True,  True,  True),
        (fm * 8,         1,      2, 1, 0, False, False, False),
    )


# ----------------------------------------------------------------------------
# Host-side parameter preparation (PyTorch default init + spectral norm)
# ----------------------------------------------------------------------------
def spectral_normalize(w, key, n_iter=30, eps=1e-12):
    """torch.nn.utils.spectral_norm semantics: W / sigma_max(W.reshape(OC,-1)).
    # TODO(synk): PyTorch keeps persistent power-iteration buffers (u, v) that
    # update once per forward; here a fresh, well-converged power iteration
    # with a random start is used instead, so sigma is not bit-identical.
    """
    oc = w.shape[0]
    w_mat = w.reshape(oc, -1)
    u = jax.random.normal(key, (oc,), jnp.float32)
    u = u / (jnp.linalg.norm(u) + eps)
    v = None
    for _ in range(n_iter):
        v = w_mat.T @ u
        v = v / (jnp.linalg.norm(v) + eps)
        u = w_mat @ v
        u = u / (jnp.linalg.norm(u) + eps)
    sigma = u @ (w_mat @ v)
    return w / sigma


def init_params(key, specs):
    params = {}
    n_layers = len(specs)
    for idx, (ic, oc, k, s, p, sn, bn, act) in enumerate(specs):
        key, kw, ku = jax.random.split(key, 3)
        bound = 1.0 / math.sqrt(ic * k * k)        # PyTorch Conv2d default init
        w = jax.random.uniform(kw, (oc, ic, k, k), jnp.float32, -bound, bound)
        if sn:
            w = spectral_normalize(w, ku)
        w_hwio = jnp.transpose(w, (2, 3, 1, 0))    # (k, k, ic, oc)
        params[f"w{idx}_hwio"] = w_hwio            # used by the XLA reference
        if idx == 0:
            # block 1 is driven by a host-built im2col patch matrix
            params["w0_mat"] = w_hwio.reshape(k * k * ic, oc)
        elif idx < n_layers - 1:
            # per-tap weights for the in-kernel stride-2 convolutions
            params[f"w{idx}_taps"] = w_hwio.reshape(k * k, ic, oc)
            params[f"g{idx}"] = jnp.ones((1, oc), jnp.float32)
            params[f"b{idx}"] = jnp.zeros((1, oc), jnp.float32)
        else:
            assert oc == 1, "last discriminator block must have a single output"
            params["w4_last"] = jnp.transpose(w_hwio, (0, 1, 3, 2)).reshape(
                k * k, 1, 1, 1, ic)
    return params


# ----------------------------------------------------------------------------
# Plain-JAX glue: im2col for the first block only (function of the raw input)
# ----------------------------------------------------------------------------
def im2col(x_nhwc, k, s, p):
    if p > 0:
        x_nhwc = jnp.pad(x_nhwc, ((0, 0), (p, p), (p, p), (0, 0)))
    n, h, w, c = x_nhwc.shape
    oh = (h - k) // s + 1
    ow = (w - k) // s + 1
    cols = []
    for i in range(k):
        for j in range(k):
            cols.append(
                x_nhwc[:, i:i + s * (oh - 1) + 1:s, j:j + s * (ow - 1) + 1:s, :])
    patches = jnp.stack(cols, axis=3)                  # (N, OH, OW, k*k, C)
    return patches.reshape(n * oh * ow, k * k * c), oh, ow


# ----------------------------------------------------------------------------
# In-kernel building blocks (trace-time helpers on VMEM-resident values)
# ----------------------------------------------------------------------------
def _leaky_relu(y):
    return jnp.where(y >= 0.0, y, 0.2 * y)


def _conv4x4_s2(a, w_ref, oc, batch):
    """4x4 / stride-2 / pad-1 convolution of a (N, H, W, C) activation against
    per-tap weights w_ref (16, C, OC).

    Stride-2 access is an even/odd (row, col) decimation built from
    concatenates and static slices only; matmul operands are kept 8-sublane
    aligned by over-fetching the output width to a multiple of 8 (the caller
    trims the extra columns after BatchNorm).  Returns the (N*OH*OW_T, OC)
    f32 accumulator and (OH, OW, OW_T).
    """
    n, h, w, c = a.shape
    oh, ow = h // 2, w // 2
    ow_t = ((ow + 7) // 8) * 8            # 8-aligned output width
    wq = ow_t + 1                         # columns each parity quadrant needs
    wpad = 2 * wq                         # zero-padded input width
    # zero padding: one ring for the convolution + extra zero columns so every
    # tap can slice a full ow_t-wide window.
    zrow = jnp.zeros((n, 1, w, c), jnp.float32)
    ap = jnp.concatenate([zrow, a, zrow], axis=1)               # (n, h+2, w, c)
    zl = jnp.zeros((n, h + 2, 1, c), jnp.float32)
    zr = jnp.zeros((n, h + 2, wpad - w - 1, c), jnp.float32)
    ap = jnp.concatenate([zl, ap, zr], axis=2)                  # (n, h+2, wpad, c)
    hq = oh + 1
    # even/odd row split: reshape only regroups dims above the (sublane, lane)
    # pair -> layout no-op.
    ar = ap.reshape(n, hq, 2, wpad, c)
    quads = []
    for rp in range(2):
        rows = ar[:, :, rp, :, :]                               # (n, hq, wpad, c)
        qrow = []
        for cp in range(2):
            cols = [rows[:, :, 2 * q + cp:2 * q + cp + 1, :] for q in range(wq)]
            qrow.append(jnp.concatenate(cols, axis=2))          # (n, hq, wq, c)
        quads.append(qrow)
    m_t = batch * oh * ow_t
    acc = jnp.zeros((m_t, oc), jnp.float32)
    for i in range(4):
        for j in range(4):
            xs = quads[i % 2][j % 2][:, i // 2:i // 2 + oh,
                                     j // 2:j // 2 + ow_t, :]   # (n, oh, ow_t, c)
            xs = xs.reshape(m_t, c)       # 8-aligned collapse -> layout no-op
            acc = acc + jnp.dot(xs, w_ref[i * 4 + j],
                                preferred_element_type=jnp.float32)
    return acc, oh, ow, ow_t


def _masked_batchnorm(acc, g_ref, b_ref, ow, ow_t, count, eps=1e-5):
    """Training-mode BatchNorm2d on the (N*OH*OW_T, OC) accumulator.

    Rows with (row % OW_T) >= OW are over-fetch padding and are excluded from
    the batch statistics (biased variance, eps=1e-5, gamma/beta applied)."""
    m_t = acc.shape[0]
    rows = lax.broadcasted_iota(jnp.int32, (m_t, 1), 0)
    mask = ((rows % ow_t) < ow).astype(jnp.float32)
    mean = jnp.sum(acc * mask, axis=0, keepdims=True) / count
    cent = (acc - mean) * mask
    var = jnp.sum(cent * cent, axis=0, keepdims=True) / count
    y = (acc - mean) * lax.rsqrt(var + eps)
    return y * g_ref[...] + b_ref[...]


def _make_kernel(channels, batch, oh0, ow0):
    """Builds the fused 5-block discriminator kernel (static shapes closed over)."""
    oc0, oc1, oc2, oc3, _oc4 = channels

    def kernel(p0_ref, w0_ref,
               w1_ref, g1_ref, b1_ref,
               w2_ref, g2_ref, b2_ref,
               w3_ref, g3_ref, b3_ref,
               w4_ref, o_ref):
        # --- block 1: host-built im2col patches -> one MXU matmul + LeakyReLU
        y = jnp.dot(p0_ref[...], w0_ref[...], preferred_element_type=jnp.float32)
        y = _leaky_relu(y)
        a = y.reshape(batch, oh0, ow0, oc0)      # ow0 % 8 == 0 -> layout no-op

        # --- blocks 2-4: stride-2 conv + BatchNorm + LeakyReLU, all in VMEM
        for w_ref, g_ref, b_ref, oc in ((w1_ref, g1_ref, b1_ref, oc1),
                                        (w2_ref, g2_ref, b2_ref, oc2),
                                        (w3_ref, g3_ref, b3_ref, oc3)):
            acc, oh, ow, ow_t = _conv4x4_s2(a, w_ref, oc, batch)
            y = _masked_batchnorm(acc, g_ref, b_ref, ow, ow_t, batch * oh * ow)
            y = _leaky_relu(y)
            a = y.reshape(batch, oh, ow_t, oc)[:, :, :ow, :]   # drop pad columns

        # --- block 5: 2x2 / stride-1 / valid conv (OC=1) + sigmoid
        logit = jnp.zeros((batch, 1, 1, 1), jnp.float32)
        for i in range(2):
            for j in range(2):
                xs = a[:, i:i + 1, j:j + 1, :]                  # (N, 1, 1, C)
                logit = logit + jnp.sum(xs * w4_ref[i * 2 + j],
                                        axis=3, keepdims=True)
        o_ref[...] = jax.nn.sigmoid(logit).astype(o_ref.dtype)

    return kernel


# ----------------------------------------------------------------------------
# Public forward pass: NCHW input -> (N,) sigmoid probabilities
# ----------------------------------------------------------------------------
def make_forward(specs):
    channels = tuple(s[1] for s in specs)
    k0, s0, p0 = specs[0][2], specs[0][3], specs[0][4]

    @jax.jit
    def forward(x_nchw, params):
        x = jnp.transpose(x_nchw, (0, 2, 3, 1)).astype(jnp.float32)  # NCHW->NHWC
        n, h, w, _ = x.shape
        assert h == 32 and w == 32, "spatial chain 32->16->8->4->2->1 needs 32x32"
        patches0, oh0, ow0 = im2col(x, k0, s0, p0)
        assert ow0 % 8 == 0
        kernel = _make_kernel(channels, n, oh0, ow0)
        out = pl.pallas_call(
            kernel,
            out_shape=jax.ShapeDtypeStruct((n, 1, 1, 1), jnp.float32),
            in_specs=[pl.BlockSpec(memory_space=pltpu.MemorySpace.VMEM)
                      for _ in range(12)],
            out_specs=pl.BlockSpec(memory_space=pltpu.MemorySpace.VMEM),
        )(patches0, params["w0_mat"],
          params["w1_taps"], params["g1"], params["b1"],
          params["w2_taps"], params["g2"], params["b2"],
          params["w3_taps"], params["g3"], params["b3"],
          params["w4_last"])
        # torch.sigmoid(out).view(-1, 1).squeeze(1): (N,1,1,1) -> (N,)
        return out.reshape(-1)

    return forward


# ----------------------------------------------------------------------------
# Pure-JAX reference (XLA convolutions) used to validate the fused kernel
# ----------------------------------------------------------------------------
def make_reference(specs):
    @jax.jit
    def reference(x_nchw, params):
        a = jnp.transpose(x_nchw, (0, 2, 3, 1)).astype(jnp.float32)
        for idx, (ic, oc, k, s, p, sn, bn, act) in enumerate(specs):
            a = lax.conv_general_dilated(
                a, params[f"w{idx}_hwio"], (s, s), [(p, p), (p, p)],
                dimension_numbers=("NHWC", "HWIO", "NHWC"),
                precision=lax.Precision.HIGHEST)
            if bn:
                mean = jnp.mean(a, axis=(0, 1, 2), keepdims=True)
                var = jnp.mean(jnp.square(a - mean), axis=(0, 1, 2), keepdims=True)
                a = (a - mean) * lax.rsqrt(var + 1e-5)
                a = a * params[f"g{idx}"].reshape(1, 1, 1, oc) \
                    + params[f"b{idx}"].reshape(1, 1, 1, oc)
            if act:
                a = jnp.where(a >= 0.0, a, 0.2 * a)
        return jax.nn.sigmoid(a).reshape(-1)

    return reference


if __name__ == "__main__":
    FEATURE_MAPS = 8
    IMAGE_CHANNELS = 1     # MNIST-style input
    BATCH = 2

    specs = make_layer_specs(FEATURE_MAPS, IMAGE_CHANNELS)
    key = jax.random.PRNGKey(0)
    k_params, k_x = jax.random.split(key)
    params = init_params(k_params, specs)

    # 32x32 input: spatial chain 32 -> 16 -> 8 -> 4 -> 2 -> 1.
    x = jax.random.normal(k_x, (BATCH, IMAGE_CHANNELS, 32, 32), jnp.float32)

    forward = make_forward(specs)
    out = jax.block_until_ready(forward(x, params))

    assert out.shape == (BATCH,), out.shape
    assert bool(jnp.all(jnp.isfinite(out)))
    assert bool(jnp.all((out >= 0.0) & (out <= 1.0)))

    # Cross-check the fused Pallas kernel against a plain-XLA reference.
    reference = make_reference(specs)
    ref = jax.block_until_ready(reference(x, params))
    max_err = float(jnp.max(jnp.abs(out - ref)))
    assert max_err < 5e-2, f"Pallas forward deviates from reference: {max_err}"

    print("KERNEL_OK")
</pallas_src>

<mosaic_0001>
module attributes {stable_mosaic.version = 11 : i64} {
  func.func @kernel(%arg0: memref<512x16xf32, #tpu.memory_space<vmem>>, %arg1: memref<16x8xf32, #tpu.memory_space<vmem>>, %arg2: memref<16x8x16xf32, #tpu.memory_space<vmem>>, %arg3: memref<1x16xf32, #tpu.memory_space<vmem>>, %arg4: memref<1x16xf32, #tpu.memory_space<vmem>>, %arg5: memref<16x16x32xf32, #tpu.memory_space<vmem>>, %arg6: memref<1x32xf32, #tpu.memory_space<vmem>>, %arg7: memref<1x32xf32, #tpu.memory_space<vmem>>, %arg8: memref<16x32x64xf32, #tpu.memory_space<vmem>>, %arg9: memref<1x64xf32, #tpu.memory_space<vmem>>, %arg10: memref<1x64xf32, #tpu.memory_space<vmem>>, %arg11: memref<4x1x1x1x64xf32, #tpu.memory_space<vmem>>, %arg12: memref<2x1x1x1xf32, #tpu.memory_space<vmem>>) attributes {dimension_semantics = [], scalar_prefetch = 0 : i64, scratch_operands = 0 : i64, tpu.core_type = #tpu.core_type<tc>} {
    %c0 = arith.constant 0 : index
    %c0_0 = arith.constant 0 : index
    %0 = vector.load %arg0[%c0, %c0_0] : memref<512x16xf32, #tpu.memory_space<vmem>>, vector<512x16xf32>
    %c0_1 = arith.constant 0 : index
    %c0_2 = arith.constant 0 : index
    %1 = vector.load %arg1[%c0_1, %c0_2] : memref<16x8xf32, #tpu.memory_space<vmem>>, vector<16x8xf32>
    %cst = arith.constant dense<0.000000e+00> : vector<512x8xf32>
    %2 = tpu.matmul %0, %1, %cst {dimension_numbers = #tpu.dot_dimension_numbers<[1], [0], [0], [1], [0, 0, 1, 1], [], []>} : vector<512x16xf32>, vector<16x8xf32>, vector<512x8xf32> -> vector<512x8xf32>
    %cst_3 = arith.constant 0.000000e+00 : f32
    %3 = vector.broadcast %cst_3 : f32 to vector<512x8xf32>
    %4 = arith.cmpf oge, %2, %3 : vector<512x8xf32>
    %cst_4 = arith.constant 2.000000e-01 : f32
    %5 = vector.broadcast %cst_4 : f32 to vector<512x8xf32>
    %6 = arith.mulf %5, %2 : vector<512x8xf32>
    %7 = arith.select %4, %2, %6 : vector<512x8xi1>, vector<512x8xf32>
    %8 = vector.shape_cast %7 : vector<512x8xf32> to vector<2x16x16x8xf32>
    %cst_5 = arith.constant 0.000000e+00 : f32
    %9 = vector.broadcast %cst_5 : f32 to vector<2x1x16x8xf32>
    %10 = tpu.concatenate %9, %8, %9 in 1 : vector<2x1x16x8xf32>, vector<2x16x16x8xf32>, vector<2x1x16x8xf32> -> vector<2x18x16x8xf32>
    %cst_6 = arith.constant 0.000000e+00 : f32
    %11 = vector.broadcast %cst_6 : f32 to vector<2x18x1x8xf32>
    %cst_7 = arith.constant 0.000000e+00 : f32
    %12 = vector.broadcast %cst_7 : f32 to vector<2x18x1x8xf32>
    %13 = tpu.concatenate %11, %10, %12 in 2 : vector<2x18x1x8xf32>, vector<2x18x16x8xf32>, vector<2x18x1x8xf32> -> vector<2x18x18x8xf32>
    %14 = vector.shape_cast %13 : vector<2x18x18x8xf32> to vector<2x9x2x18x8xf32>
    %15 = vector.extract_strided_slice %14 {offsets = [0, 0, 0, 0, 0], sizes = [2, 9, 1, 18, 8], strides = [1, 1, 1, 1, 1]} : vector<2x9x2x18x8xf32> to vector<2x9x1x18x8xf32>
    %16 = vector.shape_cast %15 : vector<2x9x1x18x8xf32> to vector<2x9x18x8xf32>
    %17 = vector.extract_strided_slice %16 {offsets = [0, 0, 0, 0], sizes = [2, 9, 1, 8], strides = [1, 1, 1, 1]} : vector<2x9x18x8xf32> to vector<2x9x1x8xf32>
    %18 = vector.extract_strided_slice %16 {offsets = [0, 0, 2, 0], sizes = [2, 9, 1, 8], strides = [1, 1, 1, 1]} : vector<2x9x18x8xf32> to vector<2x9x1x8xf32>
    %19 = vector.extract_strided_slice %16 {offsets = [0, 0, 4, 0], sizes = [2, 9, 1, 8], strides = [1, 1, 1, 1]} : vector<2x9x18x8xf32> to vector<2x9x1x8xf32>
    %20 = vector.extract_strided_slice %16 {offsets = [0, 0, 6, 0], sizes = [2, 9, 1, 8], strides = [1, 1, 1, 1]} : vector<2x9x18x8xf32> to vector<2x9x1x8xf32>
    %21 = vector.extract_strided_slice %16 {offsets = [0, 0, 8, 0], sizes = [2, 9, 1, 8], strides = [1, 1, 1, 1]} : vector<2x9x18x8xf32> to vector<2x9x1x8xf32>
    %22 = vector.extract_strided_slice %16 {offsets = [0, 0, 10, 0], sizes = [2, 9, 1, 8], strides = [1, 1, 1, 1]} : vector<2x9x18x8xf32> to vector<2x9x1x8xf32>
    %23 = vector.extract_strided_slice %16 {offsets = [0, 0, 12, 0], sizes = [2, 9, 1, 8], strides = [1, 1, 1, 1]} : vector<2x9x18x8xf32> to vector<2x9x1x8xf32>
    %24 = vector.extract_strided_slice %16 {offsets = [0, 0, 14, 0], sizes = [2, 9, 1, 8], strides = [1, 1, 1, 1]} : vector<2x9x18x8xf32> to vector<2x9x1x8xf32>
    %25 = vector.extract_strided_slice %16 {offsets = [0, 0, 16, 0], sizes = [2, 9, 1, 8], strides = [1, 1, 1, 1]} : vector<2x9x18x8xf32> to vector<2x9x1x8xf32>
    %26 = tpu.concatenate %17, %18, %19, %20, %21, %22, %23, %24, %25 in 2 : vector<2x9x1x8xf32>, vector<2x9x1x8xf32>, vector<2x9x1x8xf32>, vector<2x9x1x8xf32>, vector<2x9x1x8xf32>, vector<2x9x1x8xf32>, vector<2x9x1x8xf32>, vector<2x9x1x8xf32>, vector<2x9x1x8xf32> -> vector<2x9x9x8xf32>
    %27 = vector.extract_strided_slice %16 {offsets = [0, 0, 1, 0], sizes = [2, 9, 1, 8], strides = [1, 1, 1, 1]} : vector<2x9x18x8xf32> to vector<2x9x1x8xf32>
    %28 = vector.extract_strided_slice %16 {offsets = [0, 0, 3, 0], sizes = [2, 9, 1, 8], strides = [1, 1, 1, 1]} : vector<2x9x18x8xf32> to vector<2x9x1x8xf32>
    %29 = vector.extract_strided_slice %16 {offsets = [0, 0, 5, 0], sizes = [2, 9, 1, 8], strides = [1, 1, 1, 1]} : vector<2x9x18x8xf32> to vector<2x9x1x8xf32>
    %30 = vector.extract_strided_slice %16 {offsets = [0, 0, 7, 0], sizes = [2, 9, 1, 8], strides = [1, 1, 1, 1]} : vector<2x9x18x8xf32> to vector<2x9x1x8xf32>
    %31 = vector.extract_strided_slice %16 {offsets = [0, 0, 9, 0], sizes = [2, 9, 1, 8], strides = [1, 1, 1, 1]} : vector<2x9x18x8xf32> to vector<2x9x1x8xf32>
    %32 = vector.extract_strided_slice %16 {offsets = [0, 0, 11, 0], sizes = [2, 9, 1, 8], strides = [1, 1, 1, 1]} : vector<2x9x18x8xf32> to vector<2x9x1x8xf32>
    %33 = vector.extract_strided_slice %16 {offsets = [0, 0, 13, 0], sizes = [2, 9, 1, 8], strides = [1, 1, 1, 1]} : vector<2x9x18x8xf32> to vector<2x9x1x8xf32>
    %34 = vector.extract_strided_slice %16 {offsets = [0, 0, 15, 0], sizes = [2, 9, 1, 8], strides = [1, 1, 1, 1]} : vector<2x9x18x8xf32> to vector<2x9x1x8xf32>
    %35 = vector.extract_strided_slice %16 {offsets = [0, 0, 17, 0], sizes = [2, 9, 1, 8], strides = [1, 1, 1, 1]} : vector<2x9x18x8xf32> to vector<2x9x1x8xf32>
    %36 = tpu.concatenate %27, %28, %29, %30, %31, %32, %33, %34, %35 in 2 : vector<2x9x1x8xf32>, vector<2x9x1x8xf32>, vector<2x9x1x8xf32>, vector<2x9x1x8xf32>, vector<2x9x1x8xf32>, vector<2x9x1x8xf32>, vector<2x9x1x8xf32>, vector<2x9x1x8xf32>, vector<2x9x1x8xf32> -> vector<2x9x9x8xf32>
    %37 = vector.extract_strided_slice %14 {offsets = [0, 0, 1, 0, 0], sizes = [2, 9, 1, 18, 8], strides = [1, 1, 1, 1, 1]} : vector<2x9x2x18x8xf32> to vector<2x9x1x18x8xf32>
    %38 = vector.shape_cast %37 : vector<2x9x1x18x8xf32> to vector<2x9x18x8xf32>
    %39 = vector.extract_strided_slice %38 {offsets = [0, 0, 0, 0], sizes = [2, 9, 1, 8], strides = [1, 1, 1, 1]} : vector<2x9x18x8xf32> to vector<2x9x1x8xf32>
    %40 = vector.extract_strided_slice %38 {offsets = [0, 0, 2, 0], sizes = [2, 9, 1, 8], strides = [1, 1, 1, 1]} : vector<2x9x18x8xf32> to vector<2x9x1x8xf32>
    %41 = vector.extract_strided_slice %38 {offsets = [0, 0, 4, 0], sizes = [2, 9, 1, 8], strides = [1, 1, 1, 1]} : vector<2x9x18x8xf32> to vector<2x9x1x8xf32>
    %42 = vector.extract_strided_slice %38 {offsets = [0, 0, 6, 0], sizes = [2, 9, 1, 8], strides = [1, 1, 1, 1]} : vector<2x9x18x8xf32> to vector<2x9x1x8xf32>
    %43 = vector.extract_strided_slice %38 {offsets = [0, 0, 8, 0], sizes = [2, 9, 1, 8], strides = [1, 1, 1, 1]} : vector<2x9x18x8xf32> to vector<2x9x1x8xf32>
    %44 = vector.extract_strided_slice %38 {offsets = [0, 0, 10, 0], sizes = [2, 9, 1, 8], strides = [1, 1, 1, 1]} : vector<2x9x18x8xf32> to vector<2x9x1x8xf32>
    %45 = vector.extract_strided_slice %38 {offsets = [0, 0, 12, 0], sizes = [2, 9, 1, 8], strides = [1, 1, 1, 1]} : vector<2x9x18x8xf32> to vector<2x9x1x8xf32>
    %46 = vector.extract_strided_slice %38 {offsets = [0, 0, 14, 0], sizes = [2, 9, 1, 8], strides = [1, 1, 1, 1]} : vector<2x9x18x8xf32> to vector<2x9x1x8xf32>
    %47 = vector.extract_strided_slice %38 {offsets = [0, 0, 16, 0], sizes = [2, 9, 1, 8], strides = [1, 1, 1, 1]} : vector<2x9x18x8xf32> to vector<2x9x1x8xf32>
    %48 = tpu.concatenate %39, %40, %41, %42, %43, %44, %45, %46, %47 in 2 : vector<2x9x1x8xf32>, vector<2x9x1x8xf32>, vector<2x9x1x8xf32>, vector<2x9x1x8xf32>, vector<2x9x1x8xf32>, vector<2x9x1x8xf32>, vector<2x9x1x8xf32>, vector<2x9x1x8xf32>, vector<2x9x1x8xf32> -> vector<2x9x9x8xf32>
    %49 = vector.extract_strided_slice %38 {offsets = [0, 0, 1, 0], sizes = [2, 9, 1, 8], strides = [1, 1, 1, 1]} : vector<2x9x18x8xf32> to vector<2x9x1x8xf32>
    %50 = vector.extract_strided_slice %38 {offsets = [0, 0, 3, 0], sizes = [2, 9, 1, 8], strides = [1, 1, 1, 1]} : vector<2x9x18x8xf32> to vector<2x9x1x8xf32>
    %51 = vector.extract_strided_slice %38 {offsets = [0, 0, 5, 0], sizes = [2, 9, 1, 8], strides = [1, 1, 1, 1]} : vector<2x9x18x8xf32> to vector<2x9x1x8xf32>
    %52 = vector.extract_strided_slice %38 {offsets = [0, 0, 7, 0], sizes = [2, 9, 1, 8], strides = [1, 1, 1, 1]} : vector<2x9x18x8xf32> to vector<2x9x1x8xf32>
    %53 = vector.extract_strided_slice %38 {offsets = [0, 0, 9, 0], sizes = [2, 9, 1, 8], strides = [1, 1, 1, 1]} : vector<2x9x18x8xf32> to vector<2x9x1x8xf32>
    %54 = vector.extract_strided_slice %38 {offsets = [0, 0, 11, 0], sizes = [2, 9, 1, 8], strides = [1, 1, 1, 1]} : vector<2x9x18x8xf32> to vector<2x9x1x8xf32>
    %55 = vector.extract_strided_slice %38 {offsets = [0, 0, 13, 0], sizes = [2, 9, 1, 8], strides = [1, 1, 1, 1]} : vector<2x9x18x8xf32> to vector<2x9x1x8xf32>
    %56 = vector.extract_strided_slice %38 {offsets = [0, 0, 15, 0], sizes = [2, 9, 1, 8], strides = [1, 1, 1, 1]} : vector<2x9x18x8xf32> to vector<2x9x1x8xf32>
    %57 = vector.extract_strided_slice %38 {offsets = [0, 0, 17, 0], sizes = [2, 9, 1, 8], strides = [1, 1, 1, 1]} : vector<2x9x18x8xf32> to vector<2x9x1x8xf32>
    %58 = tpu.concatenate %49, %50, %51, %52, %53, %54, %55, %56, %57 in 2 : vector<2x9x1x8xf32>, vector<2x9x1x8xf32>, vector<2x9x1x8xf32>, vector<2x9x1x8xf32>, vector<2x9x1x8xf32>, vector<2x9x1x8xf32>, vector<2x9x1x8xf32>, vector<2x9x1x8xf32>, vector<2x9x1x8xf32> -> vector<2x9x9x8xf32>
    %cst_8 = arith.constant 0.000000e+00 : f32
    %59 = vector.broadcast %cst_8 : f32 to vector<128x16xf32>
    %60 = vector.extract_strided_slice %26 {offsets = [0, 0, 0, 0], sizes = [2, 8, 8, 8], strides = [1, 1, 1, 1]} : vector<2x9x9x8xf32> to vector<2x8x8x8xf32>
    %61 = vector.shape_cast %60 : vector<2x8x8x8xf32> to vector<128x8xf32>
    %c0_9 = arith.constant 0 : index
    %c0_10 = arith.constant 0 : index
    %c0_11 = arith.constant 0 : index
    %62 = vector.load %arg2[%c0_9, %c0_10, %c0_11] : memref<16x8x16xf32, #tpu.memory_space<vmem>>, vector<1x8x16xf32>
    %63 = vector.shape_cast %62 : vector<1x8x16xf32> to vector<8x16xf32>
    %cst_12 = arith.constant dense<0.000000e+00> : vector<128x16xf32>
    %64 = tpu.matmul %61, %63, %cst_12 {dimension_numbers = #tpu.dot_dimension_numbers<[1], [0], [0], [1], [0, 0, 1, 1], [], []>} : vector<128x8xf32>, vector<8x16xf32>, vector<128x16xf32> -> vector<128x16xf32>
    %65 = arith.addf %59, %64 : vector<128x16xf32>
    %66 = vector.extract_strided_slice %36 {offsets = [0, 0, 0, 0], sizes = [2, 8, 8, 8], strides = [1, 1, 1, 1]} : vector<2x9x9x8xf32> to vector<2x8x8x8xf32>
    %67 = vector.shape_cast %66 : vector<2x8x8x8xf32> to vector<128x8xf32>
    %c1 = arith.constant 1 : index
    %c0_13 = arith.constant 0 : index
    %c0_14 = arith.constant 0 : index
    %68 = vector.load %arg2[%c1, %c0_13, %c0_14] : memref<16x8x16xf32, #tpu.memory_space<vmem>>, vector<1x8x16xf32>
    %69 = vector.shape_cast %68 : vector<1x8x16xf32> to vector<8x16xf32>
    %cst_15 = arith.constant dense<0.000000e+00> : vector<128x16xf32>
    %70 = tpu.matmul %67, %69, %cst_15 {dimension_numbers = #tpu.dot_dimension_numbers<[1], [0], [0], [1], [0, 0, 1, 1], [], []>} : vector<128x8xf32>, vector<8x16xf32>, vector<128x16xf32> -> vector<128x16xf32>
    %71 = arith.addf %65, %70 : vector<128x16xf32>
    %72 = vector.extract_strided_slice %26 {offsets = [0, 0, 1, 0], sizes = [2, 8, 8, 8], strides = [1, 1, 1, 1]} : vector<2x9x9x8xf32> to vector<2x8x8x8xf32>
    %73 = vector.shape_cast %72 : vector<2x8x8x8xf32> to vector<128x8xf32>
    %c2 = arith.constant 2 : index
    %c0_16 = arith.constant 0 : index
    %c0_17 = arith.constant 0 : index
    %74 = vector.load %arg2[%c2, %c0_16, %c0_17] : memref<16x8x16xf32, #tpu.memory_space<vmem>>, vector<1x8x16xf32>
    %75 = vector.shape_cast %74 : vector<1x8x16xf32> to vector<8x16xf32>
    %cst_18 = arith.constant dense<0.000000e+00> : vector<128x16xf32>
    %76 = tpu.matmul %73, %75, %cst_18 {dimension_numbers = #tpu.dot_dimension_numbers<[1], [0], [0], [1], [0, 0, 1, 1], [], []>} : vector<128x8xf32>, vector<8x16xf32>, vector<128x16xf32> -> vector<128x16xf32>
    %77 = arith.addf %71, %76 : vector<128x16xf32>
    %78 = vector.extract_strided_slice %36 {offsets = [0, 0, 1, 0], sizes = [2, 8, 8, 8], strides = [1, 1, 1, 1]} : vector<2x9x9x8xf32> to vector<2x8x8x8xf32>
    %79 = vector.shape_cast %78 : vector<2x8x8x8xf32> to vector<128x8xf32>
    %c3 = arith.constant 3 : index
    %c0_19 = arith.constant 0 : index
    %c0_20 = arith.constant 0 : index
    %80 = vector.load %arg2[%c3, %c0_19, %c0_20] : memref<16x8x16xf32, #tpu.memory_space<vmem>>, vector<1x8x16xf32>
    %81 = vector.shape_cast %80 : vector<1x8x16xf32> to vector<8x16xf32>
    %cst_21 = arith.constant dense<0.000000e+00> : vector<128x16xf32>
    %82 = tpu.matmul %79, %81, %cst_21 {dimension_numbers = #tpu.dot_dimension_numbers<[1], [0], [0], [1], [0, 0, 1, 1], [], []>} : vector<128x8xf32>, vector<8x16xf32>, vector<128x16xf32> -> vector<128x16xf32>
    %83 = arith.addf %77, %82 : vector<128x16xf32>
    %84 = vector.extract_strided_slice %48 {offsets = [0, 0, 0, 0], sizes = [2, 8, 8, 8], strides = [1, 1, 1, 1]} : vector<2x9x9x8xf32> to vector<2x8x8x8xf32>
    %85 = vector.shape_cast %84 : vector<2x8x8x8xf32> to vector<128x8xf32>
    %c4 = arith.constant 4 : index
    %c0_22 = arith.constant 0 : index
    %c0_23 = arith.constant 0 : index
    %86 = vector.load %arg2[%c4, %c0_22, %c0_23] : memref<16x8x16xf32, #tpu.memory_space<vmem>>, vector<1x8x16xf32>
    %87 = vector.shape_cast %86 : vector<1x8x16xf32> to vector<8x16xf32>
    %cst_24 = arith.constant dense<0.000000e+00> : vector<128x16xf32>
    %88 = tpu.matmul %85, %87, %cst_24 {dimension_numbers = #tpu.dot_dimension_numbers<[1], [0], [0], [1], [0, 0, 1, 1], [], []>} : vector<128x8xf32>, vector<8x16xf32>, vector<128x16xf32> -> vector<128x16xf32>
    %89 = arith.addf %83, %88 : vector<128x16xf32>
    %90 = vector.extract_strided_slice %58 {offsets = [0, 0, 0, 0], sizes = [2, 8, 8, 8], strides = [1, 1, 1, 1]} : vector<2x9x9x8xf32> to vector<2x8x8x8xf32>
    %91 = vector.shape_cast %90 : vector<2x8x8x8xf32> to vector<128x8xf32>
    %c5 = arith.constant 5 : index
    %c0_25 = arith.constant 0 : index
    %c0_26 = arith.constant 0 : index
    %92 = vector.load %arg2[%c5, %c0_25, %c0_26] : memref<16x8x16xf32, #tpu.memory_space<vmem>>, vector<1x8x16xf32>
    %93 = vector.shape_cast %92 : vector<1x8x16xf32> to vector<8x16xf32>
    %cst_27 = arith.constant dense<0.000000e+00> : vector<128x16xf32>
    %94 = tpu.matmul %91, %93, %cst_27 {dimension_numbers = #tpu.dot_dimension_numbers<[1], [0], [0], [1], [0, 0, 1, 1], [], []>} : vector<128x8xf32>, vector<8x16xf32>, vector<128x16xf32> -> vector<128x16xf32>
    %95 = arith.addf %89, %94 : vector<128x16xf32>
    %96 = vector.extract_strided_slice %48 {offsets = [0, 0, 1, 0], sizes = [2, 8, 8, 8], strides = [1, 1, 1, 1]} : vector<2x9x9x8xf32> to vector<2x8x8x8xf32>
    %97 = vector.shape_cast %96 : vector<2x8x8x8xf32> to vector<128x8xf32>
    %c6 = arith.constant 6 : index
    %c0_28 = arith.constant 0 : index
    %c0_29 = arith.constant 0 : index
    %98 = vector.load %arg2[%c6, %c0_28, %c0_29] : memref<16x8x16xf32, #tpu.memory_space<vmem>>, vector<1x8x16xf32>
    %99 = vector.shape_cast %98 : vector<1x8x16xf32> to vector<8x16xf32>
    %cst_30 = arith.constant dense<0.000000e+00> : vector<128x16xf32>
    %100 = tpu.matmul %97, %99, %cst_30 {dimension_numbers = #tpu.dot_dimension_numbers<[1], [0], [0], [1], [0, 0, 1, 1], [], []>} : vector<128x8xf32>, vector<8x16xf32>, vector<128x16xf32> -> vector<128x16xf32>
    %101 = arith.addf %95, %100 : vector<128x16xf32>
    %102 = vector.extract_strided_slice %58 {offsets = [0, 0, 1, 0], sizes = [2, 8, 8, 8], strides = [1, 1, 1, 1]} : vector<2x9x9x8xf32> to vector<2x8x8x8xf32>
    %103 = vector.shape_cast %102 : vector<2x8x8x8xf32> to vector<128x8xf32>
    %c7 = arith.constant 7 : index
    %c0_31 = arith.constant 0 : index
    %c0_32 = arith.constant 0 : index
    %104 = vector.load %arg2[%c7, %c0_31, %c0_32] : memref<16x8x16xf32, #tpu.memory_space<vmem>>, vector<1x8x16xf32>
    %105 = vector.shape_cast %104 : vector<1x8x16xf32> to vector<8x16xf32>
    %cst_33 = arith.constant dense<0.000000e+00> : vector<128x16xf32>
    %106 = tpu.matmul %103, %105, %cst_33 {dimension_numbers = #tpu.dot_dimension_numbers<[1], [0], [0], [1], [0, 0, 1, 1], [], []>} : vector<128x8xf32>, vector<8x16xf32>, vector<128x16xf32> -> vector<128x16xf32>
    %107 = arith.addf %101, %106 : vector<128x16xf32>
    %108 = vector.extract_strided_slice %26 {offsets = [0, 1, 0, 0], sizes = [2, 8, 8, 8], strides = [1, 1, 1, 1]} : vector<2x9x9x8xf32> to vector<2x8x8x8xf32>
    %109 = vector.shape_cast %108 : vector<2x8x8x8xf32> to vector<128x8xf32>
    %c8 = arith.constant 8 : index
    %c0_34 = arith.constant 0 : index
    %c0_35 = arith.constant 0 : index
    %110 = vector.load %arg2[%c8, %c0_34, %c0_35] : memref<16x8x16xf32, #tpu.memory_space<vmem>>, vector<1x8x16xf32>
    %111 = vector.shape_cast %110 : vector<1x8x16xf32> to vector<8x16xf32>
    %cst_36 = arith.constant dense<0.000000e+00> : vector<128x16xf32>
    %112 = tpu.matmul %109, %111, %cst_36 {dimension_numbers = #tpu.dot_dimension_numbers<[1], [0], [0], [1], [0, 0, 1, 1], [], []>} : vector<128x8xf32>, vector<8x16xf32>, vector<128x16xf32> -> vector<128x16xf32>
    %113 = arith.addf %107, %112 : vector<128x16xf32>
    %114 = vector.extract_strided_slice %36 {offsets = [0, 1, 0, 0], sizes = [2, 8, 8, 8], strides = [1, 1, 1, 1]} : vector<2x9x9x8xf32> to vector<2x8x8x8xf32>
    %115 = vector.shape_cast %114 : vector<2x8x8x8xf32> to vector<128x8xf32>
    %c9 = arith.constant 9 : index
    %c0_37 = arith.constant 0 : index
    %c0_38 = arith.constant 0 : index
    %116 = vector.load %arg2[%c9, %c0_37, %c0_38] : memref<16x8x16xf32, #tpu.memory_space<vmem>>, vector<1x8x16xf32>
    %117 = vector.shape_cast %116 : vector<1x8x16xf32> to vector<8x16xf32>
    %cst_39 = arith.constant dense<0.000000e+00> : vector<128x16xf32>
    %118 = tpu.matmul %115, %117, %cst_39 {dimension_numbers = #tpu.dot_dimension_numbers<[1], [0], [0], [1], [0, 0, 1, 1], [], []>} : vector<128x8xf32>, vector<8x16xf32>, vector<128x16xf32> -> vector<128x16xf32>
    %119 = arith.addf %113, %118 : vector<128x16xf32>
    %120 = vector.extract_strided_slice %26 {offsets = [0, 1, 1, 0], sizes = [2, 8, 8, 8], strides = [1, 1, 1, 1]} : vector<2x9x9x8xf32> to vector<2x8x8x8xf32>
    %121 = vector.shape_cast %120 : vector<2x8x8x8xf32> to vector<128x8xf32>
    %c10 = arith.constant 10 : index
    %c0_40 = arith.constant 0 : index
    %c0_41 = arith.constant 0 : index
    %122 = vector.load %arg2[%c10, %c0_40, %c0_41] : memref<16x8x16xf32, #tpu.memory_space<vmem>>, vector<1x8x16xf32>
    %123 = vector.shape_cast %122 : vector<1x8x16xf32> to vector<8x16xf32>
    %cst_42 = arith.constant dense<0.000000e+00> : vector<128x16xf32>
    %124 = tpu.matmul %121, %123, %cst_42 {dimension_numbers = #tpu.dot_dimension_numbers<[1], [0], [0], [1], [0, 0, 1, 1], [], []>} : vector<128x8xf32>, vector<8x16xf32>, vector<128x16xf32> -> vector<128x16xf32>
    %125 = arith.addf %119, %124 : vector<128x16xf32>
    %126 = vector.extract_strided_slice %36 {offsets = [0, 1, 1, 0], sizes = [2, 8, 8, 8], strides = [1, 1, 1, 1]} : vector<2x9x9x8xf32> to vector<2x8x8x8xf32>
    %127 = vector.shape_cast %126 : vector<2x8x8x8xf32> to vector<128x8xf32>
    %c11 = arith.constant 11 : index
    %c0_43 = arith.constant 0 : index
    %c0_44 = arith.constant 0 : index
    %128 = vector.load %arg2[%c11, %c0_43, %c0_44] : memref<16x8x16xf32, #tpu.memory_space<vmem>>, vector<1x8x16xf32>
    %129 = vector.shape_cast %128 : vector<1x8x16xf32> to vector<8x16xf32>
    %cst_45 = arith.constant dense<0.000000e+00> : vector<128x16xf32>
    %130 = tpu.matmul %127, %129, %cst_45 {dimension_numbers = #tpu.dot_dimension_numbers<[1], [0], [0], [1], [0, 0, 1, 1], [], []>} : vector<128x8xf32>, vector<8x16xf32>, vector<128x16xf32> -> vector<128x16xf32>
    %131 = arith.addf %125, %130 : vector<128x16xf32>
    %132 = vector.extract_strided_slice %48 {offsets = [0, 1, 0, 0], sizes = [2, 8, 8, 8], strides = [1, 1, 1, 1]} : vector<2x9x9x8xf32> to vector<2x8x8x8xf32>
    %133 = vector.shape_cast %132 : vector<2x8x8x8xf32> to vector<128x8xf32>
    %c12 = arith.constant 12 : index
    %c0_46 = arith.constant 0 : index
    %c0_47 = arith.constant 0 : index
    %134 = vector.load %arg2[%c12, %c0_46, %c0_47] : memref<16x8x16xf32, #tpu.memory_space<vmem>>, vector<1x8x16xf32>
    %135 = vector.shape_cast %134 : vector<1x8x16xf32> to vector<8x16xf32>
    %cst_48 = arith.constant dense<0.000000e+00> : vector<128x16xf32>
    %136 = tpu.matmul %133, %135, %cst_48 {dimension_numbers = #tpu.dot_dimension_numbers<[1], [0], [0], [1], [0, 0, 1, 1], [], []>} : vector<128x8xf32>, vector<8x16xf32>, vector<128x16xf32> -> vector<128x16xf32>
    %137 = arith.addf %131, %136 : vector<128x16xf32>
    %138 = vector.extract_strided_slice %58 {offsets = [0, 1, 0, 0], sizes = [2, 8, 8, 8], strides = [1, 1, 1, 1]} : vector<2x9x9x8xf32> to vector<2x8x8x8xf32>
    %139 = vector.shape_cast %138 : vector<2x8x8x8xf32> to vector<128x8xf32>
    %c13 = arith.constant 13 : index
    %c0_49 = arith.constant 0 : index
    %c0_50 = arith.constant 0 : index
    %140 = vector.load %arg2[%c13, %c0_49, %c0_50] : memref<16x8x16xf32, #tpu.memory_space<vmem>>, vector<1x8x16xf32>
    %141 = vector.shape_cast %140 : vector<1x8x16xf32> to vector<8x16xf32>
    %cst_51 = arith.constant dense<0.000000e+00> : vector<128x16xf32>
    %142 = tpu.matmul %139, %141, %cst_51 {dimension_numbers = #tpu.dot_dimension_numbers<[1], [0], [0], [1], [0, 0, 1, 1], [], []>} : vector<128x8xf32>, vector<8x16xf32>, vector<128x16xf32> -> vector<128x16xf32>
    %143 = arith.addf %137, %142 : vector<128x16xf32>
    %144 = vector.extract_strided_slice %48 {offsets = [0, 1, 1, 0], sizes = [2, 8, 8, 8], strides = [1, 1, 1, 1]} : vector<2x9x9x8xf32> to vector<2x8x8x8xf32>
    %145 = vector.shape_cast %144 : vector<2x8x8x8xf32> to vector<128x8xf32>
    %c14 = arith.constant 14 : index
    %c0_52 = arith.constant 0 : index
    %c0_53 = arith.constant 0 : index
    %146 = vector.load %arg2[%c14, %c0_52, %c0_53] : memref<16x8x16xf32, #tpu.memory_space<vmem>>, vector<1x8x16xf32>
    %147 = vector.shape_cast %146 : vector<1x8x16xf32> to vector<8x16xf32>
    %cst_54 = arith.constant dense<0.000000e+00> : vector<128x16xf32>
    %148 = tpu.matmul %145, %147, %cst_54 {dimension_numbers = #tpu.dot_dimension_numbers<[1], [0], [0], [1], [0, 0, 1, 1], [], []>} : vector<128x8xf32>, vector<8x16xf32>, vector<128x16xf32> -> vector<128x16xf32>
    %149 = arith.addf %143, %148 : vector<128x16xf32>
    %150 = vector.extract_strided_slice %58 {offsets = [0, 1, 1, 0], sizes = [2, 8, 8, 8], strides = [1, 1, 1, 1]} : vector<2x9x9x8xf32> to vector<2x8x8x8xf32>
    %151 = vector.shape_cast %150 : vector<2x8x8x8xf32> to vector<128x8xf32>
    %c15 = arith.constant 15 : index
    %c0_55 = arith.constant 0 : index
    %c0_56 = arith.constant 0 : index
    %152 = vector.load %arg2[%c15, %c0_55, %c0_56] : memref<16x8x16xf32, #tpu.memory_space<vmem>>, vector<1x8x16xf32>
    %153 = vector.shape_cast %152 : vector<1x8x16xf32> to vector<8x16xf32>
    %cst_57 = arith.constant dense<0.000000e+00> : vector<128x16xf32>
    %154 = tpu.matmul %151, %153, %cst_57 {dimension_numbers = #tpu.dot_dimension_numbers<[1], [0], [0], [1], [0, 0, 1, 1], [], []>} : vector<128x8xf32>, vector<8x16xf32>, vector<128x16xf32> -> vector<128x16xf32>
    %155 = arith.addf %149, %154 : vector<128x16xf32>
    %156 = tpu.iota {dimensions = array<i32: 0>} : vector<128x1xi32>
    %c8_i32 = arith.constant 8 : i32
    %c0_i32 = arith.constant 0 : i32
    %157 = arith.cmpi eq, %c8_i32, %c0_i32 : i32
    %c1_i32 = arith.constant 1 : i32
    %158 = arith.select %157, %c1_i32, %c8_i32 : i32
    %159 = vector.broadcast %158 : i32 to vector<128x1xi32>
    %160 = arith.remsi %156, %159 : vector<128x1xi32>
    %c0_i32_58 = arith.constant 0 : i32
    %161 = vector.broadcast %c0_i32_58 : i32 to vector<128x1xi32>
    %162 = arith.cmpi ne, %160, %161 : vector<128x1xi32>
    %c0_i32_59 = arith.constant 0 : i32
    %163 = vector.broadcast %c0_i32_59 : i32 to vector<128x1xi32>
    %164 = arith.cmpi slt, %160, %163 : vector<128x1xi32>
    %c0_i32_60 = arith.constant 0 : i32
    %165 = arith.cmpi slt, %158, %c0_i32_60 : i32
    %166 = vector.broadcast %165 : i1 to vector<128x1xi1>
    %167 = vector.broadcast %166 : vector<128x1xi1> to vector<128x1xi1>
    %168 = arith.xori %164, %167 : vector<128x1xi1>
    %169 = arith.andi %168, %162 : vector<128x1xi1>
    %170 = vector.broadcast %158 : i32 to vector<128x1xi32>
    %171 = arith.addi %160, %170 : vector<128x1xi32>
    %172 = arith.select %169, %171, %160 : vector<128x1xi1>, vector<128x1xi32>
    %c8_i32_61 = arith.constant 8 : i32
    %173 = vector.broadcast %c8_i32_61 : i32 to vector<128x1xi32>
    %174 = arith.cmpi slt, %172, %173 : vector<128x1xi32>
    %175 = arith.extui %174 : vector<128x1xi1> to vector<128x1xi32>
    %176 = arith.sitofp %175 : vector<128x1xi32> to vector<128x1xf32>
    %177 = vector.broadcast %176 : vector<128x1xf32> to vector<128x16xf32>
    %178 = arith.mulf %155, %177 : vector<128x16xf32>
    %cst_62 = arith.constant dense<0.000000e+00> : vector<16xf32>
    %179 = vector.multi_reduction <add>, %178, %cst_62 [0] : vector<128x16xf32> to vector<16xf32>
    %180 = vector.shape_cast %179 : vector<16xf32> to vector<1x16xf32>
    %cst_63 = arith.constant 1.280000e+02 : f32
    %181 = vector.broadcast %cst_63 : f32 to vector<1x16xf32>
    %182 = arith.divf %180, %181 : vector<1x16xf32>
    %183 = vector.broadcast %182 : vector<1x16xf32> to vector<128x16xf32>
    %184 = arith.subf %155, %183 : vector<128x16xf32>
    %185 = vector.broadcast %176 : vector<128x1xf32> to vector<128x16xf32>
    %186 = arith.mulf %184, %185 : vector<128x16xf32>
    %187 = arith.mulf %186, %186 : vector<128x16xf32>
    %cst_64 = arith.constant dense<0.000000e+00> : vector<16xf32>
    %188 = vector.multi_reduction <add>, %187, %cst_64 [0] : vector<128x16xf32> to vector<16xf32>
    %189 = vector.shape_cast %188 : vector<16xf32> to vector<1x16xf32>
    %cst_65 = arith.constant 1.280000e+02 : f32
    %190 = vector.broadcast %cst_65 : f32 to vector<1x16xf32>
    %191 = arith.divf %189, %190 : vector<1x16xf32>
    %192 = vector.broadcast %182 : vector<1x16xf32> to vector<128x16xf32>
    %193 = arith.subf %155, %192 : vector<128x16xf32>
    %cst_66 = arith.constant 9.99999974E-6 : f32
    %194 = vector.broadcast %cst_66 : f32 to vector<1x16xf32>
    %195 = arith.addf %191, %194 : vector<1x16xf32>
    %196 = math.rsqrt %195 : vector<1x16xf32>
    %197 = vector.broadcast %196 : vector<1x16xf32> to vector<128x16xf32>
    %198 = arith.mulf %193, %197 : vector<128x16xf32>
    %c0_67 = arith.constant 0 : index
    %c0_68 = arith.constant 0 : index
    %199 = vector.load %arg3[%c0_67, %c0_68] : memref<1x16xf32, #tpu.memory_space<vmem>>, vector<1x16xf32>
    %200 = vector.broadcast %199 : vector<1x16xf32> to vector<128x16xf32>
    %201 = arith.mulf %198, %200 : vector<128x16xf32>
    %c0_69 = arith.constant 0 : index
    %c0_70 = arith.constant 0 : index
    %202 = vector.load %arg4[%c0_69, %c0_70] : memref<1x16xf32, #tpu.memory_space<vmem>>, vector<1x16xf32>
    %203 = vector.broadcast %202 : vector<1x16xf32> to vector<128x16xf32>
    %204 = arith.addf %201, %203 : vector<128x16xf32>
    %cst_71 = arith.constant 0.000000e+00 : f32
    %205 = vector.broadcast %cst_71 : f32 to vector<128x16xf32>
    %206 = arith.cmpf oge, %204, %205 : vector<128x16xf32>
    %cst_72 = arith.constant 2.000000e-01 : f32
    %207 = vector.broadcast %cst_72 : f32 to vector<128x16xf32>
    %208 = arith.mulf %207, %204 : vector<128x16xf32>
    %209 = arith.select %206, %204, %208 : vector<128x16xi1>, vector<128x16xf32>
    %210 = vector.shape_cast %209 : vector<128x16xf32> to vector<2x8x8x16xf32>
    %cst_73 = arith.constant 0.000000e+00 : f32
    %211 = vector.broadcast %cst_73 : f32 to vector<2x1x8x16xf32>
    %212 = tpu.concatenate %211, %210, %211 in 1 : vector<2x1x8x16xf32>, vector<2x8x8x16xf32>, vector<2x1x8x16xf32> -> vector<2x10x8x16xf32>
    %cst_74 = arith.constant 0.000000e+00 : f32
    %213 = vector.broadcast %cst_74 : f32 to vector<2x10x1x16xf32>
    %cst_75 = arith.constant 0.000000e+00 : f32
    %214 = vector.broadcast %cst_75 : f32 to vector<2x10x9x16xf32>
    %215 = tpu.concatenate %213, %212, %214 in 2 : vector<2x10x1x16xf32>, vector<2x10x8x16xf32>, vector<2x10x9x16xf32> -> vector<2x10x18x16xf32>
    %216 = vector.shape_cast %215 : vector<2x10x18x16xf32> to vector<2x5x2x18x16xf32>
    %217 = vector.extract_strided_slice %216 {offsets = [0, 0, 0, 0, 0], sizes = [2, 5, 1, 18, 16], strides = [1, 1, 1, 1, 1]} : vector<2x5x2x18x16xf32> to vector<2x5x1x18x16xf32>
    %218 = vector.shape_cast %217 : vector<2x5x1x18x16xf32> to vector<2x5x18x16xf32>
    %219 = vector.extract_strided_slice %218 {offsets = [0, 0, 0, 0], sizes = [2, 5, 1, 16], strides = [1, 1, 1, 1]} : vector<2x5x18x16xf32> to vector<2x5x1x16xf32>
    %220 = vector.extract_strided_slice %218 {offsets = [0, 0, 2, 0], sizes = [2, 5, 1, 16], strides = [1, 1, 1, 1]} : vector<2x5x18x16xf32> to vector<2x5x1x16xf32>
    %221 = vector.extract_strided_slice %218 {offsets = [0, 0, 4, 0], sizes = [2, 5, 1, 16], strides = [1, 1, 1, 1]} : vector<2x5x18x16xf32> to vector<2x5x1x16xf32>
    %222 = vector.extract_strided_slice %218 {offsets = [0, 0, 6, 0], sizes = [2, 5, 1, 16], strides = [1, 1, 1, 1]} : vector<2x5x18x16xf32> to vector<2x5x1x16xf32>
    %223 = vector.extract_strided_slice %218 {offsets = [0, 0, 8, 0], sizes = [2, 5, 1, 16], strides = [1, 1, 1, 1]} : vector<2x5x18x16xf32> to vector<2x5x1x16xf32>
    %224 = vector.extract_strided_slice %218 {offsets = [0, 0, 10, 0], sizes = [2, 5, 1, 16], strides = [1, 1, 1, 1]} : vector<2x5x18x16xf32> to vector<2x5x1x16xf32>
    %225 = vector.extract_strided_slice %218 {offsets = [0, 0, 12, 0], sizes = [2, 5, 1, 16], strides = [1, 1, 1, 1]} : vector<2x5x18x16xf32> to vector<2x5x1x16xf32>
    %226 = vector.extract_strided_slice %218 {offsets = [0, 0, 14, 0], sizes = [2, 5, 1, 16], strides = [1, 1, 1, 1]} : vector<2x5x18x16xf32> to vector<2x5x1x16xf32>
    %227 = vector.extract_strided_slice %218 {offsets = [0, 0, 16, 0], sizes = [2, 5, 1, 16], strides = [1, 1, 1, 1]} : vector<2x5x18x16xf32> to vector<2x5x1x16xf32>
    %228 = tpu.concatenate %219, %220, %221, %222, %223, %224, %225, %226, %227 in 2 : vector<2x5x1x16xf32>, vector<2x5x1x16xf32>, vector<2x5x1x16xf32>, vector<2x5x1x16xf32>, vector<2x5x1x16xf32>, vector<2x5x1x16xf32>, vector<2x5x1x16xf32>, vector<2x5x1x16xf32>, vector<2x5x1x16xf32> -> vector<2x5x9x16xf32>
    %229 = vector.extract_strided_slice %218 {offsets = [0, 0, 1, 0], sizes = [2, 5, 1, 16], strides = [1, 1, 1, 1]} : vector<2x5x18x16xf32> to vector<2x5x1x16xf32>
    %230 = vector.extract_strided_slice %218 {offsets = [0, 0, 3, 0], sizes = [2, 5, 1, 16], strides = [1, 1, 1, 1]} : vector<2x5x18x16xf32> to vector<2x5x1x16xf32>
    %231 = vector.extract_strided_slice %218 {offsets = [0, 0, 5, 0], sizes = [2, 5, 1, 16], strides = [1, 1, 1, 1]} : vector<2x5x18x16xf32> to vector<2x5x1x16xf32>
    %232 = vector.extract_strided_slice %218 {offsets = [0, 0, 7, 0], sizes = [2, 5, 1, 16], strides = [1, 1, 1, 1]} : vector<2x5x18x16xf32> to vector<2x5x1x16xf32>
    %233 = vector.extract_strided_slice %218 {offsets = [0, 0, 9, 0], sizes = [2, 5, 1, 16], strides = [1, 1, 1, 1]} : vector<2x5x18x16xf32> to vector<2x5x1x16xf32>
    %234 = vector.extract_strided_slice %218 {offsets = [0, 0, 11, 0], sizes = [2, 5, 1, 16], strides = [1, 1, 1, 1]} : vector<2x5x18x16xf32> to vector<2x5x1x16xf32>
    %235 = vector.extract_strided_slice %218 {offsets = [0, 0, 13, 0], sizes = [2, 5, 1, 16], strides = [1, 1, 1, 1]} : vector<2x5x18x16xf32> to vector<2x5x1x16xf32>
    %236 = vector.extract_strided_slice %218 {offsets = [0, 0, 15, 0], sizes = [2, 5, 1, 16], strides = [1, 1, 1, 1]} : vector<2x5x18x16xf32> to vector<2x5x1x16xf32>
    %237 = vector.extract_strided_slice %218 {offsets = [0, 0, 17, 0], sizes = [2, 5, 1, 16], strides = [1, 1, 1, 1]} : vector<2x5x18x16xf32> to vector<2x5x1x16xf32>
    %238 = tpu.concatenate %229, %230, %231, %232, %233, %234, %235, %236, %237 in 2 : vector<2x5x1x16xf32>, vector<2x5x1x16xf32>, vector<2x5x1x16xf32>, vector<2x5x1x16xf32>, vector<2x5x1x16xf32>, vector<2x5x1x16xf32>, vector<2x5x1x16xf32>, vector<2x5x1x16xf32>, vector<2x5x1x16xf32> -> vector<2x5x9x16xf32>
    %239 = vector.extract_strided_slice %216 {offsets = [0, 0, 1, 0, 0], sizes = [2, 5, 1, 18, 16], strides = [1, 1, 1, 1, 1]} : vector<2x5x2x18x16xf32> to vector<2x5x1x18x16xf32>
    %240 = vector.shape_cast %239 : vector<2x5x1x18x16xf32> to vector<2x5x18x16xf32>
    %241 = vector.extract_strided_slice %240 {offsets = [0, 0, 0, 0], sizes = [2, 5, 1, 16], strides = [1, 1, 1, 1]} : vector<2x5x18x16xf32> to vector<2x5x1x16xf32>
    %242 = vector.extract_strided_slice %240 {offsets = [0, 0, 2, 0], sizes = [2, 5, 1, 16], strides = [1, 1, 1, 1]} : vector<2x5x18x16xf32> to vector<2x5x1x16xf32>
    %243 = vector.extract_strided_slice %240 {offsets = [0, 0, 4, 0], sizes = [2, 5, 1, 16], strides = [1, 1, 1, 1]} : vector<2x5x18x16xf32> to vector<2x5x1x16xf32>
    %244 = vector.extract_strided_slice %240 {offsets = [0, 0, 6, 0], sizes = [2, 5, 1, 16], strides = [1, 1, 1, 1]} : vector<2x5x18x16xf32> to vector<2x5x1x16xf32>
    %245 = vector.extract_strided_slice %240 {offsets = [0, 0, 8, 0], sizes = [2, 5, 1, 16], strides = [1, 1, 1, 1]} : vector<2x5x18x16xf32> to vector<2x5x1x16xf32>
    %246 = vector.extract_strided_slice %240 {offsets = [0, 0, 10, 0], sizes = [2, 5, 1, 16], strides = [1, 1, 1, 1]} : vector<2x5x18x16xf32> to vector<2x5x1x16xf32>
    %247 = vector.extract_strided_slice %240 {offsets = [0, 0, 12, 0], sizes = [2, 5, 1, 16], strides = [1, 1, 1, 1]} : vector<2x5x18x16xf32> to vector<2x5x1x16xf32>
    %248 = vector.extract_strided_slice %240 {offsets = [0, 0, 14, 0], sizes = [2, 5, 1, 16], strides = [1, 1, 1, 1]} : vector<2x5x18x16xf32> to vector<2x5x1x16xf32>
    %249 = vector.extract_strided_slice %240 {offsets = [0, 0, 16, 0], sizes = [2, 5, 1, 16], strides = [1, 1, 1, 1]} : vector<2x5x18x16xf32> to vector<2x5x1x16xf32>
    %250 = tpu.concatenate %241, %242, %243, %244, %245, %246, %247, %248, %249 in 2 : vector<2x5x1x16xf32>, vector<2x5x1x16xf32>, vector<2x5x1x16xf32>, vector<2x5x1x16xf32>, vector<2x5x1x16xf32>, vector<2x5x1x16xf32>, vector<2x5x1x16xf32>, vector<2x5x1x16xf32>, vector<2x5x1x16xf32> -> vector<2x5x9x16xf32>
    %251 = vector.extract_strided_slice %240 {offsets = [0, 0, 1, 0], sizes = [2, 5, 1, 16], strides = [1, 1, 1, 1]} : vector<2x5x18x16xf32> to vector<2x5x1x16xf32>
    %252 = vector.extract_strided_slice %240 {offsets = [0, 0, 3, 0], sizes = [2, 5, 1, 16], strides = [1, 1, 1, 1]} : vector<2x5x18x16xf32> to vector<2x5x1x16xf32>
    %253 = vector.extract_strided_slice %240 {offsets = [0, 0, 5, 0], sizes = [2, 5, 1, 16], strides = [1, 1, 1, 1]} : vector<2x5x18x16xf32> to vector<2x5x1x16xf32>
    %254 = vector.extract_strided_slice %240 {offsets = [0, 0, 7, 0], sizes = [2, 5, 1, 16], strides = [1, 1, 1, 1]} : vector<2x5x18x16xf32> to vector<2x5x1x16xf32>
    %255 = vector.extract_strided_slice %240 {offsets = [0, 0, 9, 0], sizes = [2, 5, 1, 16], strides = [1, 1, 1, 1]} : vector<2x5x18x16xf32> to vector<2x5x1x16xf32>
    %256 = vector.extract_strided_slice %240 {offsets = [0, 0, 11, 0], sizes = [2, 5, 1, 16], strides = [1, 1, 1, 1]} : vector<2x5x18x16xf32> to vector<2x5x1x16xf32>
    %257 = vector.extract_strided_slice %240 {offsets = [0, 0, 13, 0], sizes = [2, 5, 1, 16], strides = [1, 1, 1, 1]} : vector<2x5x18x16xf32> to vector<2x5x1x16xf32>
    %258 = vector.extract_strided_slice %240 {offsets = [0, 0, 15, 0], sizes = [2, 5, 1, 16], strides = [1, 1, 1, 1]} : vector<2x5x18x16xf32> to vector<2x5x1x16xf32>
    %259 = vector.extract_strided_slice %240 {offsets = [0, 0, 17, 0], sizes = [2, 5, 1, 16], strides = [1, 1, 1, 1]} : vector<2x5x18x16xf32> to vector<2x5x1x16xf32>
    %260 = tpu.concatenate %251, %252, %253, %254, %255, %256, %257, %258, %259 in 2 : vector<2x5x1x16xf32>, vector<2x5x1x16xf32>, vector<2x5x1x16xf32>, vector<2x5x1x16xf32>, vector<2x5x1x16xf32>, vector<2x5x1x16xf32>, vector<2x5x1x16xf32>, vector<2x5x1x16xf32>, vector<2x5x1x16xf32> -> vector<2x5x9x16xf32>
    %cst_76 = arith.constant 0.000000e+00 : f32
    %261 = vector.broadcast %cst_76 : f32 to vector<64x32xf32>
    %262 = vector.extract_strided_slice %228 {offsets = [0, 0, 0, 0], sizes = [2, 4, 8, 16], strides = [1, 1, 1, 1]} : vector<2x5x9x16xf32> to vector<2x4x8x16xf32>
    %263 = vector.shape_cast %262 : vector<2x4x8x16xf32> to vector<64x16xf32>
    %c0_77 = arith.constant 0 : index
    %c0_78 = arith.constant 0 : index
    %c0_79 = arith.constant 0 : index
    %264 = vector.load %arg5[%c0_77, %c0_78, %c0_79] : memref<16x16x32xf32, #tpu.memory_space<vmem>>, vector<1x16x32xf32>
    %265 = vector.shape_cast %264 : vector<1x16x32xf32> to vector<16x32xf32>
    %cst_80 = arith.constant dense<0.000000e+00> : vector<64x32xf32>
    %266 = tpu.matmul %263, %265, %cst_80 {dimension_numbers = #tpu.dot_dimension_numbers<[1], [0], [0], [1], [0, 0, 1, 1], [], []>} : vector<64x16xf32>, vector<16x32xf32>, vector<64x32xf32> -> vector<64x32xf32>
    %267 = arith.addf %261, %266 : vector<64x32xf32>
    %268 = vector.extract_strided_slice %238 {offsets = [0, 0, 0, 0], sizes = [2, 4, 8, 16], strides = [1, 1, 1, 1]} : vector<2x5x9x16xf32> to vector<2x4x8x16xf32>
    %269 = vector.shape_cast %268 : vector<2x4x8x16xf32> to vector<64x16xf32>
    %c1_81 = arith.constant 1 : index
    %c0_82 = arith.constant 0 : index
    %c0_83 = arith.constant 0 : index
    %270 = vector.load %arg5[%c1_81, %c0_82, %c0_83] : memref<16x16x32xf32, #tpu.memory_space<vmem>>, vector<1x16x32xf32>
    %271 = vector.shape_cast %270 : vector<1x16x32xf32> to vector<16x32xf32>
    %cst_84 = arith.constant dense<0.000000e+00> : vector<64x32xf32>
    %272 = tpu.matmul %269, %271, %cst_84 {dimension_numbers = #tpu.dot_dimension_numbers<[1], [0], [0], [1], [0, 0, 1, 1], [], []>} : vector<64x16xf32>, vector<16x32xf32>, vector<64x32xf32> -> vector<64x32xf32>
    %273 = arith.addf %267, %272 : vector<64x32xf32>
    %274 = vector.extract_strided_slice %228 {offsets = [0, 0, 1, 0], sizes = [2, 4, 8, 16], strides = [1, 1, 1, 1]} : vector<2x5x9x16xf32> to vector<2x4x8x16xf32>
    %275 = vector.shape_cast %274 : vector<2x4x8x16xf32> to vector<64x16xf32>
    %c2_85 = arith.constant 2 : index
    %c0_86 = arith.constant 0 : index
    %c0_87 = arith.constant 0 : index
    %276 = vector.load %arg5[%c2_85, %c0_86, %c0_87] : memref<16x16x32xf32, #tpu.memory_space<vmem>>, vector<1x16x32xf32>
    %277 = vector.shape_cast %276 : vector<1x16x32xf32> to vector<16x32xf32>
    %cst_88 = arith.constant dense<0.000000e+00> : vector<64x32xf32>
    %278 = tpu.matmul %275, %277, %cst_88 {dimension_numbers = #tpu.dot_dimension_numbers<[1], [0], [0], [1], [0, 0, 1, 1], [], []>} : vector<64x16xf32>, vector<16x32xf32>, vector<64x32xf32> -> vector<64x32xf32>
    %279 = arith.addf %273, %278 : vector<64x32xf32>
    %280 = vector.extract_strided_slice %238 {offsets = [0, 0, 1, 0], sizes = [2, 4, 8, 16], strides = [1, 1, 1, 1]} : vector<2x5x9x16xf32> to vector<2x4x8x16xf32>
    %281 = vector.shape_cast %280 : vector<2x4x8x16xf32> to vector<64x16xf32>
    %c3_89 = arith.constant 3 : index
    %c0_90 = arith.constant 0 : index
    %c0_91 = arith.constant 0 : index
    %282 = vector.load %arg5[%c3_89, %c0_90, %c0_91] : memref<16x16x32xf32, #tpu.memory_space<vmem>>, vector<1x16x32xf32>
    %283 = vector.shape_cast %282 : vector<1x16x32xf32> to vector<16x32xf32>
    %cst_92 = arith.constant dense<0.000000e+00> : vector<64x32xf32>
    %284 = tpu.matmul %281, %283, %cst_92 {dimension_numbers = #tpu.dot_dimension_numbers<[1], [0], [0], [1], [0, 0, 1, 1], [], []>} : vector<64x16xf32>, vector<16x32xf32>, vector<64x32xf32> -> vector<64x32xf32>
    %285 = arith.addf %279, %284 : vector<64x32xf32>
    %286 = vector.extract_strided_slice %250 {offsets = [0, 0, 0, 0], sizes = [2, 4, 8, 16], strides = [1, 1, 1, 1]} : vector<2x5x9x16xf32> to vector<2x4x8x16xf32>
    %287 = vector.shape_cast %286 : vector<2x4x8x16xf32> to vector<64x16xf32>
    %c4_93 = arith.constant 4 : index
    %c0_94 = arith.constant 0 : index
    %c0_95 = arith.constant 0 : index
    %288 = vector.load %arg5[%c4_93, %c0_94, %c0_95] : memref<16x16x32xf32, #tpu.memory_space<vmem>>, vector<1x16x32xf32>
    %289 = vector.shape_cast %288 : vector<1x16x32xf32> to vector<16x32xf32>
    %cst_96 = arith.constant dense<0.000000e+00> : vector<64x32xf32>
    %290 = tpu.matmul %287, %289, %cst_96 {dimension_numbers = #tpu.dot_dimension_numbers<[1], [0], [0], [1], [0, 0, 1, 1], [], []>} : vector<64x16xf32>, vector<16x32xf32>, vector<64x32xf32> -> vector<64x32xf32>
    %291 = arith.addf %285, %290 : vector<64x32xf32>
    %292 = vector.extract_strided_slice %260 {offsets = [0, 0, 0, 0], sizes = [2, 4, 8, 16], strides = [1, 1, 1, 1]} : vector<2x5x9x16xf32> to vector<2x4x8x16xf32>
    %293 = vector.shape_cast %292 : vector<2x4x8x16xf32> to vector<64x16xf32>
    %c5_97 = arith.constant 5 : index
    %c0_98 = arith.constant 0 : index
    %c0_99 = arith.constant 0 : index
    %294 = vector.load %arg5[%c5_97, %c0_98, %c0_99] : memref<16x16x32xf32, #tpu.memory_space<vmem>>, vector<1x16x32xf32>
    %295 = vector.shape_cast %294 : vector<1x16x32xf32> to vector<16x32xf32>
    %cst_100 = arith.constant dense<0.000000e+00> : vector<64x32xf32>
    %296 = tpu.matmul %293, %295, %cst_100 {dimension_numbers = #tpu.dot_dimension_numbers<[1], [0], [0], [1], [0, 0, 1, 1], [], []>} : vector<64x16xf32>, vector<16x32xf32>, vector<64x32xf32> -> vector<64x32xf32>
    %297 = arith.addf %291, %296 : vector<64x32xf32>
    %298 = vector.extract_strided_slice %250 {offsets = [0, 0, 1, 0], sizes = [2, 4, 8, 16], strides = [1, 1, 1, 1]} : vector<2x5x9x16xf32> to vector<2x4x8x16xf32>
    %299 = vector.shape_cast %298 : vector<2x4x8x16xf32> to vector<64x16xf32>
    %c6_101 = arith.constant 6 : index
    %c0_102 = arith.constant 0 : index
    %c0_103 = arith.constant 0 : index
    %300 = vector.load %arg5[%c6_101, %c0_102, %c0_103] : memref<16x16x32xf32, #tpu.memory_space<vmem>>, vector<1x16x32xf32>
    %301 = vector.shape_cast %300 : vector<1x16x32xf32> to vector<16x32xf32>
    %cst_104 = arith.constant dense<0.000000e+00> : vector<64x32xf32>
    %302 = tpu.matmul %299, %301, %cst_104 {dimension_numbers = #tpu.dot_dimension_numbers<[1], [0], [0], [1], [0, 0, 1, 1], [], []>} : vector<64x16xf32>, vector<16x32xf32>, vector<64x32xf32> -> vector<64x32xf32>
    %303 = arith.addf %297, %302 : vector<64x32xf32>
    %304 = vector.extract_strided_slice %260 {offsets = [0, 0, 1, 0], sizes = [2, 4, 8, 16], strides = [1, 1, 1, 1]} : vector<2x5x9x16xf32> to vector<2x4x8x16xf32>
    %305 = vector.shape_cast %304 : vector<2x4x8x16xf32> to vector<64x16xf32>
    %c7_105 = arith.constant 7 : index
    %c0_106 = arith.constant 0 : index
    %c0_107 = arith.constant 0 : index
    %306 = vector.load %arg5[%c7_105, %c0_106, %c0_107] : memref<16x16x32xf32, #tpu.memory_space<vmem>>, vector<1x16x32xf32>
    %307 = vector.shape_cast %306 : vector<1x16x32xf32> to vector<16x32xf32>
    %cst_108 = arith.constant dense<0.000000e+00> : vector<64x32xf32>
    %308 = tpu.matmul %305, %307, %cst_108 {dimension_numbers = #tpu.dot_dimension_numbers<[1], [0], [0], [1], [0, 0, 1, 1], [], []>} : vector<64x16xf32>, vector<16x32xf32>, vector<64x32xf32> -> vector<64x32xf32>
    %309 = arith.addf %303, %308 : vector<64x32xf32>
    %310 = vector.extract_strided_slice %228 {offsets = [0, 1, 0, 0], sizes = [2, 4, 8, 16], strides = [1, 1, 1, 1]} : vector<2x5x9x16xf32> to vector<2x4x8x16xf32>
    %311 = vector.shape_cast %310 : vector<2x4x8x16xf32> to vector<64x16xf32>
    %c8_109 = arith.constant 8 : index
    %c0_110 = arith.constant 0 : index
    %c0_111 = arith.constant 0 : index
    %312 = vector.load %arg5[%c8_109, %c0_110, %c0_111] : memref<16x16x32xf32, #tpu.memory_space<vmem>>, vector<1x16x32xf32>
    %313 = vector.shape_cast %312 : vector<1x16x32xf32> to vector<16x32xf32>
    %cst_112 = arith.constant dense<0.000000e+00> : vector<64x32xf32>
    %314 = tpu.matmul %311, %313, %cst_112 {dimension_numbers = #tpu.dot_dimension_numbers<[1], [0], [0], [1], [0, 0, 1, 1], [], []>} : vector<64x16xf32>, vector<16x32xf32>, vector<64x32xf32> -> vector<64x32xf32>
    %315 = arith.addf %309, %314 : vector<64x32xf32>
    %316 = vector.extract_strided_slice %238 {offsets = [0, 1, 0, 0], sizes = [2, 4, 8, 16], strides = [1, 1, 1, 1]} : vector<2x5x9x16xf32> to vector<2x4x8x16xf32>
    %317 = vector.shape_cast %316 : vector<2x4x8x16xf32> to vector<64x16xf32>
    %c9_113 = arith.constant 9 : index
    %c0_114 = arith.constant 0 : index
    %c0_115 = arith.constant 0 : index
    %318 = vector.load %arg5[%c9_113, %c0_114, %c0_115] : memref<16x16x32xf32, #tpu.memory_space<vmem>>, vector<1x16x32xf32>
    %319 = vector.shape_cast %318 : vector<1x16x32xf32> to vector<16x32xf32>
    %cst_116 = arith.constant dense<0.000000e+00> : vector<64x32xf32>
    %320 = tpu.matmul %317, %319, %cst_116 {dimension_numbers = #tpu.dot_dimension_numbers<[1], [0], [0], [1], [0, 0, 1, 1], [], []>} : vector<64x16xf32>, vector<16x32xf32>, vector<64x32xf32> -> vector<64x32xf32>
    %321 = arith.addf %315, %320 : vector<64x32xf32>
    %322 = vector.extract_strided_slice %228 {offsets = [0, 1, 1, 0], sizes = [2, 4, 8, 16], strides = [1, 1, 1, 1]} : vector<2x5x9x16xf32> to vector<2x4x8x16xf32>
    %323 = vector.shape_cast %322 : vector<2x4x8x16xf32> to vector<64x16xf32>
    %c10_117 = arith.constant 10 : index
    %c0_118 = arith.constant 0 : index
    %c0_119 = arith.constant 0 : index
    %324 = vector.load %arg5[%c10_117, %c0_118, %c0_119] : memref<16x16x32xf32, #tpu.memory_space<vmem>>, vector<1x16x32xf32>
    %325 = vector.shape_cast %324 : vector<1x16x32xf32> to vector<16x32xf32>
    %cst_120 = arith.constant dense<0.000000e+00> : vector<64x32xf32>
    %326 = tpu.matmul %323, %325, %cst_120 {dimension_numbers = #tpu.dot_dimension_numbers<[1], [0], [0], [1], [0, 0, 1, 1], [], []>} : vector<64x16xf32>, vector<16x32xf32>, vector<64x32xf32> -> vector<64x32xf32>
    %327 = arith.addf %321, %326 : vector<64x32xf32>
    %328 = vector.extract_strided_slice %238 {offsets = [0, 1, 1, 0], sizes = [2, 4, 8, 16], strides = [1, 1, 1, 1]} : vector<2x5x9x16xf32> to vector<2x4x8x16xf32>
    %329 = vector.shape_cast %328 : vector<2x4x8x16xf32> to vector<64x16xf32>
    %c11_121 = arith.constant 11 : index
    %c0_122 = arith.constant 0 : index
    %c0_123 = arith.constant 0 : index
    %330 = vector.load %arg5[%c11_121, %c0_122, %c0_123] : memref<16x16x32xf32, #tpu.memory_space<vmem>>, vector<1x16x32xf32>
    %331 = vector.shape_cast %330 : vector<1x16x32xf32> to vector<16x32xf32>
    %cst_124 = arith.constant dense<0.000000e+00> : vector<64x32xf32>
    %332 = tpu.matmul %329, %331, %cst_124 {dimension_numbers = #tpu.dot_dimension_numbers<[1], [0], [0], [1], [0, 0, 1, 1], [], []>} : vector<64x16xf32>, vector<16x32xf32>, vector<64x32xf32> -> vector<64x32xf32>
    %333 = arith.addf %327, %332 : vector<64x32xf32>
    %334 = vector.extract_strided_slice %250 {offsets = [0, 1, 0, 0], sizes = [2, 4, 8, 16], strides = [1, 1, 1, 1]} : vector<2x5x9x16xf32> to vector<2x4x8x16xf32>
    %335 = vector.shape_cast %334 : vector<2x4x8x16xf32> to vector<64x16xf32>
    %c12_125 = arith.constant 12 : index
    %c0_126 = arith.constant 0 : index
    %c0_127 = arith.constant 0 : index
    %336 = vector.load %arg5[%c12_125, %c0_126, %c0_127] : memref<16x16x32xf32, #tpu.memory_space<vmem>>, vector<1x16x32xf32>
    %337 = vector.shape_cast %336 : vector<1x16x32xf32> to vector<16x32xf32>
    %cst_128 = arith.constant dense<0.000000e+00> : vector<64x32xf32>
    %338 = tpu.matmul %335, %337, %cst_128 {dimension_numbers = #tpu.dot_dimension_numbers<[1], [0], [0], [1], [0, 0, 1, 1], [], []>} : vector<64x16xf32>, vector<16x32xf32>, vector<64x32xf32> -> vector<64x32xf32>
    %339 = arith.addf %333, %338 : vector<64x32xf32>
    %340 = vector.extract_strided_slice %260 {offsets = [0, 1, 0, 0], sizes = [2, 4, 8, 16], strides = [1, 1, 1, 1]} : vector<2x5x9x16xf32> to vector<2x4x8x16xf32>
    %341 = vector.shape_cast %340 : vector<2x4x8x16xf32> to vector<64x16xf32>
    %c13_129 = arith.constant 13 : index
    %c0_130 = arith.constant 0 : index
    %c0_131 = arith.constant 0 : index
    %342 = vector.load %arg5[%c13_129, %c0_130, %c0_131] : memref<16x16x32xf32, #tpu.memory_space<vmem>>, vector<1x16x32xf32>
    %343 = vector.shape_cast %342 : vector<1x16x32xf32> to vector<16x32xf32>
    %cst_132 = arith.constant dense<0.000000e+00> : vector<64x32xf32>
    %344 = tpu.matmul %341, %343, %cst_132 {dimension_numbers = #tpu.dot_dimension_numbers<[1], [0], [0], [1], [0, 0, 1, 1], [], []>} : vector<64x16xf32>, vector<16x32xf32>, vector<64x32xf32> -> vector<64x32xf32>
    %345 = arith.addf %339, %344 : vector<64x32xf32>
    %346 = vector.extract_strided_slice %250 {offsets = [0, 1, 1, 0], sizes = [2, 4, 8, 16], strides = [1, 1, 1, 1]} : vector<2x5x9x16xf32> to vector<2x4x8x16xf32>
    %347 = vector.shape_cast %346 : vector<2x4x8x16xf32> to vector<64x16xf32>
    %c14_133 = arith.constant 14 : index
    %c0_134 = arith.constant 0 : index
    %c0_135 = arith.constant 0 : index
    %348 = vector.load %arg5[%c14_133, %c0_134, %c0_135] : memref<16x16x32xf32, #tpu.memory_space<vmem>>, vector<1x16x32xf32>
    %349 = vector.shape_cast %348 : vector<1x16x32xf32> to vector<16x32xf32>
    %cst_136 = arith.constant dense<0.000000e+00> : vector<64x32xf32>
    %350 = tpu.matmul %347, %349, %cst_136 {dimension_numbers = #tpu.dot_dimension_numbers<[1], [0], [0], [1], [0, 0, 1, 1], [], []>} : vector<64x16xf32>, vector<16x32xf32>, vector<64x32xf32> -> vector<64x32xf32>
    %351 = arith.addf %345, %350 : vector<64x32xf32>
    %352 = vector.extract_strided_slice %260 {offsets = [0, 1, 1, 0], sizes = [2, 4, 8, 16], strides = [1, 1, 1, 1]} : vector<2x5x9x16xf32> to vector<2x4x8x16xf32>
    %353 = vector.shape_cast %352 : vector<2x4x8x16xf32> to vector<64x16xf32>
    %c15_137 = arith.constant 15 : index
    %c0_138 = arith.constant 0 : index
    %c0_139 = arith.constant 0 : index
    %354 = vector.load %arg5[%c15_137, %c0_138, %c0_139] : memref<16x16x32xf32, #tpu.memory_space<vmem>>, vector<1x16x32xf32>
    %355 = vector.shape_cast %354 : vector<1x16x32xf32> to vector<16x32xf32>
    %cst_140 = arith.constant dense<0.000000e+00> : vector<64x32xf32>
    %356 = tpu.matmul %353, %355, %cst_140 {dimension_numbers = #tpu.dot_dimension_numbers<[1], [0], [0], [1], [0, 0, 1, 1], [], []>} : vector<64x16xf32>, vector<16x32xf32>, vector<64x32xf32> -> vector<64x32xf32>
    %357 = arith.addf %351, %356 : vector<64x32xf32>
    %358 = tpu.iota {dimensions = array<i32: 0>} : vector<64x1xi32>
    %c8_i32_141 = arith.constant 8 : i32
    %c0_i32_142 = arith.constant 0 : i32
    %359 = arith.cmpi eq, %c8_i32_141, %c0_i32_142 : i32
    %c1_i32_143 = arith.constant 1 : i32
    %360 = arith.select %359, %c1_i32_143, %c8_i32_141 : i32
    %361 = vector.broadcast %360 : i32 to vector<64x1xi32>
    %362 = arith.remsi %358, %361 : vector<64x1xi32>
    %c0_i32_144 = arith.constant 0 : i32
    %363 = vector.broadcast %c0_i32_144 : i32 to vector<64x1xi32>
    %364 = arith.cmpi ne, %362, %363 : vector<64x1xi32>
    %c0_i32_145 = arith.constant 0 : i32
    %365 = vector.broadcast %c0_i32_145 : i32 to vector<64x1xi32>
    %366 = arith.cmpi slt, %362, %365 : vector<64x1xi32>
    %c0_i32_146 = arith.constant 0 : i32
    %367 = arith.cmpi slt, %360, %c0_i32_146 : i32
    %368 = vector.broadcast %367 : i1 to vector<64x1xi1>
    %369 = vector.broadcast %368 : vector<64x1xi1> to vector<64x1xi1>
    %370 = arith.xori %366, %369 : vector<64x1xi1>
    %371 = arith.andi %370, %364 : vector<64x1xi1>
    %372 = vector.broadcast %360 : i32 to vector<64x1xi32>
    %373 = arith.addi %362, %372 : vector<64x1xi32>
    %374 = arith.select %371, %373, %362 : vector<64x1xi1>, vector<64x1xi32>
    %c4_i32 = arith.constant 4 : i32
    %375 = vector.broadcast %c4_i32 : i32 to vector<64x1xi32>
    %376 = arith.cmpi slt, %374, %375 : vector<64x1xi32>
    %377 = arith.extui %376 : vector<64x1xi1> to vector<64x1xi32>
    %378 = arith.sitofp %377 : vector<64x1xi32> to vector<64x1xf32>
    %379 = vector.broadcast %378 : vector<64x1xf32> to vector<64x32xf32>
    %380 = arith.mulf %357, %379 : vector<64x32xf32>
    %cst_147 = arith.constant dense<0.000000e+00> : vector<32xf32>
    %381 = vector.multi_reduction <add>, %380, %cst_147 [0] : vector<64x32xf32> to vector<32xf32>
    %382 = vector.shape_cast %381 : vector<32xf32> to vector<1x32xf32>
    %cst_148 = arith.constant 3.200000e+01 : f32
    %383 = vector.broadcast %cst_148 : f32 to vector<1x32xf32>
    %384 = arith.divf %382, %383 : vector<1x32xf32>
    %385 = vector.broadcast %384 : vector<1x32xf32> to vector<64x32xf32>
    %386 = arith.subf %357, %385 : vector<64x32xf32>
    %387 = vector.broadcast %378 : vector<64x1xf32> to vector<64x32xf32>
    %388 = arith.mulf %386, %387 : vector<64x32xf32>
    %389 = arith.mulf %388, %388 : vector<64x32xf32>
    %cst_149 = arith.constant dense<0.000000e+00> : vector<32xf32>
    %390 = vector.multi_reduction <add>, %389, %cst_149 [0] : vector<64x32xf32> to vector<32xf32>
    %391 = vector.shape_cast %390 : vector<32xf32> to vector<1x32xf32>
    %cst_150 = arith.constant 3.200000e+01 : f32
    %392 = vector.broadcast %cst_150 : f32 to vector<1x32xf32>
    %393 = arith.divf %391, %392 : vector<1x32xf32>
    %394 = vector.broadcast %384 : vector<1x32xf32> to vector<64x32xf32>
    %395 = arith.subf %357, %394 : vector<64x32xf32>
    %cst_151 = arith.constant 9.99999974E-6 : f32
    %396 = vector.broadcast %cst_151 : f32 to vector<1x32xf32>
    %397 = arith.addf %393, %396 : vector<1x32xf32>
    %398 = math.rsqrt %397 : vector<1x32xf32>
    %399 = vector.broadcast %398 : vector<1x32xf32> to vector<64x32xf32>
    %400 = arith.mulf %395, %399 : vector<64x32xf32>
    %c0_152 = arith.constant 0 : index
    %c0_153 = arith.constant 0 : index
    %401 = vector.load %arg6[%c0_152, %c0_153] : memref<1x32xf32, #tpu.memory_space<vmem>>, vector<1x32xf32>
    %402 = vector.broadcast %401 : vector<1x32xf32> to vector<64x32xf32>
    %403 = arith.mulf %400, %402 : vector<64x32xf32>
    %c0_154 = arith.constant 0 : index
    %c0_155 = arith.constant 0 : index
    %404 = vector.load %arg7[%c0_154, %c0_155] : memref<1x32xf32, #tpu.memory_space<vmem>>, vector<1x32xf32>
    %405 = vector.broadcast %404 : vector<1x32xf32> to vector<64x32xf32>
    %406 = arith.addf %403, %405 : vector<64x32xf32>
    %cst_156 = arith.constant 0.000000e+00 : f32
    %407 = vector.broadcast %cst_156 : f32 to vector<64x32xf32>
    %408 = arith.cmpf oge, %406, %407 : vector<64x32xf32>
    %cst_157 = arith.constant 2.000000e-01 : f32
    %409 = vector.broadcast %cst_157 : f32 to vector<64x32xf32>
    %410 = arith.mulf %409, %406 : vector<64x32xf32>
    %411 = arith.select %408, %406, %410 : vector<64x32xi1>, vector<64x32xf32>
    %412 = vector.shape_cast %411 : vector<64x32xf32> to vector<2x4x8x32xf32>
    %413 = vector.extract_strided_slice %412 {offsets = [0, 0, 0, 0], sizes = [2, 4, 4, 32], strides = [1, 1, 1, 1]} : vector<2x4x8x32xf32> to vector<2x4x4x32xf32>
    %cst_158 = arith.constant 0.000000e+00 : f32
    %414 = vector.broadcast %cst_158 : f32 to vector<2x1x4x32xf32>
    %415 = tpu.concatenate %414, %413, %414 in 1 : vector<2x1x4x32xf32>, vector<2x4x4x32xf32>, vector<2x1x4x32xf32> -> vector<2x6x4x32xf32>
    %cst_159 = arith.constant 0.000000e+00 : f32
    %416 = vector.broadcast %cst_159 : f32 to vector<2x6x1x32xf32>
    %cst_160 = arith.constant 0.000000e+00 : f32
    %417 = vector.broadcast %cst_160 : f32 to vector<2x6x13x32xf32>
    %418 = tpu.concatenate %416, %415, %417 in 2 : vector<2x6x1x32xf32>, vector<2x6x4x32xf32>, vector<2x6x13x32xf32> -> vector<2x6x18x32xf32>
    %419 = vector.shape_cast %418 : vector<2x6x18x32xf32> to vector<2x3x2x18x32xf32>
    %420 = vector.extract_strided_slice %419 {offsets = [0, 0, 0, 0, 0], sizes = [2, 3, 1, 18, 32], strides = [1, 1, 1, 1, 1]} : vector<2x3x2x18x32xf32> to vector<2x3x1x18x32xf32>
    %421 = vector.shape_cast %420 : vector<2x3x1x18x32xf32> to vector<2x3x18x32xf32>
    %422 = vector.extract_strided_slice %421 {offsets = [0, 0, 0, 0], sizes = [2, 3, 1, 32], strides = [1, 1, 1, 1]} : vector<2x3x18x32xf32> to vector<2x3x1x32xf32>
    %423 = vector.extract_strided_slice %421 {offsets = [0, 0, 2, 0], sizes = [2, 3, 1, 32], strides = [1, 1, 1, 1]} : vector<2x3x18x32xf32> to vector<2x3x1x32xf32>
    %424 = vector.extract_strided_slice %421 {offsets = [0, 0, 4, 0], sizes = [2, 3, 1, 32], strides = [1, 1, 1, 1]} : vector<2x3x18x32xf32> to vector<2x3x1x32xf32>
    %425 = vector.extract_strided_slice %421 {offsets = [0, 0, 6, 0], sizes = [2, 3, 1, 32], strides = [1, 1, 1, 1]} : vector<2x3x18x32xf32> to vector<2x3x1x32xf32>
    %426 = vector.extract_strided_slice %421 {offsets = [0, 0, 8, 0], sizes = [2, 3, 1, 32], strides = [1, 1, 1, 1]} : vector<2x3x18x32xf32> to vector<2x3x1x32xf32>
    %427 = vector.extract_strided_slice %421 {offsets = [0, 0, 10, 0], sizes = [2, 3, 1, 32], strides = [1, 1, 1, 1]} : vector<2x3x18x32xf32> to vector<2x3x1x32xf32>
    %428 = vector.extract_strided_slice %421 {offsets = [0, 0, 12, 0], sizes = [2, 3, 1, 32], strides = [1, 1, 1, 1]} : vector<2x3x18x32xf32> to vector<2x3x1x32xf32>
    %429 = vector.extract_strided_slice %421 {offsets = [0, 0, 14, 0], sizes = [2, 3, 1, 32], strides = [1, 1, 1, 1]} : vector<2x3x18x32xf32> to vector<2x3x1x32xf32>
    %430 = vector.extract_strided_slice %421 {offsets = [0, 0, 16, 0], sizes = [2, 3, 1, 32], strides = [1, 1, 1, 1]} : vector<2x3x18x32xf32> to vector<2x3x1x32xf32>
    %431 = tpu.concatenate %422, %423, %424, %425, %426, %427, %428, %429, %430 in 2 : vector<2x3x1x32xf32>, vector<2x3x1x32xf32>, vector<2x3x1x32xf32>, vector<2x3x1x32xf32>, vector<2x3x1x32xf32>, vector<2x3x1x32xf32>, vector<2x3x1x32xf32>, vector<2x3x1x32xf32>, vector<2x3x1x32xf32> -> vector<2x3x9x32xf32>
    %432 = vector.extract_strided_slice %421 {offsets = [0, 0, 1, 0], sizes = [2, 3, 1, 32], strides = [1, 1, 1, 1]} : vector<2x3x18x32xf32> to vector<2x3x1x32xf32>
    %433 = vector.extract_strided_slice %421 {offsets = [0, 0, 3, 0], sizes = [2, 3, 1, 32], strides = [1, 1, 1, 1]} : vector<2x3x18x32xf32> to vector<2x3x1x32xf32>
    %434 = vector.extract_strided_slice %421 {offsets = [0, 0, 5, 0], sizes = [2, 3, 1, 32], strides = [1, 1, 1, 1]} : vector<2x3x18x32xf32> to vector<2x3x1x32xf32>
    %435 = vector.extract_strided_slice %421 {offsets = [0, 0, 7, 0], sizes = [2, 3, 1, 32], strides = [1, 1, 1, 1]} : vector<2x3x18x32xf32> to vector<2x3x1x32xf32>
    %436 = vector.extract_strided_slice %421 {offsets = [0, 0, 9, 0], sizes = [2, 3, 1, 32], strides = [1, 1, 1, 1]} : vector<2x3x18x32xf32> to vector<2x3x1x32xf32>
    %437 = vector.extract_strided_slice %421 {offsets = [0, 0, 11, 0], sizes = [2, 3, 1, 32], strides = [1, 1, 1, 1]} : vector<2x3x18x32xf32> to vector<2x3x1x32xf32>
    %438 = vector.extract_strided_slice %421 {offsets = [0, 0, 13, 0], sizes = [2, 3, 1, 32], strides = [1, 1, 1, 1]} : vector<2x3x18x32xf32> to vector<2x3x1x32xf32>
    %439 = vector.extract_strided_slice %421 {offsets = [0, 0, 15, 0], sizes = [2, 3, 1, 32], strides = [1, 1, 1, 1]} : vector<2x3x18x32xf32> to vector<2x3x1x32xf32>
    %440 = vector.extract_strided_slice %421 {offsets = [0, 0, 17, 0], sizes = [2, 3, 1, 32], strides = [1, 1, 1, 1]} : vector<2x3x18x32xf32> to vector<2x3x1x32xf32>
    %441 = tpu.concatenate %432, %433, %434, %435, %436, %437, %438, %439, %440 in 2 : vector<2x3x1x32xf32>, vector<2x3x1x32xf32>, vector<2x3x1x32xf32>, vector<2x3x1x32xf32>, vector<2x3x1x32xf32>, vector<2x3x1x32xf32>, vector<2x3x1x32xf32>, vector<2x3x1x32xf32>, vector<2x3x1x32xf32> -> vector<2x3x9x32xf32>
    %442 = vector.extract_strided_slice %419 {offsets = [0, 0, 1, 0, 0], sizes = [2, 3, 1, 18, 32], strides = [1, 1, 1, 1, 1]} : vector<2x3x2x18x32xf32> to vector<2x3x1x18x32xf32>
    %443 = vector.shape_cast %442 : vector<2x3x1x18x32xf32> to vector<2x3x18x32xf32>
    %444 = vector.extract_strided_slice %443 {offsets = [0, 0, 0, 0], sizes = [2, 3, 1, 32], strides = [1, 1, 1, 1]} : vector<2x3x18x32xf32> to vector<2x3x1x32xf32>
    %445 = vector.extract_strided_slice %443 {offsets = [0, 0, 2, 0], sizes = [2, 3, 1, 32], strides = [1, 1, 1, 1]} : vector<2x3x18x32xf32> to vector<2x3x1x32xf32>
    %446 = vector.extract_strided_slice %443 {offsets = [0, 0, 4, 0], sizes = [2, 3, 1, 32], strides = [1, 1, 1, 1]} : vector<2x3x18x32xf32> to vector<2x3x1x32xf32>
    %447 = vector.extract_strided_slice %443 {offsets = [0, 0, 6, 0], sizes = [2, 3, 1, 32], strides = [1, 1, 1, 1]} : vector<2x3x18x32xf32> to vector<2x3x1x32xf32>
    %448 = vector.extract_strided_slice %443 {offsets = [0, 0, 8, 0], sizes = [2, 3, 1, 32], strides = [1, 1, 1, 1]} : vector<2x3x18x32xf32> to vector<2x3x1x32xf32>
    %449 = vector.extract_strided_slice %443 {offsets = [0, 0, 10, 0], sizes = [2, 3, 1, 32], strides = [1, 1, 1, 1]} : vector<2x3x18x32xf32> to vector<2x3x1x32xf32>
    %450 = vector.extract_strided_slice %443 {offsets = [0, 0, 12, 0], sizes = [2, 3, 1, 32], strides = [1, 1, 1, 1]} : vector<2x3x18x32xf32> to vector<2x3x1x32xf32>
    %451 = vector.extract_strided_slice %443 {offsets = [0, 0, 14, 0], sizes = [2, 3, 1, 32], strides = [1, 1, 1, 1]} : vector<2x3x18x32xf32> to vector<2x3x1x32xf32>
    %452 = vector.extract_strided_slice %443 {offsets = [0, 0, 16, 0], sizes = [2, 3, 1, 32], strides = [1, 1, 1, 1]} : vector<2x3x18x32xf32> to vector<2x3x1x32xf32>
    %453 = tpu.concatenate %444, %445, %446, %447, %448, %449, %450, %451, %452 in 2 : vector<2x3x1x32xf32>, vector<2x3x1x32xf32>, vector<2x3x1x32xf32>, vector<2x3x1x32xf32>, vector<2x3x1x32xf32>, vector<2x3x1x32xf32>, vector<2x3x1x32xf32>, vector<2x3x1x32xf32>, vector<2x3x1x32xf32> -> vector<2x3x9x32xf32>
    %454 = vector.extract_strided_slice %443 {offsets = [0, 0, 1, 0], sizes = [2, 3, 1, 32], strides = [1, 1, 1, 1]} : vector<2x3x18x32xf32> to vector<2x3x1x32xf32>
    %455 = vector.extract_strided_slice %443 {offsets = [0, 0, 3, 0], sizes = [2, 3, 1, 32], strides = [1, 1, 1, 1]} : vector<2x3x18x32xf32> to vector<2x3x1x32xf32>
    %456 = vector.extract_strided_slice %443 {offsets = [0, 0, 5, 0], sizes = [2, 3, 1, 32], strides = [1, 1, 1, 1]} : vector<2x3x18x32xf32> to vector<2x3x1x32xf32>
    %457 = vector.extract_strided_slice %443 {offsets = [0, 0, 7, 0], sizes = [2, 3, 1, 32], strides = [1, 1, 1, 1]} : vector<2x3x18x32xf32> to vector<2x3x1x32xf32>
    %458 = vector.extract_strided_slice %443 {offsets = [0, 0, 9, 0], sizes = [2, 3, 1, 32], strides = [1, 1, 1, 1]} : vector<2x3x18x32xf32> to vector<2x3x1x32xf32>
    %459 = vector.extract_strided_slice %443 {offsets = [0, 0, 11, 0], sizes = [2, 3, 1, 32], strides = [1, 1, 1, 1]} : vector<2x3x18x32xf32> to vector<2x3x1x32xf32>
    %460 = vector.extract_strided_slice %443 {offsets = [0, 0, 13, 0], sizes = [2, 3, 1, 32], strides = [1, 1, 1, 1]} : vector<2x3x18x32xf32> to vector<2x3x1x32xf32>
    %461 = vector.extract_strided_slice %443 {offsets = [0, 0, 15, 0], sizes = [2, 3, 1, 32], strides = [1, 1, 1, 1]} : vector<2x3x18x32xf32> to vector<2x3x1x32xf32>
    %462 = vector.extract_strided_slice %443 {offsets = [0, 0, 17, 0], sizes = [2, 3, 1, 32], strides = [1, 1, 1, 1]} : vector<2x3x18x32xf32> to vector<2x3x1x32xf32>
    %463 = tpu.concatenate %454, %455, %456, %457, %458, %459, %460, %461, %462 in 2 : vector<2x3x1x32xf32>, vector<2x3x1x32xf32>, vector<2x3x1x32xf32>, vector<2x3x1x32xf32>, vector<2x3x1x32xf32>, vector<2x3x1x32xf32>, vector<2x3x1x32xf32>, vector<2x3x1x32xf32>, vector<2x3x1x32xf32> -> vector<2x3x9x32xf32>
    %cst_161 = arith.constant 0.000000e+00 : f32
    %464 = vector.broadcast %cst_161 : f32 to vector<32x64xf32>
    %465 = vector.extract_strided_slice %431 {offsets = [0, 0, 0, 0], sizes = [2, 2, 8, 32], strides = [1, 1, 1, 1]} : vector<2x3x9x32xf32> to vector<2x2x8x32xf32>
    %466 = vector.shape_cast %465 : vector<2x2x8x32xf32> to vector<32x32xf32>
    %c0_162 = arith.constant 0 : index
    %c0_163 = arith.constant 0 : index
    %c0_164 = arith.constant 0 : index
    %467 = vector.load %arg8[%c0_162, %c0_163, %c0_164] : memref<16x32x64xf32, #tpu.memory_space<vmem>>, vector<1x32x64xf32>
    %468 = vector.shape_cast %467 : vector<1x32x64xf32> to vector<32x64xf32>
    %cst_165 = arith.constant dense<0.000000e+00> : vector<32x64xf32>
    %469 = tpu.matmul %466, %468, %cst_165 {dimension_numbers = #tpu.dot_dimension_numbers<[1], [0], [0], [1], [0, 0, 1, 1], [], []>} : vector<32x32xf32>, vector<32x64xf32>, vector<32x64xf32> -> vector<32x64xf32>
    %470 = arith.addf %464, %469 : vector<32x64xf32>
    %471 = vector.extract_strided_slice %441 {offsets = [0, 0, 0, 0], sizes = [2, 2, 8, 32], strides = [1, 1, 1, 1]} : vector<2x3x9x32xf32> to vector<2x2x8x32xf32>
    %472 = vector.shape_cast %471 : vector<2x2x8x32xf32> to vector<32x32xf32>
    %c1_166 = arith.constant 1 : index
    %c0_167 = arith.constant 0 : index
    %c0_168 = arith.constant 0 : index
    %473 = vector.load %arg8[%c1_166, %c0_167, %c0_168] : memref<16x32x64xf32, #tpu.memory_space<vmem>>, vector<1x32x64xf32>
    %474 = vector.shape_cast %473 : vector<1x32x64xf32> to vector<32x64xf32>
    %cst_169 = arith.constant dense<0.000000e+00> : vector<32x64xf32>
    %475 = tpu.matmul %472, %474, %cst_169 {dimension_numbers = #tpu.dot_dimension_numbers<[1], [0], [0], [1], [0, 0, 1, 1], [], []>} : vector<32x32xf32>, vector<32x64xf32>, vector<32x64xf32> -> vector<32x64xf32>
    %476 = arith.addf %470, %475 : vector<32x64xf32>
    %477 = vector.extract_strided_slice %431 {offsets = [0, 0, 1, 0], sizes = [2, 2, 8, 32], strides = [1, 1, 1, 1]} : vector<2x3x9x32xf32> to vector<2x2x8x32xf32>
    %478 = vector.shape_cast %477 : vector<2x2x8x32xf32> to vector<32x32xf32>
    %c2_170 = arith.constant 2 : index
    %c0_171 = arith.constant 0 : index
    %c0_172 = arith.constant 0 : index
    %479 = vector.load %arg8[%c2_170, %c0_171, %c0_172] : memref<16x32x64xf32, #tpu.memory_space<vmem>>, vector<1x32x64xf32>
    %480 = vector.shape_cast %479 : vector<1x32x64xf32> to vector<32x64xf32>
    %cst_173 = arith.constant dense<0.000000e+00> : vector<32x64xf32>
    %481 = tpu.matmul %478, %480, %cst_173 {dimension_numbers = #tpu.dot_dimension_numbers<[1], [0], [0], [1], [0, 0, 1, 1], [], []>} : vector<32x32xf32>, vector<32x64xf32>, vector<32x64xf32> -> vector<32x64xf32>
    %482 = arith.addf %476, %481 : vector<32x64xf32>
    %483 = vector.extract_strided_slice %441 {offsets = [0, 0, 1, 0], sizes = [2, 2, 8, 32], strides = [1, 1, 1, 1]} : vector<2x3x9x32xf32> to vector<2x2x8x32xf32>
    %484 = vector.shape_cast %483 : vector<2x2x8x32xf32> to vector<32x32xf32>
    %c3_174 = arith.constant 3 : index
    %c0_175 = arith.constant 0 : index
    %c0_176 = arith.constant 0 : index
    %485 = vector.load %arg8[%c3_174, %c0_175, %c0_176] : memref<16x32x64xf32, #tpu.memory_space<vmem>>, vector<1x32x64xf32>
    %486 = vector.shape_cast %485 : vector<1x32x64xf32> to vector<32x64xf32>
    %cst_177 = arith.constant dense<0.000000e+00> : vector<32x64xf32>
    %487 = tpu.matmul %484, %486, %cst_177 {dimension_numbers = #tpu.dot_dimension_numbers<[1], [0], [0], [1], [0, 0, 1, 1], [], []>} : vector<32x32xf32>, vector<32x64xf32>, vector<32x64xf32> -> vector<32x64xf32>
    %488 = arith.addf %482, %487 : vector<32x64xf32>
    %489 = vector.extract_strided_slice %453 {offsets = [0, 0, 0, 0], sizes = [2, 2, 8, 32], strides = [1, 1, 1, 1]} : vector<2x3x9x32xf32> to vector<2x2x8x32xf32>
    %490 = vector.shape_cast %489 : vector<2x2x8x32xf32> to vector<32x32xf32>
    %c4_178 = arith.constant 4 : index
    %c0_179 = arith.constant 0 : index
    %c0_180 = arith.constant 0 : index
    %491 = vector.load %arg8[%c4_178, %c0_179, %c0_180] : memref<16x32x64xf32, #tpu.memory_space<vmem>>, vector<1x32x64xf32>
    %492 = vector.shape_cast %491 : vector<1x32x64xf32> to vector<32x64xf32>
    %cst_181 = arith.constant dense<0.000000e+00> : vector<32x64xf32>
    %493 = tpu.matmul %490, %492, %cst_181 {dimension_numbers = #tpu.dot_dimension_numbers<[1], [0], [0], [1], [0, 0, 1, 1], [], []>} : vector<32x32xf32>, vector<32x64xf32>, vector<32x64xf32> -> vector<32x64xf32>
    %494 = arith.addf %488, %493 : vector<32x64xf32>
    %495 = vector.extract_strided_slice %463 {offsets = [0, 0, 0, 0], sizes = [2, 2, 8, 32], strides = [1, 1, 1, 1]} : vector<2x3x9x32xf32> to vector<2x2x8x32xf32>
    %496 = vector.shape_cast %495 : vector<2x2x8x32xf32> to vector<32x32xf32>
    %c5_182 = arith.constant 5 : index
    %c0_183 = arith.constant 0 : index
    %c0_184 = arith.constant 0 : index
    %497 = vector.load %arg8[%c5_182, %c0_183, %c0_184] : memref<16x32x64xf32, #tpu.memory_space<vmem>>, vector<1x32x64xf32>
    %498 = vector.shape_cast %497 : vector<1x32x64xf32> to vector<32x64xf32>
    %cst_185 = arith.constant dense<0.000000e+00> : vector<32x64xf32>
    %499 = tpu.matmul %496, %498, %cst_185 {dimension_numbers = #tpu.dot_dimension_numbers<[1], [0], [0], [1], [0, 0, 1, 1], [], []>} : vector<32x32xf32>, vector<32x64xf32>, vector<32x64xf32> -> vector<32x64xf32>
    %500 = arith.addf %494, %499 : vector<32x64xf32>
    %501 = vector.extract_strided_slice %453 {offsets = [0, 0, 1, 0], sizes = [2, 2, 8, 32], strides = [1, 1, 1, 1]} : vector<2x3x9x32xf32> to vector<2x2x8x32xf32>
    %502 = vector.shape_cast %501 : vector<2x2x8x32xf32> to vector<32x32xf32>
    %c6_186 = arith.constant 6 : index
    %c0_187 = arith.constant 0 : index
    %c0_188 = arith.constant 0 : index
    %503 = vector.load %arg8[%c6_186, %c0_187, %c0_188] : memref<16x32x64xf32, #tpu.memory_space<vmem>>, vector<1x32x64xf32>
    %504 = vector.shape_cast %503 : vector<1x32x64xf32> to vector<32x64xf32>
    %cst_189 = arith.constant dense<0.000000e+00> : vector<32x64xf32>
    %505 = tpu.matmul %502, %504, %cst_189 {dimension_numbers = #tpu.dot_dimension_numbers<[1], [0], [0], [1], [0, 0, 1, 1], [], []>} : vector<32x32xf32>, vector<32x64xf32>, vector<32x64xf32> -> vector<32x64xf32>
    %506 = arith.addf %500, %505 : vector<32x64xf32>
    %507 = vector.extract_strided_slice %463 {offsets = [0, 0, 1, 0], sizes = [2, 2, 8, 32], strides = [1, 1, 1, 1]} : vector<2x3x9x32xf32> to vector<2x2x8x32xf32>
    %508 = vector.shape_cast %507 : vector<2x2x8x32xf32> to vector<32x32xf32>
    %c7_190 = arith.constant 7 : index
    %c0_191 = arith.constant 0 : index
    %c0_192 = arith.constant 0 : index
    %509 = vector.load %arg8[%c7_190, %c0_191, %c0_192] : memref<16x32x64xf32, #tpu.memory_space<vmem>>, vector<1x32x64xf32>
    %510 = vector.shape_cast %509 : vector<1x32x64xf32> to vector<32x64xf32>
    %cst_193 = arith.constant dense<0.000000e+00> : vector<32x64xf32>
    %511 = tpu.matmul %508, %510, %cst_193 {dimension_numbers = #tpu.dot_dimension_numbers<[1], [0], [0], [1], [0, 0, 1, 1], [], []>} : vector<32x32xf32>, vector<32x64xf32>, vector<32x64xf32> -> vector<32x64xf32>
    %512 = arith.addf %506, %511 : vector<32x64xf32>
    %513 = vector.extract_strided_slice %431 {offsets = [0, 1, 0, 0], sizes = [2, 2, 8, 32], strides = [1, 1, 1, 1]} : vector<2x3x9x32xf32> to vector<2x2x8x32xf32>
    %514 = vector.shape_cast %513 : vector<2x2x8x32xf32> to vector<32x32xf32>
    %c8_194 = arith.constant 8 : index
    %c0_195 = arith.constant 0 : index
    %c0_196 = arith.constant 0 : index
    %515 = vector.load %arg8[%c8_194, %c0_195, %c0_196] : memref<16x32x64xf32, #tpu.memory_space<vmem>>, vector<1x32x64xf32>
    %516 = vector.shape_cast %515 : vector<1x32x64xf32> to vector<32x64xf32>
    %cst_197 = arith.constant dense<0.000000e+00> : vector<32x64xf32>
    %517 = tpu.matmul %514, %516, %cst_197 {dimension_numbers = #tpu.dot_dimension_numbers<[1], [0], [0], [1], [0, 0, 1, 1], [], []>} : vector<32x32xf32>, vector<32x64xf32>, vector<32x64xf32> -> vector<32x64xf32>
    %518 = arith.addf %512, %517 : vector<32x64xf32>
    %519 = vector.extract_strided_slice %441 {offsets = [0, 1, 0, 0], sizes = [2, 2, 8, 32], strides = [1, 1, 1, 1]} : vector<2x3x9x32xf32> to vector<2x2x8x32xf32>
    %520 = vector.shape_cast %519 : vector<2x2x8x32xf32> to vector<32x32xf32>
    %c9_198 = arith.constant 9 : index
    %c0_199 = arith.constant 0 : index
    %c0_200 = arith.constant 0 : index
    %521 = vector.load %arg8[%c9_198, %c0_199, %c0_200] : memref<16x32x64xf32, #tpu.memory_space<vmem>>, vector<1x32x64xf32>
    %522 = vector.shape_cast %521 : vector<1x32x64xf32> to vector<32x64xf32>
    %cst_201 = arith.constant dense<0.000000e+00> : vector<32x64xf32>
    %523 = tpu.matmul %520, %522, %cst_201 {dimension_numbers = #tpu.dot_dimension_numbers<[1], [0], [0], [1], [0, 0, 1, 1], [], []>} : vector<32x32xf32>, vector<32x64xf32>, vector<32x64xf32> -> vector<32x64xf32>
    %524 = arith.addf %518, %523 : vector<32x64xf32>
    %525 = vector.extract_strided_slice %431 {offsets = [0, 1, 1, 0], sizes = [2, 2, 8, 32], strides = [1, 1, 1, 1]} : vector<2x3x9x32xf32> to vector<2x2x8x32xf32>
    %526 = vector.shape_cast %525 : vector<2x2x8x32xf32> to vector<32x32xf32>
    %c10_202 = arith.constant 10 : index
    %c0_203 = arith.constant 0 : index
    %c0_204 = arith.constant 0 : index
    %527 = vector.load %arg8[%c10_202, %c0_203, %c0_204] : memref<16x32x64xf32, #tpu.memory_space<vmem>>, vector<1x32x64xf32>
    %528 = vector.shape_cast %527 : vector<1x32x64xf32> to vector<32x64xf32>
    %cst_205 = arith.constant dense<0.000000e+00> : vector<32x64xf32>
    %529 = tpu.matmul %526, %528, %cst_205 {dimension_numbers = #tpu.dot_dimension_numbers<[1], [0], [0], [1], [0, 0, 1, 1], [], []>} : vector<32x32xf32>, vector<32x64xf32>, vector<32x64xf32> -> vector<32x64xf32>
    %530 = arith.addf %524, %529 : vector<32x64xf32>
    %531 = vector.extract_strided_slice %441 {offsets = [0, 1, 1, 0], sizes = [2, 2, 8, 32], strides = [1, 1, 1, 1]} : vector<2x3x9x32xf32> to vector<2x2x8x32xf32>
    %532 = vector.shape_cast %531 : vector<2x2x8x32xf32> to vector<32x32xf32>
    %c11_206 = arith.constant 11 : index
    %c0_207 = arith.constant 0 : index
    %c0_208 = arith.constant 0 : index
    %533 = vector.load %arg8[%c11_206, %c0_207, %c0_208] : memref<16x32x64xf32, #tpu.memory_space<vmem>>, vector<1x32x64xf32>
    %534 = vector.shape_cast %533 : vector<1x32x64xf32> to vector<32x64xf32>
    %cst_209 = arith.constant dense<0.000000e+00> : vector<32x64xf32>
    %535 = tpu.matmul %532, %534, %cst_209 {dimension_numbers = #tpu.dot_dimension_numbers<[1], [0], [0], [1], [0, 0, 1, 1], [], []>} : vector<32x32xf32>, vector<32x64xf32>, vector<32x64xf32> -> vector<32x64xf32>
    %536 = arith.addf %530, %535 : vector<32x64xf32>
    %537 = vector.extract_strided_slice %453 {offsets = [0, 1, 0, 0], sizes = [2, 2, 8, 32], strides = [1, 1, 1, 1]} : vector<2x3x9x32xf32> to vector<2x2x8x32xf32>
    %538 = vector.shape_cast %537 : vector<2x2x8x32xf32> to vector<32x32xf32>
    %c12_210 = arith.constant 12 : index
    %c0_211 = arith.constant 0 : index
    %c0_212 = arith.constant 0 : index
    %539 = vector.load %arg8[%c12_210, %c0_211, %c0_212] : memref<16x32x64xf32, #tpu.memory_space<vmem>>, vector<1x32x64xf32>
    %540 = vector.shape_cast %539 : vector<1x32x64xf32> to vector<32x64xf32>
    %cst_213 = arith.constant dense<0.000000e+00> : vector<32x64xf32>
    %541 = tpu.matmul %538, %540, %cst_213 {dimension_numbers = #tpu.dot_dimension_numbers<[1], [0], [0], [1], [0, 0, 1, 1], [], []>} : vector<32x32xf32>, vector<32x64xf32>, vector<32x64xf32> -> vector<32x64xf32>
    %542 = arith.addf %536, %541 : vector<32x64xf32>
    %543 = vector.extract_strided_slice %463 {offsets = [0, 1, 0, 0], sizes = [2, 2, 8, 32], strides = [1, 1, 1, 1]} : vector<2x3x9x32xf32> to vector<2x2x8x32xf32>
    %544 = vector.shape_cast %543 : vector<2x2x8x32xf32> to vector<32x32xf32>
    %c13_214 = arith.constant 13 : index
    %c0_215 = arith.constant 0 : index
    %c0_216 = arith.constant 0 : index
    %545 = vector.load %arg8[%c13_214, %c0_215, %c0_216] : memref<16x32x64xf32, #tpu.memory_space<vmem>>, vector<1x32x64xf32>
    %546 = vector.shape_cast %545 : vector<1x32x64xf32> to vector<32x64xf32>
    %cst_217 = arith.constant dense<0.000000e+00> : vector<32x64xf32>
    %547 = tpu.matmul %544, %546, %cst_217 {dimension_numbers = #tpu.dot_dimension_numbers<[1], [0], [0], [1], [0, 0, 1, 1], [], []>} : vector<32x32xf32>, vector<32x64xf32>, vector<32x64xf32> -> vector<32x64xf32>
    %548 = arith.addf %542, %547 : vector<32x64xf32>
    %549 = vector.extract_strided_slice %453 {offsets = [0, 1, 1, 0], sizes = [2, 2, 8, 32], strides = [1, 1, 1, 1]} : vector<2x3x9x32xf32> to vector<2x2x8x32xf32>
    %550 = vector.shape_cast %549 : vector<2x2x8x32xf32> to vector<32x32xf32>
    %c14_218 = arith.constant 14 : index
    %c0_219 = arith.constant 0 : index
    %c0_220 = arith.constant 0 : index
    %551 = vector.load %arg8[%c14_218, %c0_219, %c0_220] : memref<16x32x64xf32, #tpu.memory_space<vmem>>, vector<1x32x64xf32>
    %552 = vector.shape_cast %551 : vector<1x32x64xf32> to vector<32x64xf32>
    %cst_221 = arith.constant dense<0.000000e+00> : vector<32x64xf32>
    %553 = tpu.matmul %550, %552, %cst_221 {dimension_numbers = #tpu.dot_dimension_numbers<[1], [0], [0], [1], [0, 0, 1, 1], [], []>} : vector<32x32xf32>, vector<32x64xf32>, vector<32x64xf32> -> vector<32x64xf32>
    %554 = arith.addf %548, %553 : vector<32x64xf32>
    %555 = vector.extract_strided_slice %463 {offsets = [0, 1, 1, 0], sizes = [2, 2, 8, 32], strides = [1, 1, 1, 1]} : vector<2x3x9x32xf32> to vector<2x2x8x32xf32>
    %556 = vector.shape_cast %555 : vector<2x2x8x32xf32> to vector<32x32xf32>
    %c15_222 = arith.constant 15 : index
    %c0_223 = arith.constant 0 : index
    %c0_224 = arith.constant 0 : index
    %557 = vector.load %arg8[%c15_222, %c0_223, %c0_224] : memref<16x32x64xf32, #tpu.memory_space<vmem>>, vector<1x32x64xf32>
    %558 = vector.shape_cast %557 : vector<1x32x64xf32> to vector<32x64xf32>
    %cst_225 = arith.constant dense<0.000000e+00> : vector<32x64xf32>
    %559 = tpu.matmul %556, %558, %cst_225 {dimension_numbers = #tpu.dot_dimension_numbers<[1], [0], [0], [1], [0, 0, 1, 1], [], []>} : vector<32x32xf32>, vector<32x64xf32>, vector<32x64xf32> -> vector<32x64xf32>
    %560 = arith.addf %554, %559 : vector<32x64xf32>
    %561 = tpu.iota {dimensions = array<i32: 0>} : vector<32x1xi32>
    %c8_i32_226 = arith.constant 8 : i32
    %c0_i32_227 = arith.constant 0 : i32
    %562 = arith.cmpi eq, %c8_i32_226, %c0_i32_227 : i32
    %c1_i32_228 = arith.constant 1 : i32
    %563 = arith.select %562, %c1_i32_228, %c8_i32_226 : i32
    %564 = vector.broadcast %563 : i32 to vector<32x1xi32>
    %565 = arith.remsi %561, %564 : vector<32x1xi32>
    %c0_i32_229 = arith.constant 0 : i32
    %566 = vector.broadcast %c0_i32_229 : i32 to vector<32x1xi32>
    %567 = arith.cmpi ne, %565, %566 : vector<32x1xi32>
    %c0_i32_230 = arith.constant 0 : i32
    %568 = vector.broadcast %c0_i32_230 : i32 to vector<32x1xi32>
    %569 = arith.cmpi slt, %565, %568 : vector<32x1xi32>
    %c0_i32_231 = arith.constant 0 : i32
    %570 = arith.cmpi slt, %563, %c0_i32_231 : i32
    %571 = vector.broadcast %570 : i1 to vector<32x1xi1>
    %572 = vector.broadcast %571 : vector<32x1xi1> to vector<32x1xi1>
    %573 = arith.xori %569, %572 : vector<32x1xi1>
    %574 = arith.andi %573, %567 : vector<32x1xi1>
    %575 = vector.broadcast %563 : i32 to vector<32x1xi32>
    %576 = arith.addi %565, %575 : vector<32x1xi32>
    %577 = arith.select %574, %576, %565 : vector<32x1xi1>, vector<32x1xi32>
    %c2_i32 = arith.constant 2 : i32
    %578 = vector.broadcast %c2_i32 : i32 to vector<32x1xi32>
    %579 = arith.cmpi slt, %577, %578 : vector<32x1xi32>
    %580 = arith.extui %579 : vector<32x1xi1> to vector<32x1xi32>
    %581 = arith.sitofp %580 : vector<32x1xi32> to vector<32x1xf32>
    %582 = vector.broadcast %581 : vector<32x1xf32> to vector<32x64xf32>
    %583 = arith.mulf %560, %582 : vector<32x64xf32>
    %cst_232 = arith.constant dense<0.000000e+00> : vector<64xf32>
    %584 = vector.multi_reduction <add>, %583, %cst_232 [0] : vector<32x64xf32> to vector<64xf32>
    %585 = vector.shape_cast %584 : vector<64xf32> to vector<1x64xf32>
    %cst_233 = arith.constant 8.000000e+00 : f32
    %586 = vector.broadcast %cst_233 : f32 to vector<1x64xf32>
    %587 = arith.divf %585, %586 : vector<1x64xf32>
    %588 = vector.broadcast %587 : vector<1x64xf32> to vector<32x64xf32>
    %589 = arith.subf %560, %588 : vector<32x64xf32>
    %590 = vector.broadcast %581 : vector<32x1xf32> to vector<32x64xf32>
    %591 = arith.mulf %589, %590 : vector<32x64xf32>
    %592 = arith.mulf %591, %591 : vector<32x64xf32>
    %cst_234 = arith.constant dense<0.000000e+00> : vector<64xf32>
    %593 = vector.multi_reduction <add>, %592, %cst_234 [0] : vector<32x64xf32> to vector<64xf32>
    %594 = vector.shape_cast %593 : vector<64xf32> to vector<1x64xf32>
    %cst_235 = arith.constant 8.000000e+00 : f32
    %595 = vector.broadcast %cst_235 : f32 to vector<1x64xf32>
    %596 = arith.divf %594, %595 : vector<1x64xf32>
    %597 = vector.broadcast %587 : vector<1x64xf32> to vector<32x64xf32>
    %598 = arith.subf %560, %597 : vector<32x64xf32>
    %cst_236 = arith.constant 9.99999974E-6 : f32
    %599 = vector.broadcast %cst_236 : f32 to vector<1x64xf32>
    %600 = arith.addf %596, %599 : vector<1x64xf32>
    %601 = math.rsqrt %600 : vector<1x64xf32>
    %602 = vector.broadcast %601 : vector<1x64xf32> to vector<32x64xf32>
    %603 = arith.mulf %598, %602 : vector<32x64xf32>
    %c0_237 = arith.constant 0 : index
    %c0_238 = arith.constant 0 : index
    %604 = vector.load %arg9[%c0_237, %c0_238] : memref<1x64xf32, #tpu.memory_space<vmem>>, vector<1x64xf32>
    %605 = vector.broadcast %604 : vector<1x64xf32> to vector<32x64xf32>
    %606 = arith.mulf %603, %605 : vector<32x64xf32>
    %c0_239 = arith.constant 0 : index
    %c0_240 = arith.constant 0 : index
    %607 = vector.load %arg10[%c0_239, %c0_240] : memref<1x64xf32, #tpu.memory_space<vmem>>, vector<1x64xf32>
    %608 = vector.broadcast %607 : vector<1x64xf32> to vector<32x64xf32>
    %609 = arith.addf %606, %608 : vector<32x64xf32>
    %cst_241 = arith.constant 0.000000e+00 : f32
    %610 = vector.broadcast %cst_241 : f32 to vector<32x64xf32>
    %611 = arith.cmpf oge, %609, %610 : vector<32x64xf32>
    %cst_242 = arith.constant 2.000000e-01 : f32
    %612 = vector.broadcast %cst_242 : f32 to vector<32x64xf32>
    %613 = arith.mulf %612, %609 : vector<32x64xf32>
    %614 = arith.select %611, %609, %613 : vector<32x64xi1>, vector<32x64xf32>
    %615 = vector.shape_cast %614 : vector<32x64xf32> to vector<2x2x8x64xf32>
    %616 = vector.extract_strided_slice %615 {offsets = [0, 0, 0, 0], sizes = [2, 2, 2, 64], strides = [1, 1, 1, 1]} : vector<2x2x8x64xf32> to vector<2x2x2x64xf32>
    %cst_243 = arith.constant 0.000000e+00 : f32
    %617 = vector.broadcast %cst_243 : f32 to vector<2x1x1x1xf32>
    %618 = vector.extract_strided_slice %616 {offsets = [0, 0, 0, 0], sizes = [2, 1, 1, 64], strides = [1, 1, 1, 1]} : vector<2x2x2x64xf32> to vector<2x1x1x64xf32>
    %c0_244 = arith.constant 0 : index
    %c0_245 = arith.constant 0 : index
    %c0_246 = arith.constant 0 : index
    %c0_247 = arith.constant 0 : index
    %c0_248 = arith.constant 0 : index
    %619 = vector.load %arg11[%c0_244, %c0_245, %c0_246, %c0_247, %c0_248] : memref<4x1x1x1x64xf32, #tpu.memory_space<vmem>>, vector<1x1x1x1x64xf32>
    %620 = vector.shape_cast %619 : vector<1x1x1x1x64xf32> to vector<1x1x1x64xf32>
    %621 = vector.broadcast %620 : vector<1x1x1x64xf32> to vector<2x1x1x64xf32>
    %622 = arith.mulf %618, %621 : vector<2x1x1x64xf32>
    %cst_249 = arith.constant dense<0.000000e+00> : vector<2x1x1xf32>
    %623 = vector.multi_reduction <add>, %622, %cst_249 [3] : vector<2x1x1x64xf32> to vector<2x1x1xf32>
    %624 = vector.shape_cast %623 : vector<2x1x1xf32> to vector<2x1x1x1xf32>
    %625 = arith.addf %617, %624 : vector<2x1x1x1xf32>
    %626 = vector.extract_strided_slice %616 {offsets = [0, 0, 1, 0], sizes = [2, 1, 1, 64], strides = [1, 1, 1, 1]} : vector<2x2x2x64xf32> to vector<2x1x1x64xf32>
    %c1_250 = arith.constant 1 : index
    %c0_251 = arith.constant 0 : index
    %c0_252 = arith.constant 0 : index
    %c0_253 = arith.constant 0 : index
    %c0_254 = arith.constant 0 : index
    %627 = vector.load %arg11[%c1_250, %c0_251, %c0_252, %c0_253, %c0_254] : memref<4x1x1x1x64xf32, #tpu.memory_space<vmem>>, vector<1x1x1x1x64xf32>
    %628 = vector.shape_cast %627 : vector<1x1x1x1x64xf32> to vector<1x1x1x64xf32>
    %629 = vector.broadcast %628 : vector<1x1x1x64xf32> to vector<2x1x1x64xf32>
    %630 = arith.mulf %626, %629 : vector<2x1x1x64xf32>
    %cst_255 = arith.constant dense<0.000000e+00> : vector<2x1x1xf32>
    %631 = vector.multi_reduction <add>, %630, %cst_255 [3] : vector<2x1x1x64xf32> to vector<2x1x1xf32>
    %632 = vector.shape_cast %631 : vector<2x1x1xf32> to vector<2x1x1x1xf32>
    %633 = arith.addf %625, %632 : vector<2x1x1x1xf32>
    %634 = vector.extract_strided_slice %616 {offsets = [0, 1, 0, 0], sizes = [2, 1, 1, 64], strides = [1, 1, 1, 1]} : vector<2x2x2x64xf32> to vector<2x1x1x64xf32>
    %c2_256 = arith.constant 2 : index
    %c0_257 = arith.constant 0 : index
    %c0_258 = arith.constant 0 : index
    %c0_259 = arith.constant 0 : index
    %c0_260 = arith.constant 0 : index
    %635 = vector.load %arg11[%c2_256, %c0_257, %c0_258, %c0_259, %c0_260] : memref<4x1x1x1x64xf32, #tpu.memory_space<vmem>>, vector<1x1x1x1x64xf32>
    %636 = vector.shape_cast %635 : vector<1x1x1x1x64xf32> to vector<1x1x1x64xf32>
    %637 = vector.broadcast %636 : vector<1x1x1x64xf32> to vector<2x1x1x64xf32>
    %638 = arith.mulf %634, %637 : vector<2x1x1x64xf32>
    %cst_261 = arith.constant dense<0.000000e+00> : vector<2x1x1xf32>
    %639 = vector.multi_reduction <add>, %638, %cst_261 [3] : vector<2x1x1x64xf32> to vector<2x1x1xf32>
    %640 = vector.shape_cast %639 : vector<2x1x1xf32> to vector<2x1x1x1xf32>
    %641 = arith.addf %633, %640 : vector<2x1x1x1xf32>
    %642 = vector.extract_strided_slice %616 {offsets = [0, 1, 1, 0], sizes = [2, 1, 1, 64], strides = [1, 1, 1, 1]} : vector<2x2x2x64xf32> to vector<2x1x1x64xf32>
    %c3_262 = arith.constant 3 : index
    %c0_263 = arith.constant 0 : index
    %c0_264 = arith.constant 0 : index
    %c0_265 = arith.constant 0 : index
    %c0_266 = arith.constant 0 : index
    %643 = vector.load %arg11[%c3_262, %c0_263, %c0_264, %c0_265, %c0_266] : memref<4x1x1x1x64xf32, #tpu.memory_space<vmem>>, vector<1x1x1x1x64xf32>
    %644 = vector.shape_cast %643 : vector<1x1x1x1x64xf32> to vector<1x1x1x64xf32>
    %645 = vector.broadcast %644 : vector<1x1x1x64xf32> to vector<2x1x1x64xf32>
    %646 = arith.mulf %642, %645 : vector<2x1x1x64xf32>
    %cst_267 = arith.constant dense<0.000000e+00> : vector<2x1x1xf32>
    %647 = vector.multi_reduction <add>, %646, %cst_267 [3] : vector<2x1x1x64xf32> to vector<2x1x1xf32>
    %648 = vector.shape_cast %647 : vector<2x1x1xf32> to vector<2x1x1x1xf32>
    %649 = arith.addf %641, %648 : vector<2x1x1x1xf32>
    %650 = arith.negf %649 : vector<2x1x1x1xf32>
    %651 = math.exp %650 : vector<2x1x1x1xf32>
    %cst_268 = arith.constant 1.000000e+00 : f32
    %652 = vector.broadcast %cst_268 : f32 to vector<2x1x1x1xf32>
    %653 = arith.addf %652, %651 : vector<2x1x1x1xf32>
    %654 = arith.divf %652, %653 : vector<2x1x1x1xf32>
    %c0_269 = arith.constant 0 : index
    %c0_270 = arith.constant 0 : index
    %c0_271 = arith.constant 0 : index
    %c0_272 = arith.constant 0 : index
    %655 = vector.load %arg12[%c0_269, %c0_270, %c0_271, %c0_272] : memref<2x1x1x1xf32, #tpu.memory_space<vmem>>, vector<2x1x1x1xf32>
    tpu.vector_store %arg12[%c0_269, %c0_270, %c0_271, %c0_272], %654 {strides = array<i32>} : memref<2x1x1x1xf32, #tpu.memory_space<vmem>>, vector<2x1x1x1xf32>,
    return
  }
}

</mosaic_0001>

<llo_original>
// kernel: forward.1
$region0: #{forward.1}
  #allocation0 [shape = 'u32[]', space=smem, size = 0x4, offset = 0x4, fixed_abs, tag = 'smem constant byte address 0x4 - core index']
  #allocation1 [shape = 'u32[72,128]{1,0:T(1,128)}', space=vmem, size = 0x9000, scoped, tag = 'internal scratch']
  %s0 = inlined_call_operand.vmem [shape: f32[512,16], index: 0, kind: input, shape index: {}]
  %s1 = inlined_call_operand.vmem [shape: f32[16,8], index: 1, kind: input, shape index: {}]
  %s2 = inlined_call_operand.vmem [shape: f32[16,8,16], index: 2, kind: input, shape index: {}]
  %s3 = inlined_call_operand.vmem [shape: f32[1,16], index: 3, kind: input, shape index: {}]
  %s4 = inlined_call_operand.vmem [shape: f32[1,16], index: 4, kind: input, shape index: {}]
  %s5 = inlined_call_operand.vmem [shape: f32[16,16,32], index: 5, kind: input, shape index: {}]
  %s6 = inlined_call_operand.vmem [shape: f32[1,32], index: 6, kind: input, shape index: {}]
  %s7 = inlined_call_operand.vmem [shape: f32[1,32], index: 7, kind: input, shape index: {}]
  %s8 = inlined_call_operand.vmem [shape: f32[16,32,64], index: 8, kind: input, shape index: {}]
  %s9 = inlined_call_operand.vmem [shape: f32[1,64], index: 9, kind: input, shape index: {}]
  %s10 = inlined_call_operand.vmem [shape: f32[1,64], index: 10, kind: input, shape index: {}]
  %s11 = inlined_call_operand.vmem [shape: f32[4,1,1,1,64], index: 11, kind: input, shape index: {}]
  %s12 = inlined_call_operand.vmem [shape: f32[2,1,1,1], index: 12, kind: output, shape index: {}]
  %s13 = sld [smem:[#allocation0]]
  $region58: #{forward.1} parent=0
    _
  %s15 = ssub.s32 1, %s13
  %s16 = scalar_select 0, %s15, %s13
  // Predicated region
  $region2: #{forward.1} parent=0 // pred_check
    _
  $region3: #{forward.1} parent=0 // pred_check_branch
    %18 = sbr.rel (0) target = $region5
  $region4: #{forward.1} parent=0 // pred_region
    _
  $region5: #{forward.1} parent=0 // pred_fallthru
    _
  // Predicated region
  $region6: #{forward.1} parent=0 // pred_check
    _
  $region7: #{forward.1} parent=0 // pred_check_branch
    %20 = sbr.rel (0) target = $region9
  $region8: #{forward.1} parent=0 // pred_region
    _
  $region9: #{forward.1} parent=0 // pred_fallthru
    _
  // Predicated region
  $region10: #{forward.1} parent=0 // pred_check
    _
  $region11: #{forward.1} parent=0 // pred_check_branch
    %22 = sbr.rel (0) target = $region13
  $region12: #{forward.1} parent=0 // pred_region
    _
  $region13: #{forward.1} parent=0 // pred_fallthru
    _
  // Predicated region
  $region14: #{forward.1} parent=0 // pred_check
    _
  $region15: #{forward.1} parent=0 // pred_check_branch
    %24 = sbr.rel (0) target = $region17
  $region16: #{forward.1} parent=0 // pred_region
    _
  $region17: #{forward.1} parent=0 // pred_fallthru
    _
  // Predicated region
  $region18: #{forward.1} parent=0 // pred_check
    _
  $region19: #{forward.1} parent=0 // pred_check_branch
    %26 = sbr.rel (0) target = $region21
  $region20: #{forward.1} parent=0 // pred_region
    _
  $region21: #{forward.1} parent=0 // pred_fallthru
    _
  // Predicated region
  $region22: #{forward.1} parent=0 // pred_check
    _
  $region23: #{forward.1} parent=0 // pred_check_branch
    %28 = sbr.rel (0) target = $region25
  $region24: #{forward.1} parent=0 // pred_region
    _
  $region25: #{forward.1} parent=0 // pred_fallthru
    _
  // Predicated region
  $region26: #{forward.1} parent=0 // pred_check
    _
  $region27: #{forward.1} parent=0 // pred_check_branch
    %30 = sbr.rel (0) target = $region29
  $region28: #{forward.1} parent=0 // pred_region
    _
  $region29: #{forward.1} parent=0 // pred_fallthru
    _
  // Predicated region
  $region30: #{forward.1} parent=0 // pred_check
    _
  $region31: #{forward.1} parent=0 // pred_check_branch
    %32 = sbr.rel (0) target = $region33
  $region32: #{forward.1} parent=0 // pred_region
    _
  $region33: #{forward.1} parent=0 // pred_fallthru
    _
  // Predicated region
  $region34: #{forward.1} parent=0 // pred_check
    _
  $region35: #{forward.1} parent=0 // pred_check_branch
    %34 = sbr.rel (0) target = $region37
  $region36: #{forward.1} parent=0 // pred_region
    _
  $region37: #{forward.1} parent=0 // pred_fallthru
    _
  // Predicated region
  $region38: #{forward.1} parent=0 // pred_check
    _
  $region39: #{forward.1} parent=0 // pred_check_branch
    %36 = sbr.rel (0) target = $region41
  $region40: #{forward.1} parent=0 // pred_region
    _
  $region41: #{forward.1} parent=0 // pred_fallthru
    _
  // Predicated region
  $region42: #{forward.1} parent=0 // pred_check
    _
  $region43: #{forward.1} parent=0 // pred_check_branch
    %38 = sbr.rel (0) target = $region45
  $region44: #{forward.1} parent=0 // pred_region
    _
  $region45: #{forward.1} parent=0 // pred_fallthru
    _
  // Predicated region
  $region46: #{forward.1} parent=0 // pred_check
    _
  $region47: #{forward.1} parent=0 // pred_check_branch
    %40 = sbr.rel (0) target = $region49
  $region48: #{forward.1} parent=0 // pred_region
    _
  $region49: #{forward.1} parent=0 // pred_fallthru
    _
  %v41 = vld [vmem:[%s0] sm:$0xff]
  %v42 = vld [vmem:[%s0 + $0x8] sm:$0xff]
  %v43 = vld [vmem:[%s0 + $0x10] sm:$0xff]
  %v44 = vld [vmem:[%s0 + $0x18] sm:$0xff]
  %v45 = vld [vmem:[%s0 + $0x20] sm:$0xff]
  %v46 = vld [vmem:[%s0 + $0x28] sm:$0xff]
  %v47 = vld [vmem:[%s0 + $0x30] sm:$0xff]
  %v48 = vld [vmem:[%s0 + $0x38] sm:$0xff]
  %v49 = vld [vmem:[%s0 + $0x40] sm:$0xff]
  %v50 = vld [vmem:[%s0 + $0x48] sm:$0xff]
  %v51 = vld [vmem:[%s0 + $0x50] sm:$0xff]
  %v52 = vld [vmem:[%s0 + $0x58] sm:$0xff]
  %v53 = vld [vmem:[%s0 + $0x60] sm:$0xff]
  %v54 = vld [vmem:[%s0 + $0x68] sm:$0xff]
  %v55 = vld [vmem:[%s0 + $0x70] sm:$0xff]
  %v56 = vld [vmem:[%s0 + $0x78] sm:$0xff]
  %v57 = vld [vmem:[%s0 + $0x80] sm:$0xff]
  %v58 = vld [vmem:[%s0 + $0x88] sm:$0xff]
  %v59 = vld [vmem:[%s0 + $0x90] sm:$0xff]
  %v60 = vld [vmem:[%s0 + $0x98] sm:$0xff]
  %v61 = vld [vmem:[%s0 + $0xa0] sm:$0xff]
  %v62 = vld [vmem:[%s0 + $0xa8] sm:$0xff]
  %v63 = vld [vmem:[%s0 + $0xb0] sm:$0xff]
  %v64 = vld [vmem:[%s0 + $0xb8] sm:$0xff]
  %v65 = vld [vmem:[%s0 + $0xc0] sm:$0xff]
  %v66 = vld [vmem:[%s0 + $0xc8] sm:$0xff]
  %v67 = vld [vmem:[%s0 + $0xd0] sm:$0xff]
  %v68 = vld [vmem:[%s0 + $0xd8] sm:$0xff]
  %v69 = vld [vmem:[%s0 + $0xe0] sm:$0xff]
  %v70 = vld [vmem:[%s0 + $0xe8] sm:$0xff]
  %v71 = vld [vmem:[%s0 + $0xf0] sm:$0xff]
  %v72 = vld [vmem:[%s0 + $0xf8] sm:$0xff]
  %v73 = vld [vmem:[%s0 + $0x100] sm:$0xff]
  %v74 = vld [vmem:[%s0 + $0x108] sm:$0xff]
  %v75 = vld [vmem:[%s0 + $0x110] sm:$0xff]
  %v76 = vld [vmem:[%s0 + $0x118] sm:$0xff]
  %v77 = vld [vmem:[%s0 + $0x120] sm:$0xff]
  %v78 = vld [vmem:[%s0 + $0x128] sm:$0xff]
  %v79 = vld [vmem:[%s0 + $0x130] sm:$0xff]
  %v80 = vld [vmem:[%s0 + $0x138] sm:$0xff]
  %v81 = vld [vmem:[%s0 + $0x140] sm:$0xff]
  %v82 = vld [vmem:[%s0 + $0x148] sm:$0xff]
  %v83 = vld [vmem:[%s0 + $0x150] sm:$0xff]
  %v84 = vld [vmem:[%s0 + $0x158] sm:$0xff]
  %v85 = vld [vmem:[%s0 + $0x160] sm:$0xff]
  %v86 = vld [vmem:[%s0 + $0x168] sm:$0xff]
  %v87 = vld [vmem:[%s0 + $0x170] sm:$0xff]
  %v88 = vld [vmem:[%s0 + $0x178] sm:$0xff]
  %v89 = vld [vmem:[%s0 + $0x180] sm:$0xff]
  %v90 = vld [vmem:[%s0 + $0x188] sm:$0xff]
  %v91 = vld [vmem:[%s0 + $0x190] sm:$0xff]
  %v92 = vld [vmem:[%s0 + $0x198] sm:$0xff]
  %v93 = vld [vmem:[%s0 + $0x1a0] sm:$0xff]
  %v94 = vld [vmem:[%s0 + $0x1a8] sm:$0xff]
  %v95 = vld [vmem:[%s0 + $0x1b0] sm:$0xff]
  %v96 = vld [vmem:[%s0 + $0x1b8] sm:$0xff]
  %v97 = vld [vmem:[%s0 + $0x1c0] sm:$0xff]
  %v98 = vld [vmem:[%s0 + $0x1c8] sm:$0xff]
  %v99 = vld [vmem:[%s0 + $0x1d0] sm:$0xff]
  %v100 = vld [vmem:[%s0 + $0x1d8] sm:$0xff]
  %v101 = vld [vmem:[%s0 + $0x1e0] sm:$0xff]
  %v102 = vld [vmem:[%s0 + $0x1e8] sm:$0xff]
  %v103 = vld [vmem:[%s0 + $0x1f0] sm:$0xff]
  %v104 = vld [vmem:[%s0 + $0x1f8] sm:$0xff]
  %v105 = vld [vmem:[%s1] sm:$0xff]
  %v106 = vld [vmem:[%s1 + $0x8] sm:$0xff]
  %vm107 = vcmask 130048
  %v109 = vsel %vm107, %v41, 0
  %v112 = vsel %vm107, %v42, 0
  %v115 = vsel %vm107, %v43, 0
  %v118 = vsel %vm107, %v44, 0
  %v121 = vsel %vm107, %v45, 0
  %v124 = vsel %vm107, %v46, 0
  %v127 = vsel %vm107, %v47, 0
  %v130 = vsel %vm107, %v48, 0
  %v133 = vsel %vm107, %v49, 0
  %v136 = vsel %vm107, %v50, 0
  %v139 = vsel %vm107, %v51, 0
  %v142 = vsel %vm107, %v52, 0
  %v145 = vsel %vm107, %v53, 0
  %v148 = vsel %vm107, %v54, 0
  %v151 = vsel %vm107, %v55, 0
  %v154 = vsel %vm107, %v56, 0
  %v157 = vsel %vm107, %v57, 0
  %v160 = vsel %vm107, %v58, 0
  %v163 = vsel %vm107, %v59, 0
  %v166 = vsel %vm107, %v60, 0
  %v169 = vsel %vm107, %v61, 0
  %v172 = vsel %vm107, %v62, 0
  %v175 = vsel %vm107, %v63, 0
  %v178 = vsel %vm107, %v64, 0
  %v181 = vsel %vm107, %v65, 0
  %v184 = vsel %vm107, %v66, 0
  %v187 = vsel %vm107, %v67, 0
  %v190 = vsel %vm107, %v68, 0
  %v193 = vsel %vm107, %v69, 0
  %v196 = vsel %vm107, %v70, 0
  %v199 = vsel %vm107, %v71, 0
  %v202 = vsel %vm107, %v72, 0
  %v205 = vsel %vm107, %v73, 0
  %v208 = vsel %vm107, %v74, 0
  %v211 = vsel %vm107, %v75, 0
  %v214 = vsel %vm107, %v76, 0
  %v217 = vsel %vm107, %v77, 0
  %v220 = vsel %vm107, %v78, 0
  %v223 = vsel %vm107, %v79, 0
  %v226 = vsel %vm107, %v80, 0
  %v229 = vsel %vm107, %v81, 0
  %v232 = vsel %vm107, %v82, 0
  %v235 = vsel %vm107, %v83, 0
  %v238 = vsel %vm107, %v84, 0
  %v241 = vsel %vm107, %v85, 0
  %v244 = vsel %vm107, %v86, 0
  %v247 = vsel %vm107, %v87, 0
  %v250 = vsel %vm107, %v88, 0
  %v253 = vsel %vm107, %v89, 0
  %v256 = vsel %vm107, %v90, 0
  %v259 = vsel %vm107, %v91, 0
  %v262 = vsel %vm107, %v92, 0
  %v265 = vsel %vm107, %v93, 0
  %v268 = vsel %vm107, %v94, 0
  %v271 = vsel %vm107, %v95, 0
  %v274 = vsel %vm107, %v96, 0
  %v277 = vsel %vm107, %v97, 0
  %v280 = vsel %vm107, %v98, 0
  %v283 = vsel %vm107, %v99, 0
  %v286 = vsel %vm107, %v100, 0
  %v289 = vsel %vm107, %v101, 0
  %v292 = vsel %vm107, %v102, 0
  %v295 = vsel %vm107, %v103, 0
  %v298 = vsel %vm107, %v104, 0
  %300 = vmatpush.msra.mxu0 0.0
  %301 = vmatpush.msra.mxu0 0.0
  %302 = vmatpush.msra.mxu0 0.0
  %303 = vmatpush.msra.mxu0 0.0
  %304 = vmatpush.msra.mxu0 0.0
  %305 = vmatpush.msra.mxu0 0.0
  %306 = vmatpush.msra.mxu0 0.0
  %307 = vmatpush.msra.mxu0 0.0
  %308 = vmatpush.msra.mxu0 0.0
  %309 = vmatpush.msra.mxu0 0.0
  %310 = vmatpush.msra.mxu0 0.0
  %311 = vmatpush.msra.mxu0 0.0
  %312 = vmatpush.msra.mxu0 0.0
  %313 = vmatpush.msra.mxu0 0.0
  %314 = vmatpush.msra.mxu0 %v106
  %315 = vmatpush.msra.mxu0 %v105
  %316 = vmatmul.f32.gmra.mxu0 %v109
  %v317 = vpop.f32.mrf.mxu0
  %v318 = vadd.f32 0.0, %v317
  %319 = vmatmul.f32.gmra.mxu0 %v112
  %v320 = vpop.f32.mrf.mxu0
  %v321 = vadd.f32 0.0, %v320
  %322 = vmatmul.f32.gmra.mxu0 %v115
  %v323 = vpop.f32.mrf.mxu0
  %v324 = vadd.f32 0.0, %v323
  %325 = vmatmul.f32.gmra.mxu0 %v118
  %v326 = vpop.f32.mrf.mxu0
  %v327 = vadd.f32 0.0, %v326
  %328 = vmatmul.f32.gmra.mxu0 %v121
  %v329 = vpop.f32.mrf.mxu0
  %v330 = vadd.f32 0.0, %v329
  %331 = vmatmul.f32.gmra.mxu0 %v124
  %v332 = vpop.f32.mrf.mxu0
  %v333 = vadd.f32 0.0, %v332
  %334 = vmatmul.f32.gmra.mxu0 %v127
  %v335 = vpop.f32.mrf.mxu0
  %v336 = vadd.f32 0.0, %v335
  %337 = vmatmul.f32.gmra.mxu0 %v130
  %v338 = vpop.f32.mrf.mxu0
  %v339 = vadd.f32 0.0, %v338
  %340 = vmatmul.f32.gmra.mxu0 %v133
  %v341 = vpop.f32.mrf.mxu0
  %v342 = vadd.f32 0.0, %v341
  %343 = vmatmul.f32.gmra.mxu0 %v136
  %v344 = vpop.f32.mrf.mxu0
  %v345 = vadd.f32 0.0, %v344
  %346 = vmatmul.f32.gmra.mxu0 %v139
  %v347 = vpop.f32.mrf.mxu0
  %v348 = vadd.f32 0.0, %v347
  %349 = vmatmul.f32.gmra.mxu0 %v142
  %v350 = vpop.f32.mrf.mxu0
  %v351 = vadd.f32 0.0, %v350
  %352 = vmatmul.f32.gmra.mxu0 %v145
  %v353 = vpop.f32.mrf.mxu0
  %v354 = vadd.f32 0.0, %v353
  %355 = vmatmul.f32.gmra.mxu0 %v148
  %v356 = vpop.f32.mrf.mxu0
  %v357 = vadd.f32 0.0, %v356
  %358 = vmatmul.f32.gmra.mxu0 %v151
  %v359 = vpop.f32.mrf.mxu0
  %v360 = vadd.f32 0.0, %v359
  %361 = vmatmul.f32.gmra.mxu0 %v154
  %v362 = vpop.f32.mrf.mxu0
  %v363 = vadd.f32 0.0, %v362
  %364 = vmatmul.f32.gmra.mxu0 %v157
  %v365 = vpop.f32.mrf.mxu0
  %v366 = vadd.f32 0.0, %v365
  %367 = vmatmul.f32.gmra.mxu0 %v160
  %v368 = vpop.f32.mrf.mxu0
  %v369 = vadd.f32 0.0, %v368
  %370 = vmatmul.f32.gmra.mxu0 %v163
  %v371 = vpop.f32.mrf.mxu0
  %v372 = vadd.f32 0.0, %v371
  %373 = vmatmul.f32.gmra.mxu0 %v166
  %v374 = vpop.f32.mrf.mxu0
  %v375 = vadd.f32 0.0, %v374
  %376 = vmatmul.f32.gmra.mxu0 %v169
  %v377 = vpop.f32.mrf.mxu0
  %v378 = vadd.f32 0.0, %v377
  %379 = vmatmul.f32.gmra.mxu0 %v172
  %v380 = vpop.f32.mrf.mxu0
  %v381 = vadd.f32 0.0, %v380
  %382 = vmatmul.f32.gmra.mxu0 %v175
  %v383 = vpop.f32.mrf.mxu0
  %v384 = vadd.f32 0.0, %v383
  %385 = vmatmul.f32.gmra.mxu0 %v178
  %v386 = vpop.f32.mrf.mxu0
  %v387 = vadd.f32 0.0, %v386
  %388 = vmatmul.f32.gmra.mxu0 %v181
  %v389 = vpop.f32.mrf.mxu0
  %v390 = vadd.f32 0.0, %v389
  %391 = vmatmul.f32.gmra.mxu0 %v184
  %v392 = vpop.f32.mrf.mxu0
  %v393 = vadd.f32 0.0, %v392
  %394 = vmatmul.f32.gmra.mxu0 %v187
  %v395 = vpop.f32.mrf.mxu0
  %v396 = vadd.f32 0.0, %v395
  %397 = vmatmul.f32.gmra.mxu0 %v190
  %v398 = vpop.f32.mrf.mxu0
  %v399 = vadd.f32 0.0, %v398
  %400 = vmatmul.f32.gmra.mxu0 %v193
  %v401 = vpop.f32.mrf.mxu0
  %v402 = vadd.f32 0.0, %v401
  %403 = vmatmul.f32.gmra.mxu0 %v196
  %v404 = vpop.f32.mrf.mxu0
  %v405 = vadd.f32 0.0, %v404
  %406 = vmatmul.f32.gmra.mxu0 %v199
  %v407 = vpop.f32.mrf.mxu0
  %v408 = vadd.f32 0.0, %v407
  %409 = vmatmul.f32.gmra.mxu0 %v202
  %v410 = vpop.f32.mrf.mxu0
  %v411 = vadd.f32 0.0, %v410
  %412 = vmatmul.f32.gmra.mxu0 %v205
  %v413 = vpop.f32.mrf.mxu0
  %v414 = vadd.f32 0.0, %v413
  %415 = vmatmul.f32.gmra.mxu0 %v208
  %v416 = vpop.f32.mrf.mxu0
  %v417 = vadd.f32 0.0, %v416
  %418 = vmatmul.f32.gmra.mxu0 %v211
  %v419 = vpop.f32.mrf.mxu0
  %v420 = vadd.f32 0.0, %v419
  %421 = vmatmul.f32.gmra.mxu0 %v214
  %v422 = vpop.f32.mrf.mxu0
  %v423 = vadd.f32 0.0, %v422
  %424 = vmatmul.f32.gmra.mxu0 %v217
  %v425 = vpop.f32.mrf.mxu0
  %v426 = vadd.f32 0.0, %v425
  %427 = vmatmul.f32.gmra.mxu0 %v220
  %v428 = vpop.f32.mrf.mxu0
  %v429 = vadd.f32 0.0, %v428
  %430 = vmatmul.f32.gmra.mxu0 %v223
  %v431 = vpop.f32.mrf.mxu0
  %v432 = vadd.f32 0.0, %v431
  %433 = vmatmul.f32.gmra.mxu0 %v226
  %v434 = vpop.f32.mrf.mxu0
  %v435 = vadd.f32 0.0, %v434
  %436 = vmatmul.f32.gmra.mxu0 %v229
  %v437 = vpop.f32.mrf.mxu0
  %v438 = vadd.f32 0.0, %v437
  %439 = vmatmul.f32.gmra.mxu0 %v232
  %v440 = vpop.f32.mrf.mxu0
  %v441 = vadd.f32 0.0, %v440
  %442 = vmatmul.f32.gmra.mxu0 %v235
  %v443 = vpop.f32.mrf.mxu0
  %v444 = vadd.f32 0.0, %v443
  %445 = vmatmul.f32.gmra.mxu0 %v238
  %v446 = vpop.f32.mrf.mxu0
  %v447 = vadd.f32 0.0, %v446
  %448 = vmatmul.f32.gmra.mxu0 %v241
  %v449 = vpop.f32.mrf.mxu0
  %v450 = vadd.f32 0.0, %v449
  %451 = vmatmul.f32.gmra.mxu0 %v244
  %v452 = vpop.f32.mrf.mxu0
  %v453 = vadd.f32 0.0, %v452
  %454 = vmatmul.f32.gmra.mxu0 %v247
  %v455 = vpop.f32.mrf.mxu0
  %v456 = vadd.f32 0.0, %v455
  %457 = vmatmul.f32.gmra.mxu0 %v250
  %v458 = vpop.f32.mrf.mxu0
  %v459 = vadd.f32 0.0, %v458
  %460 = vmatmul.f32.gmra.mxu0 %v253
  %v461 = vpop.f32.mrf.mxu0
  %v462 = vadd.f32 0.0, %v461
  %463 = vmatmul.f32.gmra.mxu0 %v256
  %v464 = vpop.f32.mrf.mxu0
  %v465 = vadd.f32 0.0, %v464
  %466 = vmatmul.f32.gmra.mxu0 %v259
  %v467 = vpop.f32.mrf.mxu0
  %v468 = vadd.f32 0.0, %v467
  %469 = vmatmul.f32.gmra.mxu0 %v262
  %v470 = vpop.f32.mrf.mxu0
  %v471 = vadd.f32 0.0, %v470
  %472 = vmatmul.f32.gmra.mxu0 %v265
  %v473 = vpop.f32.mrf.mxu0
  %v474 = vadd.f32 0.0, %v473
  %475 = vmatmul.f32.gmra.mxu0 %v268
  %v476 = vpop.f32.mrf.mxu0
  %v477 = vadd.f32 0.0, %v476
  %478 = vmatmul.f32.gmra.mxu0 %v271
  %v479 = vpop.f32.mrf.mxu0
  %v480 = vadd.f32 0.0, %v479
  %481 = vmatmul.f32.gmra.mxu0 %v274
  %v482 = vpop.f32.mrf.mxu0
  %v483 = vadd.f32 0.0, %v482
  %484 = vmatmul.f32.gmra.mxu0 %v277
  %v485 = vpop.f32.mrf.mxu0
  %v486 = vadd.f32 0.0, %v485
  %487 = vmatmul.f32.gmra.mxu0 %v280
  %v488 = vpop.f32.mrf.mxu0
  %v489 = vadd.f32 0.0, %v488
  %490 = vmatmul.f32.gmra.mxu0 %v283
  %v491 = vpop.f32.mrf.mxu0
  %v492 = vadd.f32 0.0, %v491
  %493 = vmatmul.f32.gmra.mxu0 %v286
  %v494 = vpop.f32.mrf.mxu0
  %v495 = vadd.f32 0.0, %v494
  %496 = vmatmul.f32.gmra.mxu0 %v289
  %v497 = vpop.f32.mrf.mxu0
  %v498 = vadd.f32 0.0, %v497
  %499 = vmatmul.f32.gmra.mxu0 %v292
  %v500 = vpop.f32.mrf.mxu0
  %v501 = vadd.f32 0.0, %v500
  %502 = vmatmul.f32.gmra.mxu0 %v295
  %v503 = vpop.f32.mrf.mxu0
  %v504 = vadd.f32 0.0, %v503
  %505 = vmatmul.f32.gmra.mxu0 %v298
  %v506 = vpop.f32.mrf.mxu0
  %v507 = vadd.f32 0.0, %v506
  %508 = vdwg.mxu0
  %vm509 = vcmp.ge.f32.partialorder %v318, 0.0
  %vm510 = vcmp.ge.f32.partialorder %v321, 0.0
  %vm511 = vcmp.ge.f32.partialorder %v324, 0.0
  %vm512 = vcmp.ge.f32.partialorder %v327, 0.0
  %vm513 = vcmp.ge.f32.partialorder %v330, 0.0
  %vm514 = vcmp.ge.f32.partialorder %v333, 0.0
  %vm515 = vcmp.ge.f32.partialorder %v336, 0.0
  %vm516 = vcmp.ge.f32.partialorder %v339, 0.0
  %vm517 = vcmp.ge.f32.partialorder %v342, 0.0
  %vm518 = vcmp.ge.f32.partialorder %v345, 0.0
  %vm519 = vcmp.ge.f32.partialorder %v348, 0.0
  %vm520 = vcmp.ge.f32.partialorder %v351, 0.0
  %vm521 = vcmp.ge.f32.partialorder %v354, 0.0
  %vm522 = vcmp.ge.f32.partialorder %v357, 0.0
  %vm523 = vcmp.ge.f32.partialorder %v360, 0.0
  %vm524 = vcmp.ge.f32.partialorder %v363, 0.0
  %vm525 = vcmp.ge.f32.partialorder %v366, 0.0
  %vm526 = vcmp.ge.f32.partialorder %v369, 0.0
  %vm527 = vcmp.ge.f32.partialorder %v372, 0.0
  %vm528 = vcmp.ge.f32.partialorder %v375, 0.0
  %vm529 = vcmp.ge.f32.partialorder %v378, 0.0
  %vm530 = vcmp.ge.f32.partialorder %v381, 0.0
  %vm531 = vcmp.ge.f32.partialorder %v384, 0.0
  %vm532 = vcmp.ge.f32.partialorder %v387, 0.0
  %vm533 = vcmp.ge.f32.partialorder %v390, 0.0
  %vm534 = vcmp.ge.f32.partialorder %v393, 0.0
  %vm535 = vcmp.ge.f32.partialorder %v396, 0.0
  %vm536 = vcmp.ge.f32.partialorder %v399, 0.0
  %vm537 = vcmp.ge.f32.partialorder %v402, 0.0
  %vm538 = vcmp.ge.f32.partialorder %v405, 0.0
  %vm539 = vcmp.ge.f32.partialorder %v408, 0.0
  %vm540 = vcmp.ge.f32.partialorder %v411, 0.0
  %vm541 = vcmp.ge.f32.partialorder %v414, 0.0
  %vm542 = vcmp.ge.f32.partialorder %v417, 0.0
  %vm543 = vcmp.ge.f32.partialorder %v420, 0.0
  %vm544 = vcmp.ge.f32.partialorder %v423, 0.0
  %vm545 = vcmp.ge.f32.partialorder %v426, 0.0
  %vm546 = vcmp.ge.f32.partialorder %v429, 0.0
  %vm547 = vcmp.ge.f32.partialorder %v432, 0.0
  %vm548 = vcmp.ge.f32.partialorder %v435, 0.0
  %vm549 = vcmp.ge.f32.partialorder %v438, 0.0
  %vm550 = vcmp.ge.f32.partialorder %v441, 0.0
  %vm551 = vcmp.ge.f32.partialorder %v444, 0.0
  %vm552 = vcmp.ge.f32.partialorder %v447, 0.0
  %vm553 = vcmp.ge.f32.partialorder %v450, 0.0
  %vm554 = vcmp.ge.f32.partialorder %v453, 0.0
  %vm555 = vcmp.ge.f32.partialorder %v456, 0.0
  %vm556 = vcmp.ge.f32.partialorder %v459, 0.0
  %vm557 = vcmp.ge.f32.partialorder %v462, 0.0
  %vm558 = vcmp.ge.f32.partialorder %v465, 0.0
  %vm559 = vcmp.ge.f32.partialorder %v468, 0.0
  %vm560 = vcmp.ge.f32.partialorder %v471, 0.0
  %vm561 = vcmp.ge.f32.partialorder %v474, 0.0
  %vm562 = vcmp.ge.f32.partialorder %v477, 0.0
  %vm563 = vcmp.ge.f32.partialorder %v480, 0.0
  %vm564 = vcmp.ge.f32.partialorder %v483, 0.0
  %vm565 = vcmp.ge.f32.partialorder %v486, 0.0
  %vm566 = vcmp.ge.f32.partialorder %v489, 0.0
  %vm567 = vcmp.ge.f32.partialorder %v492, 0.0
  %vm568 = vcmp.ge.f32.partialorder %v495, 0.0
  %vm569 = vcmp.ge.f32.partialorder %v498, 0.0
  %vm570 = vcmp.ge.f32.partialorder %v501, 0.0
  %vm571 = vcmp.ge.f32.partialorder %v504, 0.0
  %vm572 = vcmp.ge.f32.partialorder %v507, 0.0
  %v573 = vmul.f32 %v318, 0.2
  %v574 = vmul.f32 %v321, 0.2
  %v575 = vmul.f32 %v324, 0.2
  %v576 = vmul.f32 %v327, 0.2
  %v577 = vmul.f32 %v330, 0.2
  %v578 = vmul.f32 %v333, 0.2
  %v579 = vmul.f32 %v336, 0.2
  %v580 = vmul.f32 %v339, 0.2
  %v581 = vmul.f32 %v342, 0.2
  %v582 = vmul.f32 %v345, 0.2
  %v583 = vmul.f32 %v348, 0.2
  %v584 = vmul.f32 %v351, 0.2
  %v585 = vmul.f32 %v354, 0.2
  %v586 = vmul.f32 %v357, 0.2
  %v587 = vmul.f32 %v360, 0.2
  %v588 = vmul.f32 %v363, 0.2
  %v589 = vmul.f32 %v366, 0.2
  %v590 = vmul.f32 %v369, 0.2
  %v591 = vmul.f32 %v372, 0.2
  %v592 = vmul.f32 %v375, 0.2
  %v593 = vmul.f32 %v378, 0.2
  %v594 = vmul.f32 %v381, 0.2
  %v595 = vmul.f32 %v384, 0.2
  %v596 = vmul.f32 %v387, 0.2
  %v597 = vmul.f32 %v390, 0.2
  %v598 = vmul.f32 %v393, 0.2
  %v599 = vmul.f32 %v396, 0.2
  %v600 = vmul.f32 %v399, 0.2
  %v601 = vmul.f32 %v402, 0.2
  %v602 = vmul.f32 %v405, 0.2
  %v603 = vmul.f32 %v408, 0.2
  %v604 = vmul.f32 %v411, 0.2
  %v605 = vmul.f32 %v414, 0.2
  %v606 = vmul.f32 %v417, 0.2
  %v607 = vmul.f32 %v420, 0.2
  %v608 = vmul.f32 %v423, 0.2
  %v609 = vmul.f32 %v426, 0.2
  %v610 = vmul.f32 %v429, 0.2
  %v611 = vmul.f32 %v432, 0.2
  %v612 = vmul.f32 %v435, 0.2
  %v613 = vmul.f32 %v438, 0.2
  %v614 = vmul.f32 %v441, 0.2
  %v615 = vmul.f32 %v444, 0.2
  %v616 = vmul.f32 %v447, 0.2
  %v617 = vmul.f32 %v450, 0.2
  %v618 = vmul.f32 %v453, 0.2
  %v619 = vmul.f32 %v456, 0.2
  %v620 = vmul.f32 %v459, 0.2
  %v621 = vmul.f32 %v462, 0.2
  %v622 = vmul.f32 %v465, 0.2
  %v623 = vmul.f32 %v468, 0.2
  %v624 = vmul.f32 %v471, 0.2
  %v625 = vmul.f32 %v474, 0.2
  %v626 = vmul.f32 %v477, 0.2
  %v627 = vmul.f32 %v480, 0.2
  %v628 = vmul.f32 %v483, 0.2
  %v629 = vmul.f32 %v486, 0.2
  %v630 = vmul.f32 %v489, 0.2
  %v631 = vmul.f32 %v492, 0.2
  %v632 = vmul.f32 %v495, 0.2
  %v633 = vmul.f32 %v498, 0.2
  %v634 = vmul.f32 %v501, 0.2
  %v635 = vmul.f32 %v504, 0.2
  %v636 = vmul.f32 %v507, 0.2
  %v637 = vsel %vm509, %v318, %v573
  %v638 = vsel %vm510, %v321, %v574
  %v639 = vsel %vm511, %v324, %v575
  %v640 = vsel %vm512, %v327, %v576
  %v641 = vsel %vm513, %v330, %v577
  %v642 = vsel %vm514, %v333, %v578
  %v643 = vsel %vm515, %v336, %v579
  %v644 = vsel %vm516, %v339, %v580
  %v645 = vsel %vm517, %v342, %v581
  %v646 = vsel %vm518, %v345, %v582
  %v647 = vsel %vm519, %v348, %v583
  %v648 = vsel %vm520, %v351, %v584
  %v649 = vsel %vm521, %v354, %v585
  %v650 = vsel %vm522, %v357, %v586
  %v651 = vsel %vm523, %v360, %v587
  %v652 = vsel %vm524, %v363, %v588
  %v653 = vsel %vm525, %v366, %v589
  %v654 = vsel %vm526, %v369, %v590
  %v655 = vsel %vm527, %v372, %v591
  %v656 = vsel %vm528, %v375, %v592
  %v657 = vsel %vm529, %v378, %v593
  %v658 = vsel %vm530, %v381, %v594
  %v659 = vsel %vm531, %v384, %v595
  %v660 = vsel %vm532, %v387, %v596
  %v661 = vsel %vm533, %v390, %v597
  %v662 = vsel %vm534, %v393, %v598
  %v663 = vsel %vm535, %v396, %v599
  %v664 = vsel %vm536, %v399, %v600
  %v665 = vsel %vm537, %v402, %v601
  %v666 = vsel %vm538, %v405, %v602
  %v667 = vsel %vm539, %v408, %v603
  %v668 = vsel %vm540, %v411, %v604
  %v669 = vsel %vm541, %v414, %v605
  %v670 = vsel %vm542, %v417, %v606
  %v671 = vsel %vm543, %v420, %v607
  %v672 = vsel %vm544, %v423, %v608
  %v673 = vsel %vm545, %v426, %v609
  %v674 = vsel %vm546, %v429, %v610
  %v675 = vsel %vm547, %v432, %v611
  %v676 = vsel %vm548, %v435, %v612
  %v677 = vsel %vm549, %v438, %v613
  %v678 = vsel %vm550, %v441, %v614
  %v679 = vsel %vm551, %v444, %v615
  %v680 = vsel %vm552, %v447, %v616
  %v681 = vsel %vm553, %v450, %v617
  %v682 = vsel %vm554, %v453, %v618
  %v683 = vsel %vm555, %v456, %v619
  %v684 = vsel %vm556, %v459, %v620
  %v685 = vsel %vm557, %v462, %v621
  %v686 = vsel %vm558, %v465, %v622
  %v687 = vsel %vm559, %v468, %v623
  %v688 = vsel %vm560, %v471, %v624
  %v689 = vsel %vm561, %v474, %v625
  %v690 = vsel %vm562, %v477, %v626
  %v691 = vsel %vm563, %v480, %v627
  %v692 = vsel %vm564, %v483, %v628
  %v693 = vsel %vm565, %v486, %v629
  %v694 = vsel %vm566, %v489, %v630
  %v695 = vsel %vm567, %v492, %v631
  %v696 = vsel %vm568, %v495, %v632
  %v697 = vsel %vm569, %v498, %v633
  %v698 = vsel %vm570, %v501, %v634
  %v699 = vsel %vm571, %v504, %v635
  %v700 = vsel %vm572, %v507, %v636
  %vm766 = vcmask 1040384
  %v767 = vrot.slane 0.0, 7
  %v768 = vsel %vm766, %v767, %v767
  %v769 = vrot.slane %v637, 7
  %v770 = vrot.slane %v638, 7
  %v771 = vsel %vm766, %v769, %v770
  %v772 = vrot.slane %v639, 7
  %v773 = vrot.slane %v640, 7
  %v774 = vsel %vm766, %v772, %v773
  %v775 = vrot.slane %v641, 7
  %v776 = vrot.slane %v642, 7
  %v777 = vsel %vm766, %v775, %v776
  %v778 = vrot.slane %v643, 7
  %v779 = vrot.slane %v644, 7
  %v780 = vsel %vm766, %v778, %v779
  %v781 = vrot.slane %v645, 7
  %v782 = vrot.slane %v646, 7
  %v783 = vsel %vm766, %v781, %v782
  %v784 = vrot.slane %v647, 7
  %v785 = vrot.slane %v648, 7
  %v786 = vsel %vm766, %v784, %v785
  %v787 = vrot.slane %v649, 7
  %v788 = vrot.slane %v650, 7
  %v789 = vsel %vm766, %v787, %v788
  %v790 = vrot.slane %v651, 7
  %v791 = vrot.slane %v652, 7
  %v792 = vsel %vm766, %v790, %v791
  %v793 = vrot.slane %v653, 7
  %v794 = vrot.slane %v654, 7
  %v795 = vsel %vm766, %v793, %v794
  %v796 = vrot.slane %v655, 7
  %v797 = vrot.slane %v656, 7
  %v798 = vsel %vm766, %v796, %v797
  %v799 = vrot.slane %v657, 7
  %v800 = vrot.slane %v658, 7
  %v801 = vsel %vm766, %v799, %v800
  %v802 = vrot.slane %v659, 7
  %v803 = vrot.slane %v660, 7
  %v804 = vsel %vm766, %v802, %v803
  %v805 = vrot.slane %v661, 7
  %v806 = vrot.slane %v662, 7
  %v807 = vsel %vm766, %v805, %v806
  %v808 = vrot.slane %v663, 7
  %v809 = vrot.slane %v664, 7
  %v810 = vsel %vm766, %v808, %v809
  %v811 = vrot.slane %v665, 7
  %v812 = vrot.slane %v666, 7
  %v813 = vsel %vm766, %v811, %v812
  %v814 = vrot.slane %v667, 7
  %v815 = vrot.slane %v668, 7
  %v816 = vsel %vm766, %v814, %v815
  %v817 = vrot.slane %v669, 7
  %v818 = vrot.slane %v670, 7
  %v819 = vsel %vm766, %v817, %v818
  %v820 = vrot.slane %v671, 7
  %v821 = vrot.slane %v672, 7
  %v822 = vsel %vm766, %v820, %v821
  %v823 = vrot.slane %v673, 7
  %v824 = vrot.slane %v674, 7
  %v825 = vsel %vm766, %v823, %v824
  %v826 = vrot.slane %v675, 7
  %v827 = vrot.slane %v676, 7
  %v828 = vsel %vm766, %v826, %v827
  %v829 = vrot.slane %v677, 7
  %v830 = vrot.slane %v678, 7
  %v831 = vsel %vm766, %v829, %v830
  %v832 = vrot.slane %v679, 7
  %v833 = vrot.slane %v680, 7
  %v834 = vsel %vm766, %v832, %v833
  %v835 = vrot.slane %v681, 7
  %v836 = vrot.slane %v682, 7
  %v837 = vsel %vm766, %v835, %v836
  %v838 = vrot.slane %v683, 7
  %v839 = vrot.slane %v684, 7
  %v840 = vsel %vm766, %v838, %v839
  %v841 = vrot.slane %v685, 7
  %v842 = vrot.slane %v686, 7
  %v843 = vsel %vm766, %v841, %v842
  %v844 = vrot.slane %v687, 7
  %v845 = vrot.slane %v688, 7
  %v846 = vsel %vm766, %v844, %v845
  %v847 = vrot.slane %v689, 7
  %v848 = vrot.slane %v690, 7
  %v849 = vsel %vm766, %v847, %v848
  %v850 = vrot.slane %v691, 7
  %v851 = vrot.slane %v692, 7
  %v852 = vsel %vm766, %v850, %v851
  %v853 = vrot.slane %v693, 7
  %v854 = vrot.slane %v694, 7
  %v855 = vsel %vm766, %v853, %v854
  %v856 = vrot.slane %v695, 7
  %v857 = vrot.slane %v696, 7
  %v858 = vsel %vm766, %v856, %v857
  %v859 = vrot.slane %v697, 7
  %v860 = vrot.slane %v698, 7
  %v861 = vsel %vm766, %v859, %v860
  %v862 = vrot.slane %v699, 7
  %v863 = vrot.slane %v700, 7
  %v864 = vsel %vm766, %v862, %v863
  %v963 = vsel %vm766, 0.0, %v767
  %v964 = vsel %vm766, 0.0, %v769
  %v965 = vsel %vm766, 0.0, %v772
  %v966 = vsel %vm766, 0.0, %v775
  %v967 = vsel %vm766, 0.0, %v778
  %v968 = vsel %vm766, 0.0, %v781
  %v969 = vsel %vm766, 0.0, %v784
  %v970 = vsel %vm766, 0.0, %v787
  %v971 = vsel %vm766, 0.0, %v790
  %v972 = vsel %vm766, 0.0, %v793
  %v973 = vsel %vm766, 0.0, %v796
  %v974 = vsel %vm766, 0.0, %v799
  %v975 = vsel %vm766, 0.0, %v802
  %v976 = vsel %vm766, 0.0, %v805
  %v977 = vsel %vm766, 0.0, %v808
  %v978 = vsel %vm766, 0.0, %v811
  %v979 = vsel %vm766, 0.0, %v814
  %v980 = vsel %vm766, 0.0, %v817
  %v981 = vsel %vm766, 0.0, %v820
  %v982 = vsel %vm766, 0.0, %v823
  %v983 = vsel %vm766, 0.0, %v826
  %v984 = vsel %vm766, 0.0, %v829
  %v985 = vsel %vm766, 0.0, %v832
  %v986 = vsel %vm766, 0.0, %v835
  %v987 = vsel %vm766, 0.0, %v838
  %v988 = vsel %vm766, 0.0, %v841
  %v989 = vsel %vm766, 0.0, %v844
  %v990 = vsel %vm766, 0.0, %v847
  %v991 = vsel %vm766, 0.0, %v850
  %v992 = vsel %vm766, 0.0, %v853
  %v993 = vsel %vm766, 0.0, %v856
  %v994 = vsel %vm766, 0.0, %v859
  %v995 = vsel %vm766, 0.0, %v862
  %v996 = vsel %vm766, %v767, 0.0
  %v997 = vsel %vm766, %v770, 0.0
  %v998 = vsel %vm766, %v773, 0.0
  %v999 = vsel %vm766, %v776, 0.0
  %v1000 = vsel %vm766, %v779, 0.0
  %v1001 = vsel %vm766, %v782, 0.0
  %v1002 = vsel %vm766, %v785, 0.0
  %v1003 = vsel %vm766, %v788, 0.0
  %v1004 = vsel %vm766, %v791, 0.0
  %v1005 = vsel %vm766, %v794, 0.0
  %v1006 = vsel %vm766, %v797, 0.0
  %v1007 = vsel %vm766, %v800, 0.0
  %v1008 = vsel %vm766, %v803, 0.0
  %v1009 = vsel %vm766, %v806, 0.0
  %v1010 = vsel %vm766, %v809, 0.0
  %v1011 = vsel %vm766, %v812, 0.0
  %v1012 = vsel %vm766, %v815, 0.0
  %v1013 = vsel %vm766, %v818, 0.0
  %v1014 = vsel %vm766, %v821, 0.0
  %v1015 = vsel %vm766, %v824, 0.0
  %v1016 = vsel %vm766, %v827, 0.0
  %v1017 = vsel %vm766, %v830, 0.0
  %v1018 = vsel %vm766, %v833, 0.0
  %v1019 = vsel %vm766, %v836, 0.0
  %v1020 = vsel %vm766, %v839, 0.0
  %v1021 = vsel %vm766, %v842, 0.0
  %v1022 = vsel %vm766, %v845, 0.0
  %v1023 = vsel %vm766, %v848, 0.0
  %v1024 = vsel %vm766, %v851, 0.0
  %v1025 = vsel %vm766, %v854, 0.0
  %v1026 = vsel %vm766, %v857, 0.0
  %v1027 = vsel %vm766, %v860, 0.0
  %v1028 = vsel %vm766, %v863, 0.0
  %v1046 = vrot.slane %v963, 1
  %v1047 = vrot.slane %v965, 1
  %v1048 = vrot.slane %v967, 1
  %v1049 = vrot.slane %v969, 1
  %v1050 = vrot.slane %v971, 1
  %v1051 = vrot.slane %v973, 1
  %v1052 = vrot.slane %v975, 1
  %v1053 = vrot.slane %v977, 1
  %v1054 = vrot.slane %v979, 1
  %v1055 = vrot.slane %v981, 1
  %v1056 = vrot.slane %v983, 1
  %v1057 = vrot.slane %v985, 1
  %v1058 = vrot.slane %v987, 1
  %v1059 = vrot.slane %v989, 1
  %v1060 = vrot.slane %v991, 1
  %v1061 = vrot.slane %v993, 1
  %v1062 = vrot.slane %v995, 1
  %v1080 = vrot.slane %v963, 2
  %v1081 = vrot.slane %v965, 2
  %v1082 = vrot.slane %v967, 2
  %v1083 = vrot.slane %v969, 2
  %v1084 = vrot.slane %v971, 2
  %v1085 = vrot.slane %v973, 2
  %v1086 = vrot.slane %v975, 2
  %v1087 = vrot.slane %v977, 2
  %v1088 = vrot.slane %v979, 2
  %v1089 = vrot.slane %v981, 2
  %v1090 = vrot.slane %v983, 2
  %v1091 = vrot.slane %v985, 2
  %v1092 = vrot.slane %v987, 2
  %v1093 = vrot.slane %v989, 2
  %v1094 = vrot.slane %v991, 2
  %v1095 = vrot.slane %v993, 2
  %v1096 = vrot.slane %v995, 2
  %v1114 = vrot.slane %v963, 3
  %v1115 = vrot.slane %v965, 3
  %v1116 = vrot.slane %v967, 3
  %v1117 = vrot.slane %v969, 3
  %v1118 = vrot.slane %v971, 3
  %v1119 = vrot.slane %v973, 3
  %v1120 = vrot.slane %v975, 3
  %v1121 = vrot.slane %v977, 3
  %v1122 = vrot.slane %v979, 3
  %v1123 = vrot.slane %v981, 3
  %v1124 = vrot.slane %v983, 3
  %v1125 = vrot.slane %v985, 3
  %v1126 = vrot.slane %v987, 3
  %v1127 = vrot.slane %v989, 3
  %v1128 = vrot.slane %v991, 3
  %v1129 = vrot.slane %v993, 3
  %v1130 = vrot.slane %v995, 3
  %v1148 = vrot.slane %v768, 4
  %v1149 = vrot.slane %v774, 4
  %v1150 = vrot.slane %v780, 4
  %v1151 = vrot.slane %v786, 4
  %v1152 = vrot.slane %v792, 4
  %v1153 = vrot.slane %v798, 4
  %v1154 = vrot.slane %v804, 4
  %v1155 = vrot.slane %v810, 4
  %v1156 = vrot.slane %v816, 4
  %v1157 = vrot.slane %v822, 4
  %v1158 = vrot.slane %v828, 4
  %v1159 = vrot.slane %v834, 4
  %v1160 = vrot.slane %v840, 4
  %v1161 = vrot.slane %v846, 4
  %v1162 = vrot.slane %v852, 4
  %v1163 = vrot.slane %v858, 4
  %v1164 = vrot.slane %v864, 4
  %v1182 = vrot.slane %v768, 5
  %v1183 = vrot.slane %v774, 5
  %v1184 = vrot.slane %v780, 5
  %v1185 = vrot.slane %v786, 5
  %v1186 = vrot.slane %v792, 5
  %v1187 = vrot.slane %v798, 5
  %v1188 = vrot.slane %v804, 5
  %v1189 = vrot.slane %v810, 5
  %v1190 = vrot.slane %v816, 5
  %v1191 = vrot.slane %v822, 5
  %v1192 = vrot.slane %v828, 5
  %v1193 = vrot.slane %v834, 5
  %v1194 = vrot.slane %v840, 5
  %v1195 = vrot.slane %v846, 5
  %v1196 = vrot.slane %v852, 5
  %v1197 = vrot.slane %v858, 5
  %v1198 = vrot.slane %v864, 5
  %v1216 = vrot.slane %v768, 6
  %v1217 = vrot.slane %v774, 6
  %v1218 = vrot.slane %v780, 6
  %v1219 = vrot.slane %v786, 6
  %v1220 = vrot.slane %v792, 6
  %v1221 = vrot.slane %v798, 6
  %v1222 = vrot.slane %v804, 6
  %v1223 = vrot.slane %v810, 6
  %v1224 = vrot.slane %v816, 6
  %v1225 = vrot.slane %v822, 6
  %v1226 = vrot.slane %v828, 6
  %v1227 = vrot.slane %v834, 6
  %v1228 = vrot.slane %v840, 6
  %v1229 = vrot.slane %v846, 6
  %v1230 = vrot.slane %v852, 6
  %v1231 = vrot.slane %v858, 6
  %v1232 = vrot.slane %v864, 6
  %v1250 = vrot.slane %v768, 7
  %v1251 = vrot.slane %v774, 7
  %v1252 = vrot.slane %v780, 7
  %v1253 = vrot.slane %v786, 7
  %v1254 = vrot.slane %v792, 7
  %v1255 = vrot.slane %v798, 7
  %v1256 = vrot.slane %v804, 7
  %v1257 = vrot.slane %v810, 7
  %v1258 = vrot.slane %v816, 7
  %v1259 = vrot.slane %v822, 7
  %v1260 = vrot.slane %v828, 7
  %v1261 = vrot.slane %v834, 7
  %v1262 = vrot.slane %v840, 7
  %v1263 = vrot.slane %v846, 7
  %v1264 = vrot.slane %v852, 7
  %v1265 = vrot.slane %v858, 7
  %v1266 = vrot.slane %v864, 7
  %v1284 = vsel %vm766, %v963, %v1046
  %v1285 = vsel %vm766, %v965, %v1047
  %v1286 = vsel %vm766, %v967, %v1048
  %v1287 = vsel %vm766, %v969, %v1049
  %v1288 = vsel %vm766, %v971, %v1050
  %v1289 = vsel %vm766, %v973, %v1051
  %v1290 = vsel %vm766, %v975, %v1052
  %v1291 = vsel %vm766, %v977, %v1053
  %v1292 = vsel %vm766, %v979, %v1054
  %v1293 = vsel %vm766, %v981, %v1055
  %v1294 = vsel %vm766, %v983, %v1056
  %v1295 = vsel %vm766, %v985, %v1057
  %v1296 = vsel %vm766, %v987, %v1058
  %v1297 = vsel %vm766, %v989, %v1059
  %v1298 = vsel %vm766, %v991, %v1060
  %v1299 = vsel %vm766, %v993, %v1061
  %v1300 = vsel %vm766, %v995, %v1062
  %vm1301 = vcmask 1041408
  %v1302 = vsel %vm1301, %v1284, %v1080
  %v1303 = vsel %vm1301, %v1285, %v1081
  %v1304 = vsel %vm1301, %v1286, %v1082
  %v1305 = vsel %vm1301, %v1287, %v1083
  %v1306 = vsel %vm1301, %v1288, %v1084
  %v1307 = vsel %vm1301, %v1289, %v1085
  %v1308 = vsel %vm1301, %v1290, %v1086
  %v1309 = vsel %vm1301, %v1291, %v1087
  %v1310 = vsel %vm1301, %v1292, %v1088
  %v1311 = vsel %vm1301, %v1293, %v1089
  %v1312 = vsel %vm1301, %v1294, %v1090
  %v1313 = vsel %vm1301, %v1295, %v1091
  %v1314 = vsel %vm1301, %v1296, %v1092
  %v1315 = vsel %vm1301, %v1297, %v1093
  %v1316 = vsel %vm1301, %v1298, %v1094
  %v1317 = vsel %vm1301, %v1299, %v1095
  %v1318 = vsel %vm1301, %v1300, %v1096
  %vm1319 = vcmask 1042432
  %v1320 = vsel %vm1319, %v1302, %v1114
  %v1321 = vsel %vm1319, %v1303, %v1115
  %v1322 = vsel %vm1319, %v1304, %v1116
  %v1323 = vsel %vm1319, %v1305, %v1117
  %v1324 = vsel %vm1319, %v1306, %v1118
  %v1325 = vsel %vm1319, %v1307, %v1119
  %v1326 = vsel %vm1319, %v1308, %v1120
  %v1327 = vsel %vm1319, %v1309, %v1121
  %v1328 = vsel %vm1319, %v1310, %v1122
  %v1329 = vsel %vm1319, %v1311, %v1123
  %v1330 = vsel %vm1319, %v1312, %v1124
  %v1331 = vsel %vm1319, %v1313, %v1125
  %v1332 = vsel %vm1319, %v1314, %v1126
  %v1333 = vsel %vm1319, %v1315, %v1127
  %v1334 = vsel %vm1319, %v1316, %v1128
  %v1335 = vsel %vm1319, %v1317, %v1129
  %v1336 = vsel %vm1319, %v1318, %v1130
  %vm1337 = vcmask 1043456
  %v1338 = vsel %vm1337, %v1320, %v1148
  %v1339 = vsel %vm1337, %v1321, %v1149
  %v1340 = vsel %vm1337, %v1322, %v1150
  %v1341 = vsel %vm1337, %v1323, %v1151
  %v1342 = vsel %vm1337, %v1324, %v1152
  %v1343 = vsel %vm1337, %v1325, %v1153
  %v1344 = vsel %vm1337, %v1326, %v1154
  %v1345 = vsel %vm1337, %v1327, %v1155
  %v1346 = vsel %vm1337, %v1328, %v1156
  %v1347 = vsel %vm1337, %v1329, %v1157
  %v1348 = vsel %vm1337, %v1330, %v1158
  %v1349 = vsel %vm1337, %v1331, %v1159
  %v1350 = vsel %vm1337, %v1332, %v1160
  %v1351 = vsel %vm1337, %v1333, %v1161
  %v1352 = vsel %vm1337, %v1334, %v1162
  %v1353 = vsel %vm1337, %v1335, %v1163
  %v1354 = vsel %vm1337, %v1336, %v1164
  %vm1355 = vcmask 1044480
  %v1356 = vsel %vm1355, %v1338, %v1182
  %v1357 = vsel %vm1355, %v1339, %v1183
  %v1358 = vsel %vm1355, %v1340, %v1184
  %v1359 = vsel %vm1355, %v1341, %v1185
  %v1360 = vsel %vm1355, %v1342, %v1186
  %v1361 = vsel %vm1355, %v1343, %v1187
  %v1362 = vsel %vm1355, %v1344, %v1188
  %v1363 = vsel %vm1355, %v1345, %v1189
  %v1364 = vsel %vm1355, %v1346, %v1190
  %v1365 = vsel %vm1355, %v1347, %v1191
  %v1366 = vsel %vm1355, %v1348, %v1192
  %v1367 = vsel %vm1355, %v1349, %v1193
  %v1368 = vsel %vm1355, %v1350, %v1194
  %v1369 = vsel %vm1355, %v1351, %v1195
  %v1370 = vsel %vm1355, %v1352, %v1196
  %v1371 = vsel %vm1355, %v1353, %v1197
  %v1372 = vsel %vm1355, %v1354, %v1198
  %vm1373 = vcmask 1045504
  %v1374 = vsel %vm1373, %v1356, %v1216
  %v1375 = vsel %vm1373, %v1357, %v1217
  %v1376 = vsel %vm1373, %v1358, %v1218
  %v1377 = vsel %vm1373, %v1359, %v1219
  %v1378 = vsel %vm1373, %v1360, %v1220
  %v1379 = vsel %vm1373, %v1361, %v1221
  %v1380 = vsel %vm1373, %v1362, %v1222
  %v1381 = vsel %vm1373, %v1363, %v1223
  %v1382 = vsel %vm1373, %v1364, %v1224
  %v1383 = vsel %vm1373, %v1365, %v1225
  %v1384 = vsel %vm1373, %v1366, %v1226
  %v1385 = vsel %vm1373, %v1367, %v1227
  %v1386 = vsel %vm1373, %v1368, %v1228
  %v1387 = vsel %vm1373, %v1369, %v1229
  %v1388 = vsel %vm1373, %v1370, %v1230
  %v1389 = vsel %vm1373, %v1371, %v1231
  %v1390 = vsel %vm1373, %v1372, %v1232
  %vm1391 = vcmask 1046528
  %v1392 = vsel %vm1391, %v1374, %v1250
  %v1393 = vsel %vm1391, %v1375, %v1251
  %v1394 = vsel %vm1391, %v1376, %v1252
  %v1395 = vsel %vm1391, %v1377, %v1253
  %v1396 = vsel %vm1391, %v1378, %v1254
  %v1397 = vsel %vm1391, %v1379, %v1255
  %v1398 = vsel %vm1391, %v1380, %v1256
  %v1399 = vsel %vm1391, %v1381, %v1257
  %v1400 = vsel %vm1391, %v1382, %v1258
  %v1401 = vsel %vm1391, %v1383, %v1259
  %v1402 = vsel %vm1391, %v1384, %v1260
  %v1403 = vsel %vm1391, %v1385, %v1261
  %v1404 = vsel %vm1391, %v1386, %v1262
  %v1405 = vsel %vm1391, %v1387, %v1263
  %v1406 = vsel %vm1391, %v1388, %v1264
  %v1407 = vsel %vm1391, %v1389, %v1265
  %v1408 = vsel %vm1391, %v1390, %v1266
  %v1409 = vrot.slane %v963, 4
  %v1410 = vrot.slane %v965, 4
  %v1411 = vrot.slane %v967, 4
  %v1412 = vrot.slane %v969, 4
  %v1413 = vrot.slane %v971, 4
  %v1414 = vrot.slane %v973, 4
  %v1415 = vrot.slane %v975, 4
  %v1416 = vrot.slane %v977, 4
  %v1417 = vrot.slane %v979, 4
  %v1418 = vrot.slane %v981, 4
  %v1419 = vrot.slane %v983, 4
  %v1420 = vrot.slane %v985, 4
  %v1421 = vrot.slane %v987, 4
  %v1422 = vrot.slane %v989, 4
  %v1423 = vrot.slane %v991, 4
  %v1424 = vrot.slane %v993, 4
  %v1425 = vrot.slane %v995, 4
  %v1460 = vrot.slane %v996, 1
  %v1461 = vrot.slane %v998, 1
  %v1462 = vrot.slane %v1000, 1
  %v1463 = vrot.slane %v1002, 1
  %v1464 = vrot.slane %v1004, 1
  %v1465 = vrot.slane %v1006, 1
  %v1466 = vrot.slane %v1008, 1
  %v1467 = vrot.slane %v1010, 1
  %v1468 = vrot.slane %v1012, 1
  %v1469 = vrot.slane %v1014, 1
  %v1470 = vrot.slane %v1016, 1
  %v1471 = vrot.slane %v1018, 1
  %v1472 = vrot.slane %v1020, 1
  %v1473 = vrot.slane %v1022, 1
  %v1474 = vrot.slane %v1024, 1
  %v1475 = vrot.slane %v1026, 1
  %v1476 = vrot.slane %v1028, 1
  %v1477 = vsel %vm766, %v1046, %v1080
  %v1478 = vsel %vm766, %v1047, %v1081
  %v1479 = vsel %vm766, %v1048, %v1082
  %v1480 = vsel %vm766, %v1049, %v1083
  %v1481 = vsel %vm766, %v1050, %v1084
  %v1482 = vsel %vm766, %v1051, %v1085
  %v1483 = vsel %vm766, %v1052, %v1086
  %v1484 = vsel %vm766, %v1053, %v1087
  %v1485 = vsel %vm766, %v1054, %v1088
  %v1486 = vsel %vm766, %v1055, %v1089
  %v1487 = vsel %vm766, %v1056, %v1090
  %v1488 = vsel %vm766, %v1057, %v1091
  %v1489 = vsel %vm766, %v1058, %v1092
  %v1490 = vsel %vm766, %v1059, %v1093
  %v1491 = vsel %vm766, %v1060, %v1094
  %v1492 = vsel %vm766, %v1061, %v1095
  %v1493 = vsel %vm766, %v1062, %v1096
  %v1494 = vsel %vm1301, %v1477, %v1114
  %v1495 = vsel %vm1301, %v1478, %v1115
  %v1496 = vsel %vm1301, %v1479, %v1116
  %v1497 = vsel %vm1301, %v1480, %v1117
  %v1498 = vsel %vm1301, %v1481, %v1118
  %v1499 = vsel %vm1301, %v1482, %v1119
  %v1500 = vsel %vm1301, %v1483, %v1120
  %v1501 = vsel %vm1301, %v1484, %v1121
  %v1502 = vsel %vm1301, %v1485, %v1122
  %v1503 = vsel %vm1301, %v1486, %v1123
  %v1504 = vsel %vm1301, %v1487, %v1124
  %v1505 = vsel %vm1301, %v1488, %v1125
  %v1506 = vsel %vm1301, %v1489, %v1126
  %v1507 = vsel %vm1301, %v1490, %v1127
  %v1508 = vsel %vm1301, %v1491, %v1128
  %v1509 = vsel %vm1301, %v1492, %v1129
  %v1510 = vsel %vm1301, %v1493, %v1130
  %v1511 = vsel %vm1319, %v1494, %v1409
  %v1512 = vsel %vm1319, %v1495, %v1410
  %v1513 = vsel %vm1319, %v1496, %v1411
  %v1514 = vsel %vm1319, %v1497, %v1412
  %v1515 = vsel %vm1319, %v1498, %v1413
  %v1516 = vsel %vm1319, %v1499, %v1414
  %v1517 = vsel %vm1319, %v1500, %v1415
  %v1518 = vsel %vm1319, %v1501, %v1416
  %v1519 = vsel %vm1319, %v1502, %v1417
  %v1520 = vsel %vm1319, %v1503, %v1418
  %v1521 = vsel %vm1319, %v1504, %v1419
  %v1522 = vsel %vm1319, %v1505, %v1420
  %v1523 = vsel %vm1319, %v1506, %v1421
  %v1524 = vsel %vm1319, %v1507, %v1422
  %v1525 = vsel %vm1319, %v1508, %v1423
  %v1526 = vsel %vm1319, %v1509, %v1424
  %v1527 = vsel %vm1319, %v1510, %v1425
  %v1528 = vsel %vm1337, %v1511, %v1182
  %v1529 = vsel %vm1337, %v1512, %v1183
  %v1530 = vsel %vm1337, %v1513, %v1184
  %v1531 = vsel %vm1337, %v1514, %v1185
  %v1532 = vsel %vm1337, %v1515, %v1186
  %v1533 = vsel %vm1337, %v1516, %v1187
  %v1534 = vsel %vm1337, %v1517, %v1188
  %v1535 = vsel %vm1337, %v1518, %v1189
  %v1536 = vsel %vm1337, %v1519, %v1190
  %v1537 = vsel %vm1337, %v1520, %v1191
  %v1538 = vsel %vm1337, %v1521, %v1192
  %v1539 = vsel %vm1337, %v1522, %v1193
  %v1540 = vsel %vm1337, %v1523, %v1194
  %v1541 = vsel %vm1337, %v1524, %v1195
  %v1542 = vsel %vm1337, %v1525, %v1196
  %v1543 = vsel %vm1337, %v1526, %v1197
  %v1544 = vsel %vm1337, %v1527, %v1198
  %v1545 = vsel %vm1355, %v1528, %v1216
  %v1546 = vsel %vm1355, %v1529, %v1217
  %v1547 = vsel %vm1355, %v1530, %v1218
  %v1548 = vsel %vm1355, %v1531, %v1219
  %v1549 = vsel %vm1355, %v1532, %v1220
  %v1550 = vsel %vm1355, %v1533, %v1221
  %v1551 = vsel %vm1355, %v1534, %v1222
  %v1552 = vsel %vm1355, %v1535, %v1223
  %v1553 = vsel %vm1355, %v1536, %v1224
  %v1554 = vsel %vm1355, %v1537, %v1225
  %v1555 = vsel %vm1355, %v1538, %v1226
  %v1556 = vsel %vm1355, %v1539, %v1227
  %v1557 = vsel %vm1355, %v1540, %v1228
  %v1558 = vsel %vm1355, %v1541, %v1229
  %v1559 = vsel %vm1355, %v1542, %v1230
  %v1560 = vsel %vm1355, %v1543, %v1231
  %v1561 = vsel %vm1355, %v1544, %v1232
  %v1562 = vsel %vm1373, %v1545, %v1250
  %v1563 = vsel %vm1373, %v1546, %v1251
  %v1564 = vsel %vm1373, %v1547, %v1252
  %v1565 = vsel %vm1373, %v1548, %v1253
  %v1566 = vsel %vm1373, %v1549, %v1254
  %v1567 = vsel %vm1373, %v1550, %v1255
  %v1568 = vsel %vm1373, %v1551, %v1256
  %v1569 = vsel %vm1373, %v1552, %v1257
  %v1570 = vsel %vm1373, %v1553, %v1258
  %v1571 = vsel %vm1373, %v1554, %v1259
  %v1572 = vsel %vm1373, %v1555, %v1260
  %v1573 = vsel %vm1373, %v1556, %v1261
  %v1574 = vsel %vm1373, %v1557, %v1262
  %v1575 = vsel %vm1373, %v1558, %v1263
  %v1576 = vsel %vm1373, %v1559, %v1264
  %v1577 = vsel %vm1373, %v1560, %v1265
  %v1578 = vsel %vm1373, %v1561, %v1266
  %v1579 = vsel %vm1391, %v1562, %v768
  %v1580 = vsel %vm1391, %v1563, %v774
  %v1581 = vsel %vm1391, %v1564, %v780
  %v1582 = vsel %vm1391, %v1565, %v786
  %v1583 = vsel %vm1391, %v1566, %v792
  %v1584 = vsel %vm1391, %v1567, %v798
  %v1585 = vsel %vm1391, %v1568, %v804
  %v1586 = vsel %vm1391, %v1569, %v810
  %v1587 = vsel %vm1391, %v1570, %v816
  %v1588 = vsel %vm1391, %v1571, %v822
  %v1589 = vsel %vm1391, %v1572, %v828
  %v1590 = vsel %vm1391, %v1573, %v834
  %v1591 = vsel %vm1391, %v1574, %v840
  %v1592 = vsel %vm1391, %v1575, %v846
  %v1593 = vsel %vm1391, %v1576, %v852
  %v1594 = vsel %vm1391, %v1577, %v858
  %v1595 = vsel %vm1391, %v1578, %v864
  %v1612 = vrot.slane %v964, 1
  %v1613 = vrot.slane %v966, 1
  %v1614 = vrot.slane %v968, 1
  %v1615 = vrot.slane %v970, 1
  %v1616 = vrot.slane %v972, 1
  %v1617 = vrot.slane %v974, 1
  %v1618 = vrot.slane %v976, 1
  %v1619 = vrot.slane %v978, 1
  %v1620 = vrot.slane %v980, 1
  %v1621 = vrot.slane %v982, 1
  %v1622 = vrot.slane %v984, 1
  %v1623 = vrot.slane %v986, 1
  %v1624 = vrot.slane %v988, 1
  %v1625 = vrot.slane %v990, 1
  %v1626 = vrot.slane %v992, 1
  %v1627 = vrot.slane %v994, 1
  %v1644 = vrot.slane %v964, 2
  %v1645 = vrot.slane %v966, 2
  %v1646 = vrot.slane %v968, 2
  %v1647 = vrot.slane %v970, 2
  %v1648 = vrot.slane %v972, 2
  %v1649 = vrot.slane %v974, 2
  %v1650 = vrot.slane %v976, 2
  %v1651 = vrot.slane %v978, 2
  %v1652 = vrot.slane %v980, 2
  %v1653 = vrot.slane %v982, 2
  %v1654 = vrot.slane %v984, 2
  %v1655 = vrot.slane %v986, 2
  %v1656 = vrot.slane %v988, 2
  %v1657 = vrot.slane %v990, 2
  %v1658 = vrot.slane %v992, 2
  %v1659 = vrot.slane %v994, 2
  %v1676 = vrot.slane %v964, 3
  %v1677 = vrot.slane %v966, 3
  %v1678 = vrot.slane %v968, 3
  %v1679 = vrot.slane %v970, 3
  %v1680 = vrot.slane %v972, 3
  %v1681 = vrot.slane %v974, 3
  %v1682 = vrot.slane %v976, 3
  %v1683 = vrot.slane %v978, 3
  %v1684 = vrot.slane %v980, 3
  %v1685 = vrot.slane %v982, 3
  %v1686 = vrot.slane %v984, 3
  %v1687 = vrot.slane %v986, 3
  %v1688 = vrot.slane %v988, 3
  %v1689 = vrot.slane %v990, 3
  %v1690 = vrot.slane %v992, 3
  %v1691 = vrot.slane %v994, 3
  %v1708 = vrot.slane %v771, 4
  %v1709 = vrot.slane %v777, 4
  %v1710 = vrot.slane %v783, 4
  %v1711 = vrot.slane %v789, 4
  %v1712 = vrot.slane %v795, 4
  %v1713 = vrot.slane %v801, 4
  %v1714 = vrot.slane %v807, 4
  %v1715 = vrot.slane %v813, 4
  %v1716 = vrot.slane %v819, 4
  %v1717 = vrot.slane %v825, 4
  %v1718 = vrot.slane %v831, 4
  %v1719 = vrot.slane %v837, 4
  %v1720 = vrot.slane %v843, 4
  %v1721 = vrot.slane %v849, 4
  %v1722 = vrot.slane %v855, 4
  %v1723 = vrot.slane %v861, 4
  %v1740 = vrot.slane %v771, 5
  %v1741 = vrot.slane %v777, 5
  %v1742 = vrot.slane %v783, 5
  %v1743 = vrot.slane %v789, 5
  %v1744 = vrot.slane %v795, 5
  %v1745 = vrot.slane %v801, 5
  %v1746 = vrot.slane %v807, 5
  %v1747 = vrot.slane %v813, 5
  %v1748 = vrot.slane %v819, 5
  %v1749 = vrot.slane %v825, 5
  %v1750 = vrot.slane %v831, 5
  %v1751 = vrot.slane %v837, 5
  %v1752 = vrot.slane %v843, 5
  %v1753 = vrot.slane %v849, 5
  %v1754 = vrot.slane %v855, 5
  %v1755 = vrot.slane %v861, 5
  %v1772 = vrot.slane %v771, 6
  %v1773 = vrot.slane %v777, 6
  %v1774 = vrot.slane %v783, 6
  %v1775 = vrot.slane %v789, 6
  %v1776 = vrot.slane %v795, 6
  %v1777 = vrot.slane %v801, 6
  %v1778 = vrot.slane %v807, 6
  %v1779 = vrot.slane %v813, 6
  %v1780 = vrot.slane %v819, 6
  %v1781 = vrot.slane %v825, 6
  %v1782 = vrot.slane %v831, 6
  %v1783 = vrot.slane %v837, 6
  %v1784 = vrot.slane %v843, 6
  %v1785 = vrot.slane %v849, 6
  %v1786 = vrot.slane %v855, 6
  %v1787 = vrot.slane %v861, 6
  %v1804 = vrot.slane %v771, 7
  %v1805 = vrot.slane %v777, 7
  %v1806 = vrot.slane %v783, 7
  %v1807 = vrot.slane %v789, 7
  %v1808 = vrot.slane %v795, 7
  %v1809 = vrot.slane %v801, 7
  %v1810 = vrot.slane %v807, 7
  %v1811 = vrot.slane %v813, 7
  %v1812 = vrot.slane %v819, 7
  %v1813 = vrot.slane %v825, 7
  %v1814 = vrot.slane %v831, 7
  %v1815 = vrot.slane %v837, 7
  %v1816 = vrot.slane %v843, 7
  %v1817 = vrot.slane %v849, 7
  %v1818 = vrot.slane %v855, 7
  %v1819 = vrot.slane %v861, 7
  %v1836 = vsel %vm766, %v964, %v1612
  %v1837 = vsel %vm766, %v966, %v1613
  %v1838 = vsel %vm766, %v968, %v1614
  %v1839 = vsel %vm766, %v970, %v1615
  %v1840 = vsel %vm766, %v972, %v1616
  %v1841 = vsel %vm766, %v974, %v1617
  %v1842 = vsel %vm766, %v976, %v1618
  %v1843 = vsel %vm766, %v978, %v1619
  %v1844 = vsel %vm766, %v980, %v1620
  %v1845 = vsel %vm766, %v982, %v1621
  %v1846 = vsel %vm766, %v984, %v1622
  %v1847 = vsel %vm766, %v986, %v1623
  %v1848 = vsel %vm766, %v988, %v1624
  %v1849 = vsel %vm766, %v990, %v1625
  %v1850 = vsel %vm766, %v992, %v1626
  %v1851 = vsel %vm766, %v994, %v1627
  %v1852 = vsel %vm1301, %v1836, %v1644
  %v1853 = vsel %vm1301, %v1837, %v1645
  %v1854 = vsel %vm1301, %v1838, %v1646
  %v1855 = vsel %vm1301, %v1839, %v1647
  %v1856 = vsel %vm1301, %v1840, %v1648
  %v1857 = vsel %vm1301, %v1841, %v1649
  %v1858 = vsel %vm1301, %v1842, %v1650
  %v1859 = vsel %vm1301, %v1843, %v1651
  %v1860 = vsel %vm1301, %v1844, %v1652
  %v1861 = vsel %vm1301, %v1845, %v1653
  %v1862 = vsel %vm1301, %v1846, %v1654
  %v1863 = vsel %vm1301, %v1847, %v1655
  %v1864 = vsel %vm1301, %v1848, %v1656
  %v1865 = vsel %vm1301, %v1849, %v1657
  %v1866 = vsel %vm1301, %v1850, %v1658
  %v1867 = vsel %vm1301, %v1851, %v1659
  %v1868 = vsel %vm1319, %v1852, %v1676
  %v1869 = vsel %vm1319, %v1853, %v1677
  %v1870 = vsel %vm1319, %v1854, %v1678
  %v1871 = vsel %vm1319, %v1855, %v1679
  %v1872 = vsel %vm1319, %v1856, %v1680
  %v1873 = vsel %vm1319, %v1857, %v1681
  %v1874 = vsel %vm1319, %v1858, %v1682
  %v1875 = vsel %vm1319, %v1859, %v1683
  %v1876 = vsel %vm1319, %v1860, %v1684
  %v1877 = vsel %vm1319, %v1861, %v1685
  %v1878 = vsel %vm1319, %v1862, %v1686
  %v1879 = vsel %vm1319, %v1863, %v1687
  %v1880 = vsel %vm1319, %v1864, %v1688
  %v1881 = vsel %vm1319, %v1865, %v1689
  %v1882 = vsel %vm1319, %v1866, %v1690
  %v1883 = vsel %vm1319, %v1867, %v1691
  %v1884 = vsel %vm1337, %v1868, %v1708
  %v1885 = vsel %vm1337, %v1869, %v1709
  %v1886 = vsel %vm1337, %v1870, %v1710
  %v1887 = vsel %vm1337, %v1871, %v1711
  %v1888 = vsel %vm1337, %v1872, %v1712
  %v1889 = vsel %vm1337, %v1873, %v1713
  %v1890 = vsel %vm1337, %v1874, %v1714
  %v1891 = vsel %vm1337, %v1875, %v1715
  %v1892 = vsel %vm1337, %v1876, %v1716
  %v1893 = vsel %vm1337, %v1877, %v1717
  %v1894 = vsel %vm1337, %v1878, %v1718
  %v1895 = vsel %vm1337, %v1879, %v1719
  %v1896 = vsel %vm1337, %v1880, %v1720
  %v1897 = vsel %vm1337, %v1881, %v1721
  %v1898 = vsel %vm1337, %v1882, %v1722
  %v1899 = vsel %vm1337, %v1883, %v1723
  %v1900 = vsel %vm1355, %v1884, %v1740
  %v1901 = vsel %vm1355, %v1885, %v1741
  %v1902 = vsel %vm1355, %v1886, %v1742
  %v1903 = vsel %vm1355, %v1887, %v1743
  %v1904 = vsel %vm1355, %v1888, %v1744
  %v1905 = vsel %vm1355, %v1889, %v1745
  %v1906 = vsel %vm1355, %v1890, %v1746
  %v1907 = vsel %vm1355, %v1891, %v1747
  %v1908 = vsel %vm1355, %v1892, %v1748
  %v1909 = vsel %vm1355, %v1893, %v1749
  %v1910 = vsel %vm1355, %v1894, %v1750
  %v1911 = vsel %vm1355, %v1895, %v1751
  %v1912 = vsel %vm1355, %v1896, %v1752
  %v1913 = vsel %vm1355, %v1897, %v1753
  %v1914 = vsel %vm1355, %v1898, %v1754
  %v1915 = vsel %vm1355, %v1899, %v1755
  %v1916 = vsel %vm1373, %v1900, %v1772
  %v1917 = vsel %vm1373, %v1901, %v1773
  %v1918 = vsel %vm1373, %v1902, %v1774
  %v1919 = vsel %vm1373, %v1903, %v1775
  %v1920 = vsel %vm1373, %v1904, %v1776
  %v1921 = vsel %vm1373, %v1905, %v1777
  %v1922 = vsel %vm1373, %v1906, %v1778
  %v1923 = vsel %vm1373, %v1907, %v1779
  %v1924 = vsel %vm1373, %v1908, %v1780
  %v1925 = vsel %vm1373, %v1909, %v1781
  %v1926 = vsel %vm1373, %v1910, %v1782
  %v1927 = vsel %vm1373, %v1911, %v1783
  %v1928 = vsel %vm1373, %v1912, %v1784
  %v1929 = vsel %vm1373, %v1913, %v1785
  %v1930 = vsel %vm1373, %v1914, %v1786
  %v1931 = vsel %vm1373, %v1915, %v1787
  %v1932 = vsel %vm1391, %v1916, %v1804
  %v1933 = vsel %vm1391, %v1917, %v1805
  %v1934 = vsel %vm1391, %v1918, %v1806
  %v1935 = vsel %vm1391, %v1919, %v1807
  %v1936 = vsel %vm1391, %v1920, %v1808
  %v1937 = vsel %vm1391, %v1921, %v1809
  %v1938 = vsel %vm1391, %v1922, %v1810
  %v1939 = vsel %vm1391, %v1923, %v1811
  %v1940 = vsel %vm1391, %v1924, %v1812
  %v1941 = vsel %vm1391, %v1925, %v1813
  %v1942 = vsel %vm1391, %v1926, %v1814
  %v1943 = vsel %vm1391, %v1927, %v1815
  %v1944 = vsel %vm1391, %v1928, %v1816
  %v1945 = vsel %vm1391, %v1929, %v1817
  %v1946 = vsel %vm1391, %v1930, %v1818
  %v1947 = vsel %vm1391, %v1931, %v1819
  %v1948 = vrot.slane %v964, 4
  %v1949 = vrot.slane %v966, 4
  %v1950 = vrot.slane %v968, 4
  %v1951 = vrot.slane %v970, 4
  %v1952 = vrot.slane %v972, 4
  %v1953 = vrot.slane %v974, 4
  %v1954 = vrot.slane %v976, 4
  %v1955 = vrot.slane %v978, 4
  %v1956 = vrot.slane %v980, 4
  %v1957 = vrot.slane %v982, 4
  %v1958 = vrot.slane %v984, 4
  %v1959 = vrot.slane %v986, 4
  %v1960 = vrot.slane %v988, 4
  %v1961 = vrot.slane %v990, 4
  %v1962 = vrot.slane %v992, 4
  %v1963 = vrot.slane %v994, 4
  %v1996 = vrot.slane %v997, 1
  %v1997 = vrot.slane %v999, 1
  %v1998 = vrot.slane %v1001, 1
  %v1999 = vrot.slane %v1003, 1
  %v2000 = vrot.slane %v1005, 1
  %v2001 = vrot.slane %v1007, 1
  %v2002 = vrot.slane %v1009, 1
  %v2003 = vrot.slane %v1011, 1
  %v2004 = vrot.slane %v1013, 1
  %v2005 = vrot.slane %v1015, 1
  %v2006 = vrot.slane %v1017, 1
  %v2007 = vrot.slane %v1019, 1
  %v2008 = vrot.slane %v1021, 1
  %v2009 = vrot.slane %v1023, 1
  %v2010 = vrot.slane %v1025, 1
  %v2011 = vrot.slane %v1027, 1
  %v2012 = vsel %vm766, %v1612, %v1644
  %v2013 = vsel %vm766, %v1613, %v1645
  %v2014 = vsel %vm766, %v1614, %v1646
  %v2015 = vsel %vm766, %v1615, %v1647
  %v2016 = vsel %vm766, %v1616, %v1648
  %v2017 = vsel %vm766, %v1617, %v1649
  %v2018 = vsel %vm766, %v1618, %v1650
  %v2019 = vsel %vm766, %v1619, %v1651
  %v2020 = vsel %vm766, %v1620, %v1652
  %v2021 = vsel %vm766, %v1621, %v1653
  %v2022 = vsel %vm766, %v1622, %v1654
  %v2023 = vsel %vm766, %v1623, %v1655
  %v2024 = vsel %vm766, %v1624, %v1656
  %v2025 = vsel %vm766, %v1625, %v1657
  %v2026 = vsel %vm766, %v1626, %v1658
  %v2027 = vsel %vm766, %v1627, %v1659
  %v2028 = vsel %vm1301, %v2012, %v1676
  %v2029 = vsel %vm1301, %v2013, %v1677
  %v2030 = vsel %vm1301, %v2014, %v1678
  %v2031 = vsel %vm1301, %v2015, %v1679
  %v2032 = vsel %vm1301, %v2016, %v1680
  %v2033 = vsel %vm1301, %v2017, %v1681
  %v2034 = vsel %vm1301, %v2018, %v1682
  %v2035 = vsel %vm1301, %v2019, %v1683
  %v2036 = vsel %vm1301, %v2020, %v1684
  %v2037 = vsel %vm1301, %v2021, %v1685
  %v2038 = vsel %vm1301, %v2022, %v1686
  %v2039 = vsel %vm1301, %v2023, %v1687
  %v2040 = vsel %vm1301, %v2024, %v1688
  %v2041 = vsel %vm1301, %v2025, %v1689
  %v2042 = vsel %vm1301, %v2026, %v1690
  %v2043 = vsel %vm1301, %v2027, %v1691
  %v2044 = vsel %vm1319, %v2028, %v1948
  %v2045 = vsel %vm1319, %v2029, %v1949
  %v2046 = vsel %vm1319, %v2030, %v1950
  %v2047 = vsel %vm1319, %v2031, %v1951
  %v2048 = vsel %vm1319, %v2032, %v1952
  %v2049 = vsel %vm1319, %v2033, %v1953
  %v2050 = vsel %vm1319, %v2034, %v1954
  %v2051 = vsel %vm1319, %v2035, %v1955
  %v2052 = vsel %vm1319, %v2036, %v1956
  %v2053 = vsel %vm1319, %v2037, %v1957
  %v2054 = vsel %vm1319, %v2038, %v1958
  %v2055 = vsel %vm1319, %v2039, %v1959
  %v2056 = vsel %vm1319, %v2040, %v1960
  %v2057 = vsel %vm1319, %v2041, %v1961
  %v2058 = vsel %vm1319, %v2042, %v1962
  %v2059 = vsel %vm1319, %v2043, %v1963
  %v2060 = vsel %vm1337, %v2044, %v1740
  %v2061 = vsel %vm1337, %v2045, %v1741
  %v2062 = vsel %vm1337, %v2046, %v1742
  %v2063 = vsel %vm1337, %v2047, %v1743
  %v2064 = vsel %vm1337, %v2048, %v1744
  %v2065 = vsel %vm1337, %v2049, %v1745
  %v2066 = vsel %vm1337, %v2050, %v1746
  %v2067 = vsel %vm1337, %v2051, %v1747
  %v2068 = vsel %vm1337, %v2052, %v1748
  %v2069 = vsel %vm1337, %v2053, %v1749
  %v2070 = vsel %vm1337, %v2054, %v1750
  %v2071 = vsel %vm1337, %v2055, %v1751
  %v2072 = vsel %vm1337, %v2056, %v1752
  %v2073 = vsel %vm1337, %v2057, %v1753
  %v2074 = vsel %vm1337, %v2058, %v1754
  %v2075 = vsel %vm1337, %v2059, %v1755
  %v2076 = vsel %vm1355, %v2060, %v1772
  %v2077 = vsel %vm1355, %v2061, %v1773
  %v2078 = vsel %vm1355, %v2062, %v1774
  %v2079 = vsel %vm1355, %v2063, %v1775
  %v2080 = vsel %vm1355, %v2064, %v1776
  %v2081 = vsel %vm1355, %v2065, %v1777
  %v2082 = vsel %vm1355, %v2066, %v1778
  %v2083 = vsel %vm1355, %v2067, %v1779
  %v2084 = vsel %vm1355, %v2068, %v1780
  %v2085 = vsel %vm1355, %v2069, %v1781
  %v2086 = vsel %vm1355, %v2070, %v1782
  %v2087 = vsel %vm1355, %v2071, %v1783
  %v2088 = vsel %vm1355, %v2072, %v1784
  %v2089 = vsel %vm1355, %v2073, %v1785
  %v2090 = vsel %vm1355, %v2074, %v1786
  %v2091 = vsel %vm1355, %v2075, %v1787
  %v2092 = vsel %vm1373, %v2076, %v1804
  %v2093 = vsel %vm1373, %v2077, %v1805
  %v2094 = vsel %vm1373, %v2078, %v1806
  %v2095 = vsel %vm1373, %v2079, %v1807
  %v2096 = vsel %vm1373, %v2080, %v1808
  %v2097 = vsel %vm1373, %v2081, %v1809
  %v2098 = vsel %vm1373, %v2082, %v1810
  %v2099 = vsel %vm1373, %v2083, %v1811
  %v2100 = vsel %vm1373, %v2084, %v1812
  %v2101 = vsel %vm1373, %v2085, %v1813
  %v2102 = vsel %vm1373, %v2086, %v1814
  %v2103 = vsel %vm1373, %v2087, %v1815
  %v2104 = vsel %vm1373, %v2088, %v1816
  %v2105 = vsel %vm1373, %v2089, %v1817
  %v2106 = vsel %vm1373, %v2090, %v1818
  %v2107 = vsel %vm1373, %v2091, %v1819
  %v2108 = vsel %vm1391, %v2092, %v771
  %v2109 = vsel %vm1391, %v2093, %v777
  %v2110 = vsel %vm1391, %v2094, %v783
  %v2111 = vsel %vm1391, %v2095, %v789
  %v2112 = vsel %vm1391, %v2096, %v795
  %v2113 = vsel %vm1391, %v2097, %v801
  %v2114 = vsel %vm1391, %v2098, %v807
  %v2115 = vsel %vm1391, %v2099, %v813
  %v2116 = vsel %vm1391, %v2100, %v819
  %v2117 = vsel %vm1391, %v2101, %v825
  %v2118 = vsel %vm1391, %v2102, %v831
  %v2119 = vsel %vm1391, %v2103, %v837
  %v2120 = vsel %vm1391, %v2104, %v843
  %v2121 = vsel %vm1391, %v2105, %v849
  %v2122 = vsel %vm1391, %v2106, %v855
  %v2123 = vsel %vm1391, %v2107, %v861
  %v2124 = vld [vmem:[%s2] sm:$0xff]
  %s2125 = scalar_lea.vmem %s2, 8
  %v2126 = vld [vmem:[%s2125] sm:$0xff]
  %vm2127 = vcmask 64512
  %v2129 = vsel %vm2127, %v1579, 0
  %v2132 = vsel %vm2127, %v1580, 0
  %v2135 = vsel %vm2127, %v1581, 0
  %v2138 = vsel %vm2127, %v1582, 0
  %v2141 = vsel %vm2127, %v1583, 0
  %v2144 = vsel %vm2127, %v1584, 0
  %v2147 = vsel %vm2127, %v1585, 0
  %v2150 = vsel %vm2127, %v1586, 0
  %v2153 = vsel %vm2127, %v1588, 0
  %v2156 = vsel %vm2127, %v1589, 0
  %v2159 = vsel %vm2127, %v1590, 0
  %v2162 = vsel %vm2127, %v1591, 0
  %v2165 = vsel %vm2127, %v1592, 0
  %v2168 = vsel %vm2127, %v1593, 0
  %v2171 = vsel %vm2127, %v1594, 0
  %2173 = vmatpush.msra.mxu0 0.0
  %2174 = vmatpush.msra.mxu0 0.0
  %2175 = vmatpush.msra.mxu0 0.0
  %2176 = vmatpush.msra.mxu0 0.0
  %2177 = vmatpush.msra.mxu0 0.0
  %2178 = vmatpush.msra.mxu0 0.0
  %2179 = vmatpush.msra.mxu0 0.0
  %2180 = vmatpush.msra.mxu0 0.0
  %2181 = vmatpush.msra.mxu0 0.0
  %2182 = vmatpush.msra.mxu0 0.0
  %2183 = vmatpush.msra.mxu0 0.0
  %2184 = vmatpush.msra.mxu0 0.0
  %2185 = vmatpush.msra.mxu0 0.0
  %2186 = vmatpush.msra.mxu0 0.0
  %2187 = vmatpush.msra.mxu0 0.0
  %2188 = vmatpush.msra.mxu0 %v2126
  %2189 = vmatmul.f32.gmra.mxu0 %v2129
  %v2190 = vpop.f32.mrf.mxu0
  %v2191 = vadd.f32 0.0, %v2190
  %2192 = vmatmul.f32.gmra.mxu0 %v2132
  %v2193 = vpop.f32.mrf.mxu0
  %v2194 = vadd.f32 0.0, %v2193
  %2195 = vmatmul.f32.gmra.mxu0 %v2135
  %v2196 = vpop.f32.mrf.mxu0
  %v2197 = vadd.f32 0.0, %v2196
  %2198 = vmatmul.f32.gmra.mxu0 %v2138
  %v2199 = vpop.f32.mrf.mxu0
  %v2200 = vadd.f32 0.0, %v2199
  %2201 = vmatmul.f32.gmra.mxu0 %v2141
  %v2202 = vpop.f32.mrf.mxu0
  %v2203 = vadd.f32 0.0, %v2202
  %2204 = vmatmul.f32.gmra.mxu0 %v2144
  %v2205 = vpop.f32.mrf.mxu0
  %v2206 = vadd.f32 0.0, %v2205
  %2207 = vmatmul.f32.gmra.mxu0 %v2147
  %v2208 = vpop.f32.mrf.mxu0
  %v2209 = vadd.f32 0.0, %v2208
  %2210 = vmatmul.f32.gmra.mxu0 %v2150
  %v2211 = vpop.f32.mrf.mxu0
  %v2212 = vadd.f32 0.0, %v2211
  %2213 = vmatmul.f32.gmra.mxu0 %v2129
  %v2214 = vpop.f32.mrf.mxu0
  %v2215 = vadd.f32 0.0, %v2214
  %2216 = vmatmul.f32.gmra.mxu0 %v2153
  %v2217 = vpop.f32.mrf.mxu0
  %v2218 = vadd.f32 0.0, %v2217
  %2219 = vmatmul.f32.gmra.mxu0 %v2156
  %v2220 = vpop.f32.mrf.mxu0
  %v2221 = vadd.f32 0.0, %v2220
  %2222 = vmatmul.f32.gmra.mxu0 %v2159
  %v2223 = vpop.f32.mrf.mxu0
  %v2224 = vadd.f32 0.0, %v2223
  %2225 = vmatmul.f32.gmra.mxu0 %v2162
  %v2226 = vpop.f32.mrf.mxu0
  %v2227 = vadd.f32 0.0, %v2226
  %2228 = vmatmul.f32.gmra.mxu0 %v2165
  %v2229 = vpop.f32.mrf.mxu0
  %v2230 = vadd.f32 0.0, %v2229
  %2231 = vmatmul.f32.gmra.mxu0 %v2168
  %v2232 = vpop.f32.mrf.mxu0
  %v2233 = vadd.f32 0.0, %v2232
  %2234 = vmatmul.f32.gmra.mxu0 %v2171
  %v2235 = vpop.f32.mrf.mxu0
  %v2236 = vadd.f32 0.0, %v2235
  %2237 = vdwg.mxu0
  %v2239 = vsel %vm2127, %v1392, 0
  %v2242 = vsel %vm2127, %v1393, 0
  %v2245 = vsel %vm2127, %v1394, 0
  %v2248 = vsel %vm2127, %v1395, 0
  %v2251 = vsel %vm2127, %v1396, 0
  %v2254 = vsel %vm2127, %v1397, 0
  %v2257 = vsel %vm2127, %v1398, 0
  %v2260 = vsel %vm2127, %v1399, 0
  %v2263 = vsel %vm2127, %v1401, 0
  %v2266 = vsel %vm2127, %v1402, 0
  %v2269 = vsel %vm2127, %v1403, 0
  %v2272 = vsel %vm2127, %v1404, 0
  %v2275 = vsel %vm2127, %v1405, 0
  %v2278 = vsel %vm2127, %v1406, 0
  %v2281 = vsel %vm2127, %v1407, 0
  %2283 = vmatpush.msra.mxu0 0.0
  %2284 = vmatpush.msra.mxu0 0.0
  %2285 = vmatpush.msra.mxu0 0.0
  %2286 = vmatpush.msra.mxu0 0.0
  %2287 = vmatpush.msra.mxu0 0.0
  %2288 = vmatpush.msra.mxu0 0.0
  %2289 = vmatpush.msra.mxu0 0.0
  %2290 = vmatpush.msra.mxu0 0.0
  %2291 = vmatpush.msra.mxu0 0.0
  %2292 = vmatpush.msra.mxu0 0.0
  %2293 = vmatpush.msra.mxu0 0.0
  %2294 = vmatpush.msra.mxu0 0.0
  %2295 = vmatpush.msra.mxu0 0.0
  %2296 = vmatpush.msra.mxu0 0.0
  %2297 = vmatpush.msra.mxu0 0.0
  %2298 = vmatpush.msra.mxu0 %v2124
  %2299 = vmatmul.f32.gmra.mxu0 %v2239
  %v2300 = vpop.f32.mrf.mxu0
  %v2301 = vadd.f32 %v2191, %v2300
  %2302 = vmatmul.f32.gmra.mxu0 %v2242
  %v2303 = vpop.f32.mrf.mxu0
  %v2304 = vadd.f32 %v2194, %v2303
  %2305 = vmatmul.f32.gmra.mxu0 %v2245
  %v2306 = vpop.f32.mrf.mxu0
  %v2307 = vadd.f32 %v2197, %v2306
  %2308 = vmatmul.f32.gmra.mxu0 %v2248
  %v2309 = vpop.f32.mrf.mxu0
  %v2310 = vadd.f32 %v2200, %v2309
  %2311 = vmatmul.f32.gmra.mxu0 %v2251
  %v2312 = vpop.f32.mrf.mxu0
  %v2313 = vadd.f32 %v2203, %v2312
  %2314 = vmatmul.f32.gmra.mxu0 %v2254
  %v2315 = vpop.f32.mrf.mxu0
  %v2316 = vadd.f32 %v2206, %v2315
  %2317 = vmatmul.f32.gmra.mxu0 %v2257
  %v2318 = vpop.f32.mrf.mxu0
  %v2319 = vadd.f32 %v2209, %v2318
  %2320 = vmatmul.f32.gmra.mxu0 %v2260
  %v2321 = vpop.f32.mrf.mxu0
  %v2322 = vadd.f32 %v2212, %v2321
  %2323 = vmatmul.f32.gmra.mxu0 %v2239
  %v2324 = vpop.f32.mrf.mxu0
  %v2325 = vadd.f32 %v2215, %v2324
  %2326 = vmatmul.f32.gmra.mxu0 %v2263
  %v2327 = vpop.f32.mrf.mxu0
  %v2328 = vadd.f32 %v2218, %v2327
  %2329 = vmatmul.f32.gmra.mxu0 %v2266
  %v2330 = vpop.f32.mrf.mxu0
  %v2331 = vadd.f32 %v2221, %v2330
  %2332 = vmatmul.f32.gmra.mxu0 %v2269
  %v2333 = vpop.f32.mrf.mxu0
  %v2334 = vadd.f32 %v2224, %v2333
  %2335 = vmatmul.f32.gmra.mxu0 %v2272
  %v2336 = vpop.f32.mrf.mxu0
  %v2337 = vadd.f32 %v2227, %v2336
  %2338 = vmatmul.f32.gmra.mxu0 %v2275
  %v2339 = vpop.f32.mrf.mxu0
  %v2340 = vadd.f32 %v2230, %v2339
  %2341 = vmatmul.f32.gmra.mxu0 %v2278
  %v2342 = vpop.f32.mrf.mxu0
  %v2343 = vadd.f32 %v2233, %v2342
  %2344 = vmatmul.f32.gmra.mxu0 %v2281
  %v2345 = vpop.f32.mrf.mxu0
  %v2346 = vadd.f32 %v2236, %v2345
  %2347 = vdwg.mxu0
  %v2348 = vrot.slane %v1392, 1
  %v2349 = vsel %vm1391, %v2348, %v1460
  %v2350 = vrot.slane %v1393, 1
  %v2351 = vsel %vm1391, %v2350, %v1461
  %v2352 = vrot.slane %v1394, 1
  %v2353 = vsel %vm1391, %v2352, %v1462
  %v2354 = vrot.slane %v1395, 1
  %v2355 = vsel %vm1391, %v2354, %v1463
  %v2356 = vrot.slane %v1396, 1
  %v2357 = vsel %vm1391, %v2356, %v1464
  %v2358 = vrot.slane %v1397, 1
  %v2359 = vsel %vm1391, %v2358, %v1465
  %v2360 = vrot.slane %v1398, 1
  %v2361 = vsel %vm1391, %v2360, %v1466
  %v2362 = vrot.slane %v1399, 1
  %v2363 = vsel %vm1391, %v2362, %v1467
  %v2364 = vrot.slane %v1401, 1
  %v2365 = vsel %vm1391, %v2364, %v1469
  %v2366 = vrot.slane %v1402, 1
  %v2367 = vsel %vm1391, %v2366, %v1470
  %v2368 = vrot.slane %v1403, 1
  %v2369 = vsel %vm1391, %v2368, %v1471
  %v2370 = vrot.slane %v1404, 1
  %v2371 = vsel %vm1391, %v2370, %v1472
  %v2372 = vrot.slane %v1405, 1
  %v2373 = vsel %vm1391, %v2372, %v1473
  %v2374 = vrot.slane %v1406, 1
  %v2375 = vsel %vm1391, %v2374, %v1474
  %v2376 = vrot.slane %v1407, 1
  %v2377 = vsel %vm1391, %v2376, %v1475
  %s2378 = scalar_lea.vmem %s2, 16
  %v2379 = vld [vmem:[%s2378] sm:$0xff]
  %v2380 = vsel %vm2127, %v2349, 0
  %v2382 = vsel %vm2127, %v2351, 0
  %v2384 = vsel %vm2127, %v2353, 0
  %v2386 = vsel %vm2127, %v2355, 0
  %v2388 = vsel %vm2127, %v2357, 0
  %v2390 = vsel %vm2127, %v2359, 0
  %v2392 = vsel %vm2127, %v2361, 0
  %v2394 = vsel %vm2127, %v2363, 0
  %v2396 = vsel %vm2127, %v2365, 0
  %v2398 = vsel %vm2127, %v2367, 0
  %v2400 = vsel %vm2127, %v2369, 0
  %v2402 = vsel %vm2127, %v2371, 0
  %v2404 = vsel %vm2127, %v2373, 0
  %v2406 = vsel %vm2127, %v2375, 0
  %v2408 = vsel %vm2127, %v2377, 0
  %2410 = vmatpush.msra.mxu0 0.0
  %2411 = vmatpush.msra.mxu0 0.0
  %2412 = vmatpush.msra.mxu0 0.0
  %2413 = vmatpush.msra.mxu0 0.0
  %2414 = vmatpush.msra.mxu0 0.0
  %2415 = vmatpush.msra.mxu0 0.0
  %2416 = vmatpush.msra.mxu0 0.0
  %2417 = vmatpush.msra.mxu0 0.0
  %2418 = vmatpush.msra.mxu0 0.0
  %2419 = vmatpush.msra.mxu0 0.0
  %2420 = vmatpush.msra.mxu0 0.0
  %2421 = vmatpush.msra.mxu0 0.0
  %2422 = vmatpush.msra.mxu0 0.0
  %2423 = vmatpush.msra.mxu0 0.0
  %2424 = vmatpush.msra.mxu0 0.0
  %2425 = vmatpush.msra.mxu0 %v2379
  %2426 = vmatmul.f32.gmra.mxu0 %v2380
  %v2427 = vpop.f32.mrf.mxu0
  %v2428 = vadd.f32 0.0, %v2427
  %2429 = vmatmul.f32.gmra.mxu0 %v2382
  %v2430 = vpop.f32.mrf.mxu0
  %v2431 = vadd.f32 0.0, %v2430
  %2432 = vmatmul.f32.gmra.mxu0 %v2384
  %v2433 = vpop.f32.mrf.mxu0
  %v2434 = vadd.f32 0.0, %v2433
  %2435 = vmatmul.f32.gmra.mxu0 %v2386
  %v2436 = vpop.f32.mrf.mxu0
  %v2437 = vadd.f32 0.0, %v2436
  %2438 = vmatmul.f32.gmra.mxu0 %v2388
  %v2439 = vpop.f32.mrf.mxu0
  %v2440 = vadd.f32 0.0, %v2439
  %2441 = vmatmul.f32.gmra.mxu0 %v2390
  %v2442 = vpop.f32.mrf.mxu0
  %v2443 = vadd.f32 0.0, %v2442
  %2444 = vmatmul.f32.gmra.mxu0 %v2392
  %v2445 = vpop.f32.mrf.mxu0
  %v2446 = vadd.f32 0.0, %v2445
  %2447 = vmatmul.f32.gmra.mxu0 %v2394
  %v2448 = vpop.f32.mrf.mxu0
  %v2449 = vadd.f32 0.0, %v2448
  %2450 = vmatmul.f32.gmra.mxu0 %v2380
  %v2451 = vpop.f32.mrf.mxu0
  %v2452 = vadd.f32 0.0, %v2451
  %2453 = vmatmul.f32.gmra.mxu0 %v2396
  %v2454 = vpop.f32.mrf.mxu0
  %v2455 = vadd.f32 0.0, %v2454
  %2456 = vmatmul.f32.gmra.mxu0 %v2398
  %v2457 = vpop.f32.mrf.mxu0
  %v2458 = vadd.f32 0.0, %v2457
  %2459 = vmatmul.f32.gmra.mxu0 %v2400
  %v2460 = vpop.f32.mrf.mxu0
  %v2461 = vadd.f32 0.0, %v2460
  %2462 = vmatmul.f32.gmra.mxu0 %v2402
  %v2463 = vpop.f32.mrf.mxu0
  %v2464 = vadd.f32 0.0, %v2463
  %2465 = vmatmul.f32.gmra.mxu0 %v2404
  %v2466 = vpop.f32.mrf.mxu0
  %v2467 = vadd.f32 0.0, %v2466
  %2468 = vmatmul.f32.gmra.mxu0 %v2406
  %v2469 = vpop.f32.mrf.mxu0
  %v2470 = vadd.f32 0.0, %v2469
  %2471 = vmatmul.f32.gmra.mxu0 %v2408
  %v2472 = vpop.f32.mrf.mxu0
  %v2473 = vadd.f32 0.0, %v2472
  %2474 = vdwg.mxu0
  %v2475 = vadd.f32 %v2301, %v2428
  %v2476 = vadd.f32 %v2304, %v2431
  %v2477 = vadd.f32 %v2307, %v2434
  %v2478 = vadd.f32 %v2310, %v2437
  %v2479 = vadd.f32 %v2313, %v2440
  %v2480 = vadd.f32 %v2316, %v2443
  %v2481 = vadd.f32 %v2319, %v2446
  %v2482 = vadd.f32 %v2322, %v2449
  %v2483 = vadd.f32 %v2325, %v2452
  %v2484 = vadd.f32 %v2328, %v2455
  %v2485 = vadd.f32 %v2331, %v2458
  %v2486 = vadd.f32 %v2334, %v2461
  %v2487 = vadd.f32 %v2337, %v2464
  %v2488 = vadd.f32 %v2340, %v2467
  %v2489 = vadd.f32 %v2343, %v2470
  %v2490 = vadd.f32 %v2346, %v2473
  %v2491 = vrot.slane %v1579, 1
  %v2492 = vrot.slane %v1460, 1
  %v2493 = vsel %vm1391, %v2491, %v2492
  %v2494 = vrot.slane %v1580, 1
  %v2495 = vrot.slane %v1461, 1
  %v2496 = vsel %vm1391, %v2494, %v2495
  %v2497 = vrot.slane %v1581, 1
  %v2498 = vrot.slane %v1462, 1
  %v2499 = vsel %vm1391, %v2497, %v2498
  %v2500 = vrot.slane %v1582, 1
  %v2501 = vrot.slane %v1463, 1
  %v2502 = vsel %vm1391, %v2500, %v2501
  %v2503 = vrot.slane %v1583, 1
  %v2504 = vrot.slane %v1464, 1
  %v2505 = vsel %vm1391, %v2503, %v2504
  %v2506 = vrot.slane %v1584, 1
  %v2507 = vrot.slane %v1465, 1
  %v2508 = vsel %vm1391, %v2506, %v2507
  %v2509 = vrot.slane %v1585, 1
  %v2510 = vrot.slane %v1466, 1
  %v2511 = vsel %vm1391, %v2509, %v2510
  %v2512 = vrot.slane %v1586, 1
  %v2513 = vrot.slane %v1467, 1
  %v2514 = vsel %vm1391, %v2512, %v2513
  %v2515 = vrot.slane %v1588, 1
  %v2516 = vrot.slane %v1469, 1
  %v2517 = vsel %vm1391, %v2515, %v2516
  %v2518 = vrot.slane %v1589, 1
  %v2519 = vrot.slane %v1470, 1
  %v2520 = vsel %vm1391, %v2518, %v2519
  %v2521 = vrot.slane %v1590, 1
  %v2522 = vrot.slane %v1471, 1
  %v2523 = vsel %vm1391, %v2521, %v2522
  %v2524 = vrot.slane %v1591, 1
  %v2525 = vrot.slane %v1472, 1
  %v2526 = vsel %vm1391, %v2524, %v2525
  %v2527 = vrot.slane %v1592, 1
  %v2528 = vrot.slane %v1473, 1
  %v2529 = vsel %vm1391, %v2527, %v2528
  %v2530 = vrot.slane %v1593, 1
  %v2531 = vrot.slane %v1474, 1
  %v2532 = vsel %vm1391, %v2530, %v2531
  %v2533 = vrot.slane %v1594, 1
  %v2534 = vrot.slane %v1475, 1
  %v2535 = vsel %vm1391, %v2533, %v2534
  %s2536 = scalar_lea.vmem %s2, 24
  %v2537 = vld [vmem:[%s2536] sm:$0xff]
  %v2538 = vsel %vm2127, %v2493, 0
  %v2540 = vsel %vm2127, %v2496, 0
  %v2542 = vsel %vm2127, %v2499, 0
  %v2544 = vsel %vm2127, %v2502, 0
  %v2546 = vsel %vm2127, %v2505, 0
  %v2548 = vsel %vm2127, %v2508, 0
  %v2550 = vsel %vm2127, %v2511, 0
  %v2552 = vsel %vm2127, %v2514, 0
  %v2554 = vsel %vm2127, %v2517, 0
  %v2556 = vsel %vm2127, %v2520, 0
  %v2558 = vsel %vm2127, %v2523, 0
  %v2560 = vsel %vm2127, %v2526, 0
  %v2562 = vsel %vm2127, %v2529, 0
  %v2564 = vsel %vm2127, %v2532, 0
  %v2566 = vsel %vm2127, %v2535, 0
  %2568 = vmatpush.msra.mxu0 0.0
  %2569 = vmatpush.msra.mxu0 0.0
  %2570 = vmatpush.msra.mxu0 0.0
  %2571 = vmatpush.msra.mxu0 0.0
  %2572 = vmatpush.msra.mxu0 0.0
  %2573 = vmatpush.msra.mxu0 0.0
  %2574 = vmatpush.msra.mxu0 0.0
  %2575 = vmatpush.msra.mxu0 0.0
  %2576 = vmatpush.msra.mxu0 0.0
  %2577 = vmatpush.msra.mxu0 0.0
  %2578 = vmatpush.msra.mxu0 0.0
  %2579 = vmatpush.msra.mxu0 0.0
  %2580 = vmatpush.msra.mxu0 0.0
  %2581 = vmatpush.msra.mxu0 0.0
  %2582 = vmatpush.msra.mxu0 0.0
  %2583 = vmatpush.msra.mxu0 %v2537
  %2584 = vmatmul.f32.gmra.mxu0 %v2538
  %v2585 = vpop.f32.mrf.mxu0
  %v2586 = vadd.f32 0.0, %v2585
  %2587 = vmatmul.f32.gmra.mxu0 %v2540
  %v2588 = vpop.f32.mrf.mxu0
  %v2589 = vadd.f32 0.0, %v2588
  %2590 = vmatmul.f32.gmra.mxu0 %v2542
  %v2591 = vpop.f32.mrf.mxu0
  %v2592 = vadd.f32 0.0, %v2591
  %2593 = vmatmul.f32.gmra.mxu0 %v2544
  %v2594 = vpop.f32.mrf.mxu0
  %v2595 = vadd.f32 0.0, %v2594
  %2596 = vmatmul.f32.gmra.mxu0 %v2546
  %v2597 = vpop.f32.mrf.mxu0
  %v2598 = vadd.f32 0.0, %v2597
  %2599 = vmatmul.f32.gmra.mxu0 %v2548
  %v2600 = vpop.f32.mrf.mxu0
  %v2601 = vadd.f32 0.0, %v2600
  %2602 = vmatmul.f32.gmra.mxu0 %v2550
  %v2603 = vpop.f32.mrf.mxu0
  %v2604 = vadd.f32 0.0, %v2603
  %2605 = vmatmul.f32.gmra.mxu0 %v2552
  %v2606 = vpop.f32.mrf.mxu0
  %v2607 = vadd.f32 0.0, %v2606
  %2608 = vmatmul.f32.gmra.mxu0 %v2538
  %v2609 = vpop.f32.mrf.mxu0
  %v2610 = vadd.f32 0.0, %v2609
  %2611 = vmatmul.f32.gmra.mxu0 %v2554
  %v2612 = vpop.f32.mrf.mxu0
  %v2613 = vadd.f32 0.0, %v2612
  %2614 = vmatmul.f32.gmra.mxu0 %v2556
  %v2615 = vpop.f32.mrf.mxu0
  %v2616 = vadd.f32 0.0, %v2615
  %2617 = vmatmul.f32.gmra.mxu0 %v2558
  %v2618 = vpop.f32.mrf.mxu0
  %v2619 = vadd.f32 0.0, %v2618
  %2620 = vmatmul.f32.gmra.mxu0 %v2560
  %v2621 = vpop.f32.mrf.mxu0
  %v2622 = vadd.f32 0.0, %v2621
  %2623 = vmatmul.f32.gmra.mxu0 %v2562
  %v2624 = vpop.f32.mrf.mxu0
  %v2625 = vadd.f32 0.0, %v2624
  %2626 = vmatmul.f32.gmra.mxu0 %v2564
  %v2627 = vpop.f32.mrf.mxu0
  %v2628 = vadd.f32 0.0, %v2627
  %2629 = vmatmul.f32.gmra.mxu0 %v2566
  %v2630 = vpop.f32.mrf.mxu0
  %v2631 = vadd.f32 0.0, %v2630
  %2632 = vdwg.mxu0
  %v2633 = vadd.f32 %v2475, %v2586
  %v2634 = vadd.f32 %v2476, %v2589
  %v2635 = vadd.f32 %v2477, %v2592
  %v2636 = vadd.f32 %v2478, %v2595
  %v2637 = vadd.f32 %v2479, %v2598
  %v2638 = vadd.f32 %v2480, %v2601
  %v2639 = vadd.f32 %v2481, %v2604
  %v2640 = vadd.f32 %v2482, %v2607
  %v2641 = vadd.f32 %v2483, %v2610
  %v2642 = vadd.f32 %v2484, %v2613
  %v2643 = vadd.f32 %v2485, %v2616
  %v2644 = vadd.f32 %v2486, %v2619
  %v2645 = vadd.f32 %v2487, %v2622
  %v2646 = vadd.f32 %v2488, %v2625
  %v2647 = vadd.f32 %v2489, %v2628
  %v2648 = vadd.f32 %v2490, %v2631
  %s2649 = scalar_lea.vmem %s2, 32
  %v2650 = vld [vmem:[%s2649] sm:$0xff]
  %v2652 = vsel %vm2127, %v1932, 0
  %v2655 = vsel %vm2127, %v1933, 0
  %v2658 = vsel %vm2127, %v1934, 0
  %v2661 = vsel %vm2127, %v1935, 0
  %v2664 = vsel %vm2127, %v1936, 0
  %v2667 = vsel %vm2127, %v1937, 0
  %v2670 = vsel %vm2127, %v1938, 0
  %v2673 = vsel %vm2127, %v1939, 0
  %v2676 = vsel %vm2127, %v1940, 0
  %v2679 = vsel %vm2127, %v1941, 0
  %v2682 = vsel %vm2127, %v1942, 0
  %v2685 = vsel %vm2127, %v1943, 0
  %v2688 = vsel %vm2127, %v1944, 0
  %v2691 = vsel %vm2127, %v1945, 0
  %v2694 = vsel %vm2127, %v1946, 0
  %v2697 = vsel %vm2127, %v1947, 0
  %2699 = vmatpush.msra.mxu0 0.0
  %2700 = vmatpush.msra.mxu0 0.0
  %2701 = vmatpush.msra.mxu0 0.0
  %2702 = vmatpush.msra.mxu0 0.0
  %2703 = vmatpush.msra.mxu0 0.0
  %2704 = vmatpush.msra.mxu0 0.0
  %2705 = vmatpush.msra.mxu0 0.0
  %2706 = vmatpush.msra.mxu0 0.0
  %2707 = vmatpush.msra.mxu0 0.0
  %2708 = vmatpush.msra.mxu0 0.0
  %2709 = vmatpush.msra.mxu0 0.0
  %2710 = vmatpush.msra.mxu0 0.0
  %2711 = vmatpush.msra.mxu0 0.0
  %2712 = vmatpush.msra.mxu0 0.0
  %2713 = vmatpush.msra.mxu0 0.0
  %2714 = vmatpush.msra.mxu0 %v2650
  %2715 = vmatmul.f32.gmra.mxu0 %v2652
  %v2716 = vpop.f32.mrf.mxu0
  %v2717 = vadd.f32 0.0, %v2716
  %2718 = vmatmul.f32.gmra.mxu0 %v2655
  %v2719 = vpop.f32.mrf.mxu0
  %v2720 = vadd.f32 0.0, %v2719
  %2721 = vmatmul.f32.gmra.mxu0 %v2658
  %v2722 = vpop.f32.mrf.mxu0
  %v2723 = vadd.f32 0.0, %v2722
  %2724 = vmatmul.f32.gmra.mxu0 %v2661
  %v2725 = vpop.f32.mrf.mxu0
  %v2726 = vadd.f32 0.0, %v2725
  %2727 = vmatmul.f32.gmra.mxu0 %v2664
  %v2728 = vpop.f32.mrf.mxu0
  %v2729 = vadd.f32 0.0, %v2728
  %2730 = vmatmul.f32.gmra.mxu0 %v2667
  %v2731 = vpop.f32.mrf.mxu0
  %v2732 = vadd.f32 0.0, %v2731
  %2733 = vmatmul.f32.gmra.mxu0 %v2670
  %v2734 = vpop.f32.mrf.mxu0
  %v2735 = vadd.f32 0.0, %v2734
  %2736 = vmatmul.f32.gmra.mxu0 %v2673
  %v2737 = vpop.f32.mrf.mxu0
  %v2738 = vadd.f32 0.0, %v2737
  %2739 = vmatmul.f32.gmra.mxu0 %v2676
  %v2740 = vpop.f32.mrf.mxu0
  %v2741 = vadd.f32 0.0, %v2740
  %2742 = vmatmul.f32.gmra.mxu0 %v2679
  %v2743 = vpop.f32.mrf.mxu0
  %v2744 = vadd.f32 0.0, %v2743
  %2745 = vmatmul.f32.gmra.mxu0 %v2682
  %v2746 = vpop.f32.mrf.mxu0
  %v2747 = vadd.f32 0.0, %v2746
  %2748 = vmatmul.f32.gmra.mxu0 %v2685
  %v2749 = vpop.f32.mrf.mxu0
  %v2750 = vadd.f32 0.0, %v2749
  %2751 = vmatmul.f32.gmra.mxu0 %v2688
  %v2752 = vpop.f32.mrf.mxu0
  %v2753 = vadd.f32 0.0, %v2752
  %2754 = vmatmul.f32.gmra.mxu0 %v2691
  %v2755 = vpop.f32.mrf.mxu0
  %v2756 = vadd.f32 0.0, %v2755
  %2757 = vmatmul.f32.gmra.mxu0 %v2694
  %v2758 = vpop.f32.mrf.mxu0
  %v2759 = vadd.f32 0.0, %v2758
  %2760 = vmatmul.f32.gmra.mxu0 %v2697
  %v2761 = vpop.f32.mrf.mxu0
  %v2762 = vadd.f32 0.0, %v2761
  %2763 = vdwg.mxu0
  %v2764 = vadd.f32 %v2633, %v2717
  %v2765 = vadd.f32 %v2634, %v2720
  %v2766 = vadd.f32 %v2635, %v2723
  %v2767 = vadd.f32 %v2636, %v2726
  %v2768 = vadd.f32 %v2637, %v2729
  %v2769 = vadd.f32 %v2638, %v2732
  %v2770 = vadd.f32 %v2639, %v2735
  %v2771 = vadd.f32 %v2640, %v2738
  %v2772 = vadd.f32 %v2641, %v2741
  %v2773 = vadd.f32 %v2642, %v2744
  %v2774 = vadd.f32 %v2643, %v2747
  %v2775 = vadd.f32 %v2644, %v2750
  %v2776 = vadd.f32 %v2645, %v2753
  %v2777 = vadd.f32 %v2646, %v2756
  %v2778 = vadd.f32 %v2647, %v2759
  %v2779 = vadd.f32 %v2648, %v2762
  %s2780 = scalar_lea.vmem %s2, 40
  %v2781 = vld [vmem:[%s2780] sm:$0xff]
  %v2783 = vsel %vm2127, %v2108, 0
  %v2786 = vsel %vm2127, %v2109, 0
  %v2789 = vsel %vm2127, %v2110, 0
  %v2792 = vsel %vm2127, %v2111, 0
  %v2795 = vsel %vm2127, %v2112, 0
  %v2798 = vsel %vm2127, %v2113, 0
  %v2801 = vsel %vm2127, %v2114, 0
  %v2804 = vsel %vm2127, %v2115, 0
  %v2807 = vsel %vm2127, %v2116, 0
  %v2810 = vsel %vm2127, %v2117, 0
  %v2813 = vsel %vm2127, %v2118, 0
  %v2816 = vsel %vm2127, %v2119, 0
  %v2819 = vsel %vm2127, %v2120, 0
  %v2822 = vsel %vm2127, %v2121, 0
  %v2825 = vsel %vm2127, %v2122, 0
  %v2828 = vsel %vm2127, %v2123, 0
  %2830 = vmatpush.msra.mxu0 0.0
  %2831 = vmatpush.msra.mxu0 0.0
  %2832 = vmatpush.msra.mxu0 0.0
  %2833 = vmatpush.msra.mxu0 0.0
  %2834 = vmatpush.msra.mxu0 0.0
  %2835 = vmatpush.msra.mxu0 0.0
  %2836 = vmatpush.msra.mxu0 0.0
  %2837 = vmatpush.msra.mxu0 0.0
  %2838 = vmatpush.msra.mxu0 0.0
  %2839 = vmatpush.msra.mxu0 0.0
  %2840 = vmatpush.msra.mxu0 0.0
  %2841 = vmatpush.msra.mxu0 0.0
  %2842 = vmatpush.msra.mxu0 0.0
  %2843 = vmatpush.msra.mxu0 0.0
  %2844 = vmatpush.msra.mxu0 0.0
  %2845 = vmatpush.msra.mxu0 %v2781
  %2846 = vmatmul.f32.gmra.mxu0 %v2783
  %v2847 = vpop.f32.mrf.mxu0
  %v2848 = vadd.f32 0.0, %v2847
  %2849 = vmatmul.f32.gmra.mxu0 %v2786
  %v2850 = vpop.f32.mrf.mxu0
  %v2851 = vadd.f32 0.0, %v2850
  %2852 = vmatmul.f32.gmra.mxu0 %v2789
  %v2853 = vpop.f32.mrf.mxu0
  %v2854 = vadd.f32 0.0, %v2853
  %2855 = vmatmul.f32.gmra.mxu0 %v2792
  %v2856 = vpop.f32.mrf.mxu0
  %v2857 = vadd.f32 0.0, %v2856
  %2858 = vmatmul.f32.gmra.mxu0 %v2795
  %v2859 = vpop.f32.mrf.mxu0
  %v2860 = vadd.f32 0.0, %v2859
  %2861 = vmatmul.f32.gmra.mxu0 %v2798
  %v2862 = vpop.f32.mrf.mxu0
  %v2863 = vadd.f32 0.0, %v2862
  %2864 = vmatmul.f32.gmra.mxu0 %v2801
  %v2865 = vpop.f32.mrf.mxu0
  %v2866 = vadd.f32 0.0, %v2865
  %2867 = vmatmul.f32.gmra.mxu0 %v2804
  %v2868 = vpop.f32.mrf.mxu0
  %v2869 = vadd.f32 0.0, %v2868
  %2870 = vmatmul.f32.gmra.mxu0 %v2807
  %v2871 = vpop.f32.mrf.mxu0
  %v2872 = vadd.f32 0.0, %v2871
  %2873 = vmatmul.f32.gmra.mxu0 %v2810
  %v2874 = vpop.f32.mrf.mxu0
  %v2875 = vadd.f32 0.0, %v2874
  %2876 = vmatmul.f32.gmra.mxu0 %v2813
  %v2877 = vpop.f32.mrf.mxu0
  %v2878 = vadd.f32 0.0, %v2877
  %2879 = vmatmul.f32.gmra.mxu0 %v2816
  %v2880 = vpop.f32.mrf.mxu0
  %v2881 = vadd.f32 0.0, %v2880
  %2882 = vmatmul.f32.gmra.mxu0 %v2819
  %v2883 = vpop.f32.mrf.mxu0
  %v2884 = vadd.f32 0.0, %v2883
  %2885 = vmatmul.f32.gmra.mxu0 %v2822
  %v2886 = vpop.f32.mrf.mxu0
  %v2887 = vadd.f32 0.0, %v2886
  %2888 = vmatmul.f32.gmra.mxu0 %v2825
  %v2889 = vpop.f32.mrf.mxu0
  %v2890 = vadd.f32 0.0, %v2889
  %2891 = vmatmul.f32.gmra.mxu0 %v2828
  %v2892 = vpop.f32.mrf.mxu0
  %v2893 = vadd.f32 0.0, %v2892
  %2894 = vdwg.mxu0
  %v2895 = vadd.f32 %v2764, %v2848
  %v2896 = vadd.f32 %v2765, %v2851
  %v2897 = vadd.f32 %v2766, %v2854
  %v2898 = vadd.f32 %v2767, %v2857
  %v2899 = vadd.f32 %v2768, %v2860
  %v2900 = vadd.f32 %v2769, %v2863
  %v2901 = vadd.f32 %v2770, %v2866
  %v2902 = vadd.f32 %v2771, %v2869
  %v2903 = vadd.f32 %v2772, %v2872
  %v2904 = vadd.f32 %v2773, %v2875
  %v2905 = vadd.f32 %v2774, %v2878
  %v2906 = vadd.f32 %v2775, %v2881
  %v2907 = vadd.f32 %v2776, %v2884
  %v2908 = vadd.f32 %v2777, %v2887
  %v2909 = vadd.f32 %v2778, %v2890
  %v2910 = vadd.f32 %v2779, %v2893
  %v2911 = vrot.slane %v1932, 1
  %v2912 = vsel %vm1391, %v2911, %v1996
  %v2913 = vrot.slane %v1933, 1
  %v2914 = vsel %vm1391, %v2913, %v1997
  %v2915 = vrot.slane %v1934, 1
  %v2916 = vsel %vm1391, %v2915, %v1998
  %v2917 = vrot.slane %v1935, 1
  %v2918 = vsel %vm1391, %v2917, %v1999
  %v2919 = vrot.slane %v1936, 1
  %v2920 = vsel %vm1391, %v2919, %v2000
  %v2921 = vrot.slane %v1937, 1
  %v2922 = vsel %vm1391, %v2921, %v2001
  %v2923 = vrot.slane %v1938, 1
  %v2924 = vsel %vm1391, %v2923, %v2002
  %v2925 = vrot.slane %v1939, 1
  %v2926 = vsel %vm1391, %v2925, %v2003
  %v2927 = vrot.slane %v1940, 1
  %v2928 = vsel %vm1391, %v2927, %v2004
  %v2929 = vrot.slane %v1941, 1
  %v2930 = vsel %vm1391, %v2929, %v2005
  %v2931 = vrot.slane %v1942, 1
  %v2932 = vsel %vm1391, %v2931, %v2006
  %v2933 = vrot.slane %v1943, 1
  %v2934 = vsel %vm1391, %v2933, %v2007
  %v2935 = vrot.slane %v1944, 1
  %v2936 = vsel %vm1391, %v2935, %v2008
  %v2937 = vrot.slane %v1945, 1
  %v2938 = vsel %vm1391, %v2937, %v2009
  %v2939 = vrot.slane %v1946, 1
  %v2940 = vsel %vm1391, %v2939, %v2010
  %v2941 = vrot.slane %v1947, 1
  %v2942 = vsel %vm1391, %v2941, %v2011
  %s2943 = scalar_lea.vmem %s2, 48
  %v2944 = vld [vmem:[%s2943] sm:$0xff]
  %v2945 = vsel %vm2127, %v2912, 0
  %v2947 = vsel %vm2127, %v2914, 0
  %v2949 = vsel %vm2127, %v2916, 0
  %v2951 = vsel %vm2127, %v2918, 0
  %v2953 = vsel %vm2127, %v2920, 0
  %v2955 = vsel %vm2127, %v2922, 0
  %v2957 = vsel %vm2127, %v2924, 0
  %v2959 = vsel %vm2127, %v2926, 0
  %v2961 = vsel %vm2127, %v2928, 0
  %v2963 = vsel %vm2127, %v2930, 0
  %v2965 = vsel %vm2127, %v2932, 0
  %v2967 = vsel %vm2127, %v2934, 0
  %v2969 = vsel %vm2127, %v2936, 0
  %v2971 = vsel %vm2127, %v2938, 0
  %v2973 = vsel %vm2127, %v2940, 0
  %v2975 = vsel %vm2127, %v2942, 0
  %2977 = vmatpush.msra.mxu0 0.0
  %2978 = vmatpush.msra.mxu0 0.0
  %2979 = vmatpush.msra.mxu0 0.0
  %2980 = vmatpush.msra.mxu0 0.0
  %2981 = vmatpush.msra.mxu0 0.0
  %2982 = vmatpush.msra.mxu0 0.0
  %2983 = vmatpush.msra.mxu0 0.0
  %2984 = vmatpush.msra.mxu0 0.0
  %2985 = vmatpush.msra.mxu0 0.0
  %2986 = vmatpush.msra.mxu0 0.0
  %2987 = vmatpush.msra.mxu0 0.0
  %2988 = vmatpush.msra.mxu0 0.0
  %2989 = vmatpush.msra.mxu0 0.0
  %2990 = vmatpush.msra.mxu0 0.0
  %2991 = vmatpush.msra.mxu0 0.0
  %2992 = vmatpush.msra.mxu0 %v2944
  %2993 = vmatmul.f32.gmra.mxu0 %v2945
  %v2994 = vpop.f32.mrf.mxu0
  %v2995 = vadd.f32 0.0, %v2994
  %2996 = vmatmul.f32.gmra.mxu0 %v2947
  %v2997 = vpop.f32.mrf.mxu0
  %v2998 = vadd.f32 0.0, %v2997
  %2999 = vmatmul.f32.gmra.mxu0 %v2949
  %v3000 = vpop.f32.mrf.mxu0
  %v3001 = vadd.f32 0.0, %v3000
  %3002 = vmatmul.f32.gmra.mxu0 %v2951
  %v3003 = vpop.f32.mrf.mxu0
  %v3004 = vadd.f32 0.0, %v3003
  %3005 = vmatmul.f32.gmra.mxu0 %v2953
  %v3006 = vpop.f32.mrf.mxu0
  %v3007 = vadd.f32 0.0, %v3006
  %3008 = vmatmul.f32.gmra.mxu0 %v2955
  %v3009 = vpop.f32.mrf.mxu0
  %v3010 = vadd.f32 0.0, %v3009
  %3011 = vmatmul.f32.gmra.mxu0 %v2957
  %v3012 = vpop.f32.mrf.mxu0
  %v3013 = vadd.f32 0.0, %v3012
  %3014 = vmatmul.f32.gmra.mxu0 %v2959
  %v3015 = vpop.f32.mrf.mxu0
  %v3016 = vadd.f32 0.0, %v3015
  %3017 = vmatmul.f32.gmra.mxu0 %v2961
  %v3018 = vpop.f32.mrf.mxu0
  %v3019 = vadd.f32 0.0, %v3018
  %3020 = vmatmul.f32.gmra.mxu0 %v2963
  %v3021 = vpop.f32.mrf.mxu0
  %v3022 = vadd.f32 0.0, %v3021
  %3023 = vmatmul.f32.gmra.mxu0 %v2965
  %v3024 = vpop.f32.mrf.mxu0
  %v3025 = vadd.f32 0.0, %v3024
  %3026 = vmatmul.f32.gmra.mxu0 %v2967
  %v3027 = vpop.f32.mrf.mxu0
  %v3028 = vadd.f32 0.0, %v3027
  %3029 = vmatmul.f32.gmra.mxu0 %v2969
  %v3030 = vpop.f32.mrf.mxu0
  %v3031 = vadd.f32 0.0, %v3030
  %3032 = vmatmul.f32.gmra.mxu0 %v2971
  %v3033 = vpop.f32.mrf.mxu0
  %v3034 = vadd.f32 0.0, %v3033
  %3035 = vmatmul.f32.gmra.mxu0 %v2973
  %v3036 = vpop.f32.mrf.mxu0
  %v3037 = vadd.f32 0.0, %v3036
  %3038 = vmatmul.f32.gmra.mxu0 %v2975
  %v3039 = vpop.f32.mrf.mxu0
  %v3040 = vadd.f32 0.0, %v3039
  %3041 = vdwg.mxu0
  %v3042 = vadd.f32 %v2895, %v2995
  %v3043 = vadd.f32 %v2896, %v2998
  %v3044 = vadd.f32 %v2897, %v3001
  %v3045 = vadd.f32 %v2898, %v3004
  %v3046 = vadd.f32 %v2899, %v3007
  %v3047 = vadd.f32 %v2900, %v3010
  %v3048 = vadd.f32 %v2901, %v3013
  %v3049 = vadd.f32 %v2902, %v3016
  %v3050 = vadd.f32 %v2903, %v3019
  %v3051 = vadd.f32 %v2904, %v3022
  %v3052 = vadd.f32 %v2905, %v3025
  %v3053 = vadd.f32 %v2906, %v3028
  %v3054 = vadd.f32 %v2907, %v3031
  %v3055 = vadd.f32 %v2908, %v3034
  %v3056 = vadd.f32 %v2909, %v3037
  %v3057 = vadd.f32 %v2910, %v3040
  %v3058 = vrot.slane %v2108, 1
  %v3059 = vrot.slane %v1996, 1
  %v3060 = vsel %vm1391, %v3058, %v3059
  %v3061 = vrot.slane %v2109, 1
  %v3062 = vrot.slane %v1997, 1
  %v3063 = vsel %vm1391, %v3061, %v3062
  %v3064 = vrot.slane %v2110, 1
  %v3065 = vrot.slane %v1998, 1
  %v3066 = vsel %vm1391, %v3064, %v3065
  %v3067 = vrot.slane %v2111, 1
  %v3068 = vrot.slane %v1999, 1
  %v3069 = vsel %vm1391, %v3067, %v3068
  %v3070 = vrot.slane %v2112, 1
  %v3071 = vrot.slane %v2000, 1
  %v3072 = vsel %vm1391, %v3070, %v3071
  %v3073 = vrot.slane %v2113, 1
  %v3074 = vrot.slane %v2001, 1
  %v3075 = vsel %vm1391, %v3073, %v3074
  %v3076 = vrot.slane %v2114, 1
  %v3077 = vrot.slane %v2002, 1
  %v3078 = vsel %vm1391, %v3076, %v3077
  %v3079 = vrot.slane %v2115, 1
  %v3080 = vrot.slane %v2003, 1
  %v3081 = vsel %vm1391, %v3079, %v3080
  %v3082 = vrot.slane %v2116, 1
  %v3083 = vrot.slane %v2004, 1
  %v3084 = vsel %vm1391, %v3082, %v3083
  %v3085 = vrot.slane %v2117, 1
  %v3086 = vrot.slane %v2005, 1
  %v3087 = vsel %vm1391, %v3085, %v3086
  %v3088 = vrot.slane %v2118, 1
  %v3089 = vrot.slane %v2006, 1
  %v3090 = vsel %vm1391, %v3088, %v3089
  %v3091 = vrot.slane %v2119, 1
  %v3092 = vrot.slane %v2007, 1
  %v3093 = vsel %vm1391, %v3091, %v3092
  %v3094 = vrot.slane %v2120, 1
  %v3095 = vrot.slane %v2008, 1
  %v3096 = vsel %vm1391, %v3094, %v3095
  %v3097 = vrot.slane %v2121, 1
  %v3098 = vrot.slane %v2009, 1
  %v3099 = vsel %vm1391, %v3097, %v3098
  %v3100 = vrot.slane %v2122, 1
  %v3101 = vrot.slane %v2010, 1
  %v3102 = vsel %vm1391, %v3100, %v3101
  %v3103 = vrot.slane %v2123, 1
  %v3104 = vrot.slane %v2011, 1
  %v3105 = vsel %vm1391, %v3103, %v3104
  %s3106 = scalar_lea.vmem %s2, 56
  %v3107 = vld [vmem:[%s3106] sm:$0xff]
  %v3108 = vsel %vm2127, %v3060, 0
  %v3110 = vsel %vm2127, %v3063, 0
  %v3112 = vsel %vm2127, %v3066, 0
  %v3114 = vsel %vm2127, %v3069, 0
  %v3116 = vsel %vm2127, %v3072, 0
  %v3118 = vsel %vm2127, %v3075, 0
  %v3120 = vsel %vm2127, %v3078, 0
  %v3122 = vsel %vm2127, %v3081, 0
  %v3124 = vsel %vm2127, %v3084, 0
  %v3126 = vsel %vm2127, %v3087, 0
  %v3128 = vsel %vm2127, %v3090, 0
  %v3130 = vsel %vm2127, %v3093, 0
  %v3132 = vsel %vm2127, %v3096, 0
  %v3134 = vsel %vm2127, %v3099, 0
  %v3136 = vsel %vm2127, %v3102, 0
  %v3138 = vsel %vm2127, %v3105, 0
  %3140 = vmatpush.msra.mxu0 0.0
  %3141 = vmatpush.msra.mxu0 0.0
  %3142 = vmatpush.msra.mxu0 0.0
  %3143 = vmatpush.msra.mxu0 0.0
  %3144 = vmatpush.msra.mxu0 0.0
  %3145 = vmatpush.msra.mxu0 0.0
  %3146 = vmatpush.msra.mxu0 0.0
  %3147 = vmatpush.msra.mxu0 0.0
  %3148 = vmatpush.msra.mxu0 0.0
  %3149 = vmatpush.msra.mxu0 0.0
  %3150 = vmatpush.msra.mxu0 0.0
  %3151 = vmatpush.msra.mxu0 0.0
  %3152 = vmatpush.msra.mxu0 0.0
  %3153 = vmatpush.msra.mxu0 0.0
  %3154 = vmatpush.msra.mxu0 0.0
  %3155 = vmatpush.msra.mxu0 %v3107
  %3156 = vmatmul.f32.gmra.mxu0 %v3108
  %v3157 = vpop.f32.mrf.mxu0
  %v3158 = vadd.f32 0.0, %v3157
  %3159 = vmatmul.f32.gmra.mxu0 %v3110
  %v3160 = vpop.f32.mrf.mxu0
  %v3161 = vadd.f32 0.0, %v3160
  %3162 = vmatmul.f32.gmra.mxu0 %v3112
  %v3163 = vpop.f32.mrf.mxu0
  %v3164 = vadd.f32 0.0, %v3163
  %3165 = vmatmul.f32.gmra.mxu0 %v3114
  %v3166 = vpop.f32.mrf.mxu0
  %v3167 = vadd.f32 0.0, %v3166
  %3168 = vmatmul.f32.gmra.mxu0 %v3116
  %v3169 = vpop.f32.mrf.mxu0
  %v3170 = vadd.f32 0.0, %v3169
  %3171 = vmatmul.f32.gmra.mxu0 %v3118
  %v3172 = vpop.f32.mrf.mxu0
  %v3173 = vadd.f32 0.0, %v3172
  %3174 = vmatmul.f32.gmra.mxu0 %v3120
  %v3175 = vpop.f32.mrf.mxu0
  %v3176 = vadd.f32 0.0, %v3175
  %3177 = vmatmul.f32.gmra.mxu0 %v3122
  %v3178 = vpop.f32.mrf.mxu0
  %v3179 = vadd.f32 0.0, %v3178
  %3180 = vmatmul.f32.gmra.mxu0 %v3124
  %v3181 = vpop.f32.mrf.mxu0
  %v3182 = vadd.f32 0.0, %v3181
  %3183 = vmatmul.f32.gmra.mxu0 %v3126
  %v3184 = vpop.f32.mrf.mxu0
  %v3185 = vadd.f32 0.0, %v3184
  %3186 = vmatmul.f32.gmra.mxu0 %v3128
  %v3187 = vpop.f32.mrf.mxu0
  %v3188 = vadd.f32 0.0, %v3187
  %3189 = vmatmul.f32.gmra.mxu0 %v3130
  %v3190 = vpop.f32.mrf.mxu0
  %v3191 = vadd.f32 0.0, %v3190
  %3192 = vmatmul.f32.gmra.mxu0 %v3132
  %v3193 = vpop.f32.mrf.mxu0
  %v3194 = vadd.f32 0.0, %v3193
  %3195 = vmatmul.f32.gmra.mxu0 %v3134
  %v3196 = vpop.f32.mrf.mxu0
  %v3197 = vadd.f32 0.0, %v3196
  %3198 = vmatmul.f32.gmra.mxu0 %v3136
  %v3199 = vpop.f32.mrf.mxu0
  %v3200 = vadd.f32 0.0, %v3199
  %3201 = vmatmul.f32.gmra.mxu0 %v3138
  %v3202 = vpop.f32.mrf.mxu0
  %v3203 = vadd.f32 0.0, %v3202
  %3204 = vdwg.mxu0
  %v3205 = vadd.f32 %v3042, %v3158
  %v3206 = vadd.f32 %v3043, %v3161
  %v3207 = vadd.f32 %v3044, %v3164
  %v3208 = vadd.f32 %v3045, %v3167
  %v3209 = vadd.f32 %v3046, %v3170
  %v3210 = vadd.f32 %v3047, %v3173
  %v3211 = vadd.f32 %v3048, %v3176
  %v3212 = vadd.f32 %v3049, %v3179
  %v3213 = vadd.f32 %v3050, %v3182
  %v3214 = vadd.f32 %v3051, %v3185
  %v3215 = vadd.f32 %v3052, %v3188
  %v3216 = vadd.f32 %v3053, %v3191
  %v3217 = vadd.f32 %v3054, %v3194
  %v3218 = vadd.f32 %v3055, %v3197
  %v3219 = vadd.f32 %v3056, %v3200
  %v3220 = vadd.f32 %v3057, %v3203
  %s3221 = scalar_lea.vmem %s2, 64
  %v3222 = vld [vmem:[%s3221] sm:$0xff]
  %v3224 = vsel %vm2127, %v1400, 0
  %v3227 = vsel %vm2127, %v1408, 0
  %3229 = vmatpush.msra.mxu0 0.0
  %3230 = vmatpush.msra.mxu0 0.0
  %3231 = vmatpush.msra.mxu0 0.0
  %3232 = vmatpush.msra.mxu0 0.0
  %3233 = vmatpush.msra.mxu0 0.0
  %3234 = vmatpush.msra.mxu0 0.0
  %3235 = vmatpush.msra.mxu0 0.0
  %3236 = vmatpush.msra.mxu0 0.0
  %3237 = vmatpush.msra.mxu0 0.0
  %3238 = vmatpush.msra.mxu0 0.0
  %3239 = vmatpush.msra.mxu0 0.0
  %3240 = vmatpush.msra.mxu0 0.0
  %3241 = vmatpush.msra.mxu0 0.0
  %3242 = vmatpush.msra.mxu0 0.0
  %3243 = vmatpush.msra.mxu0 0.0
  %3244 = vmatpush.msra.mxu0 %v3222
  %3245 = vmatmul.f32.gmra.mxu0 %v2242
  %v3246 = vpop.f32.mrf.mxu0
  %v3247 = vadd.f32 0.0, %v3246
  %3248 = vmatmul.f32.gmra.mxu0 %v2245
  %v3249 = vpop.f32.mrf.mxu0
  %v3250 = vadd.f32 0.0, %v3249
  %3251 = vmatmul.f32.gmra.mxu0 %v2248
  %v3252 = vpop.f32.mrf.mxu0
  %v3253 = vadd.f32 0.0, %v3252
  %3254 = vmatmul.f32.gmra.mxu0 %v2251
  %v3255 = vpop.f32.mrf.mxu0
  %v3256 = vadd.f32 0.0, %v3255
  %3257 = vmatmul.f32.gmra.mxu0 %v2254
  %v3258 = vpop.f32.mrf.mxu0
  %v3259 = vadd.f32 0.0, %v3258
  %3260 = vmatmul.f32.gmra.mxu0 %v2257
  %v3261 = vpop.f32.mrf.mxu0
  %v3262 = vadd.f32 0.0, %v3261
  %3263 = vmatmul.f32.gmra.mxu0 %v2260
  %v3264 = vpop.f32.mrf.mxu0
  %v3265 = vadd.f32 0.0, %v3264
  %3266 = vmatmul.f32.gmra.mxu0 %v3224
  %v3267 = vpop.f32.mrf.mxu0
  %v3268 = vadd.f32 0.0, %v3267
  %3269 = vmatmul.f32.gmra.mxu0 %v2263
  %v3270 = vpop.f32.mrf.mxu0
  %v3271 = vadd.f32 0.0, %v3270
  %3272 = vmatmul.f32.gmra.mxu0 %v2266
  %v3273 = vpop.f32.mrf.mxu0
  %v3274 = vadd.f32 0.0, %v3273
  %3275 = vmatmul.f32.gmra.mxu0 %v2269
  %v3276 = vpop.f32.mrf.mxu0
  %v3277 = vadd.f32 0.0, %v3276
  %3278 = vmatmul.f32.gmra.mxu0 %v2272
  %v3279 = vpop.f32.mrf.mxu0
  %v3280 = vadd.f32 0.0, %v3279
  %3281 = vmatmul.f32.gmra.mxu0 %v2275
  %v3282 = vpop.f32.mrf.mxu0
  %v3283 = vadd.f32 0.0, %v3282
  %3284 = vmatmul.f32.gmra.mxu0 %v2278
  %v3285 = vpop.f32.mrf.mxu0
  %v3286 = vadd.f32 0.0, %v3285
  %3287 = vmatmul.f32.gmra.mxu0 %v2281
  %v3288 = vpop.f32.mrf.mxu0
  %v3289 = vadd.f32 0.0, %v3288
  %3290 = vmatmul.f32.gmra.mxu0 %v3227
  %v3291 = vpop.f32.mrf.mxu0
  %v3292 = vadd.f32 0.0, %v3291
  %3293 = vdwg.mxu0
  %v3294 = vadd.f32 %v3205, %v3247
  %v3295 = vadd.f32 %v3206, %v3250
  %v3296 = vadd.f32 %v3207, %v3253
  %v3297 = vadd.f32 %v3208, %v3256
  %v3298 = vadd.f32 %v3209, %v3259
  %v3299 = vadd.f32 %v3210, %v3262
  %v3300 = vadd.f32 %v3211, %v3265
  %v3301 = vadd.f32 %v3212, %v3268
  %v3302 = vadd.f32 %v3213, %v3271
  %v3303 = vadd.f32 %v3214, %v3274
  %v3304 = vadd.f32 %v3215, %v3277
  %v3305 = vadd.f32 %v3216, %v3280
  %v3306 = vadd.f32 %v3217, %v3283
  %v3307 = vadd.f32 %v3218, %v3286
  %v3308 = vadd.f32 %v3219, %v3289
  %v3309 = vadd.f32 %v3220, %v3292
  %s3310 = scalar_lea.vmem %s2, 72
  %v3311 = vld [vmem:[%s3310] sm:$0xff]
  %v3313 = vsel %vm2127, %v1587, 0
  %v3316 = vsel %vm2127, %v1595, 0
  %3318 = vmatpush.msra.mxu0 0.0
  %3319 = vmatpush.msra.mxu0 0.0
  %3320 = vmatpush.msra.mxu0 0.0
  %3321 = vmatpush.msra.mxu0 0.0
  %3322 = vmatpush.msra.mxu0 0.0
  %3323 = vmatpush.msra.mxu0 0.0
  %3324 = vmatpush.msra.mxu0 0.0
  %3325 = vmatpush.msra.mxu0 0.0
  %3326 = vmatpush.msra.mxu0 0.0
  %3327 = vmatpush.msra.mxu0 0.0
  %3328 = vmatpush.msra.mxu0 0.0
  %3329 = vmatpush.msra.mxu0 0.0
  %3330 = vmatpush.msra.mxu0 0.0
  %3331 = vmatpush.msra.mxu0 0.0
  %3332 = vmatpush.msra.mxu0 0.0
  %3333 = vmatpush.msra.mxu0 %v3311
  %3334 = vmatmul.f32.gmra.mxu0 %v2132
  %v3335 = vpop.f32.mrf.mxu0
  %v3336 = vadd.f32 0.0, %v3335
  %3337 = vmatmul.f32.gmra.mxu0 %v2135
  %v3338 = vpop.f32.mrf.mxu0
  %v3339 = vadd.f32 0.0, %v3338
  %3340 = vmatmul.f32.gmra.mxu0 %v2138
  %v3341 = vpop.f32.mrf.mxu0
  %v3342 = vadd.f32 0.0, %v3341
  %3343 = vmatmul.f32.gmra.mxu0 %v2141
  %v3344 = vpop.f32.mrf.mxu0
  %v3345 = vadd.f32 0.0, %v3344
  %3346 = vmatmul.f32.gmra.mxu0 %v2144
  %v3347 = vpop.f32.mrf.mxu0
  %v3348 = vadd.f32 0.0, %v3347
  %3349 = vmatmul.f32.gmra.mxu0 %v2147
  %v3350 = vpop.f32.mrf.mxu0
  %v3351 = vadd.f32 0.0, %v3350
  %3352 = vmatmul.f32.gmra.mxu0 %v2150
  %v3353 = vpop.f32.mrf.mxu0
  %v3354 = vadd.f32 0.0, %v3353
  %3355 = vmatmul.f32.gmra.mxu0 %v3313
  %v3356 = vpop.f32.mrf.mxu0
  %v3357 = vadd.f32 0.0, %v3356
  %3358 = vmatmul.f32.gmra.mxu0 %v2153
  %v3359 = vpop.f32.mrf.mxu0
  %v3360 = vadd.f32 0.0, %v3359
  %3361 = vmatmul.f32.gmra.mxu0 %v2156
  %v3362 = vpop.f32.mrf.mxu0
  %v3363 = vadd.f32 0.0, %v3362
  %3364 = vmatmul.f32.gmra.mxu0 %v2159
  %v3365 = vpop.f32.mrf.mxu0
  %v3366 = vadd.f32 0.0, %v3365
  %3367 = vmatmul.f32.gmra.mxu0 %v2162
  %v3368 = vpop.f32.mrf.mxu0
  %v3369 = vadd.f32 0.0, %v3368
  %3370 = vmatmul.f32.gmra.mxu0 %v2165
  %v3371 = vpop.f32.mrf.mxu0
  %v3372 = vadd.f32 0.0, %v3371
  %3373 = vmatmul.f32.gmra.mxu0 %v2168
  %v3374 = vpop.f32.mrf.mxu0
  %v3375 = vadd.f32 0.0, %v3374
  %3376 = vmatmul.f32.gmra.mxu0 %v2171
  %v3377 = vpop.f32.mrf.mxu0
  %v3378 = vadd.f32 0.0, %v3377
  %3379 = vmatmul.f32.gmra.mxu0 %v3316
  %v3380 = vpop.f32.mrf.mxu0
  %v3381 = vadd.f32 0.0, %v3380
  %3382 = vdwg.mxu0
  %v3383 = vadd.f32 %v3294, %v3336
  %v3384 = vadd.f32 %v3295, %v3339
  %v3385 = vadd.f32 %v3296, %v3342
  %v3386 = vadd.f32 %v3297, %v3345
  %v3387 = vadd.f32 %v3298, %v3348
  %v3388 = vadd.f32 %v3299, %v3351
  %v3389 = vadd.f32 %v3300, %v3354
  %v3390 = vadd.f32 %v3301, %v3357
  %v3391 = vadd.f32 %v3302, %v3360
  %v3392 = vadd.f32 %v3303, %v3363
  %v3393 = vadd.f32 %v3304, %v3366
  %v3394 = vadd.f32 %v3305, %v3369
  %v3395 = vadd.f32 %v3306, %v3372
  %v3396 = vadd.f32 %v3307, %v3375
  %v3397 = vadd.f32 %v3308, %v3378
  %v3398 = vadd.f32 %v3309, %v3381
  %v3399 = vrot.slane %v1400, 1
  %v3400 = vsel %vm1391, %v3399, %v1468
  %v3401 = vrot.slane %v1408, 1
  %v3402 = vsel %vm1391, %v3401, %v1476
  %s3403 = scalar_lea.vmem %s2, 80
  %v3404 = vld [vmem:[%s3403] sm:$0xff]
  %v3405 = vsel %vm2127, %v3400, 0
  %v3407 = vsel %vm2127, %v3402, 0
  %3409 = vmatpush.msra.mxu0 0.0
  %3410 = vmatpush.msra.mxu0 0.0
  %3411 = vmatpush.msra.mxu0 0.0
  %3412 = vmatpush.msra.mxu0 0.0
  %3413 = vmatpush.msra.mxu0 0.0
  %3414 = vmatpush.msra.mxu0 0.0
  %3415 = vmatpush.msra.mxu0 0.0
  %3416 = vmatpush.msra.mxu0 0.0
  %3417 = vmatpush.msra.mxu0 0.0
  %3418 = vmatpush.msra.mxu0 0.0
  %3419 = vmatpush.msra.mxu0 0.0
  %3420 = vmatpush.msra.mxu0 0.0
  %3421 = vmatpush.msra.mxu0 0.0
  %3422 = vmatpush.msra.mxu0 0.0
  %3423 = vmatpush.msra.mxu0 0.0
  %3424 = vmatpush.msra.mxu0 %v3404
  %3425 = vmatmul.f32.gmra.mxu0 %v2382
  %v3426 = vpop.f32.mrf.mxu0
  %v3427 = vadd.f32 0.0, %v3426
  %3428 = vmatmul.f32.gmra.mxu0 %v2384
  %v3429 = vpop.f32.mrf.mxu0
  %v3430 = vadd.f32 0.0, %v3429
  %3431 = vmatmul.f32.gmra.mxu0 %v2386
  %v3432 = vpop.f32.mrf.mxu0
  %v3433 = vadd.f32 0.0, %v3432
  %3434 = vmatmul.f32.gmra.mxu0 %v2388
  %v3435 = vpop.f32.mrf.mxu0
  %v3436 = vadd.f32 0.0, %v3435
  %3437 = vmatmul.f32.gmra.mxu0 %v2390
  %v3438 = vpop.f32.mrf.mxu0
  %v3439 = vadd.f32 0.0, %v3438
  %3440 = vmatmul.f32.gmra.mxu0 %v2392
  %v3441 = vpop.f32.mrf.mxu0
  %v3442 = vadd.f32 0.0, %v3441
  %3443 = vmatmul.f32.gmra.mxu0 %v2394
  %v3444 = vpop.f32.mrf.mxu0
  %v3445 = vadd.f32 0.0, %v3444
  %3446 = vmatmul.f32.gmra.mxu0 %v3405
  %v3447 = vpop.f32.mrf.mxu0
  %v3448 = vadd.f32 0.0, %v3447
  %3449 = vmatmul.f32.gmra.mxu0 %v2396
  %v3450 = vpop.f32.mrf.mxu0
  %v3451 = vadd.f32 0.0, %v3450
  %3452 = vmatmul.f32.gmra.mxu0 %v2398
  %v3453 = vpop.f32.mrf.mxu0
  %v3454 = vadd.f32 0.0, %v3453
  %3455 = vmatmul.f32.gmra.mxu0 %v2400
  %v3456 = vpop.f32.mrf.mxu0
  %v3457 = vadd.f32 0.0, %v3456
  %3458 = vmatmul.f32.gmra.mxu0 %v2402
  %v3459 = vpop.f32.mrf.mxu0
  %v3460 = vadd.f32 0.0, %v3459
  %3461 = vmatmul.f32.gmra.mxu0 %v2404
  %v3462 = vpop.f32.mrf.mxu0
  %v3463 = vadd.f32 0.0, %v3462
  %3464 = vmatmul.f32.gmra.mxu0 %v2406
  %v3465 = vpop.f32.mrf.mxu0
  %v3466 = vadd.f32 0.0, %v3465
  %3467 = vmatmul.f32.gmra.mxu0 %v2408
  %v3468 = vpop.f32.mrf.mxu0
  %v3469 = vadd.f32 0.0, %v3468
  %3470 = vmatmul.f32.gmra.mxu0 %v3407
  %v3471 = vpop.f32.mrf.mxu0
  %v3472 = vadd.f32 0.0, %v3471
  %3473 = vdwg.mxu0
  %v3474 = vadd.f32 %v3383, %v3427
  %v3475 = vadd.f32 %v3384, %v3430
  %v3476 = vadd.f32 %v3385, %v3433
  %v3477 = vadd.f32 %v3386, %v3436
  %v3478 = vadd.f32 %v3387, %v3439
  %v3479 = vadd.f32 %v3388, %v3442
  %v3480 = vadd.f32 %v3389, %v3445
  %v3481 = vadd.f32 %v3390, %v3448
  %v3482 = vadd.f32 %v3391, %v3451
  %v3483 = vadd.f32 %v3392, %v3454
  %v3484 = vadd.f32 %v3393, %v3457
  %v3485 = vadd.f32 %v3394, %v3460
  %v3486 = vadd.f32 %v3395, %v3463
  %v3487 = vadd.f32 %v3396, %v3466
  %v3488 = vadd.f32 %v3397, %v3469
  %v3489 = vadd.f32 %v3398, %v3472
  %v3490 = vrot.slane %v1587, 1
  %v3491 = vrot.slane %v1468, 1
  %v3492 = vsel %vm1391, %v3490, %v3491
  %v3493 = vrot.slane %v1595, 1
  %v3494 = vrot.slane %v1476, 1
  %v3495 = vsel %vm1391, %v3493, %v3494
  %s3496 = scalar_lea.vmem %s2, 88
  %v3497 = vld [vmem:[%s3496] sm:$0xff]
  %v3498 = vsel %vm2127, %v3492, 0
  %v3500 = vsel %vm2127, %v3495, 0
  %3502 = vmatpush.msra.mxu0 0.0
  %3503 = vmatpush.msra.mxu0 0.0
  %3504 = vmatpush.msra.mxu0 0.0
  %3505 = vmatpush.msra.mxu0 0.0
  %3506 = vmatpush.msra.mxu0 0.0
  %3507 = vmatpush.msra.mxu0 0.0
  %3508 = vmatpush.msra.mxu0 0.0
  %3509 = vmatpush.msra.mxu0 0.0
  %3510 = vmatpush.msra.mxu0 0.0
  %3511 = vmatpush.msra.mxu0 0.0
  %3512 = vmatpush.msra.mxu0 0.0
  %3513 = vmatpush.msra.mxu0 0.0
  %3514 = vmatpush.msra.mxu0 0.0
  %3515 = vmatpush.msra.mxu0 0.0
  %3516 = vmatpush.msra.mxu0 0.0
  %3517 = vmatpush.msra.mxu0 %v3497
  %3518 = vmatmul.f32.gmra.mxu0 %v2540
  %v3519 = vpop.f32.mrf.mxu0
  %v3520 = vadd.f32 0.0, %v3519
  %3521 = vmatmul.f32.gmra.mxu0 %v2542
  %v3522 = vpop.f32.mrf.mxu0
  %v3523 = vadd.f32 0.0, %v3522
  %3524 = vmatmul.f32.gmra.mxu0 %v2544
  %v3525 = vpop.f32.mrf.mxu0
  %v3526 = vadd.f32 0.0, %v3525
  %3527 = vmatmul.f32.gmra.mxu0 %v2546
  %v3528 = vpop.f32.mrf.mxu0
  %v3529 = vadd.f32 0.0, %v3528
  %3530 = vmatmul.f32.gmra.mxu0 %v2548
  %v3531 = vpop.f32.mrf.mxu0
  %v3532 = vadd.f32 0.0, %v3531
  %3533 = vmatmul.f32.gmra.mxu0 %v2550
  %v3534 = vpop.f32.mrf.mxu0
  %v3535 = vadd.f32 0.0, %v3534
  %3536 = vmatmul.f32.gmra.mxu0 %v2552
  %v3537 = vpop.f32.mrf.mxu0
  %v3538 = vadd.f32 0.0, %v3537
  %3539 = vmatmul.f32.gmra.mxu0 %v3498
  %v3540 = vpop.f32.mrf.mxu0
  %v3541 = vadd.f32 0.0, %v3540
  %3542 = vmatmul.f32.gmra.mxu0 %v2554
  %v3543 = vpop.f32.mrf.mxu0
  %v3544 = vadd.f32 0.0, %v3543
  %3545 = vmatmul.f32.gmra.mxu0 %v2556
  %v3546 = vpop.f32.mrf.mxu0
  %v3547 = vadd.f32 0.0, %v3546
  %3548 = vmatmul.f32.gmra.mxu0 %v2558
  %v3549 = vpop.f32.mrf.mxu0
  %v3550 = vadd.f32 0.0, %v3549
  %3551 = vmatmul.f32.gmra.mxu0 %v2560
  %v3552 = vpop.f32.mrf.mxu0
  %v3553 = vadd.f32 0.0, %v3552
  %3554 = vmatmul.f32.gmra.mxu0 %v2562
  %v3555 = vpop.f32.mrf.mxu0
  %v3556 = vadd.f32 0.0, %v3555
  %3557 = vmatmul.f32.gmra.mxu0 %v2564
  %v3558 = vpop.f32.mrf.mxu0
  %v3559 = vadd.f32 0.0, %v3558
  %3560 = vmatmul.f32.gmra.mxu0 %v2566
  %v3561 = vpop.f32.mrf.mxu0
  %v3562 = vadd.f32 0.0, %v3561
  %3563 = vmatmul.f32.gmra.mxu0 %v3500
  %v3564 = vpop.f32.mrf.mxu0
  %v3565 = vadd.f32 0.0, %v3564
  %3566 = vdwg.mxu0
  %v3567 = vadd.f32 %v3474, %v3520
  %v3568 = vadd.f32 %v3475, %v3523
  %v3569 = vadd.f32 %v3476, %v3526
  %v3570 = vadd.f32 %v3477, %v3529
  %v3571 = vadd.f32 %v3478, %v3532
  %v3572 = vadd.f32 %v3479, %v3535
  %v3573 = vadd.f32 %v3480, %v3538
  %v3574 = vadd.f32 %v3481, %v3541
  %v3575 = vadd.f32 %v3482, %v3544
  %v3576 = vadd.f32 %v3483, %v3547
  %v3577 = vadd.f32 %v3484, %v3550
  %v3578 = vadd.f32 %v3485, %v3553
  %v3579 = vadd.f32 %v3486, %v3556
  %v3580 = vadd.f32 %v3487, %v3559
  %v3581 = vadd.f32 %v3488, %v3562
  %v3582 = vadd.f32 %v3489, %v3565
  %s3583 = scalar_lea.vmem %s2, 96
  %v3584 = vld [vmem:[%s3583] sm:$0xff]
  %3585 = vmatpush.msra.mxu0 0.0
  %3586 = vmatpush.msra.mxu0 0.0
  %3587 = vmatpush.msra.mxu0 0.0
  %3588 = vmatpush.msra.mxu0 0.0
  %3589 = vmatpush.msra.mxu0 0.0
  %3590 = vmatpush.msra.mxu0 0.0
  %3591 = vmatpush.msra.mxu0 0.0
  %3592 = vmatpush.msra.mxu0 0.0
  %3593 = vmatpush.msra.mxu0 0.0
  %3594 = vmatpush.msra.mxu0 0.0
  %3595 = vmatpush.msra.mxu0 0.0
  %3596 = vmatpush.msra.mxu0 0.0
  %3597 = vmatpush.msra.mxu0 0.0
  %3598 = vmatpush.msra.mxu0 0.0
  %3599 = vmatpush.msra.mxu0 0.0
  %3600 = vmatpush.msra.mxu0 %v3584
  %3601 = vmatmul.f32.gmra.mxu0 %v2655
  %v3602 = vpop.f32.mrf.mxu0
  %v3603 = vadd.f32 0.0, %v3602
  %3604 = vmatmul.f32.gmra.mxu0 %v2658
  %v3605 = vpop.f32.mrf.mxu0
  %v3606 = vadd.f32 0.0, %v3605
  %3607 = vmatmul.f32.gmra.mxu0 %v2661
  %v3608 = vpop.f32.mrf.mxu0
  %v3609 = vadd.f32 0.0, %v3608
  %3610 = vmatmul.f32.gmra.mxu0 %v2664
  %v3611 = vpop.f32.mrf.mxu0
  %v3612 = vadd.f32 0.0, %v3611
  %3613 = vmatmul.f32.gmra.mxu0 %v2667
  %v3614 = vpop.f32.mrf.mxu0
  %v3615 = vadd.f32 0.0, %v3614
  %3616 = vmatmul.f32.gmra.mxu0 %v2670
  %v3617 = vpop.f32.mrf.mxu0
  %v3618 = vadd.f32 0.0, %v3617
  %3619 = vmatmul.f32.gmra.mxu0 %v2673
  %v3620 = vpop.f32.mrf.mxu0
  %v3621 = vadd.f32 0.0, %v3620
  %3622 = vmatmul.f32.gmra.mxu0 %v2239
  %v3623 = vpop.f32.mrf.mxu0
  %v3624 = vadd.f32 0.0, %v3623
  %3625 = vmatmul.f32.gmra.mxu0 %v2679
  %v3626 = vpop.f32.mrf.mxu0
  %v3627 = vadd.f32 0.0, %v3626
  %3628 = vmatmul.f32.gmra.mxu0 %v2682
  %v3629 = vpop.f32.mrf.mxu0
  %v3630 = vadd.f32 0.0, %v3629
  %3631 = vmatmul.f32.gmra.mxu0 %v2685
  %v3632 = vpop.f32.mrf.mxu0
  %v3633 = vadd.f32 0.0, %v3632
  %3634 = vmatmul.f32.gmra.mxu0 %v2688
  %v3635 = vpop.f32.mrf.mxu0
  %v3636 = vadd.f32 0.0, %v3635
  %3637 = vmatmul.f32.gmra.mxu0 %v2691
  %v3638 = vpop.f32.mrf.mxu0
  %v3639 = vadd.f32 0.0, %v3638
  %3640 = vmatmul.f32.gmra.mxu0 %v2694
  %v3641 = vpop.f32.mrf.mxu0
  %v3642 = vadd.f32 0.0, %v3641
  %3643 = vmatmul.f32.gmra.mxu0 %v2697
  %v3644 = vpop.f32.mrf.mxu0
  %v3645 = vadd.f32 0.0, %v3644
  %3646 = vmatmul.f32.gmra.mxu0 %v2239
  %v3647 = vpop.f32.mrf.mxu0
  %v3648 = vadd.f32 0.0, %v3647
  %3649 = vdwg.mxu0
  %v3650 = vadd.f32 %v3567, %v3603
  %v3651 = vadd.f32 %v3568, %v3606
  %v3652 = vadd.f32 %v3569, %v3609
  %v3653 = vadd.f32 %v3570, %v3612
  %v3654 = vadd.f32 %v3571, %v3615
  %v3655 = vadd.f32 %v3572, %v3618
  %v3656 = vadd.f32 %v3573, %v3621
  %v3657 = vadd.f32 %v3574, %v3624
  %v3658 = vadd.f32 %v3575, %v3627
  %v3659 = vadd.f32 %v3576, %v3630
  %v3660 = vadd.f32 %v3577, %v3633
  %v3661 = vadd.f32 %v3578, %v3636
  %v3662 = vadd.f32 %v3579, %v3639
  %v3663 = vadd.f32 %v3580, %v3642
  %v3664 = vadd.f32 %v3581, %v3645
  %v3665 = vadd.f32 %v3582, %v3648
  %s3666 = scalar_lea.vmem %s2, 104
  %v3667 = vld [vmem:[%s3666] sm:$0xff]
  %3668 = vmatpush.msra.mxu0 0.0
  %3669 = vmatpush.msra.mxu0 0.0
  %3670 = vmatpush.msra.mxu0 0.0
  %3671 = vmatpush.msra.mxu0 0.0
  %3672 = vmatpush.msra.mxu0 0.0
  %3673 = vmatpush.msra.mxu0 0.0
  %3674 = vmatpush.msra.mxu0 0.0
  %3675 = vmatpush.msra.mxu0 0.0
  %3676 = vmatpush.msra.mxu0 0.0
  %3677 = vmatpush.msra.mxu0 0.0
  %3678 = vmatpush.msra.mxu0 0.0
  %3679 = vmatpush.msra.mxu0 0.0
  %3680 = vmatpush.msra.mxu0 0.0
  %3681 = vmatpush.msra.mxu0 0.0
  %3682 = vmatpush.msra.mxu0 0.0
  %3683 = vmatpush.msra.mxu0 %v3667
  %3684 = vmatmul.f32.gmra.mxu0 %v2786
  %v3685 = vpop.f32.mrf.mxu0
  %v3686 = vadd.f32 0.0, %v3685
  %3687 = vmatmul.f32.gmra.mxu0 %v2789
  %v3688 = vpop.f32.mrf.mxu0
  %v3689 = vadd.f32 0.0, %v3688
  %3690 = vmatmul.f32.gmra.mxu0 %v2792
  %v3691 = vpop.f32.mrf.mxu0
  %v3692 = vadd.f32 0.0, %v3691
  %3693 = vmatmul.f32.gmra.mxu0 %v2795
  %v3694 = vpop.f32.mrf.mxu0
  %v3695 = vadd.f32 0.0, %v3694
  %3696 = vmatmul.f32.gmra.mxu0 %v2798
  %v3697 = vpop.f32.mrf.mxu0
  %v3698 = vadd.f32 0.0, %v3697
  %3699 = vmatmul.f32.gmra.mxu0 %v2801
  %v3700 = vpop.f32.mrf.mxu0
  %v3701 = vadd.f32 0.0, %v3700
  %3702 = vmatmul.f32.gmra.mxu0 %v2804
  %v3703 = vpop.f32.mrf.mxu0
  %v3704 = vadd.f32 0.0, %v3703
  %3705 = vmatmul.f32.gmra.mxu0 %v2129
  %v3706 = vpop.f32.mrf.mxu0
  %v3707 = vadd.f32 0.0, %v3706
  %3708 = vmatmul.f32.gmra.mxu0 %v2810
  %v3709 = vpop.f32.mrf.mxu0
  %v3710 = vadd.f32 0.0, %v3709
  %3711 = vmatmul.f32.gmra.mxu0 %v2813
  %v3712 = vpop.f32.mrf.mxu0
  %v3713 = vadd.f32 0.0, %v3712
  %3714 = vmatmul.f32.gmra.mxu0 %v2816
  %v3715 = vpop.f32.mrf.mxu0
  %v3716 = vadd.f32 0.0, %v3715
  %3717 = vmatmul.f32.gmra.mxu0 %v2819
  %v3718 = vpop.f32.mrf.mxu0
  %v3719 = vadd.f32 0.0, %v3718
  %3720 = vmatmul.f32.gmra.mxu0 %v2822
  %v3721 = vpop.f32.mrf.mxu0
  %v3722 = vadd.f32 0.0, %v3721
  %3723 = vmatmul.f32.gmra.mxu0 %v2825
  %v3724 = vpop.f32.mrf.mxu0
  %v3725 = vadd.f32 0.0, %v3724
  %3726 = vmatmul.f32.gmra.mxu0 %v2828
  %v3727 = vpop.f32.mrf.mxu0
  %v3728 = vadd.f32 0.0, %v3727
  %3729 = vmatmul.f32.gmra.mxu0 %v2129
  %v3730 = vpop.f32.mrf.mxu0
  %v3731 = vadd.f32 0.0, %v3730
  %3732 = vdwg.mxu0
  %v3733 = vadd.f32 %v3650, %v3686
  %v3734 = vadd.f32 %v3651, %v3689
  %v3735 = vadd.f32 %v3652, %v3692
  %v3736 = vadd.f32 %v3653, %v3695
  %v3737 = vadd.f32 %v3654, %v3698
  %v3738 = vadd.f32 %v3655, %v3701
  %v3739 = vadd.f32 %v3656, %v3704
  %v3740 = vadd.f32 %v3657, %v3707
  %v3741 = vadd.f32 %v3658, %v3710
  %v3742 = vadd.f32 %v3659, %v3713
  %v3743 = vadd.f32 %v3660, %v3716
  %v3744 = vadd.f32 %v3661, %v3719
  %v3745 = vadd.f32 %v3662, %v3722
  %v3746 = vadd.f32 %v3663, %v3725
  %v3747 = vadd.f32 %v3664, %v3728
  %v3748 = vadd.f32 %v3665, %v3731
  %s3749 = scalar_lea.vmem %s2, 112
  %v3750 = vld [vmem:[%s3749] sm:$0xff]
  %3751 = vmatpush.msra.mxu0 0.0
  %3752 = vmatpush.msra.mxu0 0.0
  %3753 = vmatpush.msra.mxu0 0.0
  %3754 = vmatpush.msra.mxu0 0.0
  %3755 = vmatpush.msra.mxu0 0.0
  %3756 = vmatpush.msra.mxu0 0.0
  %3757 = vmatpush.msra.mxu0 0.0
  %3758 = vmatpush.msra.mxu0 0.0
  %3759 = vmatpush.msra.mxu0 0.0
  %3760 = vmatpush.msra.mxu0 0.0
  %3761 = vmatpush.msra.mxu0 0.0
  %3762 = vmatpush.msra.mxu0 0.0
  %3763 = vmatpush.msra.mxu0 0.0
  %3764 = vmatpush.msra.mxu0 0.0
  %3765 = vmatpush.msra.mxu0 0.0
  %3766 = vmatpush.msra.mxu0 %v3750
  %3767 = vmatmul.f32.gmra.mxu0 %v2947
  %v3768 = vpop.f32.mrf.mxu0
  %v3769 = vadd.f32 0.0, %v3768
  %3770 = vmatmul.f32.gmra.mxu0 %v2949
  %v3771 = vpop.f32.mrf.mxu0
  %v3772 = vadd.f32 0.0, %v3771
  %3773 = vmatmul.f32.gmra.mxu0 %v2951
  %v3774 = vpop.f32.mrf.mxu0
  %v3775 = vadd.f32 0.0, %v3774
  %3776 = vmatmul.f32.gmra.mxu0 %v2953
  %v3777 = vpop.f32.mrf.mxu0
  %v3778 = vadd.f32 0.0, %v3777
  %3779 = vmatmul.f32.gmra.mxu0 %v2955
  %v3780 = vpop.f32.mrf.mxu0
  %v3781 = vadd.f32 0.0, %v3780
  %3782 = vmatmul.f32.gmra.mxu0 %v2957
  %v3783 = vpop.f32.mrf.mxu0
  %v3784 = vadd.f32 0.0, %v3783
  %3785 = vmatmul.f32.gmra.mxu0 %v2959
  %v3786 = vpop.f32.mrf.mxu0
  %v3787 = vadd.f32 0.0, %v3786
  %3788 = vmatmul.f32.gmra.mxu0 %v2380
  %v3789 = vpop.f32.mrf.mxu0
  %v3790 = vadd.f32 0.0, %v3789
  %3791 = vmatmul.f32.gmra.mxu0 %v2963
  %v3792 = vpop.f32.mrf.mxu0
  %v3793 = vadd.f32 0.0, %v3792
  %3794 = vmatmul.f32.gmra.mxu0 %v2965
  %v3795 = vpop.f32.mrf.mxu0
  %v3796 = vadd.f32 0.0, %v3795
  %3797 = vmatmul.f32.gmra.mxu0 %v2967
  %v3798 = vpop.f32.mrf.mxu0
  %v3799 = vadd.f32 0.0, %v3798
  %3800 = vmatmul.f32.gmra.mxu0 %v2969
  %v3801 = vpop.f32.mrf.mxu0
  %v3802 = vadd.f32 0.0, %v3801
  %3803 = vmatmul.f32.gmra.mxu0 %v2971
  %v3804 = vpop.f32.mrf.mxu0
  %v3805 = vadd.f32 0.0, %v3804
  %3806 = vmatmul.f32.gmra.mxu0 %v2973
  %v3807 = vpop.f32.mrf.mxu0
  %v3808 = vadd.f32 0.0, %v3807
  %3809 = vmatmul.f32.gmra.mxu0 %v2975
  %v3810 = vpop.f32.mrf.mxu0
  %v3811 = vadd.f32 0.0, %v3810
  %3812 = vmatmul.f32.gmra.mxu0 %v2380
  %v3813 = vpop.f32.mrf.mxu0
  %v3814 = vadd.f32 0.0, %v3813
  %3815 = vdwg.mxu0
  %v3816 = vadd.f32 %v3733, %v3769
  %v3817 = vadd.f32 %v3734, %v3772
  %v3818 = vadd.f32 %v3735, %v3775
  %v3819 = vadd.f32 %v3736, %v3778
  %v3820 = vadd.f32 %v3737, %v3781
  %v3821 = vadd.f32 %v3738, %v3784
  %v3822 = vadd.f32 %v3739, %v3787
  %v3823 = vadd.f32 %v3740, %v3790
  %v3824 = vadd.f32 %v3741, %v3793
  %v3825 = vadd.f32 %v3742, %v3796
  %v3826 = vadd.f32 %v3743, %v3799
  %v3827 = vadd.f32 %v3744, %v3802
  %v3828 = vadd.f32 %v3745, %v3805
  %v3829 = vadd.f32 %v3746, %v3808
  %v3830 = vadd.f32 %v3747, %v3811
  %v3831 = vadd.f32 %v3748, %v3814
  %s3832 = scalar_lea.vmem %s2, 120
  %v3833 = vld [vmem:[%s3832] sm:$0xff]
  %3834 = vmatpush.msra.mxu0 0.0
  %3835 = vmatpush.msra.mxu0 0.0
  %3836 = vmatpush.msra.mxu0 0.0
  %3837 = vmatpush.msra.mxu0 0.0
  %3838 = vmatpush.msra.mxu0 0.0
  %3839 = vmatpush.msra.mxu0 0.0
  %3840 = vmatpush.msra.mxu0 0.0
  %3841 = vmatpush.msra.mxu0 0.0
  %3842 = vmatpush.msra.mxu0 0.0
  %3843 = vmatpush.msra.mxu0 0.0
  %3844 = vmatpush.msra.mxu0 0.0
  %3845 = vmatpush.msra.mxu0 0.0
  %3846 = vmatpush.msra.mxu0 0.0
  %3847 = vmatpush.msra.mxu0 0.0
  %3848 = vmatpush.msra.mxu0 0.0
  %3849 = vmatpush.msra.mxu0 %v3833
  %3850 = vmatmul.f32.gmra.mxu0 %v3110
  %v3851 = vpop.f32.mrf.mxu0
  %v3852 = vadd.f32 0.0, %v3851
  %3853 = vmatmul.f32.gmra.mxu0 %v3112
  %v3854 = vpop.f32.mrf.mxu0
  %v3855 = vadd.f32 0.0, %v3854
  %3856 = vmatmul.f32.gmra.mxu0 %v3114
  %v3857 = vpop.f32.mrf.mxu0
  %v3858 = vadd.f32 0.0, %v3857
  %3859 = vmatmul.f32.gmra.mxu0 %v3116
  %v3860 = vpop.f32.mrf.mxu0
  %v3861 = vadd.f32 0.0, %v3860
  %3862 = vmatmul.f32.gmra.mxu0 %v3118
  %v3863 = vpop.f32.mrf.mxu0
  %v3864 = vadd.f32 0.0, %v3863
  %3865 = vmatmul.f32.gmra.mxu0 %v3120
  %v3866 = vpop.f32.mrf.mxu0
  %v3867 = vadd.f32 0.0, %v3866
  %3868 = vmatmul.f32.gmra.mxu0 %v3122
  %v3869 = vpop.f32.mrf.mxu0
  %v3870 = vadd.f32 0.0, %v3869
  %3871 = vmatmul.f32.gmra.mxu0 %v2538
  %v3872 = vpop.f32.mrf.mxu0
  %v3873 = vadd.f32 0.0, %v3872
  %3874 = vmatmul.f32.gmra.mxu0 %v3126
  %v3875 = vpop.f32.mrf.mxu0
  %v3876 = vadd.f32 0.0, %v3875
  %3877 = vmatmul.f32.gmra.mxu0 %v3128
  %v3878 = vpop.f32.mrf.mxu0
  %v3879 = vadd.f32 0.0, %v3878
  %3880 = vmatmul.f32.gmra.mxu0 %v3130
  %v3881 = vpop.f32.mrf.mxu0
  %v3882 = vadd.f32 0.0, %v3881
  %3883 = vmatmul.f32.gmra.mxu0 %v3132
  %v3884 = vpop.f32.mrf.mxu0
  %v3885 = vadd.f32 0.0, %v3884
  %3886 = vmatmul.f32.gmra.mxu0 %v3134
  %v3887 = vpop.f32.mrf.mxu0
  %v3888 = vadd.f32 0.0, %v3887
  %3889 = vmatmul.f32.gmra.mxu0 %v3136
  %v3890 = vpop.f32.mrf.mxu0
  %v3891 = vadd.f32 0.0, %v3890
  %3892 = vmatmul.f32.gmra.mxu0 %v3138
  %v3893 = vpop.f32.mrf.mxu0
  %v3894 = vadd.f32 0.0, %v3893
  %3895 = vmatmul.f32.gmra.mxu0 %v2538
  %v3896 = vpop.f32.mrf.mxu0
  %v3897 = vadd.f32 0.0, %v3896
  %3898 = vdwg.mxu0
  %v3899 = vadd.f32 %v3816, %v3852
  %v3900 = vadd.f32 %v3817, %v3855
  %v3901 = vadd.f32 %v3818, %v3858
  %v3902 = vadd.f32 %v3819, %v3861
  %v3903 = vadd.f32 %v3820, %v3864
  %v3904 = vadd.f32 %v3821, %v3867
  %v3905 = vadd.f32 %v3822, %v3870
  %v3906 = vadd.f32 %v3823, %v3873
  %v3907 = vadd.f32 %v3824, %v3876
  %v3908 = vadd.f32 %v3825, %v3879
  %v3909 = vadd.f32 %v3826, %v3882
  %v3910 = vadd.f32 %v3827, %v3885
  %v3911 = vadd.f32 %v3828, %v3888
  %v3912 = vadd.f32 %v3829, %v3891
  %v3913 = vadd.f32 %v3830, %v3894
  %v3914 = vadd.f32 %v3831, %v3897
  %v3915 = vlaneseq
  %v3916 = vshrl.u32 %v3915, 7
  %v3917 = vadd.s32 %v3916, 8
  %v3918 = vadd.s32 %v3916, 16
  %v3919 = vadd.s32 %v3916, 24
  %v3920 = vadd.s32 %v3916, 32
  %v3921 = vadd.s32 %v3916, 40
  %v3922 = vadd.s32 %v3916, 48
  %v3923 = vadd.s32 %v3916, 56
  %v3924 = vadd.s32 %v3916, 64
  %v3925 = vadd.s32 %v3916, 72
  %v3926 = vadd.s32 %v3916, 80
  %v3927 = vadd.s32 %v3916, 88
  %v3928 = vadd.s32 %v3916, 96
  %v3929 = vadd.s32 %v3916, 104
  %v3930 = vadd.s32 %v3916, 112
  %v3931 = vadd.s32 %v3916, 120
  %vm3932 = vcmp.lt.s32.totalorder %v3916, 0
  %v3933 = vsub.s32 0, %v3916
  %v3934 = vsel %vm3932, %v3933, %v3916
  %v3935 = vshrl.u32 %v3934, 3
  %v3936 = vand.u32 %v3934, 7
  %v3937 = vsub.s32 0, %v3936
  %v3938 = vsel %vm3932, %v3937, %v3936
  %vm3939 = vcmp.lt.s32.totalorder %v3917, 0
  %v3940 = vsub.s32 0, %v3917
  %v3941 = vsel %vm3939, %v3940, %v3917
  %v3942 = vshrl.u32 %v3941, 3
  %v3943 = vand.u32 %v3941, 7
  %v3944 = vsub.s32 0, %v3943
  %v3945 = vsel %vm3939, %v3944, %v3943
  %vm3946 = vcmp.lt.s32.totalorder %v3918, 0
  %v3947 = vsub.s32 0, %v3918
  %v3948 = vsel %vm3946, %v3947, %v3918
  %v3949 = vshrl.u32 %v3948, 3
  %v3950 = vand.u32 %v3948, 7
  %v3951 = vsub.s32 0, %v3950
  %v3952 = vsel %vm3946, %v3951, %v3950
  %vm3953 = vcmp.lt.s32.totalorder %v3919, 0
  %v3954 = vsub.s32 0, %v3919
  %v3955 = vsel %vm3953, %v3954, %v3919
  %v3956 = vshrl.u32 %v3955, 3
  %v3957 = vand.u32 %v3955, 7
  %v3958 = vsub.s32 0, %v3957
  %v3959 = vsel %vm3953, %v3958, %v3957
  %vm3960 = vcmp.lt.s32.totalorder %v3920, 0
  %v3961 = vsub.s32 0, %v3920
  %v3962 = vsel %vm3960, %v3961, %v3920
  %v3963 = vshrl.u32 %v3962, 3
  %v3964 = vand.u32 %v3962, 7
  %v3965 = vsub.s32 0, %v3964
  %v3966 = vsel %vm3960, %v3965, %v3964
  %vm3967 = vcmp.lt.s32.totalorder %v3921, 0
  %v3968 = vsub.s32 0, %v3921
  %v3969 = vsel %vm3967, %v3968, %v3921
  %v3970 = vshrl.u32 %v3969, 3
  %v3971 = vand.u32 %v3969, 7
  %v3972 = vsub.s32 0, %v3971
  %v3973 = vsel %vm3967, %v3972, %v3971
  %vm3974 = vcmp.lt.s32.totalorder %v3922, 0
  %v3975 = vsub.s32 0, %v3922
  %v3976 = vsel %vm3974, %v3975, %v3922
  %v3977 = vshrl.u32 %v3976, 3
  %v3978 = vand.u32 %v3976, 7
  %v3979 = vsub.s32 0, %v3978
  %v3980 = vsel %vm3974, %v3979, %v3978
  %vm3981 = vcmp.lt.s32.totalorder %v3923, 0
  %v3982 = vsub.s32 0, %v3923
  %v3983 = vsel %vm3981, %v3982, %v3923
  %v3984 = vshrl.u32 %v3983, 3
  %v3985 = vand.u32 %v3983, 7
  %v3986 = vsub.s32 0, %v3985
  %v3987 = vsel %vm3981, %v3986, %v3985
  %vm3988 = vcmp.lt.s32.totalorder %v3924, 0
  %v3989 = vsub.s32 0, %v3924
  %v3990 = vsel %vm3988, %v3989, %v3924
  %v3991 = vshrl.u32 %v3990, 3
  %v3992 = vand.u32 %v3990, 7
  %v3993 = vsub.s32 0, %v3992
  %v3994 = vsel %vm3988, %v3993, %v3992
  %vm3995 = vcmp.lt.s32.totalorder %v3925, 0
  %v3996 = vsub.s32 0, %v3925
  %v3997 = vsel %vm3995, %v3996, %v3925
  %v3998 = vshrl.u32 %v3997, 3
  %v3999 = vand.u32 %v3997, 7
  %v4000 = vsub.s32 0, %v3999
  %v4001 = vsel %vm3995, %v4000, %v3999
  %vm4002 = vcmp.lt.s32.totalorder %v3926, 0
  %v4003 = vsub.s32 0, %v3926
  %v4004 = vsel %vm4002, %v4003, %v3926
  %v4005 = vshrl.u32 %v4004, 3
  %v4006 = vand.u32 %v4004, 7
  %v4007 = vsub.s32 0, %v4006
  %v4008 = vsel %vm4002, %v4007, %v4006
  %vm4009 = vcmp.lt.s32.totalorder %v3927, 0
  %v4010 = vsub.s32 0, %v3927
  %v4011 = vsel %vm4009, %v4010, %v3927
  %v4012 = vshrl.u32 %v4011, 3
  %v4013 = vand.u32 %v4011, 7
  %v4014 = vsub.s32 0, %v4013
  %v4015 = vsel %vm4009, %v4014, %v4013
  %vm4016 = vcmp.lt.s32.totalorder %v3928, 0
  %v4017 = vsub.s32 0, %v3928
  %v4018 = vsel %vm4016, %v4017, %v3928
  %v4019 = vshrl.u32 %v4018, 3
  %v4020 = vand.u32 %v4018, 7
  %v4021 = vsub.s32 0, %v4020
  %v4022 = vsel %vm4016, %v4021, %v4020
  %vm4023 = vcmp.lt.s32.totalorder %v3929, 0
  %v4024 = vsub.s32 0, %v3929
  %v4025 = vsel %vm4023, %v4024, %v3929
  %v4026 = vshrl.u32 %v4025, 3
  %v4027 = vand.u32 %v4025, 7
  %v4028 = vsub.s32 0, %v4027
  %v4029 = vsel %vm4023, %v4028, %v4027
  %vm4030 = vcmp.lt.s32.totalorder %v3930, 0
  %v4031 = vsub.s32 0, %v3930
  %v4032 = vsel %vm4030, %v4031, %v3930
  %v4033 = vshrl.u32 %v4032, 3
  %v4034 = vand.u32 %v4032, 7
  %v4035 = vsub.s32 0, %v4034
  %v4036 = vsel %vm4030, %v4035, %v4034
  %vm4037 = vcmp.lt.s32.totalorder %v3931, 0
  %v4038 = vsub.s32 0, %v3931
  %v4039 = vsel %vm4037, %v4038, %v3931
  %v4040 = vshrl.u32 %v4039, 3
  %v4041 = vand.u32 %v4039, 7
  %v4042 = vsub.s32 0, %v4041
  %v4043 = vsel %vm4037, %v4042, %v4041
  %vm4044 = vcmp.ne.s32.totalorder %v3938, 0
  %vm4045 = vcmp.ne.s32.totalorder %v3945, 0
  %vm4046 = vcmp.ne.s32.totalorder %v3952, 0
  %vm4047 = vcmp.ne.s32.totalorder %v3959, 0
  %vm4048 = vcmp.ne.s32.totalorder %v3966, 0
  %vm4049 = vcmp.ne.s32.totalorder %v3973, 0
  %vm4050 = vcmp.ne.s32.totalorder %v3980, 0
  %vm4051 = vcmp.ne.s32.totalorder %v3987, 0
  %vm4052 = vcmp.ne.s32.totalorder %v3994, 0
  %vm4053 = vcmp.ne.s32.totalorder %v4001, 0
  %vm4054 = vcmp.ne.s32.totalorder %v4008, 0
  %vm4055 = vcmp.ne.s32.totalorder %v4015, 0
  %vm4056 = vcmp.ne.s32.totalorder %v4022, 0
  %vm4057 = vcmp.ne.s32.totalorder %v4029, 0
  %vm4058 = vcmp.ne.s32.totalorder %v4036, 0
  %vm4059 = vcmp.ne.s32.totalorder %v4043, 0
  %vm4060 = vcmp.lt.s32.totalorder %v3938, 0
  %vm4061 = vcmp.lt.s32.totalorder %v3945, 0
  %vm4062 = vcmp.lt.s32.totalorder %v3952, 0
  %vm4063 = vcmp.lt.s32.totalorder %v3959, 0
  %vm4064 = vcmp.lt.s32.totalorder %v3966, 0
  %vm4065 = vcmp.lt.s32.totalorder %v3973, 0
  %vm4066 = vcmp.lt.s32.totalorder %v3980, 0
  %vm4067 = vcmp.lt.s32.totalorder %v3987, 0
  %vm4068 = vcmp.lt.s32.totalorder %v3994, 0
  %vm4069 = vcmp.lt.s32.totalorder %v4001, 0
  %vm4070 = vcmp.lt.s32.totalorder %v4008, 0
  %vm4071 = vcmp.lt.s32.totalorder %v4015, 0
  %vm4072 = vcmp.lt.s32.totalorder %v4022, 0
  %vm4073 = vcmp.lt.s32.totalorder %v4029, 0
  %vm4074 = vcmp.lt.s32.totalorder %v4036, 0
  %vm4075 = vcmp.lt.s32.totalorder %v4043, 0
  %vm4076 = vmand %vm4060, %vm4044
  %vm4077 = vmand %vm4061, %vm4045
  %vm4078 = vmand %vm4062, %vm4046
  %vm4079 = vmand %vm4063, %vm4047
  %vm4080 = vmand %vm4064, %vm4048
  %vm4081 = vmand %vm4065, %vm4049
  %vm4082 = vmand %vm4066, %vm4050
  %vm4083 = vmand %vm4067, %vm4051
  %vm4084 = vmand %vm4068, %vm4052
  %vm4085 = vmand %vm4069, %vm4053
  %vm4086 = vmand %vm4070, %vm4054
  %vm4087 = vmand %vm4071, %vm4055
  %vm4088 = vmand %vm4072, %vm4056
  %vm4089 = vmand %vm4073, %vm4057
  %vm4090 = vmand %vm4074, %vm4058
  %vm4091 = vmand %vm4075, %vm4059
  %v4092 = vadd.s32 %v3938, 8
  %v4093 = vadd.s32 %v3945, 8
  %v4094 = vadd.s32 %v3952, 8
  %v4095 = vadd.s32 %v3959, 8
  %v4096 = vadd.s32 %v3966, 8
  %v4097 = vadd.s32 %v3973, 8
  %v4098 = vadd.s32 %v3980, 8
  %v4099 = vadd.s32 %v3987, 8
  %v4100 = vadd.s32 %v3994, 8
  %v4101 = vadd.s32 %v4001, 8
  %v4102 = vadd.s32 %v4008, 8
  %v4103 = vadd.s32 %v4015, 8
  %v4104 = vadd.s32 %v4022, 8
  %v4105 = vadd.s32 %v4029, 8
  %v4106 = vadd.s32 %v4036, 8
  %v4107 = vadd.s32 %v4043, 8
  %v4108 = vsel %vm4076, %v4092, %v3938
  %v4109 = vsel %vm4077, %v4093, %v3945
  %v4110 = vsel %vm4078, %v4094, %v3952
  %v4111 = vsel %vm4079, %v4095, %v3959
  %v4112 = vsel %vm4080, %v4096, %v3966
  %v4113 = vsel %vm4081, %v4097, %v3973
  %v4114 = vsel %vm4082, %v4098, %v3980
  %v4115 = vsel %vm4083, %v4099, %v3987
  %v4116 = vsel %vm4084, %v4100, %v3994
  %v4117 = vsel %vm4085, %v4101, %v4001
  %v4118 = vsel %vm4086, %v4102, %v4008
  %v4119 = vsel %vm4087, %v4103, %v4015
  %v4120 = vsel %vm4088, %v4104, %v4022
  %v4121 = vsel %vm4089, %v4105, %v4029
  %v4122 = vsel %vm4090, %v4106, %v4036
  %v4123 = vsel %vm4091, %v4107, %v4043
  %vm4124 = vcmp.lt.s32.totalorder %v4108, 8
  %vm4125 = vcmp.lt.s32.totalorder %v4109, 8
  %vm4126 = vcmp.lt.s32.totalorder %v4110, 8
  %vm4127 = vcmp.lt.s32.totalorder %v4111, 8
  %vm4128 = vcmp.lt.s32.totalorder %v4112, 8
  %vm4129 = vcmp.lt.s32.totalorder %v4113, 8
  %vm4130 = vcmp.lt.s32.totalorder %v4114, 8
  %vm4131 = vcmp.lt.s32.totalorder %v4115, 8
  %vm4132 = vcmp.lt.s32.totalorder %v4116, 8
  %vm4133 = vcmp.lt.s32.totalorder %v4117, 8
  %vm4134 = vcmp.lt.s32.totalorder %v4118, 8
  %vm4135 = vcmp.lt.s32.totalorder %v4119, 8
  %vm4136 = vcmp.lt.s32.totalorder %v4120, 8
  %vm4137 = vcmp.lt.s32.totalorder %v4121, 8
  %vm4138 = vcmp.lt.s32.totalorder %v4122, 8
  %vm4139 = vcmp.lt.s32.totalorder %v4123, 8
  %v4140 = vsel %vm4124, 1, 0
  %v4141 = vsel %vm4125, 1, 0
  %v4142 = vsel %vm4126, 1, 0
  %v4143 = vsel %vm4127, 1, 0
  %v4144 = vsel %vm4128, 1, 0
  %v4145 = vsel %vm4129, 1, 0
  %v4146 = vsel %vm4130, 1, 0
  %v4147 = vsel %vm4131, 1, 0
  %v4148 = vsel %vm4132, 1, 0
  %v4149 = vsel %vm4133, 1, 0
  %v4150 = vsel %vm4134, 1, 0
  %v4151 = vsel %vm4135, 1, 0
  %v4152 = vsel %vm4136, 1, 0
  %v4153 = vsel %vm4137, 1, 0
  %v4154 = vsel %vm4138, 1, 0
  %v4155 = vsel %vm4139, 1, 0
  %v4156 = vcvt.s32.f32 %v4140
  %v4157 = vcvt.s32.f32 %v4141
  %v4158 = vcvt.s32.f32 %v4142
  %v4159 = vcvt.s32.f32 %v4143
  %v4160 = vcvt.s32.f32 %v4144
  %v4161 = vcvt.s32.f32 %v4145
  %v4162 = vcvt.s32.f32 %v4146
  %v4163 = vcvt.s32.f32 %v4147
  %v4164 = vcvt.s32.f32 %v4148
  %v4165 = vcvt.s32.f32 %v4149
  %v4166 = vcvt.s32.f32 %v4150
  %v4167 = vcvt.s32.f32 %v4151
  %v4168 = vcvt.s32.f32 %v4152
  %v4169 = vcvt.s32.f32 %v4153
  %v4170 = vcvt.s32.f32 %v4154
  %v4171 = vcvt.s32.f32 %v4155
  %v4172 = vmul.f32 %v3899, %v4156
  %v4173 = vmul.f32 %v3900, %v4157
  %v4174 = vmul.f32 %v3901, %v4158
  %v4175 = vmul.f32 %v3902, %v4159
  %v4176 = vmul.f32 %v3903, %v4160
  %v4177 = vmul.f32 %v3904, %v4161
  %v4178 = vmul.f32 %v3905, %v4162
  %v4179 = vmul.f32 %v3906, %v4163
  %v4180 = vmul.f32 %v3907, %v4164
  %v4181 = vmul.f32 %v3908, %v4165
  %v4182 = vmul.f32 %v3909, %v4166
  %v4183 = vmul.f32 %v3910, %v4167
  %v4184 = vmul.f32 %v3911, %v4168
  %v4185 = vmul.f32 %v3912, %v4169
  %v4186 = vmul.f32 %v3913, %v4170
  %v4187 = vmul.f32 %v3914, %v4171
  %v4188 = vsel %vm107, %v4172, 0.0
  %v4189 = vsel %vm107, %v4173, 0.0
  %v4190 = vadd.f32 %v4188, %v4189
  %v4191 = vsel %vm107, %v4174, 0.0
  %v4192 = vadd.f32 %v4190, %v4191
  %v4193 = vsel %vm107, %v4175, 0.0
  %v4194 = vadd.f32 %v4192, %v4193
  %v4195 = vsel %vm107, %v4176, 0.0
  %v4196 = vadd.f32 %v4194, %v4195
  %v4197 = vsel %vm107, %v4177, 0.0
  %v4198 = vadd.f32 %v4196, %v4197
  %v4199 = vsel %vm107, %v4178, 0.0
  %v4200 = vadd.f32 %v4198, %v4199
  %v4201 = vsel %vm107, %v4179, 0.0
  %v4202 = vadd.f32 %v4200, %v4201
  %v4203 = vsel %vm107, %v4180, 0.0
  %v4204 = vadd.f32 %v4202, %v4203
  %v4205 = vsel %vm107, %v4181, 0.0
  %v4206 = vadd.f32 %v4204, %v4205
  %v4207 = vsel %vm107, %v4182, 0.0
  %v4208 = vadd.f32 %v4206, %v4207
  %v4209 = vsel %vm107, %v4183, 0.0
  %v4210 = vadd.f32 %v4208, %v4209
  %v4211 = vsel %vm107, %v4184, 0.0
  %v4212 = vadd.f32 %v4210, %v4211
  %v4213 = vsel %vm107, %v4185, 0.0
  %v4214 = vadd.f32 %v4212, %v4213
  %v4215 = vsel %vm107, %v4186, 0.0
  %v4216 = vadd.f32 %v4214, %v4215
  %v4217 = vsel %vm107, %v4187, 0.0
  %v4218 = vadd.f32 %v4216, %v4217
  %v4219 = vrot.slane %v4218, 4
  %v4220 = vadd.f32 %v4218, %v4219
  %v4221 = vrot.slane %v4220, 2
  %v4222 = vadd.f32 %v4220, %v4221
  %v4223 = vrot.slane %v4222, 1
  %v4224 = vadd.f32 %v4222, %v4223
  %v4225 = vrcp.pop 128.0
  %v4226 = vmul.f32 128.0, %v4225
  %v4227 = vsub.f32 1.0, %v4226
  %v4228 = vmul.f32 %v4225, %v4227
  %v4229 = vadd.f32 %v4225, %v4228
  %vm4230 = vweird.f32 %v4225
  %v4231 = vsel %vm4230, %v4225, %v4229
  %v4232 = vmul.f32 %v4224, %v4231
  %v4233 = vsub.f32 %v3899, %v4232
  %v4234 = vsub.f32 %v3900, %v4232
  %v4235 = vsub.f32 %v3901, %v4232
  %v4236 = vsub.f32 %v3902, %v4232
  %v4237 = vsub.f32 %v3903, %v4232
  %v4238 = vsub.f32 %v3904, %v4232
  %v4239 = vsub.f32 %v3905, %v4232
  %v4240 = vsub.f32 %v3906, %v4232
  %v4241 = vsub.f32 %v3907, %v4232
  %v4242 = vsub.f32 %v3908, %v4232
  %v4243 = vsub.f32 %v3909, %v4232
  %v4244 = vsub.f32 %v3910, %v4232
  %v4245 = vsub.f32 %v3911, %v4232
  %v4246 = vsub.f32 %v3912, %v4232
  %v4247 = vsub.f32 %v3913, %v4232
  %v4248 = vsub.f32 %v3914, %v4232
  %v4249 = vmul.f32 %v4233, %v4156
  %v4250 = vmul.f32 %v4234, %v4157
  %v4251 = vmul.f32 %v4235, %v4158
  %v4252 = vmul.f32 %v4236, %v4159
  %v4253 = vmul.f32 %v4237, %v4160
  %v4254 = vmul.f32 %v4238, %v4161
  %v4255 = vmul.f32 %v4239, %v4162
  %v4256 = vmul.f32 %v4240, %v4163
  %v4257 = vmul.f32 %v4241, %v4164
  %v4258 = vmul.f32 %v4242, %v4165
  %v4259 = vmul.f32 %v4243, %v4166
  %v4260 = vmul.f32 %v4244, %v4167
  %v4261 = vmul.f32 %v4245, %v4168
  %v4262 = vmul.f32 %v4246, %v4169
  %v4263 = vmul.f32 %v4247, %v4170
  %v4264 = vmul.f32 %v4248, %v4171
  %v4265 = vmul.f32 %v4249, %v4249
  %v4266 = vmul.f32 %v4250, %v4250
  %v4267 = vmul.f32 %v4251, %v4251
  %v4268 = vmul.f32 %v4252, %v4252
  %v4269 = vmul.f32 %v4253, %v4253
  %v4270 = vmul.f32 %v4254, %v4254
  %v4271 = vmul.f32 %v4255, %v4255
  %v4272 = vmul.f32 %v4256, %v4256
  %v4273 = vmul.f32 %v4257, %v4257
  %v4274 = vmul.f32 %v4258, %v4258
  %v4275 = vmul.f32 %v4259, %v4259
  %v4276 = vmul.f32 %v4260, %v4260
  %v4277 = vmul.f32 %v4261, %v4261
  %v4278 = vmul.f32 %v4262, %v4262
  %v4279 = vmul.f32 %v4263, %v4263
  %v4280 = vmul.f32 %v4264, %v4264
  %v4281 = vsel %vm107, %v4265, 0.0
  %v4282 = vsel %vm107, %v4266, 0.0
  %v4283 = vadd.f32 %v4281, %v4282
  %v4284 = vsel %vm107, %v4267, 0.0
  %v4285 = vadd.f32 %v4283, %v4284
  %v4286 = vsel %vm107, %v4268, 0.0
  %v4287 = vadd.f32 %v4285, %v4286
  %v4288 = vsel %vm107, %v4269, 0.0
  %v4289 = vadd.f32 %v4287, %v4288
  %v4290 = vsel %vm107, %v4270, 0.0
  %v4291 = vadd.f32 %v4289, %v4290
  %v4292 = vsel %vm107, %v4271, 0.0
  %v4293 = vadd.f32 %v4291, %v4292
  %v4294 = vsel %vm107, %v4272, 0.0
  %v4295 = vadd.f32 %v4293, %v4294
  %v4296 = vsel %vm107, %v4273, 0.0
  %v4297 = vadd.f32 %v4295, %v4296
  %v4298 = vsel %vm107, %v4274, 0.0
  %v4299 = vadd.f32 %v4297, %v4298
  %v4300 = vsel %vm107, %v4275, 0.0
  %v4301 = vadd.f32 %v4299, %v4300
  %v4302 = vsel %vm107, %v4276, 0.0
  %v4303 = vadd.f32 %v4301, %v4302
  %v4304 = vsel %vm107, %v4277, 0.0
  %v4305 = vadd.f32 %v4303, %v4304
  %v4306 = vsel %vm107, %v4278, 0.0
  %v4307 = vadd.f32 %v4305, %v4306
  %v4308 = vsel %vm107, %v4279, 0.0
  %v4309 = vadd.f32 %v4307, %v4308
  %v4310 = vsel %vm107, %v4280, 0.0
  %v4311 = vadd.f32 %v4309, %v4310
  %v4312 = vrot.slane %v4311, 4
  %v4313 = vadd.f32 %v4311, %v4312
  %v4314 = vrot.slane %v4313, 2
  %v4315 = vadd.f32 %v4313, %v4314
  %v4316 = vrot.slane %v4315, 1
  %v4317 = vadd.f32 %v4315, %v4316
  %v4318 = vmul.f32 %v4317, %v4231
  %v4319 = vadd.f32 %v4318, 1e-05
  %v4320 = vrsqrt.pop %v4319
  %v4321 = vmul.f32 %v4320, %v4319
  %v4322 = vmul.f32 %v4321, %v4320
  %v4323 = vmul.f32 0.5, %v4322
  %v4324 = vsub.f32 1.5, %v4323
  %v4325 = vmul.f32 %v4320, %v4324
  %vm4326 = vweird.f32 %v4319
  %vm4327 = vweird.f32 %v4320
  %vm4328 = vmor %vm4326, %vm4327
  %v4329 = vsel %vm4328, %v4320, %v4325
  %v4330 = vmul.f32 %v4233, %v4329
  %v4331 = vmul.f32 %v4234, %v4329
  %v4332 = vmul.f32 %v4235, %v4329
  %v4333 = vmul.f32 %v4236, %v4329
  %v4334 = vmul.f32 %v4237, %v4329
  %v4335 = vmul.f32 %v4238, %v4329
  %v4336 = vmul.f32 %v4239, %v4329
  %v4337 = vmul.f32 %v4240, %v4329
  %v4338 = vmul.f32 %v4241, %v4329
  %v4339 = vmul.f32 %v4242, %v4329
  %v4340 = vmul.f32 %v4243, %v4329
  %v4341 = vmul.f32 %v4244, %v4329
  %v4342 = vmul.f32 %v4245, %v4329
  %v4343 = vmul.f32 %v4246, %v4329
  %v4344 = vmul.f32 %v4247, %v4329
  %v4345 = vmul.f32 %v4248, %v4329
  %v4346 = vld [vmem:[%s3] sm:$0x1]
  %v4348 = vperm.slane %v4346, 0
  %v4350 = vmul.f32 %v4330, %v4348
  %v4351 = vmul.f32 %v4331, %v4348
  %v4352 = vmul.f32 %v4332, %v4348
  %v4353 = vmul.f32 %v4333, %v4348
  %v4354 = vmul.f32 %v4334, %v4348
  %v4355 = vmul.f32 %v4335, %v4348
  %v4356 = vmul.f32 %v4336, %v4348
  %v4357 = vmul.f32 %v4337, %v4348
  %v4358 = vmul.f32 %v4338, %v4348
  %v4359 = vmul.f32 %v4339, %v4348
  %v4360 = vmul.f32 %v4340, %v4348
  %v4361 = vmul.f32 %v4341, %v4348
  %v4362 = vmul.f32 %v4342, %v4348
  %v4363 = vmul.f32 %v4343, %v4348
  %v4364 = vmul.f32 %v4344, %v4348
  %v4365 = vmul.f32 %v4345, %v4348
  %v4366 = vld [vmem:[%s4] sm:$0x1]
  %v4368 = vperm.slane %v4366, 0
  %v4370 = vadd.f32 %v4350, %v4368
  %v4371 = vadd.f32 %v4351, %v4368
  %v4372 = vadd.f32 %v4352, %v4368
  %v4373 = vadd.f32 %v4353, %v4368
  %v4374 = vadd.f32 %v4354, %v4368
  %v4375 = vadd.f32 %v4355, %v4368
  %v4376 = vadd.f32 %v4356, %v4368
  %v4377 = vadd.f32 %v4357, %v4368
  %v4378 = vadd.f32 %v4358, %v4368
  %v4379 = vadd.f32 %v4359, %v4368
  %v4380 = vadd.f32 %v4360, %v4368
  %v4381 = vadd.f32 %v4361, %v4368
  %v4382 = vadd.f32 %v4362, %v4368
  %v4383 = vadd.f32 %v4363, %v4368
  %v4384 = vadd.f32 %v4364, %v4368
  %v4385 = vadd.f32 %v4365, %v4368
  %vm4386 = vcmp.ge.f32.partialorder %v4370, 0.0
  %vm4387 = vcmp.ge.f32.partialorder %v4371, 0.0
  %vm4388 = vcmp.ge.f32.partialorder %v4372, 0.0
  %vm4389 = vcmp.ge.f32.partialorder %v4373, 0.0
  %vm4390 = vcmp.ge.f32.partialorder %v4374, 0.0
  %vm4391 = vcmp.ge.f32.partialorder %v4375, 0.0
  %vm4392 = vcmp.ge.f32.partialorder %v4376, 0.0
  %vm4393 = vcmp.ge.f32.partialorder %v4377, 0.0
  %vm4394 = vcmp.ge.f32.partialorder %v4378, 0.0
  %vm4395 = vcmp.ge.f32.partialorder %v4379, 0.0
  %vm4396 = vcmp.ge.f32.partialorder %v4380, 0.0
  %vm4397 = vcmp.ge.f32.partialorder %v4381, 0.0
  %vm4398 = vcmp.ge.f32.partialorder %v4382, 0.0
  %vm4399 = vcmp.ge.f32.partialorder %v4383, 0.0
  %vm4400 = vcmp.ge.f32.partialorder %v4384, 0.0
  %vm4401 = vcmp.ge.f32.partialorder %v4385, 0.0
  %v4402 = vmul.f32 %v4370, 0.2
  %v4403 = vmul.f32 %v4371, 0.2
  %v4404 = vmul.f32 %v4372, 0.2
  %v4405 = vmul.f32 %v4373, 0.2
  %v4406 = vmul.f32 %v4374, 0.2
  %v4407 = vmul.f32 %v4375, 0.2
  %v4408 = vmul.f32 %v4376, 0.2
  %v4409 = vmul.f32 %v4377, 0.2
  %v4410 = vmul.f32 %v4378, 0.2
  %v4411 = vmul.f32 %v4379, 0.2
  %v4412 = vmul.f32 %v4380, 0.2
  %v4413 = vmul.f32 %v4381, 0.2
  %v4414 = vmul.f32 %v4382, 0.2
  %v4415 = vmul.f32 %v4383, 0.2
  %v4416 = vmul.f32 %v4384, 0.2
  %v4417 = vmul.f32 %v4385, 0.2
  %v4418 = vsel %vm4386, %v4370, %v4402
  %v4419 = vsel %vm4387, %v4371, %v4403
  %v4420 = vsel %vm4388, %v4372, %v4404
  %v4421 = vsel %vm4389, %v4373, %v4405
  %v4422 = vsel %vm4390, %v4374, %v4406
  %v4423 = vsel %vm4391, %v4375, %v4407
  %v4424 = vsel %vm4392, %v4376, %v4408
  %v4425 = vsel %vm4393, %v4377, %v4409
  %v4426 = vsel %vm4394, %v4378, %v4410
  %v4427 = vsel %vm4395, %v4379, %v4411
  %v4428 = vsel %vm4396, %v4380, %v4412
  %v4429 = vsel %vm4397, %v4381, %v4413
  %v4430 = vsel %vm4398, %v4382, %v4414
  %v4431 = vsel %vm4399, %v4383, %v4415
  %v4432 = vsel %vm4400, %v4384, %v4416
  %v4433 = vsel %vm4401, %v4385, %v4417
  %v4450 = vrot.slane %v4418, 7
  %v4451 = vrot.slane %v4419, 7
  %v4452 = vrot.slane %v4420, 7
  %v4453 = vrot.slane %v4421, 7
  %v4454 = vrot.slane %v4422, 7
  %v4455 = vrot.slane %v4423, 7
  %v4456 = vrot.slane %v4424, 7
  %v4457 = vrot.slane %v4425, 7
  %v4458 = vrot.slane %v4426, 7
  %v4459 = vrot.slane %v4427, 7
  %v4460 = vrot.slane %v4428, 7
  %v4461 = vrot.slane %v4429, 7
  %v4462 = vrot.slane %v4430, 7
  %v4463 = vrot.slane %v4431, 7
  %v4464 = vrot.slane %v4432, 7
  %v4465 = vrot.slane %v4433, 7
  %v4482 = vsel %vm766, 0.0, %v4450
  %v4483 = vsel %vm766, 0.0, %v4451
  %v4484 = vsel %vm766, 0.0, %v4452
  %v4485 = vsel %vm766, 0.0, %v4453
  %v4486 = vsel %vm766, 0.0, %v4454
  %v4487 = vsel %vm766, 0.0, %v4455
  %v4488 = vsel %vm766, 0.0, %v4456
  %v4489 = vsel %vm766, 0.0, %v4457
  %v4490 = vsel %vm766, 0.0, %v4458
  %v4491 = vsel %vm766, 0.0, %v4459
  %v4492 = vsel %vm766, 0.0, %v4460
  %v4493 = vsel %vm766, 0.0, %v4461
  %v4494 = vsel %vm766, 0.0, %v4462
  %v4495 = vsel %vm766, 0.0, %v4463
  %v4496 = vsel %vm766, 0.0, %v4464
  %v4497 = vsel %vm766, 0.0, %v4465
  %v4498 = vsel %vm766, %v4450, 0.0
  %v4499 = vsel %vm766, %v4451, 0.0
  %v4500 = vsel %vm766, %v4452, 0.0
  %v4501 = vsel %vm766, %v4453, 0.0
  %v4502 = vsel %vm766, %v4454, 0.0
  %v4503 = vsel %vm766, %v4455, 0.0
  %v4504 = vsel %vm766, %v4456, 0.0
  %v4505 = vsel %vm766, %v4457, 0.0
  %v4506 = vsel %vm766, %v4458, 0.0
  %v4507 = vsel %vm766, %v4459, 0.0
  %v4508 = vsel %vm766, %v4460, 0.0
  %v4509 = vsel %vm766, %v4461, 0.0
  %v4510 = vsel %vm766, %v4462, 0.0
  %v4511 = vsel %vm766, %v4463, 0.0
  %v4512 = vsel %vm766, %v4464, 0.0
  %v4513 = vsel %vm766, %v4465, 0.0
  %v4522 = vrot.slane %v4483, 1
  %v4523 = vrot.slane %v4485, 1
  %v4524 = vrot.slane %v4487, 1
  %v4525 = vrot.slane %v4489, 1
  %v4526 = vrot.slane %v4491, 1
  %v4527 = vrot.slane %v4493, 1
  %v4528 = vrot.slane %v4495, 1
  %v4529 = vrot.slane %v4497, 1
  %v4538 = vrot.slane %v4483, 2
  %v4539 = vrot.slane %v4485, 2
  %v4540 = vrot.slane %v4487, 2
  %v4541 = vrot.slane %v4489, 2
  %v4542 = vrot.slane %v4491, 2
  %v4543 = vrot.slane %v4493, 2
  %v4544 = vrot.slane %v4495, 2
  %v4545 = vrot.slane %v4497, 2
  %v4554 = vrot.slane %v4483, 3
  %v4555 = vrot.slane %v4485, 3
  %v4556 = vrot.slane %v4487, 3
  %v4557 = vrot.slane %v4489, 3
  %v4558 = vrot.slane %v4491, 3
  %v4559 = vrot.slane %v4493, 3
  %v4560 = vrot.slane %v4495, 3
  %v4561 = vrot.slane %v4497, 3
  %v4578 = vrot.slane %v996, 4
  %v4579 = vrot.slane %v4499, 4
  %v4580 = vrot.slane %v4501, 4
  %v4581 = vrot.slane %v4503, 4
  %v4582 = vrot.slane %v4505, 4
  %v4583 = vrot.slane %v4507, 4
  %v4584 = vrot.slane %v4509, 4
  %v4585 = vrot.slane %v4511, 4
  %v4586 = vrot.slane %v4513, 4
  %v4596 = vrot.slane %v996, 5
  %v4597 = vrot.slane %v4499, 5
  %v4598 = vrot.slane %v4501, 5
  %v4599 = vrot.slane %v4503, 5
  %v4600 = vrot.slane %v4505, 5
  %v4601 = vrot.slane %v4507, 5
  %v4602 = vrot.slane %v4509, 5
  %v4603 = vrot.slane %v4511, 5
  %v4604 = vrot.slane %v4513, 5
  %v4614 = vrot.slane %v996, 6
  %v4615 = vrot.slane %v4499, 6
  %v4616 = vrot.slane %v4501, 6
  %v4617 = vrot.slane %v4503, 6
  %v4618 = vrot.slane %v4505, 6
  %v4619 = vrot.slane %v4507, 6
  %v4620 = vrot.slane %v4509, 6
  %v4621 = vrot.slane %v4511, 6
  %v4622 = vrot.slane %v4513, 6
  %v4632 = vrot.slane %v996, 7
  %v4633 = vrot.slane %v4499, 7
  %v4634 = vrot.slane %v4501, 7
  %v4635 = vrot.slane %v4503, 7
  %v4636 = vrot.slane %v4505, 7
  %v4637 = vrot.slane %v4507, 7
  %v4638 = vrot.slane %v4509, 7
  %v4639 = vrot.slane %v4511, 7
  %v4640 = vrot.slane %v4513, 7
  %v4650 = vsel %vm766, %v4483, %v4522
  %v4651 = vsel %vm766, %v4485, %v4523
  %v4652 = vsel %vm766, %v4487, %v4524
  %v4653 = vsel %vm766, %v4489, %v4525
  %v4654 = vsel %vm766, %v4491, %v4526
  %v4655 = vsel %vm766, %v4493, %v4527
  %v4656 = vsel %vm766, %v4495, %v4528
  %v4657 = vsel %vm766, %v4497, %v4529
  %v4658 = vsel %vm1301, %v4650, %v4538
  %v4659 = vsel %vm1301, %v4651, %v4539
  %v4660 = vsel %vm1301, %v4652, %v4540
  %v4661 = vsel %vm1301, %v4653, %v4541
  %v4662 = vsel %vm1301, %v4654, %v4542
  %v4663 = vsel %vm1301, %v4655, %v4543
  %v4664 = vsel %vm1301, %v4656, %v4544
  %v4665 = vsel %vm1301, %v4657, %v4545
  %v4666 = vsel %vm1319, %v4658, %v4554
  %v4667 = vsel %vm1319, %v4659, %v4555
  %v4668 = vsel %vm1319, %v4660, %v4556
  %v4669 = vsel %vm1319, %v4661, %v4557
  %v4670 = vsel %vm1319, %v4662, %v4558
  %v4671 = vsel %vm1319, %v4663, %v4559
  %v4672 = vsel %vm1319, %v4664, %v4560
  %v4673 = vsel %vm1319, %v4665, %v4561
  %v4674 = vsel %vm1337, %v1320, %v4578
  %v4675 = vsel %vm1337, %v4666, %v4579
  %v4676 = vsel %vm1337, %v4667, %v4580
  %v4677 = vsel %vm1337, %v4668, %v4581
  %v4678 = vsel %vm1337, %v4669, %v4582
  %v4679 = vsel %vm1337, %v4670, %v4583
  %v4680 = vsel %vm1337, %v4671, %v4584
  %v4681 = vsel %vm1337, %v4672, %v4585
  %v4682 = vsel %vm1337, %v4673, %v4586
  %v4683 = vsel %vm1355, %v4674, %v4596
  %v4684 = vsel %vm1355, %v4675, %v4597
  %v4685 = vsel %vm1355, %v4676, %v4598
  %v4686 = vsel %vm1355, %v4677, %v4599
  %v4687 = vsel %vm1355, %v4678, %v4600
  %v4688 = vsel %vm1355, %v4679, %v4601
  %v4689 = vsel %vm1355, %v4680, %v4602
  %v4690 = vsel %vm1355, %v4681, %v4603
  %v4691 = vsel %vm1355, %v4682, %v4604
  %v4692 = vsel %vm1373, %v4683, %v4614
  %v4693 = vsel %vm1373, %v4684, %v4615
  %v4694 = vsel %vm1373, %v4685, %v4616
  %v4695 = vsel %vm1373, %v4686, %v4617
  %v4696 = vsel %vm1373, %v4687, %v4618
  %v4697 = vsel %vm1373, %v4688, %v4619
  %v4698 = vsel %vm1373, %v4689, %v4620
  %v4699 = vsel %vm1373, %v4690, %v4621
  %v4700 = vsel %vm1373, %v4691, %v4622
  %v4701 = vsel %vm1391, %v4692, %v4632
  %v4702 = vsel %vm1391, %v4693, %v4633
  %v4703 = vsel %vm1391, %v4694, %v4634
  %v4704 = vsel %vm1391, %v4695, %v4635
  %v4705 = vsel %vm1391, %v4696, %v4636
  %v4706 = vsel %vm1391, %v4697, %v4637
  %v4707 = vsel %vm1391, %v4698, %v4638
  %v4708 = vsel %vm1391, %v4699, %v4639
  %v4709 = vsel %vm1391, %v4700, %v4640
  %v4710 = vrot.slane %v4483, 4
  %v4711 = vrot.slane %v4485, 4
  %v4712 = vrot.slane %v4487, 4
  %v4713 = vrot.slane %v4489, 4
  %v4714 = vrot.slane %v4491, 4
  %v4715 = vrot.slane %v4493, 4
  %v4716 = vrot.slane %v4495, 4
  %v4717 = vrot.slane %v4497, 4
  %v4726 = vrot.slane 0.0, 1
  %v4727 = vsel %vm766, %v4522, %v4538
  %v4728 = vsel %vm766, %v4523, %v4539
  %v4729 = vsel %vm766, %v4524, %v4540
  %v4730 = vsel %vm766, %v4525, %v4541
  %v4731 = vsel %vm766, %v4526, %v4542
  %v4732 = vsel %vm766, %v4527, %v4543
  %v4733 = vsel %vm766, %v4528, %v4544
  %v4734 = vsel %vm766, %v4529, %v4545
  %v4735 = vsel %vm1301, %v4727, %v4554
  %v4736 = vsel %vm1301, %v4728, %v4555
  %v4737 = vsel %vm1301, %v4729, %v4556
  %v4738 = vsel %vm1301, %v4730, %v4557
  %v4739 = vsel %vm1301, %v4731, %v4558
  %v4740 = vsel %vm1301, %v4732, %v4559
  %v4741 = vsel %vm1301, %v4733, %v4560
  %v4742 = vsel %vm1301, %v4734, %v4561
  %v4743 = vsel %vm1319, %v4735, %v4710
  %v4744 = vsel %vm1319, %v4736, %v4711
  %v4745 = vsel %vm1319, %v4737, %v4712
  %v4746 = vsel %vm1319, %v4738, %v4713
  %v4747 = vsel %vm1319, %v4739, %v4714
  %v4748 = vsel %vm1319, %v4740, %v4715
  %v4749 = vsel %vm1319, %v4741, %v4716
  %v4750 = vsel %vm1319, %v4742, %v4717
  %v4751 = vsel %vm1337, %v1511, %v4596
  %v4752 = vsel %vm1337, %v4743, %v4597
  %v4753 = vsel %vm1337, %v4744, %v4598
  %v4754 = vsel %vm1337, %v4745, %v4599
  %v4755 = vsel %vm1337, %v4746, %v4600
  %v4756 = vsel %vm1337, %v4747, %v4601
  %v4757 = vsel %vm1337, %v4748, %v4602
  %v4758 = vsel %vm1337, %v4749, %v4603
  %v4759 = vsel %vm1337, %v4750, %v4604
  %v4760 = vsel %vm1355, %v4751, %v4614
  %v4761 = vsel %vm1355, %v4752, %v4615
  %v4762 = vsel %vm1355, %v4753, %v4616
  %v4763 = vsel %vm1355, %v4754, %v4617
  %v4764 = vsel %vm1355, %v4755, %v4618
  %v4765 = vsel %vm1355, %v4756, %v4619
  %v4766 = vsel %vm1355, %v4757, %v4620
  %v4767 = vsel %vm1355, %v4758, %v4621
  %v4768 = vsel %vm1355, %v4759, %v4622
  %v4769 = vsel %vm1373, %v4760, %v4632
  %v4770 = vsel %vm1373, %v4761, %v4633
  %v4771 = vsel %vm1373, %v4762, %v4634
  %v4772 = vsel %vm1373, %v4763, %v4635
  %v4773 = vsel %vm1373, %v4764, %v4636
  %v4774 = vsel %vm1373, %v4765, %v4637
  %v4775 = vsel %vm1373, %v4766, %v4638
  %v4776 = vsel %vm1373, %v4767, %v4639
  %v4777 = vsel %vm1373, %v4768, %v4640
  %v4778 = vsel %vm1391, %v4769, %v996
  %v4779 = vsel %vm1391, %v4770, %v4499
  %v4780 = vsel %vm1391, %v4771, %v4501
  %v4781 = vsel %vm1391, %v4772, %v4503
  %v4782 = vsel %vm1391, %v4773, %v4505
  %v4783 = vsel %vm1391, %v4774, %v4507
  %v4784 = vsel %vm1391, %v4775, %v4509
  %v4785 = vsel %vm1391, %v4776, %v4511
  %v4786 = vsel %vm1391, %v4777, %v4513
  %v4795 = vrot.slane %v4482, 1
  %v4796 = vrot.slane %v4484, 1
  %v4797 = vrot.slane %v4486, 1
  %v4798 = vrot.slane %v4488, 1
  %v4799 = vrot.slane %v4490, 1
  %v4800 = vrot.slane %v4492, 1
  %v4801 = vrot.slane %v4494, 1
  %v4802 = vrot.slane %v4496, 1
  %v4811 = vrot.slane %v4482, 2
  %v4812 = vrot.slane %v4484, 2
  %v4813 = vrot.slane %v4486, 2
  %v4814 = vrot.slane %v4488, 2
  %v4815 = vrot.slane %v4490, 2
  %v4816 = vrot.slane %v4492, 2
  %v4817 = vrot.slane %v4494, 2
  %v4818 = vrot.slane %v4496, 2
  %v4827 = vrot.slane %v4482, 3
  %v4828 = vrot.slane %v4484, 3
  %v4829 = vrot.slane %v4486, 3
  %v4830 = vrot.slane %v4488, 3
  %v4831 = vrot.slane %v4490, 3
  %v4832 = vrot.slane %v4492, 3
  %v4833 = vrot.slane %v4494, 3
  %v4834 = vrot.slane %v4496, 3
  %v4851 = vrot.slane %v4498, 4
  %v4852 = vrot.slane %v4500, 4
  %v4853 = vrot.slane %v4502, 4
  %v4854 = vrot.slane %v4504, 4
  %v4855 = vrot.slane %v4506, 4
  %v4856 = vrot.slane %v4508, 4
  %v4857 = vrot.slane %v4510, 4
  %v4858 = vrot.slane %v4512, 4
  %v4867 = vrot.slane %v4498, 5
  %v4868 = vrot.slane %v4500, 5
  %v4869 = vrot.slane %v4502, 5
  %v4870 = vrot.slane %v4504, 5
  %v4871 = vrot.slane %v4506, 5
  %v4872 = vrot.slane %v4508, 5
  %v4873 = vrot.slane %v4510, 5
  %v4874 = vrot.slane %v4512, 5
  %v4883 = vrot.slane %v4498, 6
  %v4884 = vrot.slane %v4500, 6
  %v4885 = vrot.slane %v4502, 6
  %v4886 = vrot.slane %v4504, 6
  %v4887 = vrot.slane %v4506, 6
  %v4888 = vrot.slane %v4508, 6
  %v4889 = vrot.slane %v4510, 6
  %v4890 = vrot.slane %v4512, 6
  %v4899 = vrot.slane %v4498, 7
  %v4900 = vrot.slane %v4500, 7
  %v4901 = vrot.slane %v4502, 7
  %v4902 = vrot.slane %v4504, 7
  %v4903 = vrot.slane %v4506, 7
  %v4904 = vrot.slane %v4508, 7
  %v4905 = vrot.slane %v4510, 7
  %v4906 = vrot.slane %v4512, 7
  %v4915 = vsel %vm766, %v4482, %v4795
  %v4916 = vsel %vm766, %v4484, %v4796
  %v4917 = vsel %vm766, %v4486, %v4797
  %v4918 = vsel %vm766, %v4488, %v4798
  %v4919 = vsel %vm766, %v4490, %v4799
  %v4920 = vsel %vm766, %v4492, %v4800
  %v4921 = vsel %vm766, %v4494, %v4801
  %v4922 = vsel %vm766, %v4496, %v4802
  %v4923 = vsel %vm1301, %v4915, %v4811
  %v4924 = vsel %vm1301, %v4916, %v4812
  %v4925 = vsel %vm1301, %v4917, %v4813
  %v4926 = vsel %vm1301, %v4918, %v4814
  %v4927 = vsel %vm1301, %v4919, %v4815
  %v4928 = vsel %vm1301, %v4920, %v4816
  %v4929 = vsel %vm1301, %v4921, %v4817
  %v4930 = vsel %vm1301, %v4922, %v4818
  %v4931 = vsel %vm1319, %v4923, %v4827
  %v4932 = vsel %vm1319, %v4924, %v4828
  %v4933 = vsel %vm1319, %v4925, %v4829
  %v4934 = vsel %vm1319, %v4926, %v4830
  %v4935 = vsel %vm1319, %v4927, %v4831
  %v4936 = vsel %vm1319, %v4928, %v4832
  %v4937 = vsel %vm1319, %v4929, %v4833
  %v4938 = vsel %vm1319, %v4930, %v4834
  %v4939 = vsel %vm1337, %v4931, %v4851
  %v4940 = vsel %vm1337, %v4932, %v4852
  %v4941 = vsel %vm1337, %v4933, %v4853
  %v4942 = vsel %vm1337, %v4934, %v4854
  %v4943 = vsel %vm1337, %v4935, %v4855
  %v4944 = vsel %vm1337, %v4936, %v4856
  %v4945 = vsel %vm1337, %v4937, %v4857
  %v4946 = vsel %vm1337, %v4938, %v4858
  %v4947 = vsel %vm1355, %v4939, %v4867
  %v4948 = vsel %vm1355, %v4940, %v4868
  %v4949 = vsel %vm1355, %v4941, %v4869
  %v4950 = vsel %vm1355, %v4942, %v4870
  %v4951 = vsel %vm1355, %v4943, %v4871
  %v4952 = vsel %vm1355, %v4944, %v4872
  %v4953 = vsel %vm1355, %v4945, %v4873
  %v4954 = vsel %vm1355, %v4946, %v4874
  %v4955 = vsel %vm1373, %v4947, %v4883
  %v4956 = vsel %vm1373, %v4948, %v4884
  %v4957 = vsel %vm1373, %v4949, %v4885
  %v4958 = vsel %vm1373, %v4950, %v4886
  %v4959 = vsel %vm1373, %v4951, %v4887
  %v4960 = vsel %vm1373, %v4952, %v4888
  %v4961 = vsel %vm1373, %v4953, %v4889
  %v4962 = vsel %vm1373, %v4954, %v4890
  %v4963 = vsel %vm1391, %v4955, %v4899
  %v4964 = vsel %vm1391, %v4956, %v4900
  %v4965 = vsel %vm1391, %v4957, %v4901
  %v4966 = vsel %vm1391, %v4958, %v4902
  %v4967 = vsel %vm1391, %v4959, %v4903
  %v4968 = vsel %vm1391, %v4960, %v4904
  %v4969 = vsel %vm1391, %v4961, %v4905
  %v4970 = vsel %vm1391, %v4962, %v4906
  %v4971 = vrot.slane %v4482, 4
  %v4972 = vrot.slane %v4484, 4
  %v4973 = vrot.slane %v4486, 4
  %v4974 = vrot.slane %v4488, 4
  %v4975 = vrot.slane %v4490, 4
  %v4976 = vrot.slane %v4492, 4
  %v4977 = vrot.slane %v4494, 4
  %v4978 = vrot.slane %v4496, 4
  %v4987 = vsel %vm766, %v4795, %v4811
  %v4988 = vsel %vm766, %v4796, %v4812
  %v4989 = vsel %vm766, %v4797, %v4813
  %v4990 = vsel %vm766, %v4798, %v4814
  %v4991 = vsel %vm766, %v4799, %v4815
  %v4992 = vsel %vm766, %v4800, %v4816
  %v4993 = vsel %vm766, %v4801, %v4817
  %v4994 = vsel %vm766, %v4802, %v4818
  %v4995 = vsel %vm1301, %v4987, %v4827
  %v4996 = vsel %vm1301, %v4988, %v4828
  %v4997 = vsel %vm1301, %v4989, %v4829
  %v4998 = vsel %vm1301, %v4990, %v4830
  %v4999 = vsel %vm1301, %v4991, %v4831
  %v5000 = vsel %vm1301, %v4992, %v4832
  %v5001 = vsel %vm1301, %v4993, %v4833
  %v5002 = vsel %vm1301, %v4994, %v4834
  %v5003 = vsel %vm1319, %v4995, %v4971
  %v5004 = vsel %vm1319, %v4996, %v4972
  %v5005 = vsel %vm1319, %v4997, %v4973
  %v5006 = vsel %vm1319, %v4998, %v4974
  %v5007 = vsel %vm1319, %v4999, %v4975
  %v5008 = vsel %vm1319, %v5000, %v4976
  %v5009 = vsel %vm1319, %v5001, %v4977
  %v5010 = vsel %vm1319, %v5002, %v4978
  %v5011 = vsel %vm1337, %v5003, %v4867
  %v5012 = vsel %vm1337, %v5004, %v4868
  %v5013 = vsel %vm1337, %v5005, %v4869
  %v5014 = vsel %vm1337, %v5006, %v4870
  %v5015 = vsel %vm1337, %v5007, %v4871
  %v5016 = vsel %vm1337, %v5008, %v4872
  %v5017 = vsel %vm1337, %v5009, %v4873
  %v5018 = vsel %vm1337, %v5010, %v4874
  %v5019 = vsel %vm1355, %v5011, %v4883
  %v5020 = vsel %vm1355, %v5012, %v4884
  %v5021 = vsel %vm1355, %v5013, %v4885
  %v5022 = vsel %vm1355, %v5014, %v4886
  %v5023 = vsel %vm1355, %v5015, %v4887
  %v5024 = vsel %vm1355, %v5016, %v4888
  %v5025 = vsel %vm1355, %v5017, %v4889
  %v5026 = vsel %vm1355, %v5018, %v4890
  %v5027 = vsel %vm1373, %v5019, %v4899
  %v5028 = vsel %vm1373, %v5020, %v4900
  %v5029 = vsel %vm1373, %v5021, %v4901
  %v5030 = vsel %vm1373, %v5022, %v4902
  %v5031 = vsel %vm1373, %v5023, %v4903
  %v5032 = vsel %vm1373, %v5024, %v4904
  %v5033 = vsel %vm1373, %v5025, %v4905
  %v5034 = vsel %vm1373, %v5026, %v4906
  %v5035 = vsel %vm1391, %v5027, %v4498
  %v5036 = vsel %vm1391, %v5028, %v4500
  %v5037 = vsel %vm1391, %v5029, %v4502
  %v5038 = vsel %vm1391, %v5030, %v4504
  %v5039 = vsel %vm1391, %v5031, %v4506
  %v5040 = vsel %vm1391, %v5032, %v4508
  %v5041 = vsel %vm1391, %v5033, %v4510
  %v5042 = vsel %vm1391, %v5034, %v4512
  %v5043 = vld [vmem:[%s5] sm:$0xff]
  %v5044 = vld [vmem:[%s5 + $0x8] sm:$0xff]
  %s5045 = scalar_lea.vmem %s5, 16
  %v5046 = vld [vmem:[%s5045] sm:$0xff]
  %v5047 = vld [vmem:[%s5045 + $0x8] sm:$0xff]
  %v5049 = vsel %vm107, %v4778, 0
  %v5052 = vsel %vm107, %v4779, 0
  %v5055 = vsel %vm107, %v4780, 0
  %v5058 = vsel %vm107, %v4781, 0
  %v5061 = vsel %vm107, %v4783, 0
  %v5064 = vsel %vm107, %v4784, 0
  %v5067 = vsel %vm107, %v4785, 0
  %5069 = vmatpush.msra.mxu0 0.0
  %5070 = vmatpush.msra.mxu0 0.0
  %5071 = vmatpush.msra.mxu0 0.0
  %5072 = vmatpush.msra.mxu0 0.0
  %5073 = vmatpush.msra.mxu0 0.0
  %5074 = vmatpush.msra.mxu0 0.0
  %5075 = vmatpush.msra.mxu0 0.0
  %5076 = vmatpush.msra.mxu0 0.0
  %5077 = vmatpush.msra.mxu0 0.0
  %5078 = vmatpush.msra.mxu0 0.0
  %5079 = vmatpush.msra.mxu0 0.0
  %5080 = vmatpush.msra.mxu0 0.0
  %5081 = vmatpush.msra.mxu0 0.0
  %5082 = vmatpush.msra.mxu0 0.0
  %5083 = vmatpush.msra.mxu0 %v5047
  %5084 = vmatpush.msra.mxu0 %v5046
  %5085 = vmatmul.f32.gmra.mxu0 %v5049
  %v5086 = vpop.f32.mrf.mxu0
  %v5087 = vadd.f32 0.0, %v5086
  %5088 = vmatmul.f32.gmra.mxu0 %v5052
  %v5089 = vpop.f32.mrf.mxu0
  %v5090 = vadd.f32 0.0, %v5089
  %5091 = vmatmul.f32.gmra.mxu0 %v5055
  %v5092 = vpop.f32.mrf.mxu0
  %v5093 = vadd.f32 0.0, %v5092
  %5094 = vmatmul.f32.gmra.mxu0 %v5058
  %v5095 = vpop.f32.mrf.mxu0
  %v5096 = vadd.f32 0.0, %v5095
  %5097 = vmatmul.f32.gmra.mxu0 %v5049
  %v5098 = vpop.f32.mrf.mxu0
  %v5099 = vadd.f32 0.0, %v5098
  %5100 = vmatmul.f32.gmra.mxu0 %v5061
  %v5101 = vpop.f32.mrf.mxu0
  %v5102 = vadd.f32 0.0, %v5101
  %5103 = vmatmul.f32.gmra.mxu0 %v5064
  %v5104 = vpop.f32.mrf.mxu0
  %v5105 = vadd.f32 0.0, %v5104
  %5106 = vmatmul.f32.gmra.mxu0 %v5067
  %v5107 = vpop.f32.mrf.mxu0
  %v5108 = vadd.f32 0.0, %v5107
  %5109 = vdwg.mxu0
  %v5111 = vsel %vm107, %v4701, 0
  %v5114 = vsel %vm107, %v4702, 0
  %v5117 = vsel %vm107, %v4703, 0
  %v5120 = vsel %vm107, %v4704, 0
  %v5123 = vsel %vm107, %v4706, 0
  %v5126 = vsel %vm107, %v4707, 0
  %v5129 = vsel %vm107, %v4708, 0
  %5131 = vmatpush.msra.mxu0 0.0
  %5132 = vmatpush.msra.mxu0 0.0
  %5133 = vmatpush.msra.mxu0 0.0
  %5134 = vmatpush.msra.mxu0 0.0
  %5135 = vmatpush.msra.mxu0 0.0
  %5136 = vmatpush.msra.mxu0 0.0
  %5137 = vmatpush.msra.mxu0 0.0
  %5138 = vmatpush.msra.mxu0 0.0
  %5139 = vmatpush.msra.mxu0 0.0
  %5140 = vmatpush.msra.mxu0 0.0
  %5141 = vmatpush.msra.mxu0 0.0
  %5142 = vmatpush.msra.mxu0 0.0
  %5143 = vmatpush.msra.mxu0 0.0
  %5144 = vmatpush.msra.mxu0 0.0
  %5145 = vmatpush.msra.mxu0 %v5044
  %5146 = vmatpush.msra.mxu0 %v5043
  %5147 = vmatmul.f32.gmra.mxu0 %v5111
  %v5148 = vpop.f32.mrf.mxu0
  %v5149 = vadd.f32 %v5087, %v5148
  %5150 = vmatmul.f32.gmra.mxu0 %v5114
  %v5151 = vpop.f32.mrf.mxu0
  %v5152 = vadd.f32 %v5090, %v5151
  %5153 = vmatmul.f32.gmra.mxu0 %v5117
  %v5154 = vpop.f32.mrf.mxu0
  %v5155 = vadd.f32 %v5093, %v5154
  %5156 = vmatmul.f32.gmra.mxu0 %v5120
  %v5157 = vpop.f32.mrf.mxu0
  %v5158 = vadd.f32 %v5096, %v5157
  %5159 = vmatmul.f32.gmra.mxu0 %v5111
  %v5160 = vpop.f32.mrf.mxu0
  %v5161 = vadd.f32 %v5099, %v5160
  %5162 = vmatmul.f32.gmra.mxu0 %v5123
  %v5163 = vpop.f32.mrf.mxu0
  %v5164 = vadd.f32 %v5102, %v5163
  %5165 = vmatmul.f32.gmra.mxu0 %v5126
  %v5166 = vpop.f32.mrf.mxu0
  %v5167 = vadd.f32 %v5105, %v5166
  %5168 = vmatmul.f32.gmra.mxu0 %v5129
  %v5169 = vpop.f32.mrf.mxu0
  %v5170 = vadd.f32 %v5108, %v5169
  %5171 = vdwg.mxu0
  %v5172 = vrot.slane %v4701, 1
  %v5173 = vsel %vm1391, %v5172, %v4726
  %v5174 = vrot.slane %v4702, 1
  %v5175 = vsel %vm1391, %v5174, %v4726
  %v5176 = vrot.slane %v4703, 1
  %v5177 = vsel %vm1391, %v5176, %v4726
  %v5178 = vrot.slane %v4704, 1
  %v5179 = vsel %vm1391, %v5178, %v4726
  %v5180 = vrot.slane %v4706, 1
  %v5181 = vsel %vm1391, %v5180, %v4726
  %v5182 = vrot.slane %v4707, 1
  %v5183 = vsel %vm1391, %v5182, %v4726
  %v5184 = vrot.slane %v4708, 1
  %v5185 = vsel %vm1391, %v5184, %v4726
  %s5186 = scalar_lea.vmem %s5, 32
  %v5187 = vld [vmem:[%s5186] sm:$0xff]
  %v5188 = vld [vmem:[%s5186 + $0x8] sm:$0xff]
  %v5189 = vsel %vm107, %v5173, 0
  %v5191 = vsel %vm107, %v5175, 0
  %v5193 = vsel %vm107, %v5177, 0
  %v5195 = vsel %vm107, %v5179, 0
  %v5197 = vsel %vm107, %v5181, 0
  %v5199 = vsel %vm107, %v5183, 0
  %v5201 = vsel %vm107, %v5185, 0
  %5203 = vmatpush.msra.mxu0 0.0
  %5204 = vmatpush.msra.mxu0 0.0
  %5205 = vmatpush.msra.mxu0 0.0
  %5206 = vmatpush.msra.mxu0 0.0
  %5207 = vmatpush.msra.mxu0 0.0
  %5208 = vmatpush.msra.mxu0 0.0
  %5209 = vmatpush.msra.mxu0 0.0
  %5210 = vmatpush.msra.mxu0 0.0
  %5211 = vmatpush.msra.mxu0 0.0
  %5212 = vmatpush.msra.mxu0 0.0
  %5213 = vmatpush.msra.mxu0 0.0
  %5214 = vmatpush.msra.mxu0 0.0
  %5215 = vmatpush.msra.mxu0 0.0
  %5216 = vmatpush.msra.mxu0 0.0
  %5217 = vmatpush.msra.mxu0 %v5188
  %5218 = vmatpush.msra.mxu0 %v5187
  %5219 = vmatmul.f32.gmra.mxu0 %v5189
  %v5220 = vpop.f32.mrf.mxu0
  %v5221 = vadd.f32 0.0, %v5220
  %5222 = vmatmul.f32.gmra.mxu0 %v5191
  %v5223 = vpop.f32.mrf.mxu0
  %v5224 = vadd.f32 0.0, %v5223
  %5225 = vmatmul.f32.gmra.mxu0 %v5193
  %v5226 = vpop.f32.mrf.mxu0
  %v5227 = vadd.f32 0.0, %v5226
  %5228 = vmatmul.f32.gmra.mxu0 %v5195
  %v5229 = vpop.f32.mrf.mxu0
  %v5230 = vadd.f32 0.0, %v5229
  %5231 = vmatmul.f32.gmra.mxu0 %v5189
  %v5232 = vpop.f32.mrf.mxu0
  %v5233 = vadd.f32 0.0, %v5232
  %5234 = vmatmul.f32.gmra.mxu0 %v5197
  %v5235 = vpop.f32.mrf.mxu0
  %v5236 = vadd.f32 0.0, %v5235
  %5237 = vmatmul.f32.gmra.mxu0 %v5199
  %v5238 = vpop.f32.mrf.mxu0
  %v5239 = vadd.f32 0.0, %v5238
  %5240 = vmatmul.f32.gmra.mxu0 %v5201
  %v5241 = vpop.f32.mrf.mxu0
  %v5242 = vadd.f32 0.0, %v5241
  %5243 = vdwg.mxu0
  %v5244 = vadd.f32 %v5149, %v5221
  %v5245 = vadd.f32 %v5152, %v5224
  %v5246 = vadd.f32 %v5155, %v5227
  %v5247 = vadd.f32 %v5158, %v5230
  %v5248 = vadd.f32 %v5161, %v5233
  %v5249 = vadd.f32 %v5164, %v5236
  %v5250 = vadd.f32 %v5167, %v5239
  %v5251 = vadd.f32 %v5170, %v5242
  %v5252 = vrot.slane %v4778, 1
  %v5253 = vrot.slane %v4726, 1
  %v5254 = vsel %vm1391, %v5252, %v5253
  %v5255 = vrot.slane %v4779, 1
  %v5256 = vsel %vm1391, %v5255, %v5253
  %v5257 = vrot.slane %v4780, 1
  %v5258 = vsel %vm1391, %v5257, %v5253
  %v5259 = vrot.slane %v4781, 1
  %v5260 = vsel %vm1391, %v5259, %v5253
  %v5261 = vrot.slane %v4783, 1
  %v5262 = vsel %vm1391, %v5261, %v5253
  %v5263 = vrot.slane %v4784, 1
  %v5264 = vsel %vm1391, %v5263, %v5253
  %v5265 = vrot.slane %v4785, 1
  %v5266 = vsel %vm1391, %v5265, %v5253
  %s5267 = scalar_lea.vmem %s5, 48
  %v5268 = vld [vmem:[%s5267] sm:$0xff]
  %v5269 = vld [vmem:[%s5267 + $0x8] sm:$0xff]
  %v5270 = vsel %vm107, %v5254, 0
  %v5272 = vsel %vm107, %v5256, 0
  %v5274 = vsel %vm107, %v5258, 0
  %v5276 = vsel %vm107, %v5260, 0
  %v5278 = vsel %vm107, %v5262, 0
  %v5280 = vsel %vm107, %v5264, 0
  %v5282 = vsel %vm107, %v5266, 0
  %5284 = vmatpush.msra.mxu0 0.0
  %5285 = vmatpush.msra.mxu0 0.0
  %5286 = vmatpush.msra.mxu0 0.0
  %5287 = vmatpush.msra.mxu0 0.0
  %5288 = vmatpush.msra.mxu0 0.0
  %5289 = vmatpush.msra.mxu0 0.0
  %5290 = vmatpush.msra.mxu0 0.0
  %5291 = vmatpush.msra.mxu0 0.0
  %5292 = vmatpush.msra.mxu0 0.0
  %5293 = vmatpush.msra.mxu0 0.0
  %5294 = vmatpush.msra.mxu0 0.0
  %5295 = vmatpush.msra.mxu0 0.0
  %5296 = vmatpush.msra.mxu0 0.0
  %5297 = vmatpush.msra.mxu0 0.0
  %5298 = vmatpush.msra.mxu0 %v5269
  %5299 = vmatpush.msra.mxu0 %v5268
  %5300 = vmatmul.f32.gmra.mxu0 %v5270
  %v5301 = vpop.f32.mrf.mxu0
  %v5302 = vadd.f32 0.0, %v5301
  %5303 = vmatmul.f32.gmra.mxu0 %v5272
  %v5304 = vpop.f32.mrf.mxu0
  %v5305 = vadd.f32 0.0, %v5304
  %5306 = vmatmul.f32.gmra.mxu0 %v5274
  %v5307 = vpop.f32.mrf.mxu0
  %v5308 = vadd.f32 0.0, %v5307
  %5309 = vmatmul.f32.gmra.mxu0 %v5276
  %v5310 = vpop.f32.mrf.mxu0
  %v5311 = vadd.f32 0.0, %v5310
  %5312 = vmatmul.f32.gmra.mxu0 %v5270
  %v5313 = vpop.f32.mrf.mxu0
  %v5314 = vadd.f32 0.0, %v5313
  %5315 = vmatmul.f32.gmra.mxu0 %v5278
  %v5316 = vpop.f32.mrf.mxu0
  %v5317 = vadd.f32 0.0, %v5316
  %5318 = vmatmul.f32.gmra.mxu0 %v5280
  %v5319 = vpop.f32.mrf.mxu0
  %v5320 = vadd.f32 0.0, %v5319
  %5321 = vmatmul.f32.gmra.mxu0 %v5282
  %v5322 = vpop.f32.mrf.mxu0
  %v5323 = vadd.f32 0.0, %v5322
  %5324 = vdwg.mxu0
  %v5325 = vadd.f32 %v5244, %v5302
  %v5326 = vadd.f32 %v5245, %v5305
  %v5327 = vadd.f32 %v5246, %v5308
  %v5328 = vadd.f32 %v5247, %v5311
  %v5329 = vadd.f32 %v5248, %v5314
  %v5330 = vadd.f32 %v5249, %v5317
  %v5331 = vadd.f32 %v5250, %v5320
  %v5332 = vadd.f32 %v5251, %v5323
  %s5333 = scalar_lea.vmem %s5, 64
  %v5334 = vld [vmem:[%s5333] sm:$0xff]
  %v5335 = vld [vmem:[%s5333 + $0x8] sm:$0xff]
  %v5337 = vsel %vm107, %v4963, 0
  %v5340 = vsel %vm107, %v4964, 0
  %v5343 = vsel %vm107, %v4965, 0
  %v5346 = vsel %vm107, %v4966, 0
  %v5349 = vsel %vm107, %v4967, 0
  %v5352 = vsel %vm107, %v4968, 0
  %v5355 = vsel %vm107, %v4969, 0
  %v5358 = vsel %vm107, %v4970, 0
  %5360 = vmatpush.msra.mxu0 0.0
  %5361 = vmatpush.msra.mxu0 0.0
  %5362 = vmatpush.msra.mxu0 0.0
  %5363 = vmatpush.msra.mxu0 0.0
  %5364 = vmatpush.msra.mxu0 0.0
  %5365 = vmatpush.msra.mxu0 0.0
  %5366 = vmatpush.msra.mxu0 0.0
  %5367 = vmatpush.msra.mxu0 0.0
  %5368 = vmatpush.msra.mxu0 0.0
  %5369 = vmatpush.msra.mxu0 0.0
  %5370 = vmatpush.msra.mxu0 0.0
  %5371 = vmatpush.msra.mxu0 0.0
  %5372 = vmatpush.msra.mxu0 0.0
  %5373 = vmatpush.msra.mxu0 0.0
  %5374 = vmatpush.msra.mxu0 %v5335
  %5375 = vmatpush.msra.mxu0 %v5334
  %5376 = vmatmul.f32.gmra.mxu0 %v5337
  %v5377 = vpop.f32.mrf.mxu0
  %v5378 = vadd.f32 0.0, %v5377
  %5379 = vmatmul.f32.gmra.mxu0 %v5340
  %v5380 = vpop.f32.mrf.mxu0
  %v5381 = vadd.f32 0.0, %v5380
  %5382 = vmatmul.f32.gmra.mxu0 %v5343
  %v5383 = vpop.f32.mrf.mxu0
  %v5384 = vadd.f32 0.0, %v5383
  %5385 = vmatmul.f32.gmra.mxu0 %v5346
  %v5386 = vpop.f32.mrf.mxu0
  %v5387 = vadd.f32 0.0, %v5386
  %5388 = vmatmul.f32.gmra.mxu0 %v5349
  %v5389 = vpop.f32.mrf.mxu0
  %v5390 = vadd.f32 0.0, %v5389
  %5391 = vmatmul.f32.gmra.mxu0 %v5352
  %v5392 = vpop.f32.mrf.mxu0
  %v5393 = vadd.f32 0.0, %v5392
  %5394 = vmatmul.f32.gmra.mxu0 %v5355
  %v5395 = vpop.f32.mrf.mxu0
  %v5396 = vadd.f32 0.0, %v5395
  %5397 = vmatmul.f32.gmra.mxu0 %v5358
  %v5398 = vpop.f32.mrf.mxu0
  %v5399 = vadd.f32 0.0, %v5398
  %5400 = vdwg.mxu0
  %v5401 = vadd.f32 %v5325, %v5378
  %v5402 = vadd.f32 %v5326, %v5381
  %v5403 = vadd.f32 %v5327, %v5384
  %v5404 = vadd.f32 %v5328, %v5387
  %v5405 = vadd.f32 %v5329, %v5390
  %v5406 = vadd.f32 %v5330, %v5393
  %v5407 = vadd.f32 %v5331, %v5396
  %v5408 = vadd.f32 %v5332, %v5399
  %s5409 = scalar_lea.vmem %s5, 80
  %v5410 = vld [vmem:[%s5409] sm:$0xff]
  %v5411 = vld [vmem:[%s5409 + $0x8] sm:$0xff]
  %v5413 = vsel %vm107, %v5035, 0
  %v5416 = vsel %vm107, %v5036, 0
  %v5419 = vsel %vm107, %v5037, 0
  %v5422 = vsel %vm107, %v5038, 0
  %v5425 = vsel %vm107, %v5039, 0
  %v5428 = vsel %vm107, %v5040, 0
  %v5431 = vsel %vm107, %v5041, 0
  %v5434 = vsel %vm107, %v5042, 0
  %5436 = vmatpush.msra.mxu0 0.0
  %5437 = vmatpush.msra.mxu0 0.0
  %5438 = vmatpush.msra.mxu0 0.0
  %5439 = vmatpush.msra.mxu0 0.0
  %5440 = vmatpush.msra.mxu0 0.0
  %5441 = vmatpush.msra.mxu0 0.0
  %5442 = vmatpush.msra.mxu0 0.0
  %5443 = vmatpush.msra.mxu0 0.0
  %5444 = vmatpush.msra.mxu0 0.0
  %5445 = vmatpush.msra.mxu0 0.0
  %5446 = vmatpush.msra.mxu0 0.0
  %5447 = vmatpush.msra.mxu0 0.0
  %5448 = vmatpush.msra.mxu0 0.0
  %5449 = vmatpush.msra.mxu0 0.0
  %5450 = vmatpush.msra.mxu0 %v5411
  %5451 = vmatpush.msra.mxu0 %v5410
  %5452 = vmatmul.f32.gmra.mxu0 %v5413
  %v5453 = vpop.f32.mrf.mxu0
  %v5454 = vadd.f32 0.0, %v5453
  %5455 = vmatmul.f32.gmra.mxu0 %v5416
  %v5456 = vpop.f32.mrf.mxu0
  %v5457 = vadd.f32 0.0, %v5456
  %5458 = vmatmul.f32.gmra.mxu0 %v5419
  %v5459 = vpop.f32.mrf.mxu0
  %v5460 = vadd.f32 0.0, %v5459
  %5461 = vmatmul.f32.gmra.mxu0 %v5422
  %v5462 = vpop.f32.mrf.mxu0
  %v5463 = vadd.f32 0.0, %v5462
  %5464 = vmatmul.f32.gmra.mxu0 %v5425
  %v5465 = vpop.f32.mrf.mxu0
  %v5466 = vadd.f32 0.0, %v5465
  %5467 = vmatmul.f32.gmra.mxu0 %v5428
  %v5468 = vpop.f32.mrf.mxu0
  %v5469 = vadd.f32 0.0, %v5468
  %5470 = vmatmul.f32.gmra.mxu0 %v5431
  %v5471 = vpop.f32.mrf.mxu0
  %v5472 = vadd.f32 0.0, %v5471
  %5473 = vmatmul.f32.gmra.mxu0 %v5434
  %v5474 = vpop.f32.mrf.mxu0
  %v5475 = vadd.f32 0.0, %v5474
  %5476 = vdwg.mxu0
  %v5477 = vadd.f32 %v5401, %v5454
  %v5478 = vadd.f32 %v5402, %v5457
  %v5479 = vadd.f32 %v5403, %v5460
  %v5480 = vadd.f32 %v5404, %v5463
  %v5481 = vadd.f32 %v5405, %v5466
  %v5482 = vadd.f32 %v5406, %v5469
  %v5483 = vadd.f32 %v5407, %v5472
  %v5484 = vadd.f32 %v5408, %v5475
  %v5485 = vrot.slane %v4963, 1
  %v5486 = vsel %vm1391, %v5485, %v4726
  %v5487 = vrot.slane %v4964, 1
  %v5488 = vsel %vm1391, %v5487, %v4726
  %v5489 = vrot.slane %v4965, 1
  %v5490 = vsel %vm1391, %v5489, %v4726
  %v5491 = vrot.slane %v4966, 1
  %v5492 = vsel %vm1391, %v5491, %v4726
  %v5493 = vrot.slane %v4967, 1
  %v5494 = vsel %vm1391, %v5493, %v4726
  %v5495 = vrot.slane %v4968, 1
  %v5496 = vsel %vm1391, %v5495, %v4726
  %v5497 = vrot.slane %v4969, 1
  %v5498 = vsel %vm1391, %v5497, %v4726
  %v5499 = vrot.slane %v4970, 1
  %v5500 = vsel %vm1391, %v5499, %v4726
  %s5501 = scalar_lea.vmem %s5, 96
  %v5502 = vld [vmem:[%s5501] sm:$0xff]
  %v5503 = vld [vmem:[%s5501 + $0x8] sm:$0xff]
  %v5504 = vsel %vm107, %v5486, 0
  %v5506 = vsel %vm107, %v5488, 0
  %v5508 = vsel %vm107, %v5490, 0
  %v5510 = vsel %vm107, %v5492, 0
  %v5512 = vsel %vm107, %v5494, 0
  %v5514 = vsel %vm107, %v5496, 0
  %v5516 = vsel %vm107, %v5498, 0
  %v5518 = vsel %vm107, %v5500, 0
  %5520 = vmatpush.msra.mxu0 0.0
  %5521 = vmatpush.msra.mxu0 0.0
  %5522 = vmatpush.msra.mxu0 0.0
  %5523 = vmatpush.msra.mxu0 0.0
  %5524 = vmatpush.msra.mxu0 0.0
  %5525 = vmatpush.msra.mxu0 0.0
  %5526 = vmatpush.msra.mxu0 0.0
  %5527 = vmatpush.msra.mxu0 0.0
  %5528 = vmatpush.msra.mxu0 0.0
  %5529 = vmatpush.msra.mxu0 0.0
  %5530 = vmatpush.msra.mxu0 0.0
  %5531 = vmatpush.msra.mxu0 0.0
  %5532 = vmatpush.msra.mxu0 0.0
  %5533 = vmatpush.msra.mxu0 0.0
  %5534 = vmatpush.msra.mxu0 %v5503
  %5535 = vmatpush.msra.mxu0 %v5502
  %5536 = vmatmul.f32.gmra.mxu0 %v5504
  %v5537 = vpop.f32.mrf.mxu0
  %v5538 = vadd.f32 0.0, %v5537
  %5539 = vmatmul.f32.gmra.mxu0 %v5506
  %v5540 = vpop.f32.mrf.mxu0
  %v5541 = vadd.f32 0.0, %v5540
  %5542 = vmatmul.f32.gmra.mxu0 %v5508
  %v5543 = vpop.f32.mrf.mxu0
  %v5544 = vadd.f32 0.0, %v5543
  %5545 = vmatmul.f32.gmra.mxu0 %v5510
  %v5546 = vpop.f32.mrf.mxu0
  %v5547 = vadd.f32 0.0, %v5546
  %5548 = vmatmul.f32.gmra.mxu0 %v5512
  %v5549 = vpop.f32.mrf.mxu0
  %v5550 = vadd.f32 0.0, %v5549
  %5551 = vmatmul.f32.gmra.mxu0 %v5514
  %v5552 = vpop.f32.mrf.mxu0
  %v5553 = vadd.f32 0.0, %v5552
  %5554 = vmatmul.f32.gmra.mxu0 %v5516
  %v5555 = vpop.f32.mrf.mxu0
  %v5556 = vadd.f32 0.0, %v5555
  %5557 = vmatmul.f32.gmra.mxu0 %v5518
  %v5558 = vpop.f32.mrf.mxu0
  %v5559 = vadd.f32 0.0, %v5558
  %5560 = vdwg.mxu0
  %v5561 = vadd.f32 %v5477, %v5538
  %v5562 = vadd.f32 %v5478, %v5541
  %v5563 = vadd.f32 %v5479, %v5544
  %v5564 = vadd.f32 %v5480, %v5547
  %v5565 = vadd.f32 %v5481, %v5550
  %v5566 = vadd.f32 %v5482, %v5553
  %v5567 = vadd.f32 %v5483, %v5556
  %v5568 = vadd.f32 %v5484, %v5559
  %v5569 = vrot.slane %v5035, 1
  %v5570 = vsel %vm1391, %v5569, %v5253
  %v5571 = vrot.slane %v5036, 1
  %v5572 = vsel %vm1391, %v5571, %v5253
  %v5573 = vrot.slane %v5037, 1
  %v5574 = vsel %vm1391, %v5573, %v5253
  %v5575 = vrot.slane %v5038, 1
  %v5576 = vsel %vm1391, %v5575, %v5253
  %v5577 = vrot.slane %v5039, 1
  %v5578 = vsel %vm1391, %v5577, %v5253
  %v5579 = vrot.slane %v5040, 1
  %v5580 = vsel %vm1391, %v5579, %v5253
  %v5581 = vrot.slane %v5041, 1
  %v5582 = vsel %vm1391, %v5581, %v5253
  %v5583 = vrot.slane %v5042, 1
  %v5584 = vsel %vm1391, %v5583, %v5253
  %s5585 = scalar_lea.vmem %s5, 112
  %v5586 = vld [vmem:[%s5585] sm:$0xff]
  %v5587 = vld [vmem:[%s5585 + $0x8] sm:$0xff]
  %v5588 = vsel %vm107, %v5570, 0
  %v5590 = vsel %vm107, %v5572, 0
  %v5592 = vsel %vm107, %v5574, 0
  %v5594 = vsel %vm107, %v5576, 0
  %v5596 = vsel %vm107, %v5578, 0
  %v5598 = vsel %vm107, %v5580, 0
  %v5600 = vsel %vm107, %v5582, 0
  %v5602 = vsel %vm107, %v5584, 0
  %5604 = vmatpush.msra.mxu0 0.0
  %5605 = vmatpush.msra.mxu0 0.0
  %5606 = vmatpush.msra.mxu0 0.0
  %5607 = vmatpush.msra.mxu0 0.0
  %5608 = vmatpush.msra.mxu0 0.0
  %5609 = vmatpush.msra.mxu0 0.0
  %5610 = vmatpush.msra.mxu0 0.0
  %5611 = vmatpush.msra.mxu0 0.0
  %5612 = vmatpush.msra.mxu0 0.0
  %5613 = vmatpush.msra.mxu0 0.0
  %5614 = vmatpush.msra.mxu0 0.0
  %5615 = vmatpush.msra.mxu0 0.0
  %5616 = vmatpush.msra.mxu0 0.0
  %5617 = vmatpush.msra.mxu0 0.0
  %5618 = vmatpush.msra.mxu0 %v5587
  %5619 = vmatpush.msra.mxu0 %v5586
  %5620 = vmatmul.f32.gmra.mxu0 %v5588
  %v5621 = vpop.f32.mrf.mxu0
  %v5622 = vadd.f32 0.0, %v5621
  %5623 = vmatmul.f32.gmra.mxu0 %v5590
  %v5624 = vpop.f32.mrf.mxu0
  %v5625 = vadd.f32 0.0, %v5624
  %5626 = vmatmul.f32.gmra.mxu0 %v5592
  %v5627 = vpop.f32.mrf.mxu0
  %v5628 = vadd.f32 0.0, %v5627
  %5629 = vmatmul.f32.gmra.mxu0 %v5594
  %v5630 = vpop.f32.mrf.mxu0
  %v5631 = vadd.f32 0.0, %v5630
  %5632 = vmatmul.f32.gmra.mxu0 %v5596
  %v5633 = vpop.f32.mrf.mxu0
  %v5634 = vadd.f32 0.0, %v5633
  %5635 = vmatmul.f32.gmra.mxu0 %v5598
  %v5636 = vpop.f32.mrf.mxu0
  %v5637 = vadd.f32 0.0, %v5636
  %5638 = vmatmul.f32.gmra.mxu0 %v5600
  %v5639 = vpop.f32.mrf.mxu0
  %v5640 = vadd.f32 0.0, %v5639
  %5641 = vmatmul.f32.gmra.mxu0 %v5602
  %v5642 = vpop.f32.mrf.mxu0
  %v5643 = vadd.f32 0.0, %v5642
  %5644 = vdwg.mxu0
  %v5645 = vadd.f32 %v5561, %v5622
  %v5646 = vadd.f32 %v5562, %v5625
  %v5647 = vadd.f32 %v5563, %v5628
  %v5648 = vadd.f32 %v5564, %v5631
  %v5649 = vadd.f32 %v5565, %v5634
  %v5650 = vadd.f32 %v5566, %v5637
  %v5651 = vadd.f32 %v5567, %v5640
  %v5652 = vadd.f32 %v5568, %v5643
  %s5653 = scalar_lea.vmem %s5, 128
  %v5654 = vld [vmem:[%s5653] sm:$0xff]
  %v5655 = vld [vmem:[%s5653 + $0x8] sm:$0xff]
  %v5657 = vsel %vm107, %v4705, 0
  %v5660 = vsel %vm107, %v4709, 0
  %5662 = vmatpush.msra.mxu0 0.0
  %5663 = vmatpush.msra.mxu0 0.0
  %5664 = vmatpush.msra.mxu0 0.0
  %5665 = vmatpush.msra.mxu0 0.0
  %5666 = vmatpush.msra.mxu0 0.0
  %5667 = vmatpush.msra.mxu0 0.0
  %5668 = vmatpush.msra.mxu0 0.0
  %5669 = vmatpush.msra.mxu0 0.0
  %5670 = vmatpush.msra.mxu0 0.0
  %5671 = vmatpush.msra.mxu0 0.0
  %5672 = vmatpush.msra.mxu0 0.0
  %5673 = vmatpush.msra.mxu0 0.0
  %5674 = vmatpush.msra.mxu0 0.0
  %5675 = vmatpush.msra.mxu0 0.0
  %5676 = vmatpush.msra.mxu0 %v5655
  %5677 = vmatpush.msra.mxu0 %v5654
  %5678 = vmatmul.f32.gmra.mxu0 %v5114
  %v5679 = vpop.f32.mrf.mxu0
  %v5680 = vadd.f32 0.0, %v5679
  %5681 = vmatmul.f32.gmra.mxu0 %v5117
  %v5682 = vpop.f32.mrf.mxu0
  %v5683 = vadd.f32 0.0, %v5682
  %5684 = vmatmul.f32.gmra.mxu0 %v5120
  %v5685 = vpop.f32.mrf.mxu0
  %v5686 = vadd.f32 0.0, %v5685
  %5687 = vmatmul.f32.gmra.mxu0 %v5657
  %v5688 = vpop.f32.mrf.mxu0
  %v5689 = vadd.f32 0.0, %v5688
  %5690 = vmatmul.f32.gmra.mxu0 %v5123
  %v5691 = vpop.f32.mrf.mxu0
  %v5692 = vadd.f32 0.0, %v5691
  %5693 = vmatmul.f32.gmra.mxu0 %v5126
  %v5694 = vpop.f32.mrf.mxu0
  %v5695 = vadd.f32 0.0, %v5694
  %5696 = vmatmul.f32.gmra.mxu0 %v5129
  %v5697 = vpop.f32.mrf.mxu0
  %v5698 = vadd.f32 0.0, %v5697
  %5699 = vmatmul.f32.gmra.mxu0 %v5660
  %v5700 = vpop.f32.mrf.mxu0
  %v5701 = vadd.f32 0.0, %v5700
  %5702 = vdwg.mxu0
  %v5703 = vadd.f32 %v5645, %v5680
  %v5704 = vadd.f32 %v5646, %v5683
  %v5705 = vadd.f32 %v5647, %v5686
  %v5706 = vadd.f32 %v5648, %v5689
  %v5707 = vadd.f32 %v5649, %v5692
  %v5708 = vadd.f32 %v5650, %v5695
  %v5709 = vadd.f32 %v5651, %v5698
  %v5710 = vadd.f32 %v5652, %v5701
  %s5711 = scalar_lea.vmem %s5, 144
  %v5712 = vld [vmem:[%s5711] sm:$0xff]
  %v5713 = vld [vmem:[%s5711 + $0x8] sm:$0xff]
  %v5715 = vsel %vm107, %v4782, 0
  %v5718 = vsel %vm107, %v4786, 0
  %5720 = vmatpush.msra.mxu0 0.0
  %5721 = vmatpush.msra.mxu0 0.0
  %5722 = vmatpush.msra.mxu0 0.0
  %5723 = vmatpush.msra.mxu0 0.0
  %5724 = vmatpush.msra.mxu0 0.0
  %5725 = vmatpush.msra.mxu0 0.0
  %5726 = vmatpush.msra.mxu0 0.0
  %5727 = vmatpush.msra.mxu0 0.0
  %5728 = vmatpush.msra.mxu0 0.0
  %5729 = vmatpush.msra.mxu0 0.0
  %5730 = vmatpush.msra.mxu0 0.0
  %5731 = vmatpush.msra.mxu0 0.0
  %5732 = vmatpush.msra.mxu0 0.0
  %5733 = vmatpush.msra.mxu0 0.0
  %5734 = vmatpush.msra.mxu0 %v5713
  %5735 = vmatpush.msra.mxu0 %v5712
  %5736 = vmatmul.f32.gmra.mxu0 %v5052
  %v5737 = vpop.f32.mrf.mxu0
  %v5738 = vadd.f32 0.0, %v5737
  %5739 = vmatmul.f32.gmra.mxu0 %v5055
  %v5740 = vpop.f32.mrf.mxu0
  %v5741 = vadd.f32 0.0, %v5740
  %5742 = vmatmul.f32.gmra.mxu0 %v5058
  %v5743 = vpop.f32.mrf.mxu0
  %v5744 = vadd.f32 0.0, %v5743
  %5745 = vmatmul.f32.gmra.mxu0 %v5715
  %v5746 = vpop.f32.mrf.mxu0
  %v5747 = vadd.f32 0.0, %v5746
  %5748 = vmatmul.f32.gmra.mxu0 %v5061
  %v5749 = vpop.f32.mrf.mxu0
  %v5750 = vadd.f32 0.0, %v5749
  %5751 = vmatmul.f32.gmra.mxu0 %v5064
  %v5752 = vpop.f32.mrf.mxu0
  %v5753 = vadd.f32 0.0, %v5752
  %5754 = vmatmul.f32.gmra.mxu0 %v5067
  %v5755 = vpop.f32.mrf.mxu0
  %v5756 = vadd.f32 0.0, %v5755
  %5757 = vmatmul.f32.gmra.mxu0 %v5718
  %v5758 = vpop.f32.mrf.mxu0
  %v5759 = vadd.f32 0.0, %v5758
  %5760 = vdwg.mxu0
  %v5761 = vadd.f32 %v5703, %v5738
  %v5762 = vadd.f32 %v5704, %v5741
  %v5763 = vadd.f32 %v5705, %v5744
  %v5764 = vadd.f32 %v5706, %v5747
  %v5765 = vadd.f32 %v5707, %v5750
  %v5766 = vadd.f32 %v5708, %v5753
  %v5767 = vadd.f32 %v5709, %v5756
  %v5768 = vadd.f32 %v5710, %v5759
  %v5769 = vrot.slane %v4705, 1
  %v5770 = vsel %vm1391, %v5769, %v4726
  %v5771 = vrot.slane %v4709, 1
  %v5772 = vsel %vm1391, %v5771, %v4726
  %s5773 = scalar_lea.vmem %s5, 160
  %v5774 = vld [vmem:[%s5773] sm:$0xff]
  %v5775 = vld [vmem:[%s5773 + $0x8] sm:$0xff]
  %v5776 = vsel %vm107, %v5770, 0
  %v5778 = vsel %vm107, %v5772, 0
  %5780 = vmatpush.msra.mxu0 0.0
  %5781 = vmatpush.msra.mxu0 0.0
  %5782 = vmatpush.msra.mxu0 0.0
  %5783 = vmatpush.msra.mxu0 0.0
  %5784 = vmatpush.msra.mxu0 0.0
  %5785 = vmatpush.msra.mxu0 0.0
  %5786 = vmatpush.msra.mxu0 0.0
  %5787 = vmatpush.msra.mxu0 0.0
  %5788 = vmatpush.msra.mxu0 0.0
  %5789 = vmatpush.msra.mxu0 0.0
  %5790 = vmatpush.msra.mxu0 0.0
  %5791 = vmatpush.msra.mxu0 0.0
  %5792 = vmatpush.msra.mxu0 0.0
  %5793 = vmatpush.msra.mxu0 0.0
  %5794 = vmatpush.msra.mxu0 %v5775
  %5795 = vmatpush.msra.mxu0 %v5774
  %5796 = vmatmul.f32.gmra.mxu0 %v5191
  %v5797 = vpop.f32.mrf.mxu0
  %v5798 = vadd.f32 0.0, %v5797
  %5799 = vmatmul.f32.gmra.mxu0 %v5193
  %v5800 = vpop.f32.mrf.mxu0
  %v5801 = vadd.f32 0.0, %v5800
  %5802 = vmatmul.f32.gmra.mxu0 %v5195
  %v5803 = vpop.f32.mrf.mxu0
  %v5804 = vadd.f32 0.0, %v5803
  %5805 = vmatmul.f32.gmra.mxu0 %v5776
  %v5806 = vpop.f32.mrf.mxu0
  %v5807 = vadd.f32 0.0, %v5806
  %5808 = vmatmul.f32.gmra.mxu0 %v5197
  %v5809 = vpop.f32.mrf.mxu0
  %v5810 = vadd.f32 0.0, %v5809
  %5811 = vmatmul.f32.gmra.mxu0 %v5199
  %v5812 = vpop.f32.mrf.mxu0
  %v5813 = vadd.f32 0.0, %v5812
  %5814 = vmatmul.f32.gmra.mxu0 %v5201
  %v5815 = vpop.f32.mrf.mxu0
  %v5816 = vadd.f32 0.0, %v5815
  %5817 = vmatmul.f32.gmra.mxu0 %v5778
  %v5818 = vpop.f32.mrf.mxu0
  %v5819 = vadd.f32 0.0, %v5818
  %5820 = vdwg.mxu0
  %v5821 = vadd.f32 %v5761, %v5798
  %v5822 = vadd.f32 %v5762, %v5801
  %v5823 = vadd.f32 %v5763, %v5804
  %v5824 = vadd.f32 %v5764, %v5807
  %v5825 = vadd.f32 %v5765, %v5810
  %v5826 = vadd.f32 %v5766, %v5813
  %v5827 = vadd.f32 %v5767, %v5816
  %v5828 = vadd.f32 %v5768, %v5819
  %v5829 = vrot.slane %v4782, 1
  %v5830 = vsel %vm1391, %v5829, %v5253
  %v5831 = vrot.slane %v4786, 1
  %v5832 = vsel %vm1391, %v5831, %v5253
  %s5833 = scalar_lea.vmem %s5, 176
  %v5834 = vld [vmem:[%s5833] sm:$0xff]
  %v5835 = vld [vmem:[%s5833 + $0x8] sm:$0xff]
  %v5836 = vsel %vm107, %v5830, 0
  %v5838 = vsel %vm107, %v5832, 0
  %5840 = vmatpush.msra.mxu0 0.0
  %5841 = vmatpush.msra.mxu0 0.0
  %5842 = vmatpush.msra.mxu0 0.0
  %5843 = vmatpush.msra.mxu0 0.0
  %5844 = vmatpush.msra.mxu0 0.0
  %5845 = vmatpush.msra.mxu0 0.0
  %5846 = vmatpush.msra.mxu0 0.0
  %5847 = vmatpush.msra.mxu0 0.0
  %5848 = vmatpush.msra.mxu0 0.0
  %5849 = vmatpush.msra.mxu0 0.0
  %5850 = vmatpush.msra.mxu0 0.0
  %5851 = vmatpush.msra.mxu0 0.0
  %5852 = vmatpush.msra.mxu0 0.0
  %5853 = vmatpush.msra.mxu0 0.0
  %5854 = vmatpush.msra.mxu0 %v5835
  %5855 = vmatpush.msra.mxu0 %v5834
  %5856 = vmatmul.f32.gmra.mxu0 %v5272
  %v5857 = vpop.f32.mrf.mxu0
  %v5858 = vadd.f32 0.0, %v5857
  %5859 = vmatmul.f32.gmra.mxu0 %v5274
  %v5860 = vpop.f32.mrf.mxu0
  %v5861 = vadd.f32 0.0, %v5860
  %5862 = vmatmul.f32.gmra.mxu0 %v5276
  %v5863 = vpop.f32.mrf.mxu0
  %v5864 = vadd.f32 0.0, %v5863
  %5865 = vmatmul.f32.gmra.mxu0 %v5836
  %v5866 = vpop.f32.mrf.mxu0
  %v5867 = vadd.f32 0.0, %v5866
  %5868 = vmatmul.f32.gmra.mxu0 %v5278
  %v5869 = vpop.f32.mrf.mxu0
  %v5870 = vadd.f32 0.0, %v5869
  %5871 = vmatmul.f32.gmra.mxu0 %v5280
  %v5872 = vpop.f32.mrf.mxu0
  %v5873 = vadd.f32 0.0, %v5872
  %5874 = vmatmul.f32.gmra.mxu0 %v5282
  %v5875 = vpop.f32.mrf.mxu0
  %v5876 = vadd.f32 0.0, %v5875
  %5877 = vmatmul.f32.gmra.mxu0 %v5838
  %v5878 = vpop.f32.mrf.mxu0
  %v5879 = vadd.f32 0.0, %v5878
  %5880 = vdwg.mxu0
  %v5881 = vadd.f32 %v5821, %v5858
  %v5882 = vadd.f32 %v5822, %v5861
  %v5883 = vadd.f32 %v5823, %v5864
  %v5884 = vadd.f32 %v5824, %v5867
  %v5885 = vadd.f32 %v5825, %v5870
  %v5886 = vadd.f32 %v5826, %v5873
  %v5887 = vadd.f32 %v5827, %v5876
  %v5888 = vadd.f32 %v5828, %v5879
  %s5889 = scalar_lea.vmem %s5, 192
  %v5890 = vld [vmem:[%s5889] sm:$0xff]
  %v5891 = vld [vmem:[%s5889 + $0x8] sm:$0xff]
  %5892 = vmatpush.msra.mxu0 0.0
  %5893 = vmatpush.msra.mxu0 0.0
  %5894 = vmatpush.msra.mxu0 0.0
  %5895 = vmatpush.msra.mxu0 0.0
  %5896 = vmatpush.msra.mxu0 0.0
  %5897 = vmatpush.msra.mxu0 0.0
  %5898 = vmatpush.msra.mxu0 0.0
  %5899 = vmatpush.msra.mxu0 0.0
  %5900 = vmatpush.msra.mxu0 0.0
  %5901 = vmatpush.msra.mxu0 0.0
  %5902 = vmatpush.msra.mxu0 0.0
  %5903 = vmatpush.msra.mxu0 0.0
  %5904 = vmatpush.msra.mxu0 0.0
  %5905 = vmatpush.msra.mxu0 0.0
  %5906 = vmatpush.msra.mxu0 %v5891
  %5907 = vmatpush.msra.mxu0 %v5890
  %5908 = vmatmul.f32.gmra.mxu0 %v5340
  %v5909 = vpop.f32.mrf.mxu0
  %v5910 = vadd.f32 0.0, %v5909
  %5911 = vmatmul.f32.gmra.mxu0 %v5343
  %v5912 = vpop.f32.mrf.mxu0
  %v5913 = vadd.f32 0.0, %v5912
  %5914 = vmatmul.f32.gmra.mxu0 %v5346
  %v5915 = vpop.f32.mrf.mxu0
  %v5916 = vadd.f32 0.0, %v5915
  %5917 = vmatmul.f32.gmra.mxu0 %v5111
  %v5918 = vpop.f32.mrf.mxu0
  %v5919 = vadd.f32 0.0, %v5918
  %5920 = vmatmul.f32.gmra.mxu0 %v5352
  %v5921 = vpop.f32.mrf.mxu0
  %v5922 = vadd.f32 0.0, %v5921
  %5923 = vmatmul.f32.gmra.mxu0 %v5355
  %v5924 = vpop.f32.mrf.mxu0
  %v5925 = vadd.f32 0.0, %v5924
  %5926 = vmatmul.f32.gmra.mxu0 %v5358
  %v5927 = vpop.f32.mrf.mxu0
  %v5928 = vadd.f32 0.0, %v5927
  %5929 = vmatmul.f32.gmra.mxu0 %v5111
  %v5930 = vpop.f32.mrf.mxu0
  %v5931 = vadd.f32 0.0, %v5930
  %5932 = vdwg.mxu0
  %v5933 = vadd.f32 %v5881, %v5910
  %v5934 = vadd.f32 %v5882, %v5913
  %v5935 = vadd.f32 %v5883, %v5916
  %v5936 = vadd.f32 %v5884, %v5919
  %v5937 = vadd.f32 %v5885, %v5922
  %v5938 = vadd.f32 %v5886, %v5925
  %v5939 = vadd.f32 %v5887, %v5928
  %v5940 = vadd.f32 %v5888, %v5931
  %s5941 = scalar_lea.vmem %s5, 208
  %v5942 = vld [vmem:[%s5941] sm:$0xff]
  %v5943 = vld [vmem:[%s5941 + $0x8] sm:$0xff]
  %5944 = vmatpush.msra.mxu0 0.0
  %5945 = vmatpush.msra.mxu0 0.0
  %5946 = vmatpush.msra.mxu0 0.0
  %5947 = vmatpush.msra.mxu0 0.0
  %5948 = vmatpush.msra.mxu0 0.0
  %5949 = vmatpush.msra.mxu0 0.0
  %5950 = vmatpush.msra.mxu0 0.0
  %5951 = vmatpush.msra.mxu0 0.0
  %5952 = vmatpush.msra.mxu0 0.0
  %5953 = vmatpush.msra.mxu0 0.0
  %5954 = vmatpush.msra.mxu0 0.0
  %5955 = vmatpush.msra.mxu0 0.0
  %5956 = vmatpush.msra.mxu0 0.0
  %5957 = vmatpush.msra.mxu0 0.0
  %5958 = vmatpush.msra.mxu0 %v5943
  %5959 = vmatpush.msra.mxu0 %v5942
  %5960 = vmatmul.f32.gmra.mxu0 %v5416
  %v5961 = vpop.f32.mrf.mxu0
  %v5962 = vadd.f32 0.0, %v5961
  %5963 = vmatmul.f32.gmra.mxu0 %v5419
  %v5964 = vpop.f32.mrf.mxu0
  %v5965 = vadd.f32 0.0, %v5964
  %5966 = vmatmul.f32.gmra.mxu0 %v5422
  %v5967 = vpop.f32.mrf.mxu0
  %v5968 = vadd.f32 0.0, %v5967
  %5969 = vmatmul.f32.gmra.mxu0 %v5049
  %v5970 = vpop.f32.mrf.mxu0
  %v5971 = vadd.f32 0.0, %v5970
  %5972 = vmatmul.f32.gmra.mxu0 %v5428
  %v5973 = vpop.f32.mrf.mxu0
  %v5974 = vadd.f32 0.0, %v5973
  %5975 = vmatmul.f32.gmra.mxu0 %v5431
  %v5976 = vpop.f32.mrf.mxu0
  %v5977 = vadd.f32 0.0, %v5976
  %5978 = vmatmul.f32.gmra.mxu0 %v5434
  %v5979 = vpop.f32.mrf.mxu0
  %v5980 = vadd.f32 0.0, %v5979
  %5981 = vmatmul.f32.gmra.mxu0 %v5049
  %v5982 = vpop.f32.mrf.mxu0
  %v5983 = vadd.f32 0.0, %v5982
  %5984 = vdwg.mxu0
  %v5985 = vadd.f32 %v5933, %v5962
  %v5986 = vadd.f32 %v5934, %v5965
  %v5987 = vadd.f32 %v5935, %v5968
  %v5988 = vadd.f32 %v5936, %v5971
  %v5989 = vadd.f32 %v5937, %v5974
  %v5990 = vadd.f32 %v5938, %v5977
  %v5991 = vadd.f32 %v5939, %v5980
  %v5992 = vadd.f32 %v5940, %v5983
  %s5993 = scalar_lea.vmem %s5, 224
  %v5994 = vld [vmem:[%s5993] sm:$0xff]
  %v5995 = vld [vmem:[%s5993 + $0x8] sm:$0xff]
  %5996 = vmatpush.msra.mxu0 0.0
  %5997 = vmatpush.msra.mxu0 0.0
  %5998 = vmatpush.msra.mxu0 0.0
  %5999 = vmatpush.msra.mxu0 0.0
  %6000 = vmatpush.msra.mxu0 0.0
  %6001 = vmatpush.msra.mxu0 0.0
  %6002 = vmatpush.msra.mxu0 0.0
  %6003 = vmatpush.msra.mxu0 0.0
  %6004 = vmatpush.msra.mxu0 0.0
  %6005 = vmatpush.msra.mxu0 0.0
  %6006 = vmatpush.msra.mxu0 0.0
  %6007 = vmatpush.msra.mxu0 0.0
  %6008 = vmatpush.msra.mxu0 0.0
  %6009 = vmatpush.msra.mxu0 0.0
  %6010 = vmatpush.msra.mxu0 %v5995
  %6011 = vmatpush.msra.mxu0 %v5994
  %6012 = vmatmul.f32.gmra.mxu0 %v5506
  %v6013 = vpop.f32.mrf.mxu0
  %v6014 = vadd.f32 0.0, %v6013
  %6015 = vmatmul.f32.gmra.mxu0 %v5508
  %v6016 = vpop.f32.mrf.mxu0
  %v6017 = vadd.f32 0.0, %v6016
  %6018 = vmatmul.f32.gmra.mxu0 %v5510
  %v6019 = vpop.f32.mrf.mxu0
  %v6020 = vadd.f32 0.0, %v6019
  %6021 = vmatmul.f32.gmra.mxu0 %v5189
  %v6022 = vpop.f32.mrf.mxu0
  %v6023 = vadd.f32 0.0, %v6022
  %6024 = vmatmul.f32.gmra.mxu0 %v5514
  %v6025 = vpop.f32.mrf.mxu0
  %v6026 = vadd.f32 0.0, %v6025
  %6027 = vmatmul.f32.gmra.mxu0 %v5516
  %v6028 = vpop.f32.mrf.mxu0
  %v6029 = vadd.f32 0.0, %v6028
  %6030 = vmatmul.f32.gmra.mxu0 %v5518
  %v6031 = vpop.f32.mrf.mxu0
  %v6032 = vadd.f32 0.0, %v6031
  %6033 = vmatmul.f32.gmra.mxu0 %v5189
  %v6034 = vpop.f32.mrf.mxu0
  %v6035 = vadd.f32 0.0, %v6034
  %6036 = vdwg.mxu0
  %v6037 = vadd.f32 %v5985, %v6014
  %v6038 = vadd.f32 %v5986, %v6017
  %v6039 = vadd.f32 %v5987, %v6020
  %v6040 = vadd.f32 %v5988, %v6023
  %v6041 = vadd.f32 %v5989, %v6026
  %v6042 = vadd.f32 %v5990, %v6029
  %v6043 = vadd.f32 %v5991, %v6032
  %v6044 = vadd.f32 %v5992, %v6035
  %s6045 = scalar_lea.vmem %s5, 240
  %v6046 = vld [vmem:[%s6045] sm:$0xff]
  %v6047 = vld [vmem:[%s6045 + $0x8] sm:$0xff]
  %6048 = vmatpush.msra.mxu0 0.0
  %6049 = vmatpush.msra.mxu0 0.0
  %6050 = vmatpush.msra.mxu0 0.0
  %6051 = vmatpush.msra.mxu0 0.0
  %6052 = vmatpush.msra.mxu0 0.0
  %6053 = vmatpush.msra.mxu0 0.0
  %6054 = vmatpush.msra.mxu0 0.0
  %6055 = vmatpush.msra.mxu0 0.0
  %6056 = vmatpush.msra.mxu0 0.0
  %6057 = vmatpush.msra.mxu0 0.0
  %6058 = vmatpush.msra.mxu0 0.0
  %6059 = vmatpush.msra.mxu0 0.0
  %6060 = vmatpush.msra.mxu0 0.0
  %6061 = vmatpush.msra.mxu0 0.0
  %6062 = vmatpush.msra.mxu0 %v6047
  %6063 = vmatpush.msra.mxu0 %v6046
  %6064 = vmatmul.f32.gmra.mxu0 %v5590
  %v6065 = vpop.f32.mrf.mxu0
  %v6066 = vadd.f32 0.0, %v6065
  %6067 = vmatmul.f32.gmra.mxu0 %v5592
  %v6068 = vpop.f32.mrf.mxu0
  %v6069 = vadd.f32 0.0, %v6068
  %6070 = vmatmul.f32.gmra.mxu0 %v5594
  %v6071 = vpop.f32.mrf.mxu0
  %v6072 = vadd.f32 0.0, %v6071
  %6073 = vmatmul.f32.gmra.mxu0 %v5270
  %v6074 = vpop.f32.mrf.mxu0
  %v6075 = vadd.f32 0.0, %v6074
  %6076 = vmatmul.f32.gmra.mxu0 %v5598
  %v6077 = vpop.f32.mrf.mxu0
  %v6078 = vadd.f32 0.0, %v6077
  %6079 = vmatmul.f32.gmra.mxu0 %v5600
  %v6080 = vpop.f32.mrf.mxu0
  %v6081 = vadd.f32 0.0, %v6080
  %6082 = vmatmul.f32.gmra.mxu0 %v5602
  %v6083 = vpop.f32.mrf.mxu0
  %v6084 = vadd.f32 0.0, %v6083
  %6085 = vmatmul.f32.gmra.mxu0 %v5270
  %v6086 = vpop.f32.mrf.mxu0
  %v6087 = vadd.f32 0.0, %v6086
  %6088 = vdwg.mxu0
  %v6089 = vadd.f32 %v6037, %v6066
  %v6090 = vadd.f32 %v6038, %v6069
  %v6091 = vadd.f32 %v6039, %v6072
  %v6092 = vadd.f32 %v6040, %v6075
  %v6093 = vadd.f32 %v6041, %v6078
  %v6094 = vadd.f32 %v6042, %v6081
  %v6095 = vadd.f32 %v6043, %v6084
  %v6096 = vadd.f32 %v6044, %v6087
  %vm6097 = vcmp.lt.s32.totalorder %v4108, 4
  %vm6098 = vcmp.lt.s32.totalorder %v4109, 4
  %vm6099 = vcmp.lt.s32.totalorder %v4110, 4
  %vm6100 = vcmp.lt.s32.totalorder %v4111, 4
  %vm6101 = vcmp.lt.s32.totalorder %v4112, 4
  %vm6102 = vcmp.lt.s32.totalorder %v4113, 4
  %vm6103 = vcmp.lt.s32.totalorder %v4114, 4
  %vm6104 = vcmp.lt.s32.totalorder %v4115, 4
  %v6105 = vsel %vm6097, 1, 0
  %v6106 = vsel %vm6098, 1, 0
  %v6107 = vsel %vm6099, 1, 0
  %v6108 = vsel %vm6100, 1, 0
  %v6109 = vsel %vm6101, 1, 0
  %v6110 = vsel %vm6102, 1, 0
  %v6111 = vsel %vm6103, 1, 0
  %v6112 = vsel %vm6104, 1, 0
  %v6113 = vcvt.s32.f32 %v6105
  %v6114 = vcvt.s32.f32 %v6106
  %v6115 = vcvt.s32.f32 %v6107
  %v6116 = vcvt.s32.f32 %v6108
  %v6117 = vcvt.s32.f32 %v6109
  %v6118 = vcvt.s32.f32 %v6110
  %v6119 = vcvt.s32.f32 %v6111
  %v6120 = vcvt.s32.f32 %v6112
  %v6121 = vmul.f32 %v6089, %v6113
  %v6122 = vmul.f32 %v6090, %v6114
  %v6123 = vmul.f32 %v6091, %v6115
  %v6124 = vmul.f32 %v6092, %v6116
  %v6125 = vmul.f32 %v6093, %v6117
  %v6126 = vmul.f32 %v6094, %v6118
  %v6127 = vmul.f32 %v6095, %v6119
  %v6128 = vmul.f32 %v6096, %v6120
  %vm6129 = vcmask 261120
  %v6130 = vsel %vm6129, %v6121, 0.0
  %v6131 = vsel %vm6129, %v6122, 0.0
  %v6132 = vadd.f32 %v6130, %v6131
  %v6133 = vsel %vm6129, %v6123, 0.0
  %v6134 = vadd.f32 %v6132, %v6133
  %v6135 = vsel %vm6129, %v6124, 0.0
  %v6136 = vadd.f32 %v6134, %v6135
  %v6137 = vsel %vm6129, %v6125, 0.0
  %v6138 = vadd.f32 %v6136, %v6137
  %v6139 = vsel %vm6129, %v6126, 0.0
  %v6140 = vadd.f32 %v6138, %v6139
  %v6141 = vsel %vm6129, %v6127, 0.0
  %v6142 = vadd.f32 %v6140, %v6141
  %v6143 = vsel %vm6129, %v6128, 0.0
  %v6144 = vadd.f32 %v6142, %v6143
  %v6145 = vrot.slane %v6144, 4
  %v6146 = vadd.f32 %v6144, %v6145
  %v6147 = vrot.slane %v6146, 2
  %v6148 = vadd.f32 %v6146, %v6147
  %v6149 = vrot.slane %v6148, 1
  %v6150 = vadd.f32 %v6148, %v6149
  %v6151 = vrcp.pop 32.0
  %v6152 = vmul.f32 32.0, %v6151
  %v6153 = vsub.f32 1.0, %v6152
  %v6154 = vmul.f32 %v6151, %v6153
  %v6155 = vadd.f32 %v6151, %v6154
  %vm6156 = vweird.f32 %v6151
  %v6157 = vsel %vm6156, %v6151, %v6155
  %v6158 = vmul.f32 %v6150, %v6157
  %v6159 = vsub.f32 %v6089, %v6158
  %v6160 = vsub.f32 %v6090, %v6158
  %v6161 = vsub.f32 %v6091, %v6158
  %v6162 = vsub.f32 %v6092, %v6158
  %v6163 = vsub.f32 %v6093, %v6158
  %v6164 = vsub.f32 %v6094, %v6158
  %v6165 = vsub.f32 %v6095, %v6158
  %v6166 = vsub.f32 %v6096, %v6158
  %v6167 = vmul.f32 %v6159, %v6113
  %v6168 = vmul.f32 %v6160, %v6114
  %v6169 = vmul.f32 %v6161, %v6115
  %v6170 = vmul.f32 %v6162, %v6116
  %v6171 = vmul.f32 %v6163, %v6117
  %v6172 = vmul.f32 %v6164, %v6118
  %v6173 = vmul.f32 %v6165, %v6119
  %v6174 = vmul.f32 %v6166, %v6120
  %v6175 = vmul.f32 %v6167, %v6167
  %v6176 = vmul.f32 %v6168, %v6168
  %v6177 = vmul.f32 %v6169, %v6169
  %v6178 = vmul.f32 %v6170, %v6170
  %v6179 = vmul.f32 %v6171, %v6171
  %v6180 = vmul.f32 %v6172, %v6172
  %v6181 = vmul.f32 %v6173, %v6173
  %v6182 = vmul.f32 %v6174, %v6174
  %v6183 = vsel %vm6129, %v6175, 0.0
  %v6184 = vsel %vm6129, %v6176, 0.0
  %v6185 = vadd.f32 %v6183, %v6184
  %v6186 = vsel %vm6129, %v6177, 0.0
  %v6187 = vadd.f32 %v6185, %v6186
  %v6188 = vsel %vm6129, %v6178, 0.0
  %v6189 = vadd.f32 %v6187, %v6188
  %v6190 = vsel %vm6129, %v6179, 0.0
  %v6191 = vadd.f32 %v6189, %v6190
  %v6192 = vsel %vm6129, %v6180, 0.0
  %v6193 = vadd.f32 %v6191, %v6192
  %v6194 = vsel %vm6129, %v6181, 0.0
  %v6195 = vadd.f32 %v6193, %v6194
  %v6196 = vsel %vm6129, %v6182, 0.0
  %v6197 = vadd.f32 %v6195, %v6196
  %v6198 = vrot.slane %v6197, 4
  %v6199 = vadd.f32 %v6197, %v6198
  %v6200 = vrot.slane %v6199, 2
  %v6201 = vadd.f32 %v6199, %v6200
  %v6202 = vrot.slane %v6201, 1
  %v6203 = vadd.f32 %v6201, %v6202
  %v6204 = vmul.f32 %v6203, %v6157
  %v6205 = vadd.f32 %v6204, 1e-05
  %v6206 = vrsqrt.pop %v6205
  %v6207 = vmul.f32 %v6206, %v6205
  %v6208 = vmul.f32 %v6207, %v6206
  %v6209 = vmul.f32 0.5, %v6208
  %v6210 = vsub.f32 1.5, %v6209
  %v6211 = vmul.f32 %v6206, %v6210
  %vm6212 = vweird.f32 %v6205
  %vm6213 = vweird.f32 %v6206
  %vm6214 = vmor %vm6212, %vm6213
  %v6215 = vsel %vm6214, %v6206, %v6211
  %v6216 = vmul.f32 %v6159, %v6215
  %v6217 = vmul.f32 %v6160, %v6215
  %v6218 = vmul.f32 %v6161, %v6215
  %v6219 = vmul.f32 %v6162, %v6215
  %v6220 = vmul.f32 %v6163, %v6215
  %v6221 = vmul.f32 %v6164, %v6215
  %v6222 = vmul.f32 %v6165, %v6215
  %v6223 = vmul.f32 %v6166, %v6215
  %v6224 = vld [vmem:[%s6] sm:$0x1]
  %v6226 = vperm.slane %v6224, 0
  %v6228 = vmul.f32 %v6216, %v6226
  %v6229 = vmul.f32 %v6217, %v6226
  %v6230 = vmul.f32 %v6218, %v6226
  %v6231 = vmul.f32 %v6219, %v6226
  %v6232 = vmul.f32 %v6220, %v6226
  %v6233 = vmul.f32 %v6221, %v6226
  %v6234 = vmul.f32 %v6222, %v6226
  %v6235 = vmul.f32 %v6223, %v6226
  %v6236 = vld [vmem:[%s7] sm:$0x1]
  %v6238 = vperm.slane %v6236, 0
  %v6240 = vadd.f32 %v6228, %v6238
  %v6241 = vadd.f32 %v6229, %v6238
  %v6242 = vadd.f32 %v6230, %v6238
  %v6243 = vadd.f32 %v6231, %v6238
  %v6244 = vadd.f32 %v6232, %v6238
  %v6245 = vadd.f32 %v6233, %v6238
  %v6246 = vadd.f32 %v6234, %v6238
  %v6247 = vadd.f32 %v6235, %v6238
  %vm6248 = vcmp.ge.f32.partialorder %v6240, 0.0
  %vm6249 = vcmp.ge.f32.partialorder %v6241, 0.0
  %vm6250 = vcmp.ge.f32.partialorder %v6242, 0.0
  %vm6251 = vcmp.ge.f32.partialorder %v6243, 0.0
  %vm6252 = vcmp.ge.f32.partialorder %v6244, 0.0
  %vm6253 = vcmp.ge.f32.partialorder %v6245, 0.0
  %vm6254 = vcmp.ge.f32.partialorder %v6246, 0.0
  %vm6255 = vcmp.ge.f32.partialorder %v6247, 0.0
  %v6256 = vmul.f32 %v6240, 0.2
  %v6257 = vmul.f32 %v6241, 0.2
  %v6258 = vmul.f32 %v6242, 0.2
  %v6259 = vmul.f32 %v6243, 0.2
  %v6260 = vmul.f32 %v6244, 0.2
  %v6261 = vmul.f32 %v6245, 0.2
  %v6262 = vmul.f32 %v6246, 0.2
  %v6263 = vmul.f32 %v6247, 0.2
  %v6264 = vsel %vm6248, %v6240, %v6256
  %v6265 = vsel %vm6249, %v6241, %v6257
  %v6266 = vsel %vm6250, %v6242, %v6258
  %v6267 = vsel %vm6251, %v6243, %v6259
  %v6268 = vsel %vm6252, %v6244, %v6260
  %v6269 = vsel %vm6253, %v6245, %v6261
  %v6270 = vsel %vm6254, %v6246, %v6262
  %v6271 = vsel %vm6255, %v6247, %v6263
  %v6280 = vrot.slane %v6264, 7
  %v6281 = vrot.slane %v6265, 7
  %v6282 = vrot.slane %v6266, 7
  %v6283 = vrot.slane %v6267, 7
  %v6284 = vrot.slane %v6268, 7
  %v6285 = vrot.slane %v6269, 7
  %v6286 = vrot.slane %v6270, 7
  %v6287 = vrot.slane %v6271, 7
  %v6296 = vsel %vm766, 0.0, %v6280
  %v6297 = vsel %vm766, 0.0, %v6281
  %v6298 = vsel %vm766, 0.0, %v6282
  %v6299 = vsel %vm766, 0.0, %v6283
  %v6300 = vsel %vm766, 0.0, %v6284
  %v6301 = vsel %vm766, 0.0, %v6285
  %v6302 = vsel %vm766, 0.0, %v6286
  %v6303 = vsel %vm766, 0.0, %v6287
  %v6304 = vsel %vm1355, %v963, 0.0
  %v6305 = vsel %vm1355, %v6296, 0.0
  %v6306 = vsel %vm1355, %v6297, 0.0
  %v6307 = vsel %vm1355, %v6298, 0.0
  %v6308 = vsel %vm1355, %v6299, 0.0
  %v6309 = vsel %vm1355, %v6300, 0.0
  %v6310 = vsel %vm1355, %v6301, 0.0
  %v6311 = vsel %vm1355, %v6302, 0.0
  %v6312 = vsel %vm1355, %v6303, 0.0
  %v6318 = vrot.slane %v6304, 1
  %v6319 = vrot.slane %v6306, 1
  %v6320 = vrot.slane %v6308, 1
  %v6321 = vrot.slane %v6310, 1
  %v6322 = vrot.slane %v6312, 1
  %v6328 = vrot.slane %v6304, 2
  %v6329 = vrot.slane %v6306, 2
  %v6330 = vrot.slane %v6308, 2
  %v6331 = vrot.slane %v6310, 2
  %v6332 = vrot.slane %v6312, 2
  %v6338 = vrot.slane %v6304, 3
  %v6339 = vrot.slane %v6306, 3
  %v6340 = vrot.slane %v6308, 3
  %v6341 = vrot.slane %v6310, 3
  %v6342 = vrot.slane %v6312, 3
  %v6348 = vrot.slane 0.0, 4
  %v6350 = vrot.slane 0.0, 5
  %v6352 = vrot.slane 0.0, 6
  %v6354 = vsel %vm766, %v6304, %v6318
  %v6355 = vsel %vm766, %v6306, %v6319
  %v6356 = vsel %vm766, %v6308, %v6320
  %v6357 = vsel %vm766, %v6310, %v6321
  %v6358 = vsel %vm766, %v6312, %v6322
  %v6359 = vsel %vm1301, %v6354, %v6328
  %v6360 = vsel %vm1301, %v6355, %v6329
  %v6361 = vsel %vm1301, %v6356, %v6330
  %v6362 = vsel %vm1301, %v6357, %v6331
  %v6363 = vsel %vm1301, %v6358, %v6332
  %v6364 = vsel %vm1319, %v6359, %v6338
  %v6365 = vsel %vm1319, %v6360, %v6339
  %v6366 = vsel %vm1319, %v6361, %v6340
  %v6367 = vsel %vm1319, %v6362, %v6341
  %v6368 = vsel %vm1319, %v6363, %v6342
  %v6369 = vsel %vm1337, %v6364, %v6348
  %v6370 = vsel %vm1337, %v6365, %v6348
  %v6371 = vsel %vm1337, %v6366, %v6348
  %v6372 = vsel %vm1337, %v6367, %v6348
  %v6373 = vsel %vm1337, %v6368, %v6348
  %v6374 = vsel %vm1355, %v6369, %v6350
  %v6375 = vsel %vm1355, %v6370, %v6350
  %v6376 = vsel %vm1355, %v6371, %v6350
  %v6377 = vsel %vm1355, %v6372, %v6350
  %v6378 = vsel %vm1355, %v6373, %v6350
  %v6379 = vsel %vm1373, %v6374, %v6352
  %v6380 = vsel %vm1373, %v6375, %v6352
  %v6381 = vsel %vm1373, %v6376, %v6352
  %v6382 = vsel %vm1373, %v6377, %v6352
  %v6383 = vsel %vm1373, %v6378, %v6352
  %v6384 = vsel %vm1391, %v6379, %v767
  %v6385 = vsel %vm1391, %v6380, %v767
  %v6386 = vsel %vm1391, %v6381, %v767
  %v6387 = vsel %vm1391, %v6382, %v767
  %v6388 = vsel %vm1391, %v6383, %v767
  %v6389 = vrot.slane %v6304, 4
  %v6390 = vrot.slane %v6306, 4
  %v6391 = vrot.slane %v6308, 4
  %v6392 = vrot.slane %v6310, 4
  %v6393 = vrot.slane %v6312, 4
  %v6399 = vsel %vm766, %v6318, %v6328
  %v6400 = vsel %vm766, %v6319, %v6329
  %v6401 = vsel %vm766, %v6320, %v6330
  %v6402 = vsel %vm766, %v6321, %v6331
  %v6403 = vsel %vm766, %v6322, %v6332
  %v6404 = vsel %vm1301, %v6399, %v6338
  %v6405 = vsel %vm1301, %v6400, %v6339
  %v6406 = vsel %vm1301, %v6401, %v6340
  %v6407 = vsel %vm1301, %v6402, %v6341
  %v6408 = vsel %vm1301, %v6403, %v6342
  %v6409 = vsel %vm1319, %v6404, %v6389
  %v6410 = vsel %vm1319, %v6405, %v6390
  %v6411 = vsel %vm1319, %v6406, %v6391
  %v6412 = vsel %vm1319, %v6407, %v6392
  %v6413 = vsel %vm1319, %v6408, %v6393
  %v6414 = vsel %vm1337, %v6409, %v6350
  %v6415 = vsel %vm1337, %v6410, %v6350
  %v6416 = vsel %vm1337, %v6411, %v6350
  %v6417 = vsel %vm1337, %v6412, %v6350
  %v6418 = vsel %vm1337, %v6413, %v6350
  %v6419 = vsel %vm1355, %v6414, %v6352
  %v6420 = vsel %vm1355, %v6415, %v6352
  %v6421 = vsel %vm1355, %v6416, %v6352
  %v6422 = vsel %vm1355, %v6417, %v6352
  %v6423 = vsel %vm1355, %v6418, %v6352
  %v6424 = vsel %vm1373, %v6419, %v767
  %v6425 = vsel %vm1373, %v6420, %v767
  %v6426 = vsel %vm1373, %v6421, %v767
  %v6427 = vsel %vm1373, %v6422, %v767
  %v6428 = vsel %vm1373, %v6423, %v767
  %v6429 = vsel %vm1391, %v6424, 0.0
  %v6430 = vsel %vm1391, %v6425, 0.0
  %v6431 = vsel %vm1391, %v6426, 0.0
  %v6432 = vsel %vm1391, %v6427, 0.0
  %v6433 = vsel %vm1391, %v6428, 0.0
  %v6438 = vrot.slane %v6305, 1
  %v6439 = vrot.slane %v6307, 1
  %v6440 = vrot.slane %v6309, 1
  %v6441 = vrot.slane %v6311, 1
  %v6446 = vrot.slane %v6305, 2
  %v6447 = vrot.slane %v6307, 2
  %v6448 = vrot.slane %v6309, 2
  %v6449 = vrot.slane %v6311, 2
  %v6454 = vrot.slane %v6305, 3
  %v6455 = vrot.slane %v6307, 3
  %v6456 = vrot.slane %v6309, 3
  %v6457 = vrot.slane %v6311, 3
  %v6462 = vsel %vm766, %v6305, %v6438
  %v6463 = vsel %vm766, %v6307, %v6439
  %v6464 = vsel %vm766, %v6309, %v6440
  %v6465 = vsel %vm766, %v6311, %v6441
  %v6466 = vsel %vm1301, %v6462, %v6446
  %v6467 = vsel %vm1301, %v6463, %v6447
  %v6468 = vsel %vm1301, %v6464, %v6448
  %v6469 = vsel %vm1301, %v6465, %v6449
  %v6470 = vsel %vm1319, %v6466, %v6454
  %v6471 = vsel %vm1319, %v6467, %v6455
  %v6472 = vsel %vm1319, %v6468, %v6456
  %v6473 = vsel %vm1319, %v6469, %v6457
  %v6474 = vsel %vm1337, %v6470, %v6348
  %v6475 = vsel %vm1337, %v6471, %v6348
  %v6476 = vsel %vm1337, %v6472, %v6348
  %v6477 = vsel %vm1337, %v6473, %v6348
  %v6478 = vsel %vm1355, %v6474, %v6350
  %v6479 = vsel %vm1355, %v6475, %v6350
  %v6480 = vsel %vm1355, %v6476, %v6350
  %v6481 = vsel %vm1355, %v6477, %v6350
  %v6482 = vsel %vm1373, %v6478, %v6352
  %v6483 = vsel %vm1373, %v6479, %v6352
  %v6484 = vsel %vm1373, %v6480, %v6352
  %v6485 = vsel %vm1373, %v6481, %v6352
  %v6486 = vsel %vm1391, %v6482, %v767
  %v6487 = vsel %vm1391, %v6483, %v767
  %v6488 = vsel %vm1391, %v6484, %v767
  %v6489 = vsel %vm1391, %v6485, %v767
  %v6490 = vrot.slane %v6305, 4
  %v6491 = vrot.slane %v6307, 4
  %v6492 = vrot.slane %v6309, 4
  %v6493 = vrot.slane %v6311, 4
  %v6498 = vsel %vm766, %v6438, %v6446
  %v6499 = vsel %vm766, %v6439, %v6447
  %v6500 = vsel %vm766, %v6440, %v6448
  %v6501 = vsel %vm766, %v6441, %v6449
  %v6502 = vsel %vm1301, %v6498, %v6454
  %v6503 = vsel %vm1301, %v6499, %v6455
  %v6504 = vsel %vm1301, %v6500, %v6456
  %v6505 = vsel %vm1301, %v6501, %v6457
  %v6506 = vsel %vm1319, %v6502, %v6490
  %v6507 = vsel %vm1319, %v6503, %v6491
  %v6508 = vsel %vm1319, %v6504, %v6492
  %v6509 = vsel %vm1319, %v6505, %v6493
  %v6510 = vsel %vm1337, %v6506, %v6350
  %v6511 = vsel %vm1337, %v6507, %v6350
  %v6512 = vsel %vm1337, %v6508, %v6350
  %v6513 = vsel %vm1337, %v6509, %v6350
  %v6514 = vsel %vm1355, %v6510, %v6352
  %v6515 = vsel %vm1355, %v6511, %v6352
  %v6516 = vsel %vm1355, %v6512, %v6352
  %v6517 = vsel %vm1355, %v6513, %v6352
  %v6518 = vsel %vm1373, %v6514, %v767
  %v6519 = vsel %vm1373, %v6515, %v767
  %v6520 = vsel %vm1373, %v6516, %v767
  %v6521 = vsel %vm1373, %v6517, %v767
  %v6522 = vsel %vm1391, %v6518, 0.0
  %v6523 = vsel %vm1391, %v6519, 0.0
  %v6524 = vsel %vm1391, %v6520, 0.0
  %v6525 = vsel %vm1391, %v6521, 0.0
  %v6526 = vld [vmem:[%s8] sm:$0xff]
  %v6527 = vld [vmem:[%s8 + $0x8] sm:$0xff]
  %v6528 = vld [vmem:[%s8 + $0x10] sm:$0xff]
  %v6529 = vld [vmem:[%s8 + $0x18] sm:$0xff]
  %s6530 = scalar_lea.vmem %s8, 32
  %v6531 = vld [vmem:[%s6530] sm:$0xff]
  %v6532 = vld [vmem:[%s6530 + $0x8] sm:$0xff]
  %v6533 = vld [vmem:[%s6530 + $0x10] sm:$0xff]
  %v6534 = vld [vmem:[%s6530 + $0x18] sm:$0xff]
  %v6536 = vsel %vm6129, %v6429, 0
  %v6539 = vsel %vm6129, %v6430, 0
  %v6542 = vsel %vm6129, %v6432, 0
  %6544 = vmatpush.msra.mxu0 0.0
  %6545 = vmatpush.msra.mxu0 0.0
  %6546 = vmatpush.msra.mxu0 0.0
  %6547 = vmatpush.msra.mxu0 0.0
  %6548 = vmatpush.msra.mxu0 0.0
  %6549 = vmatpush.msra.mxu0 0.0
  %6550 = vmatpush.msra.mxu0 0.0
  %6551 = vmatpush.msra.mxu0 0.0
  %6552 = vmatpush.msra.mxu0 0.0
  %6553 = vmatpush.msra.mxu0 0.0
  %6554 = vmatpush.msra.mxu0 0.0
  %6555 = vmatpush.msra.mxu0 0.0
  %6556 = vmatpush.msra.mxu0 %v6534
  %6557 = vmatpush.msra.mxu0 %v6533
  %6558 = vmatpush.msra.mxu0 %v6532
  %6559 = vmatpush.msra.mxu0 %v6531
  %6560 = vmatmul.f32.gmra.mxu0 %v6536
  %v6561 = vpop.f32.mrf.mxu0
  %v6562 = vadd.f32 0.0, %v6561
  %6563 = vmatmul.f32.gmra.mxu0 %v6539
  %v6564 = vpop.f32.mrf.mxu0
  %v6565 = vadd.f32 0.0, %v6564
  %6566 = vmatmul.f32.gmra.mxu0 %v6536
  %v6567 = vpop.f32.mrf.mxu0
  %v6568 = vadd.f32 0.0, %v6567
  %6569 = vmatmul.f32.gmra.mxu0 %v6542
  %v6570 = vpop.f32.mrf.mxu0
  %v6571 = vadd.f32 0.0, %v6570
  %6572 = vdwg.mxu0
  %v6574 = vsel %vm6129, %v6384, 0
  %v6577 = vsel %vm6129, %v6385, 0
  %v6580 = vsel %vm6129, %v6387, 0
  %6582 = vmatpush.msra.mxu0 0.0
  %6583 = vmatpush.msra.mxu0 0.0
  %6584 = vmatpush.msra.mxu0 0.0
  %6585 = vmatpush.msra.mxu0 0.0
  %6586 = vmatpush.msra.mxu0 0.0
  %6587 = vmatpush.msra.mxu0 0.0
  %6588 = vmatpush.msra.mxu0 0.0
  %6589 = vmatpush.msra.mxu0 0.0
  %6590 = vmatpush.msra.mxu0 0.0
  %6591 = vmatpush.msra.mxu0 0.0
  %6592 = vmatpush.msra.mxu0 0.0
  %6593 = vmatpush.msra.mxu0 0.0
  %6594 = vmatpush.msra.mxu0 %v6529
  %6595 = vmatpush.msra.mxu0 %v6528
  %6596 = vmatpush.msra.mxu0 %v6527
  %6597 = vmatpush.msra.mxu0 %v6526
  %6598 = vmatmul.f32.gmra.mxu0 %v6574
  %v6599 = vpop.f32.mrf.mxu0
  %v6600 = vadd.f32 %v6562, %v6599
  %6601 = vmatmul.f32.gmra.mxu0 %v6577
  %v6602 = vpop.f32.mrf.mxu0
  %v6603 = vadd.f32 %v6565, %v6602
  %6604 = vmatmul.f32.gmra.mxu0 %v6574
  %v6605 = vpop.f32.mrf.mxu0
  %v6606 = vadd.f32 %v6568, %v6605
  %6607 = vmatmul.f32.gmra.mxu0 %v6580
  %v6608 = vpop.f32.mrf.mxu0
  %v6609 = vadd.f32 %v6571, %v6608
  %6610 = vdwg.mxu0
  %v6611 = vrot.slane %v6384, 1
  %v6612 = vsel %vm1391, %v6611, %v4726
  %v6613 = vrot.slane %v6385, 1
  %v6614 = vsel %vm1391, %v6613, %v4726
  %v6615 = vrot.slane %v6387, 1
  %v6616 = vsel %vm1391, %v6615, %v4726
  %s6617 = scalar_lea.vmem %s8, 64
  %v6618 = vld [vmem:[%s6617] sm:$0xff]
  %v6619 = vld [vmem:[%s6617 + $0x8] sm:$0xff]
  %v6620 = vld [vmem:[%s6617 + $0x10] sm:$0xff]
  %v6621 = vld [vmem:[%s6617 + $0x18] sm:$0xff]
  %v6622 = vsel %vm6129, %v6612, 0
  %v6624 = vsel %vm6129, %v6614, 0
  %v6626 = vsel %vm6129, %v6616, 0
  %6628 = vmatpush.msra.mxu0 0.0
  %6629 = vmatpush.msra.mxu0 0.0
  %6630 = vmatpush.msra.mxu0 0.0
  %6631 = vmatpush.msra.mxu0 0.0
  %6632 = vmatpush.msra.mxu0 0.0
  %6633 = vmatpush.msra.mxu0 0.0
  %6634 = vmatpush.msra.mxu0 0.0
  %6635 = vmatpush.msra.mxu0 0.0
  %6636 = vmatpush.msra.mxu0 0.0
  %6637 = vmatpush.msra.mxu0 0.0
  %6638 = vmatpush.msra.mxu0 0.0
  %6639 = vmatpush.msra.mxu0 0.0
  %6640 = vmatpush.msra.mxu0 %v6621
  %6641 = vmatpush.msra.mxu0 %v6620
  %6642 = vmatpush.msra.mxu0 %v6619
  %6643 = vmatpush.msra.mxu0 %v6618
  %6644 = vmatmul.f32.gmra.mxu0 %v6622
  %v6645 = vpop.f32.mrf.mxu0
  %v6646 = vadd.f32 0.0, %v6645
  %6647 = vmatmul.f32.gmra.mxu0 %v6624
  %v6648 = vpop.f32.mrf.mxu0
  %v6649 = vadd.f32 0.0, %v6648
  %6650 = vmatmul.f32.gmra.mxu0 %v6622
  %v6651 = vpop.f32.mrf.mxu0
  %v6652 = vadd.f32 0.0, %v6651
  %6653 = vmatmul.f32.gmra.mxu0 %v6626
  %v6654 = vpop.f32.mrf.mxu0
  %v6655 = vadd.f32 0.0, %v6654
  %6656 = vdwg.mxu0
  %v6657 = vadd.f32 %v6600, %v6646
  %v6658 = vadd.f32 %v6603, %v6649
  %v6659 = vadd.f32 %v6606, %v6652
  %v6660 = vadd.f32 %v6609, %v6655
  %v6661 = vrot.slane %v6429, 1
  %v6662 = vsel %vm1391, %v6661, %v5253
  %v6663 = vrot.slane %v6430, 1
  %v6664 = vsel %vm1391, %v6663, %v5253
  %v6665 = vrot.slane %v6432, 1
  %v6666 = vsel %vm1391, %v6665, %v5253
  %s6667 = scalar_lea.vmem %s8, 96
  %v6668 = vld [vmem:[%s6667] sm:$0xff]
  %v6669 = vld [vmem:[%s6667 + $0x8] sm:$0xff]
  %v6670 = vld [vmem:[%s6667 + $0x10] sm:$0xff]
  %v6671 = vld [vmem:[%s6667 + $0x18] sm:$0xff]
  %v6672 = vsel %vm6129, %v6662, 0
  %v6674 = vsel %vm6129, %v6664, 0
  %v6676 = vsel %vm6129, %v6666, 0
  %6678 = vmatpush.msra.mxu0 0.0
  %6679 = vmatpush.msra.mxu0 0.0
  %6680 = vmatpush.msra.mxu0 0.0
  %6681 = vmatpush.msra.mxu0 0.0
  %6682 = vmatpush.msra.mxu0 0.0
  %6683 = vmatpush.msra.mxu0 0.0
  %6684 = vmatpush.msra.mxu0 0.0
  %6685 = vmatpush.msra.mxu0 0.0
  %6686 = vmatpush.msra.mxu0 0.0
  %6687 = vmatpush.msra.mxu0 0.0
  %6688 = vmatpush.msra.mxu0 0.0
  %6689 = vmatpush.msra.mxu0 0.0
  %6690 = vmatpush.msra.mxu0 %v6671
  %6691 = vmatpush.msra.mxu0 %v6670
  %6692 = vmatpush.msra.mxu0 %v6669
  %6693 = vmatpush.msra.mxu0 %v6668
  %6694 = vmatmul.f32.gmra.mxu0 %v6672
  %v6695 = vpop.f32.mrf.mxu0
  %v6696 = vadd.f32 0.0, %v6695
  %6697 = vmatmul.f32.gmra.mxu0 %v6674
  %v6698 = vpop.f32.mrf.mxu0
  %v6699 = vadd.f32 0.0, %v6698
  %6700 = vmatmul.f32.gmra.mxu0 %v6672
  %v6701 = vpop.f32.mrf.mxu0
  %v6702 = vadd.f32 0.0, %v6701
  %6703 = vmatmul.f32.gmra.mxu0 %v6676
  %v6704 = vpop.f32.mrf.mxu0
  %v6705 = vadd.f32 0.0, %v6704
  %6706 = vdwg.mxu0
  %v6707 = vadd.f32 %v6657, %v6696
  %v6708 = vadd.f32 %v6658, %v6699
  %v6709 = vadd.f32 %v6659, %v6702
  %v6710 = vadd.f32 %v6660, %v6705
  %s6711 = scalar_lea.vmem %s8, 128
  %v6712 = vld [vmem:[%s6711] sm:$0xff]
  %v6713 = vld [vmem:[%s6711 + $0x8] sm:$0xff]
  %v6714 = vld [vmem:[%s6711 + $0x10] sm:$0xff]
  %v6715 = vld [vmem:[%s6711 + $0x18] sm:$0xff]
  %v6717 = vsel %vm6129, %v6486, 0
  %v6720 = vsel %vm6129, %v6487, 0
  %v6723 = vsel %vm6129, %v6488, 0
  %v6726 = vsel %vm6129, %v6489, 0
  %6728 = vmatpush.msra.mxu0 0.0
  %6729 = vmatpush.msra.mxu0 0.0
  %6730 = vmatpush.msra.mxu0 0.0
  %6731 = vmatpush.msra.mxu0 0.0
  %6732 = vmatpush.msra.mxu0 0.0
  %6733 = vmatpush.msra.mxu0 0.0
  %6734 = vmatpush.msra.mxu0 0.0
  %6735 = vmatpush.msra.mxu0 0.0
  %6736 = vmatpush.msra.mxu0 0.0
  %6737 = vmatpush.msra.mxu0 0.0
  %6738 = vmatpush.msra.mxu0 0.0
  %6739 = vmatpush.msra.mxu0 0.0
  %6740 = vmatpush.msra.mxu0 %v6715
  %6741 = vmatpush.msra.mxu0 %v6714
  %6742 = vmatpush.msra.mxu0 %v6713
  %6743 = vmatpush.msra.mxu0 %v6712
  %6744 = vmatmul.f32.gmra.mxu0 %v6717
  %v6745 = vpop.f32.mrf.mxu0
  %v6746 = vadd.f32 0.0, %v6745
  %6747 = vmatmul.f32.gmra.mxu0 %v6720
  %v6748 = vpop.f32.mrf.mxu0
  %v6749 = vadd.f32 0.0, %v6748
  %6750 = vmatmul.f32.gmra.mxu0 %v6723
  %v6751 = vpop.f32.mrf.mxu0
  %v6752 = vadd.f32 0.0, %v6751
  %6753 = vmatmul.f32.gmra.mxu0 %v6726
  %v6754 = vpop.f32.mrf.mxu0
  %v6755 = vadd.f32 0.0, %v6754
  %6756 = vdwg.mxu0
  %v6757 = vadd.f32 %v6707, %v6746
  %v6758 = vadd.f32 %v6708, %v6749
  %v6759 = vadd.f32 %v6709, %v6752
  %v6760 = vadd.f32 %v6710, %v6755
  %s6761 = scalar_lea.vmem %s8, 160
  %v6762 = vld [vmem:[%s6761] sm:$0xff]
  %v6763 = vld [vmem:[%s6761 + $0x8] sm:$0xff]
  %v6764 = vld [vmem:[%s6761 + $0x10] sm:$0xff]
  %v6765 = vld [vmem:[%s6761 + $0x18] sm:$0xff]
  %v6767 = vsel %vm6129, %v6522, 0
  %v6770 = vsel %vm6129, %v6523, 0
  %v6773 = vsel %vm6129, %v6524, 0
  %v6776 = vsel %vm6129, %v6525, 0
  %6778 = vmatpush.msra.mxu0 0.0
  %6779 = vmatpush.msra.mxu0 0.0
  %6780 = vmatpush.msra.mxu0 0.0
  %6781 = vmatpush.msra.mxu0 0.0
  %6782 = vmatpush.msra.mxu0 0.0
  %6783 = vmatpush.msra.mxu0 0.0
  %6784 = vmatpush.msra.mxu0 0.0
  %6785 = vmatpush.msra.mxu0 0.0
  %6786 = vmatpush.msra.mxu0 0.0
  %6787 = vmatpush.msra.mxu0 0.0
  %6788 = vmatpush.msra.mxu0 0.0
  %6789 = vmatpush.msra.mxu0 0.0
  %6790 = vmatpush.msra.mxu0 %v6765
  %6791 = vmatpush.msra.mxu0 %v6764
  %6792 = vmatpush.msra.mxu0 %v6763
  %6793 = vmatpush.msra.mxu0 %v6762
  %6794 = vmatmul.f32.gmra.mxu0 %v6767
  %v6795 = vpop.f32.mrf.mxu0
  %v6796 = vadd.f32 0.0, %v6795
  %6797 = vmatmul.f32.gmra.mxu0 %v6770
  %v6798 = vpop.f32.mrf.mxu0
  %v6799 = vadd.f32 0.0, %v6798
  %6800 = vmatmul.f32.gmra.mxu0 %v6773
  %v6801 = vpop.f32.mrf.mxu0
  %v6802 = vadd.f32 0.0, %v6801
  %6803 = vmatmul.f32.gmra.mxu0 %v6776
  %v6804 = vpop.f32.mrf.mxu0
  %v6805 = vadd.f32 0.0, %v6804
  %6806 = vdwg.mxu0
  %v6807 = vadd.f32 %v6757, %v6796
  %v6808 = vadd.f32 %v6758, %v6799
  %v6809 = vadd.f32 %v6759, %v6802
  %v6810 = vadd.f32 %v6760, %v6805
  %v6811 = vrot.slane %v6486, 1
  %v6812 = vsel %vm1391, %v6811, %v4726
  %v6813 = vrot.slane %v6487, 1
  %v6814 = vsel %vm1391, %v6813, %v4726
  %v6815 = vrot.slane %v6488, 1
  %v6816 = vsel %vm1391, %v6815, %v4726
  %v6817 = vrot.slane %v6489, 1
  %v6818 = vsel %vm1391, %v6817, %v4726
  %s6819 = scalar_lea.vmem %s8, 192
  %v6820 = vld [vmem:[%s6819] sm:$0xff]
  %v6821 = vld [vmem:[%s6819 + $0x8] sm:$0xff]
  %v6822 = vld [vmem:[%s6819 + $0x10] sm:$0xff]
  %v6823 = vld [vmem:[%s6819 + $0x18] sm:$0xff]
  %v6824 = vsel %vm6129, %v6812, 0
  %v6826 = vsel %vm6129, %v6814, 0
  %v6828 = vsel %vm6129, %v6816, 0
  %v6830 = vsel %vm6129, %v6818, 0
  %6832 = vmatpush.msra.mxu0 0.0
  %6833 = vmatpush.msra.mxu0 0.0
  %6834 = vmatpush.msra.mxu0 0.0
  %6835 = vmatpush.msra.mxu0 0.0
  %6836 = vmatpush.msra.mxu0 0.0
  %6837 = vmatpush.msra.mxu0 0.0
  %6838 = vmatpush.msra.mxu0 0.0
  %6839 = vmatpush.msra.mxu0 0.0
  %6840 = vmatpush.msra.mxu0 0.0
  %6841 = vmatpush.msra.mxu0 0.0
  %6842 = vmatpush.msra.mxu0 0.0
  %6843 = vmatpush.msra.mxu0 0.0
  %6844 = vmatpush.msra.mxu0 %v6823
  %6845 = vmatpush.msra.mxu0 %v6822
  %6846 = vmatpush.msra.mxu0 %v6821
  %6847 = vmatpush.msra.mxu0 %v6820
  %6848 = vmatmul.f32.gmra.mxu0 %v6824
  %v6849 = vpop.f32.mrf.mxu0
  %v6850 = vadd.f32 0.0, %v6849
  %6851 = vmatmul.f32.gmra.mxu0 %v6826
  %v6852 = vpop.f32.mrf.mxu0
  %v6853 = vadd.f32 0.0, %v6852
  %6854 = vmatmul.f32.gmra.mxu0 %v6828
  %v6855 = vpop.f32.mrf.mxu0
  %v6856 = vadd.f32 0.0, %v6855
  %6857 = vmatmul.f32.gmra.mxu0 %v6830
  %v6858 = vpop.f32.mrf.mxu0
  %v6859 = vadd.f32 0.0, %v6858
  %6860 = vdwg.mxu0
  %v6861 = vadd.f32 %v6807, %v6850
  %v6862 = vadd.f32 %v6808, %v6853
  %v6863 = vadd.f32 %v6809, %v6856
  %v6864 = vadd.f32 %v6810, %v6859
  %v6865 = vrot.slane %v6522, 1
  %v6866 = vsel %vm1391, %v6865, %v5253
  %v6867 = vrot.slane %v6523, 1
  %v6868 = vsel %vm1391, %v6867, %v5253
  %v6869 = vrot.slane %v6524, 1
  %v6870 = vsel %vm1391, %v6869, %v5253
  %v6871 = vrot.slane %v6525, 1
  %v6872 = vsel %vm1391, %v6871, %v5253
  %s6873 = scalar_lea.vmem %s8, 224
  %v6874 = vld [vmem:[%s6873] sm:$0xff]
  %v6875 = vld [vmem:[%s6873 + $0x8] sm:$0xff]
  %v6876 = vld [vmem:[%s6873 + $0x10] sm:$0xff]
  %v6877 = vld [vmem:[%s6873 + $0x18] sm:$0xff]
  %v6878 = vsel %vm6129, %v6866, 0
  %v6880 = vsel %vm6129, %v6868, 0
  %v6882 = vsel %vm6129, %v6870, 0
  %v6884 = vsel %vm6129, %v6872, 0
  %6886 = vmatpush.msra.mxu0 0.0
  %6887 = vmatpush.msra.mxu0 0.0
  %6888 = vmatpush.msra.mxu0 0.0
  %6889 = vmatpush.msra.mxu0 0.0
  %6890 = vmatpush.msra.mxu0 0.0
  %6891 = vmatpush.msra.mxu0 0.0
  %6892 = vmatpush.msra.mxu0 0.0
  %6893 = vmatpush.msra.mxu0 0.0
  %6894 = vmatpush.msra.mxu0 0.0
  %6895 = vmatpush.msra.mxu0 0.0
  %6896 = vmatpush.msra.mxu0 0.0
  %6897 = vmatpush.msra.mxu0 0.0
  %6898 = vmatpush.msra.mxu0 %v6877
  %6899 = vmatpush.msra.mxu0 %v6876
  %6900 = vmatpush.msra.mxu0 %v6875
  %6901 = vmatpush.msra.mxu0 %v6874
  %6902 = vmatmul.f32.gmra.mxu0 %v6878
  %v6903 = vpop.f32.mrf.mxu0
  %v6904 = vadd.f32 0.0, %v6903
  %6905 = vmatmul.f32.gmra.mxu0 %v6880
  %v6906 = vpop.f32.mrf.mxu0
  %v6907 = vadd.f32 0.0, %v6906
  %6908 = vmatmul.f32.gmra.mxu0 %v6882
  %v6909 = vpop.f32.mrf.mxu0
  %v6910 = vadd.f32 0.0, %v6909
  %6911 = vmatmul.f32.gmra.mxu0 %v6884
  %v6912 = vpop.f32.mrf.mxu0
  %v6913 = vadd.f32 0.0, %v6912
  %6914 = vdwg.mxu0
  %v6915 = vadd.f32 %v6861, %v6904
  %v6916 = vadd.f32 %v6862, %v6907
  %v6917 = vadd.f32 %v6863, %v6910
  %v6918 = vadd.f32 %v6864, %v6913
  %s6919 = scalar_lea.vmem %s8, 256
  %v6920 = vld [vmem:[%s6919] sm:$0xff]
  %v6921 = vld [vmem:[%s6919 + $0x8] sm:$0xff]
  %v6922 = vld [vmem:[%s6919 + $0x10] sm:$0xff]
  %v6923 = vld [vmem:[%s6919 + $0x18] sm:$0xff]
  %v6925 = vsel %vm6129, %v6386, 0
  %v6928 = vsel %vm6129, %v6388, 0
  %6930 = vmatpush.msra.mxu0 0.0
  %6931 = vmatpush.msra.mxu0 0.0
  %6932 = vmatpush.msra.mxu0 0.0
  %6933 = vmatpush.msra.mxu0 0.0
  %6934 = vmatpush.msra.mxu0 0.0
  %6935 = vmatpush.msra.mxu0 0.0
  %6936 = vmatpush.msra.mxu0 0.0
  %6937 = vmatpush.msra.mxu0 0.0
  %6938 = vmatpush.msra.mxu0 0.0
  %6939 = vmatpush.msra.mxu0 0.0
  %6940 = vmatpush.msra.mxu0 0.0
  %6941 = vmatpush.msra.mxu0 0.0
  %6942 = vmatpush.msra.mxu0 %v6923
  %6943 = vmatpush.msra.mxu0 %v6922
  %6944 = vmatpush.msra.mxu0 %v6921
  %6945 = vmatpush.msra.mxu0 %v6920
  %6946 = vmatmul.f32.gmra.mxu0 %v6577
  %v6947 = vpop.f32.mrf.mxu0
  %v6948 = vadd.f32 0.0, %v6947
  %6949 = vmatmul.f32.gmra.mxu0 %v6925
  %v6950 = vpop.f32.mrf.mxu0
  %v6951 = vadd.f32 0.0, %v6950
  %6952 = vmatmul.f32.gmra.mxu0 %v6580
  %v6953 = vpop.f32.mrf.mxu0
  %v6954 = vadd.f32 0.0, %v6953
  %6955 = vmatmul.f32.gmra.mxu0 %v6928
  %v6956 = vpop.f32.mrf.mxu0
  %v6957 = vadd.f32 0.0, %v6956
  %6958 = vdwg.mxu0
  %v6959 = vadd.f32 %v6915, %v6948
  %v6960 = vadd.f32 %v6916, %v6951
  %v6961 = vadd.f32 %v6917, %v6954
  %v6962 = vadd.f32 %v6918, %v6957
  %s6963 = scalar_lea.vmem %s8, 288
  %v6964 = vld [vmem:[%s6963] sm:$0xff]
  %v6965 = vld [vmem:[%s6963 + $0x8] sm:$0xff]
  %v6966 = vld [vmem:[%s6963 + $0x10] sm:$0xff]
  %v6967 = vld [vmem:[%s6963 + $0x18] sm:$0xff]
  %v6969 = vsel %vm6129, %v6431, 0
  %v6972 = vsel %vm6129, %v6433, 0
  %6974 = vmatpush.msra.mxu0 0.0
  %6975 = vmatpush.msra.mxu0 0.0
  %6976 = vmatpush.msra.mxu0 0.0
  %6977 = vmatpush.msra.mxu0 0.0
  %6978 = vmatpush.msra.mxu0 0.0
  %6979 = vmatpush.msra.mxu0 0.0
  %6980 = vmatpush.msra.mxu0 0.0
  %6981 = vmatpush.msra.mxu0 0.0
  %6982 = vmatpush.msra.mxu0 0.0
  %6983 = vmatpush.msra.mxu0 0.0
  %6984 = vmatpush.msra.mxu0 0.0
  %6985 = vmatpush.msra.mxu0 0.0
  %6986 = vmatpush.msra.mxu0 %v6967
  %6987 = vmatpush.msra.mxu0 %v6966
  %6988 = vmatpush.msra.mxu0 %v6965
  %6989 = vmatpush.msra.mxu0 %v6964
  %6990 = vmatmul.f32.gmra.mxu0 %v6539
  %v6991 = vpop.f32.mrf.mxu0
  %v6992 = vadd.f32 0.0, %v6991
  %6993 = vmatmul.f32.gmra.mxu0 %v6969
  %v6994 = vpop.f32.mrf.mxu0
  %v6995 = vadd.f32 0.0, %v6994
  %6996 = vmatmul.f32.gmra.mxu0 %v6542
  %v6997 = vpop.f32.mrf.mxu0
  %v6998 = vadd.f32 0.0, %v6997
  %6999 = vmatmul.f32.gmra.mxu0 %v6972
  %v7000 = vpop.f32.mrf.mxu0
  %v7001 = vadd.f32 0.0, %v7000
  %7002 = vdwg.mxu0
  %v7003 = vadd.f32 %v6959, %v6992
  %v7004 = vadd.f32 %v6960, %v6995
  %v7005 = vadd.f32 %v6961, %v6998
  %v7006 = vadd.f32 %v6962, %v7001
  %v7007 = vrot.slane %v6386, 1
  %v7008 = vsel %vm1391, %v7007, %v4726
  %v7009 = vrot.slane %v6388, 1
  %v7010 = vsel %vm1391, %v7009, %v4726
  %s7011 = scalar_lea.vmem %s8, 320
  %v7012 = vld [vmem:[%s7011] sm:$0xff]
  %v7013 = vld [vmem:[%s7011 + $0x8] sm:$0xff]
  %v7014 = vld [vmem:[%s7011 + $0x10] sm:$0xff]
  %v7015 = vld [vmem:[%s7011 + $0x18] sm:$0xff]
  %v7016 = vsel %vm6129, %v7008, 0
  %v7018 = vsel %vm6129, %v7010, 0
  %7020 = vmatpush.msra.mxu0 0.0
  %7021 = vmatpush.msra.mxu0 0.0
  %7022 = vmatpush.msra.mxu0 0.0
  %7023 = vmatpush.msra.mxu0 0.0
  %7024 = vmatpush.msra.mxu0 0.0
  %7025 = vmatpush.msra.mxu0 0.0
  %7026 = vmatpush.msra.mxu0 0.0
  %7027 = vmatpush.msra.mxu0 0.0
  %7028 = vmatpush.msra.mxu0 0.0
  %7029 = vmatpush.msra.mxu0 0.0
  %7030 = vmatpush.msra.mxu0 0.0
  %7031 = vmatpush.msra.mxu0 0.0
  %7032 = vmatpush.msra.mxu0 %v7015
  %7033 = vmatpush.msra.mxu0 %v7014
  %7034 = vmatpush.msra.mxu0 %v7013
  %7035 = vmatpush.msra.mxu0 %v7012
  %7036 = vmatmul.f32.gmra.mxu0 %v6624
  %v7037 = vpop.f32.mrf.mxu0
  %v7038 = vadd.f32 0.0, %v7037
  %7039 = vmatmul.f32.gmra.mxu0 %v7016
  %v7040 = vpop.f32.mrf.mxu0
  %v7041 = vadd.f32 0.0, %v7040
  %7042 = vmatmul.f32.gmra.mxu0 %v6626
  %v7043 = vpop.f32.mrf.mxu0
  %v7044 = vadd.f32 0.0, %v7043
  %7045 = vmatmul.f32.gmra.mxu0 %v7018
  %v7046 = vpop.f32.mrf.mxu0
  %v7047 = vadd.f32 0.0, %v7046
  %7048 = vdwg.mxu0
  %v7049 = vadd.f32 %v7003, %v7038
  %v7050 = vadd.f32 %v7004, %v7041
  %v7051 = vadd.f32 %v7005, %v7044
  %v7052 = vadd.f32 %v7006, %v7047
  %v7053 = vrot.slane %v6431, 1
  %v7054 = vsel %vm1391, %v7053, %v5253
  %v7055 = vrot.slane %v6433, 1
  %v7056 = vsel %vm1391, %v7055, %v5253
  %s7057 = scalar_lea.vmem %s8, 352
  %v7058 = vld [vmem:[%s7057] sm:$0xff]
  %v7059 = vld [vmem:[%s7057 + $0x8] sm:$0xff]
  %v7060 = vld [vmem:[%s7057 + $0x10] sm:$0xff]
  %v7061 = vld [vmem:[%s7057 + $0x18] sm:$0xff]
  %v7062 = vsel %vm6129, %v7054, 0
  %v7064 = vsel %vm6129, %v7056, 0
  %7066 = vmatpush.msra.mxu0 0.0
  %7067 = vmatpush.msra.mxu0 0.0
  %7068 = vmatpush.msra.mxu0 0.0
  %7069 = vmatpush.msra.mxu0 0.0
  %7070 = vmatpush.msra.mxu0 0.0
  %7071 = vmatpush.msra.mxu0 0.0
  %7072 = vmatpush.msra.mxu0 0.0
  %7073 = vmatpush.msra.mxu0 0.0
  %7074 = vmatpush.msra.mxu0 0.0
  %7075 = vmatpush.msra.mxu0 0.0
  %7076 = vmatpush.msra.mxu0 0.0
  %7077 = vmatpush.msra.mxu0 0.0
  %7078 = vmatpush.msra.mxu0 %v7061
  %7079 = vmatpush.msra.mxu0 %v7060
  %7080 = vmatpush.msra.mxu0 %v7059
  %7081 = vmatpush.msra.mxu0 %v7058
  %7082 = vmatmul.f32.gmra.mxu0 %v6674
  %v7083 = vpop.f32.mrf.mxu0
  %v7084 = vadd.f32 0.0, %v7083
  %7085 = vmatmul.f32.gmra.mxu0 %v7062
  %v7086 = vpop.f32.mrf.mxu0
  %v7087 = vadd.f32 0.0, %v7086
  %7088 = vmatmul.f32.gmra.mxu0 %v6676
  %v7089 = vpop.f32.mrf.mxu0
  %v7090 = vadd.f32 0.0, %v7089
  %7091 = vmatmul.f32.gmra.mxu0 %v7064
  %v7092 = vpop.f32.mrf.mxu0
  %v7093 = vadd.f32 0.0, %v7092
  %7094 = vdwg.mxu0
  %v7095 = vadd.f32 %v7049, %v7084
  %v7096 = vadd.f32 %v7050, %v7087
  %v7097 = vadd.f32 %v7051, %v7090
  %v7098 = vadd.f32 %v7052, %v7093
  %s7099 = scalar_lea.vmem %s8, 384
  %v7100 = vld [vmem:[%s7099] sm:$0xff]
  %v7101 = vld [vmem:[%s7099 + $0x8] sm:$0xff]
  %v7102 = vld [vmem:[%s7099 + $0x10] sm:$0xff]
  %v7103 = vld [vmem:[%s7099 + $0x18] sm:$0xff]
  %7104 = vmatpush.msra.mxu0 0.0
  %7105 = vmatpush.msra.mxu0 0.0
  %7106 = vmatpush.msra.mxu0 0.0
  %7107 = vmatpush.msra.mxu0 0.0
  %7108 = vmatpush.msra.mxu0 0.0
  %7109 = vmatpush.msra.mxu0 0.0
  %7110 = vmatpush.msra.mxu0 0.0
  %7111 = vmatpush.msra.mxu0 0.0
  %7112 = vmatpush.msra.mxu0 0.0
  %7113 = vmatpush.msra.mxu0 0.0
  %7114 = vmatpush.msra.mxu0 0.0
  %7115 = vmatpush.msra.mxu0 0.0
  %7116 = vmatpush.msra.mxu0 %v7103
  %7117 = vmatpush.msra.mxu0 %v7102
  %7118 = vmatpush.msra.mxu0 %v7101
  %7119 = vmatpush.msra.mxu0 %v7100
  %7120 = vmatmul.f32.gmra.mxu0 %v6720
  %v7121 = vpop.f32.mrf.mxu0
  %v7122 = vadd.f32 0.0, %v7121
  %7123 = vmatmul.f32.gmra.mxu0 %v6574
  %v7124 = vpop.f32.mrf.mxu0
  %v7125 = vadd.f32 0.0, %v7124
  %7126 = vmatmul.f32.gmra.mxu0 %v6726
  %v7127 = vpop.f32.mrf.mxu0
  %v7128 = vadd.f32 0.0, %v7127
  %7129 = vmatmul.f32.gmra.mxu0 %v6574
  %v7130 = vpop.f32.mrf.mxu0
  %v7131 = vadd.f32 0.0, %v7130
  %7132 = vdwg.mxu0
  %v7133 = vadd.f32 %v7095, %v7122
  %v7134 = vadd.f32 %v7096, %v7125
  %v7135 = vadd.f32 %v7097, %v7128
  %v7136 = vadd.f32 %v7098, %v7131
  %s7137 = scalar_lea.vmem %s8, 416
  %v7138 = vld [vmem:[%s7137] sm:$0xff]
  %v7139 = vld [vmem:[%s7137 + $0x8] sm:$0xff]
  %v7140 = vld [vmem:[%s7137 + $0x10] sm:$0xff]
  %v7141 = vld [vmem:[%s7137 + $0x18] sm:$0xff]
  %7142 = vmatpush.msra.mxu0 0.0
  %7143 = vmatpush.msra.mxu0 0.0
  %7144 = vmatpush.msra.mxu0 0.0
  %7145 = vmatpush.msra.mxu0 0.0
  %7146 = vmatpush.msra.mxu0 0.0
  %7147 = vmatpush.msra.mxu0 0.0
  %7148 = vmatpush.msra.mxu0 0.0
  %7149 = vmatpush.msra.mxu0 0.0
  %7150 = vmatpush.msra.mxu0 0.0
  %7151 = vmatpush.msra.mxu0 0.0
  %7152 = vmatpush.msra.mxu0 0.0
  %7153 = vmatpush.msra.mxu0 0.0
  %7154 = vmatpush.msra.mxu0 %v7141
  %7155 = vmatpush.msra.mxu0 %v7140
  %7156 = vmatpush.msra.mxu0 %v7139
  %7157 = vmatpush.msra.mxu0 %v7138
  %7158 = vmatmul.f32.gmra.mxu0 %v6770
  %v7159 = vpop.f32.mrf.mxu0
  %v7160 = vadd.f32 0.0, %v7159
  %7161 = vmatmul.f32.gmra.mxu0 %v6536
  %v7162 = vpop.f32.mrf.mxu0
  %v7163 = vadd.f32 0.0, %v7162
  %7164 = vmatmul.f32.gmra.mxu0 %v6776
  %v7165 = vpop.f32.mrf.mxu0
  %v7166 = vadd.f32 0.0, %v7165
  %7167 = vmatmul.f32.gmra.mxu0 %v6536
  %v7168 = vpop.f32.mrf.mxu0
  %v7169 = vadd.f32 0.0, %v7168
  %7170 = vdwg.mxu0
  %v7171 = vadd.f32 %v7133, %v7160
  %v7172 = vadd.f32 %v7134, %v7163
  %v7173 = vadd.f32 %v7135, %v7166
  %v7174 = vadd.f32 %v7136, %v7169
  %s7175 = scalar_lea.vmem %s8, 448
  %v7176 = vld [vmem:[%s7175] sm:$0xff]
  %v7177 = vld [vmem:[%s7175 + $0x8] sm:$0xff]
  %v7178 = vld [vmem:[%s7175 + $0x10] sm:$0xff]
  %v7179 = vld [vmem:[%s7175 + $0x18] sm:$0xff]
  %7180 = vmatpush.msra.mxu0 0.0
  %7181 = vmatpush.msra.mxu0 0.0
  %7182 = vmatpush.msra.mxu0 0.0
  %7183 = vmatpush.msra.mxu0 0.0
  %7184 = vmatpush.msra.mxu0 0.0
  %7185 = vmatpush.msra.mxu0 0.0
  %7186 = vmatpush.msra.mxu0 0.0
  %7187 = vmatpush.msra.mxu0 0.0
  %7188 = vmatpush.msra.mxu0 0.0
  %7189 = vmatpush.msra.mxu0 0.0
  %7190 = vmatpush.msra.mxu0 0.0
  %7191 = vmatpush.msra.mxu0 0.0
  %7192 = vmatpush.msra.mxu0 %v7179
  %7193 = vmatpush.msra.mxu0 %v7178
  %7194 = vmatpush.msra.mxu0 %v7177
  %7195 = vmatpush.msra.mxu0 %v7176
  %7196 = vmatmul.f32.gmra.mxu0 %v6826
  %v7197 = vpop.f32.mrf.mxu0
  %v7198 = vadd.f32 0.0, %v7197
  %7199 = vmatmul.f32.gmra.mxu0 %v6622
  %v7200 = vpop.f32.mrf.mxu0
  %v7201 = vadd.f32 0.0, %v7200
  %7202 = vmatmul.f32.gmra.mxu0 %v6830
  %v7203 = vpop.f32.mrf.mxu0
  %v7204 = vadd.f32 0.0, %v7203
  %7205 = vmatmul.f32.gmra.mxu0 %v6622
  %v7206 = vpop.f32.mrf.mxu0
  %v7207 = vadd.f32 0.0, %v7206
  %7208 = vdwg.mxu0
  %v7209 = vadd.f32 %v7171, %v7198
  %v7210 = vadd.f32 %v7172, %v7201
  %v7211 = vadd.f32 %v7173, %v7204
  %v7212 = vadd.f32 %v7174, %v7207
  %s7213 = scalar_lea.vmem %s8, 480
  %v7214 = vld [vmem:[%s7213] sm:$0xff]
  %v7215 = vld [vmem:[%s7213 + $0x8] sm:$0xff]
  %v7216 = vld [vmem:[%s7213 + $0x10] sm:$0xff]
  %v7217 = vld [vmem:[%s7213 + $0x18] sm:$0xff]
  %7218 = vmatpush.msra.mxu0 0.0
  %7219 = vmatpush.msra.mxu0 0.0
  %7220 = vmatpush.msra.mxu0 0.0
  %7221 = vmatpush.msra.mxu0 0.0
  %7222 = vmatpush.msra.mxu0 0.0
  %7223 = vmatpush.msra.mxu0 0.0
  %7224 = vmatpush.msra.mxu0 0.0
  %7225 = vmatpush.msra.mxu0 0.0
  %7226 = vmatpush.msra.mxu0 0.0
  %7227 = vmatpush.msra.mxu0 0.0
  %7228 = vmatpush.msra.mxu0 0.0
  %7229 = vmatpush.msra.mxu0 0.0
  %7230 = vmatpush.msra.mxu0 %v7217
  %7231 = vmatpush.msra.mxu0 %v7216
  %7232 = vmatpush.msra.mxu0 %v7215
  %7233 = vmatpush.msra.mxu0 %v7214
  %7234 = vmatmul.f32.gmra.mxu0 %v6880
  %v7235 = vpop.f32.mrf.mxu0
  %v7236 = vadd.f32 0.0, %v7235
  %7237 = vmatmul.f32.gmra.mxu0 %v6672
  %v7238 = vpop.f32.mrf.mxu0
  %v7239 = vadd.f32 0.0, %v7238
  %7240 = vmatmul.f32.gmra.mxu0 %v6884
  %v7241 = vpop.f32.mrf.mxu0
  %v7242 = vadd.f32 0.0, %v7241
  %7243 = vmatmul.f32.gmra.mxu0 %v6672
  %v7244 = vpop.f32.mrf.mxu0
  %v7245 = vadd.f32 0.0, %v7244
  %7246 = vdwg.mxu0
  %v7247 = vadd.f32 %v7209, %v7236
  %v7248 = vadd.f32 %v7210, %v7239
  %v7249 = vadd.f32 %v7211, %v7242
  %v7250 = vadd.f32 %v7212, %v7245
  %vm7251 = vcmp.lt.s32.totalorder %v4108, 2
  %vm7252 = vcmp.lt.s32.totalorder %v4109, 2
  %vm7253 = vcmp.lt.s32.totalorder %v4110, 2
  %vm7254 = vcmp.lt.s32.totalorder %v4111, 2
  %v7255 = vsel %vm7251, 1, 0
  %v7256 = vsel %vm7252, 1, 0
  %v7257 = vsel %vm7253, 1, 0
  %v7258 = vsel %vm7254, 1, 0
  %v7259 = vcvt.s32.f32 %v7255
  %v7260 = vcvt.s32.f32 %v7256
  %v7261 = vcvt.s32.f32 %v7257
  %v7262 = vcvt.s32.f32 %v7258
  %v7263 = vmul.f32 %v7247, %v7259
  %v7264 = vmul.f32 %v7248, %v7260
  %v7265 = vmul.f32 %v7249, %v7261
  %v7266 = vmul.f32 %v7250, %v7262
  %vm7267 = vcmask 523264
  %v7268 = vsel %vm7267, %v7263, 0.0
  %v7269 = vsel %vm7267, %v7264, 0.0
  %v7270 = vadd.f32 %v7268, %v7269
  %v7271 = vsel %vm7267, %v7265, 0.0
  %v7272 = vadd.f32 %v7270, %v7271
  %v7273 = vsel %vm7267, %v7266, 0.0
  %v7274 = vadd.f32 %v7272, %v7273
  %v7275 = vrot.slane %v7274, 4
  %v7276 = vadd.f32 %v7274, %v7275
  %v7277 = vrot.slane %v7276, 2
  %v7278 = vadd.f32 %v7276, %v7277
  %v7279 = vrot.slane %v7278, 1
  %v7280 = vadd.f32 %v7278, %v7279
  %v7281 = vrcp.pop 8.0
  %v7282 = vmul.f32 8.0, %v7281
  %v7283 = vsub.f32 1.0, %v7282
  %v7284 = vmul.f32 %v7281, %v7283
  %v7285 = vadd.f32 %v7281, %v7284
  %vm7286 = vweird.f32 %v7281
  %v7287 = vsel %vm7286, %v7281, %v7285
  %v7288 = vmul.f32 %v7280, %v7287
  %v7289 = vsub.f32 %v7247, %v7288
  %v7290 = vsub.f32 %v7248, %v7288
  %v7291 = vsub.f32 %v7249, %v7288
  %v7292 = vsub.f32 %v7250, %v7288
  %v7293 = vmul.f32 %v7289, %v7259
  %v7294 = vmul.f32 %v7290, %v7260
  %v7295 = vmul.f32 %v7291, %v7261
  %v7296 = vmul.f32 %v7292, %v7262
  %v7297 = vmul.f32 %v7293, %v7293
  %v7298 = vmul.f32 %v7294, %v7294
  %v7299 = vmul.f32 %v7295, %v7295
  %v7300 = vmul.f32 %v7296, %v7296
  %v7301 = vsel %vm7267, %v7297, 0.0
  %v7302 = vsel %vm7267, %v7298, 0.0
  %v7303 = vadd.f32 %v7301, %v7302
  %v7304 = vsel %vm7267, %v7299, 0.0
  %v7305 = vadd.f32 %v7303, %v7304
  %v7306 = vsel %vm7267, %v7300, 0.0
  %v7307 = vadd.f32 %v7305, %v7306
  %v7308 = vrot.slane %v7307, 4
  %v7309 = vadd.f32 %v7307, %v7308
  %v7310 = vrot.slane %v7309, 2
  %v7311 = vadd.f32 %v7309, %v7310
  %v7312 = vrot.slane %v7311, 1
  %v7313 = vadd.f32 %v7311, %v7312
  %v7314 = vmul.f32 %v7313, %v7287
  %v7315 = vadd.f32 %v7314, 1e-05
  %v7316 = vrsqrt.pop %v7315
  %v7317 = vmul.f32 %v7316, %v7315
  %v7318 = vmul.f32 %v7317, %v7316
  %v7319 = vmul.f32 0.5, %v7318
  %v7320 = vsub.f32 1.5, %v7319
  %v7321 = vmul.f32 %v7316, %v7320
  %vm7322 = vweird.f32 %v7315
  %vm7323 = vweird.f32 %v7316
  %vm7324 = vmor %vm7322, %vm7323
  %v7325 = vsel %vm7324, %v7316, %v7321
  %v7326 = vmul.f32 %v7289, %v7325
  %v7327 = vmul.f32 %v7290, %v7325
  %v7328 = vmul.f32 %v7291, %v7325
  %v7329 = vmul.f32 %v7292, %v7325
  %v7330 = vld [vmem:[%s9] sm:$0x1]
  %v7332 = vperm.slane %v7330, 0
  %v7334 = vmul.f32 %v7326, %v7332
  %v7335 = vmul.f32 %v7327, %v7332
  %v7336 = vmul.f32 %v7328, %v7332
  %v7337 = vmul.f32 %v7329, %v7332
  %v7338 = vld [vmem:[%s10] sm:$0x1]
  %v7340 = vperm.slane %v7338, 0
  %v7342 = vadd.f32 %v7334, %v7340
  %v7343 = vadd.f32 %v7335, %v7340
  %v7344 = vadd.f32 %v7336, %v7340
  %v7345 = vadd.f32 %v7337, %v7340
  %vm7346 = vcmp.ge.f32.partialorder %v7342, 0.0
  %vm7347 = vcmp.ge.f32.partialorder %v7343, 0.0
  %vm7348 = vcmp.ge.f32.partialorder %v7344, 0.0
  %vm7349 = vcmp.ge.f32.partialorder %v7345, 0.0
  %v7350 = vmul.f32 %v7342, 0.2
  %v7351 = vmul.f32 %v7343, 0.2
  %v7352 = vmul.f32 %v7344, 0.2
  %v7353 = vmul.f32 %v7345, 0.2
  %v7354 = vsel %vm7346, %v7342, %v7350
  %v7355 = vsel %vm7347, %v7343, %v7351
  %v7356 = vsel %vm7348, %v7344, %v7352
  %v7357 = vsel %vm7349, %v7345, %v7353
  %v7358 = vld [vmem:[%s11] sm:$0x1]
  %v7359 = vmul.f32 %v7354, %v7358
  %v7360 = vmul.f32 %v7356, %v7358
  %vm7361 = vcmask 516096
  %v7362 = vsel %vm7361, %v7359, 0.0
  %7363 = vadd.xlane.f32.xlu0 %v7362
  %v7364 = vpop.xlane.xlu0 %7363
  %v7365 = vsel %vm7361, %v7360, 0.0
  %7366 = vadd.xlane.f32.xlu0 %v7365
  %v7367 = vpop.xlane.xlu0 %7366
  %v7368 = vadd.f32 %v7364, 0.0
  %v7369 = vadd.f32 %v7367, 0.0
  %s7370 = scalar_lea.vmem %s11, 1
  %v7371 = vld [vmem:[%s7370] sm:$0x1]
  %v7373 = vperm.slane %v7371, 0
  %v7375 = vmul.f32 %v7354, %v7373
  %v7376 = vmul.f32 %v7356, %v7373
  %vm7377 = vcmask 517121
  %v7378 = vsel %vm7377, %v7375, 0.0
  %7379 = vadd.xlane.f32.xlu0 %v7378
  %v7380 = vpop.xlane.xlu0 %7379
  %v7381 = vsel %vm7377, %v7376, 0.0
  %7382 = vadd.xlane.f32.xlu0 %v7381
  %v7383 = vpop.xlane.xlu0 %7382
  %v7386 = vrot.slane %v7380, 1
  %v7387 = vrot.slane %v7383, 1
  %v7390 = vadd.f32 %v7368, %v7386
  %v7391 = vadd.f32 %v7369, %v7387
  %s7392 = scalar_lea.vmem %s11, 2
  %v7393 = vld [vmem:[%s7392] sm:$0x1]
  %v7394 = vmul.f32 %v7355, %v7393
  %v7395 = vmul.f32 %v7357, %v7393
  %v7396 = vsel %vm7361, %v7394, 0.0
  %7397 = vadd.xlane.f32.xlu0 %v7396
  %v7398 = vpop.xlane.xlu0 %7397
  %v7399 = vsel %vm7361, %v7395, 0.0
  %7400 = vadd.xlane.f32.xlu0 %v7399
  %v7401 = vpop.xlane.xlu0 %7400
  %v7402 = vadd.f32 %v7390, %v7398
  %v7403 = vadd.f32 %v7391, %v7401
  %s7404 = scalar_lea.vmem %s11, 3
  %v7405 = vld [vmem:[%s7404] sm:$0x1]
  %v7407 = vperm.slane %v7405, 0
  %v7409 = vmul.f32 %v7355, %v7407
  %v7410 = vmul.f32 %v7357, %v7407
  %v7411 = vsel %vm7377, %v7409, 0.0
  %7412 = vadd.xlane.f32.xlu0 %v7411
  %v7413 = vpop.xlane.xlu0 %7412
  %v7414 = vsel %vm7377, %v7410, 0.0
  %7415 = vadd.xlane.f32.xlu0 %v7414
  %v7416 = vpop.xlane.xlu0 %7415
  %v7419 = vrot.slane %v7413, 1
  %v7420 = vrot.slane %v7416, 1
  %v7423 = vadd.f32 %v7402, %v7419
  %v7424 = vadd.f32 %v7403, %v7420
  %v7425 = vxor.u32 %v7423, 2147483648
  %v7426 = vxor.u32 %v7424, 2147483648
  %v7427 = vmul.f32 %v7425, 1.442695
  %v7428 = vpow.pop %v7427
  %v7429 = vmul.f32 %v7426, 1.442695
  %v7430 = vpow.pop %v7429
  %v7431 = vadd.f32 %v7428, 1.0
  %v7432 = vadd.f32 %v7430, 1.0
  %v7433 = vrcp.pop %v7431
  %v7434 = vmul.f32 %v7431, %v7433
  %v7435 = vsub.f32 1.0, %v7434
  %v7436 = vmul.f32 %v7433, %v7435
  %v7437 = vadd.f32 %v7433, %v7436
  %vm7438 = vweird.f32 %v7431
  %vm7439 = vweird.f32 %v7433
  %vm7440 = vmor %vm7438, %vm7439
  %v7441 = vsel %vm7440, %v7433, %v7437
  %v7442 = vand.u32 2147483647, %v7431
  %vm7443 = vcmp.eq.f32.partialorder %v7442, 8.507059e+37
  %v7444 = vand.u32 %v7431, 2147483648
  %v7445 = vor.u32 1.1754944e-38, %v7444
  %v7446 = vsel %vm7443, %v7445, %v7441
  %v7447 = vmul.f32 1.0, %v7446
  %v7448 = vrcp.pop %v7432
  %v7449 = vmul.f32 %v7432, %v7448
  %v7450 = vsub.f32 1.0, %v7449
  %v7451 = vmul.f32 %v7448, %v7450
  %v7452 = vadd.f32 %v7448, %v7451
  %vm7453 = vweird.f32 %v7432
  %vm7454 = vweird.f32 %v7448
  %vm7455 = vmor %vm7453, %vm7454
  %v7456 = vsel %vm7455, %v7448, %v7452
  %v7457 = vand.u32 2147483647, %v7432
  %vm7458 = vcmp.eq.f32.partialorder %v7457, 8.507059e+37
  %v7459 = vand.u32 %v7432, 2147483648
  %v7460 = vor.u32 1.1754944e-38, %v7459
  %v7461 = vsel %vm7458, %v7460, %v7456
  %v7462 = vmul.f32 1.0, %v7461
  %vm7463 = vcmask 0
  %7464 = vst.msk [vmem:[%s12] sm:$0x1] %vm7463, %v7447
  %7465 = vst.msk [vmem:[%s12 + $0x1] sm:$0x1] %vm7463, %v7462
  // Predicated region
  $region50: #{forward.1} parent=0 // pred_check
    _
  $region51: #{forward.1} parent=0 // pred_check_branch
    %7467 = sbr.rel (0) target = $region53
  $region52: #{forward.1} parent=0 // pred_region
    _
  $region53: #{forward.1} parent=0 // pred_fallthru
    _
  // Predicated region
  $region54: #{forward.1} parent=0 // pred_check
    _
  $region55: #{forward.1} parent=0 // pred_check_branch
    %7469 = sbr.rel (0) target = $region57
  $region56: #{forward.1} parent=0 // pred_region
    _
  $region57: #{forward.1} parent=0 // pred_fallthru
    _

</llo_original>
